<compile_context>
chip_gen: v7x
topology: tpu7x:2x2x1
jax: 0.10.0
libtpu: 0.0.40
codegen_flags: <defaults>
</compile_context>

<pallas_src>
import functools

import jax
import jax.numpy as jnp
from jax.experimental import pallas as pl
from jax.experimental.pallas import tpu as pltpu

LEAKY_SLOPE = 0.2
KH = KW = 4
STRIDE = 2
PAD = 1


# ----------------------------------------------------------------------------
# In-kernel helpers
# ----------------------------------------------------------------------------
def _bias_leaky(acc, b_ref):
    z = acc + b_ref[...]
    return jnp.where(z >= 0, z, LEAKY_SLOPE * z)


def _conv_taps(in_ref, w_ref, bt, oh, ow):
    """Conv as 16 per-tap matmuls with M = bt*oh*ow, accumulated in f32.

    in_ref is the parity-folded, zero-padded input:
        folded[b, s, t, r, w2, c] = padded[b, 2r+s, 2w2+t, c]
    so every 4x4/stride-2 tap is the contiguous window
        folded[:, kh%2, kw%2, kh//2 : kh//2+oh, kw//2 : kw//2+ow, :].
    """
    cin, cout = w_ref.shape[-2], w_ref.shape[-1]
    acc = jnp.zeros((bt * oh * ow, cout), jnp.float32)
    for kh in range(KH):
        for kw in range(KW):
            s, t = kh % 2, kw % 2
            r0, c0 = kh // 2, kw // 2
            tap = in_ref[:, s, t, r0:r0 + oh, c0:c0 + ow, :]        # (bt, oh, ow, cin)
            acc = acc + jnp.dot(tap.reshape(bt * oh * ow, cin),
                                w_ref[kh * KW + kw],
                                preferred_element_type=jnp.float32)
    return acc


def _pad_edge(a, axis, before):
    """Concat a single zero row/col along `axis` (builds the padded border in-value)."""
    shape = list(a.shape)
    shape[axis] = 1
    z = jnp.zeros(shape, a.dtype)
    return jnp.concatenate([z, a] if before else [a, z], axis=axis)


def _epilogue_to_folded(acc, b_ref, out_ref, bt, oh, ow):
    """bias + LeakyReLU + ONE f32->bf16 cast, then write the result as the next layer's
    parity-folded, zero-padded input using 4 contiguous full-plane stores (zero border folded
    into the same stores), replacing the old per-row selection matmuls + border zero pass."""
    cout = out_ref.shape[-1]
    y = _bias_leaky(acc, b_ref).astype(out_ref.dtype)               # single cast per layer
    yr = y.reshape(bt, oh // 2, 2, ow // 2, 2, cout)                 # row/col parity split
    for p in range(2):
        s, pad_top = (p + 1) % 2, (p + 1) // 2        # out row 2a+p -> padded row 2a+p+1
        for q in range(2):
            t, pad_left = (q + 1) % 2, (q + 1) // 2   # out col 2b+q -> padded col 2b+q+1
            blk = yr[:, :, p, :, q, :]                               # (bt, oh/2, ow/2, cout)
            blk = _pad_edge(blk, 1, before=bool(pad_top))
            blk = _pad_edge(blk, 2, before=bool(pad_left))
            out_ref[:, s, t, :, :, :] = blk                          # whole (R, C) plane


def _disc_kernel(x_ref, w1_ref, b1_ref, w2_ref, b2_ref, w3_ref, b3_ref,
                 wh_ref, bh_ref, o_ref, act1_ref, act2_ref,
                 *, bt, oh1, ow1, oh2, ow2, oh3, ow3):
    # ---- layer 1: one im2col matmul for the whole batch block ----
    lhs = x_ref[...].reshape(bt * oh1 * ow1, x_ref.shape[-1])
    acc = jnp.dot(lhs, w1_ref[...], preferred_element_type=jnp.float32)
    _epilogue_to_folded(acc, b1_ref, act1_ref, bt, oh1, ow1)

    # ---- layer 2: 16 per-tap matmuls, M = bt*oh2*ow2 ----
    acc = _conv_taps(act1_ref, w2_ref, bt, oh2, ow2)
    _epilogue_to_folded(acc, b2_ref, act2_ref, bt, oh2, ow2)

    # ---- layer 3 + fused global spatial mean + 256->1 head ----
    acc = _conv_taps(act2_ref, w3_ref, bt, oh3, ow3)
    y = _bias_leaky(acc, b3_ref)                                     # (bt*oh3*ow3, 256) f32
    mean = jnp.mean(y.reshape(bt, oh3 * ow3, y.shape[-1]), axis=1)   # (bt, 256)
    out = jnp.sum(mean * wh_ref[...], axis=-1, keepdims=True) + bh_ref[...]
    o_ref[...] = out.reshape(bt, 1, 1)


# ----------------------------------------------------------------------------
# Wrapper-side data layout glue
# ----------------------------------------------------------------------------
def _fold_weight(w_oihw):
    # PyTorch OIHW (co, ci, 4, 4) -> (kh*kw, ci, co), bf16 for the MXU.
    w = jnp.transpose(w_oihw, (2, 3, 1, 0)).reshape(KH * KW, w_oihw.shape[1], w_oihw.shape[0])
    return w.astype(jnp.bfloat16)


def _fold_weight_l1(w_oihw):
    # OIHW (64, 3, 4, 4) -> im2col weight (48, 64), index = (kh*4 + kw)*3 + ci.
    co, ci = w_oihw.shape[0], w_oihw.shape[1]
    return jnp.transpose(w_oihw, (2, 3, 1, 0)).reshape(KH * KW * ci, co).astype(jnp.bfloat16)


def _im2col_layer1(x_nhwc):
    # Layer-1 patches: (n, oh1*ow1, 48); lane dim 48 (vs. 3 before) -> dense DMA rows, ~2.7x
    # lane padding instead of ~42x.
    n, h, w, c = x_nhwc.shape
    oh, ow = h // 2, w // 2
    xp = jnp.pad(x_nhwc, ((0, 0), (PAD, PAD), (PAD, PAD), (0, 0)))
    taps = [xp[:, kh:kh + 2 * oh:2, kw:kw + 2 * ow:2, :]
            for kh in range(KH) for kw in range(KW)]
    pat = jnp.stack(taps, axis=3)                       # (n, oh, ow, 16, c)
    return pat.reshape(n, oh * ow, KH * KW * c).astype(jnp.bfloat16)


def _pick_batch_tile(n):
    # Largest batch tile that keeps >= 2 grid steps (both v7x TensorCores busy under "parallel").
    for bt in (8, 4, 2, 1):
        if n % bt == 0 and n // bt >= 2:
            return bt
    return n


def discriminator_forward(x_nchw, params, *, batch_tile=None):
    n, cin, h, w = x_nchw.shape
    assert cin == 3 and h % 8 == 0 and w % 8 == 0, "expects 3xHxW input with H,W multiples of 8"
    bt = batch_tile if batch_tile is not None else _pick_batch_tile(n)
    assert n % bt == 0

    (w1, b1), (w2, b2), (w3, b3) = params["convs"]
    wl, bl = params["linear"]

    oh1, ow1 = h // 2, w // 2
    oh2, ow2 = h // 4, w // 4
    oh3, ow3 = h // 8, w // 8

    patches = _im2col_layer1(jnp.transpose(x_nchw, (0, 2, 3, 1)))    # (n, oh1*ow1, 48) bf16
    w1c = _fold_weight_l1(w1)                                        # (48, 64)
    w2f, w3f = _fold_weight(w2), _fold_weight(w3)                    # (16, ci, co)
    b1r = b1.reshape(1, -1).astype(jnp.float32)
    b2r = b2.reshape(1, -1).astype(jnp.float32)
    b3r = b3.reshape(1, -1).astype(jnp.float32)
    whr = wl.reshape(1, -1).astype(jnp.float32)
    bhr = bl.reshape(1, 1).astype(jnp.float32)

    r2, c2 = oh1 // 2 + 1, ow1 // 2 + 1     # folded padded layer-1 output dims
    r3, c3 = oh2 // 2 + 1, ow2 // 2 + 1     # folded padded layer-2 output dims

    kernel = functools.partial(_disc_kernel, bt=bt, oh1=oh1, ow1=ow1,
                               oh2=oh2, ow2=ow2, oh3=oh3, ow3=ow3)

    out = pl.pallas_call(
        kernel,
        out_shape=jax.ShapeDtypeStruct((n, 1, 1), jnp.float32),
        grid_spec=pltpu.PrefetchScalarGridSpec(
            num_scalar_prefetch=0,
            grid=(n // bt,),
            in_specs=[
                pl.BlockSpec((bt, oh1 * ow1, KH * KW * cin), lambda i: (i, 0, 0)),
                pl.BlockSpec((KH * KW * cin, 64), lambda i: (0, 0)),
                pl.BlockSpec((1, 64), lambda i: (0, 0)),
                pl.BlockSpec((KH * KW, 64, 128), lambda i: (0, 0, 0)),
                pl.BlockSpec((1, 128), lambda i: (0, 0)),
                pl.BlockSpec((KH * KW, 128, 256), lambda i: (0, 0, 0)),
                pl.BlockSpec((1, 256), lambda i: (0, 0)),
                pl.BlockSpec((1, 256), lambda i: (0, 0)),
                pl.BlockSpec((1, 1), lambda i: (0, 0)),
            ],
            out_specs=pl.BlockSpec((bt, 1, 1), lambda i: (i, 0, 0)),
            scratch_shapes=[
                pltpu.VMEM((bt, 2, 2, r2, c2, 64), jnp.bfloat16),    # folded padded layer-1 out
                pltpu.VMEM((bt, 2, 2, r3, c3, 128), jnp.bfloat16),   # folded padded layer-2 out
            ],
        ),
        compiler_params=pltpu.CompilerParams(dimension_semantics=("parallel",)),
    )(patches, w1c, b1r, w2f, b2r, w3f, b3r, whr, bhr)
    return out.reshape(n, 1)


# ----------------------------------------------------------------------------
# Spectral norm (parameter preprocessing, plain JAX glue)
# ----------------------------------------------------------------------------
def spectral_normalize(w, key, n_iter=50):
    # NOTE: PyTorch's spectral_norm does 1 power iteration per forward with a persistent `u`
    # buffer; here we use the converged sigma (what it approaches after many forwards). This is
    # parameter preprocessing, not part of the fused forward kernel.
    w2d = w.reshape(w.shape[0], -1)
    u = jax.random.normal(key, (w2d.shape[0],), dtype=jnp.float32)
    u = u / (jnp.linalg.norm(u) + 1e-12)
    v = None
    for _ in range(n_iter):
        v = w2d.T @ u
        v = v / (jnp.linalg.norm(v) + 1e-12)
        u = w2d @ v
        u = u / (jnp.linalg.norm(u) + 1e-12)
    sigma = u @ (w2d @ v)
    return w / sigma


# ----------------------------------------------------------------------------
# Model params + pure-JAX reference
# ----------------------------------------------------------------------------
def init_params(key):
    keys = jax.random.split(key, 8)
    chans = [(3, 64), (64, 128), (128, 256)]
    convs = []
    for li, (ci, co) in enumerate(chans):
        w = 0.05 * jax.random.normal(keys[2 * li], (co, ci, KH, KW), dtype=jnp.float32)
        b = 0.01 * jax.random.normal(keys[2 * li + 1], (co,), dtype=jnp.float32)
        w = spectral_normalize(w, jax.random.fold_in(keys[2 * li], 7))
        convs.append((w, b))
    wl = 0.05 * jax.random.normal(keys[6], (1, 256), dtype=jnp.float32)   # torch Linear: (out, in)
    bl = 0.01 * jax.random.normal(keys[7], (1,), dtype=jnp.float32)
    wl = spectral_normalize(wl, jax.random.fold_in(keys[6], 7))
    return {"convs": convs, "linear": (wl, bl)}


def reference_forward(x_nchw, params):
    x = x_nchw
    for (w, b) in params["convs"]:
        x = jax.lax.conv_general_dilated(
            x, w, window_strides=(STRIDE, STRIDE), padding=((PAD, PAD), (PAD, PAD)),
            dimension_numbers=("NCHW", "OIHW", "NCHW"))
        x = x + b.reshape(1, -1, 1, 1)
        x = jnp.where(x >= 0, x, LEAKY_SLOPE * x)
    m = x.mean(axis=(-2, -1))  # (N, 256)
    wl, bl = params["linear"]
    return m @ wl.T + bl


if __name__ == "__main__":
    key = jax.random.PRNGKey(0)
    pkey, xkey = jax.random.split(key)
    params = init_params(pkey)
    # batch=4 exercises the batch-tiling path (B_t=2, two grid steps).
    x = jax.random.normal(xkey, (4, 3, 16, 16), dtype=jnp.float32)  # NCHW like PyTorch

    out = jax.block_until_ready(discriminator_forward(x, params))
    ref = jax.block_until_ready(reference_forward(x, params))

    assert out.shape == (4, 1), out.shape
    assert bool(jnp.all(jnp.isfinite(out)))
    # bf16 MXU inputs / inter-layer activations (f32 accumulation) -> loose tolerance on purpose.
    assert bool(jnp.allclose(out, ref, rtol=5e-2, atol=5e-2)), (out, ref)
    print("KERNEL_OK")
</pallas_src>

<mosaic_0001>
module attributes {stable_mosaic.version = 11 : i64} {
  func.func @_disc_kernel(%arg0: i32, %arg1: memref<2x64x48xbf16, #tpu.memory_space<vmem>>, %arg2: memref<48x64xbf16, #tpu.memory_space<vmem>>, %arg3: memref<1x64xf32, #tpu.memory_space<vmem>>, %arg4: memref<16x64x128xbf16, #tpu.memory_space<vmem>>, %arg5: memref<1x128xf32, #tpu.memory_space<vmem>>, %arg6: memref<16x128x256xbf16, #tpu.memory_space<vmem>>, %arg7: memref<1x256xf32, #tpu.memory_space<vmem>>, %arg8: memref<1x256xf32, #tpu.memory_space<vmem>>, %arg9: memref<1x1xf32, #tpu.memory_space<vmem>>, %arg10: memref<2x1x1xf32, #tpu.memory_space<vmem>>, %arg11: memref<2x2x2x5x5x64xbf16, #tpu.memory_space<vmem>>, %arg12: memref<2x2x2x3x3x128xbf16, #tpu.memory_space<vmem>>) attributes {dimension_semantics = [#tpu.dimension_semantics<parallel>], iteration_bounds = array<i64: 2>, scalar_prefetch = 0 : i64, scratch_operands = 2 : i64, tpu.core_type = #tpu.core_type<tc>, window_params = [{transform_indices = @transform_0, window_bounds = array<i64: 2, 64, 48>}, {pipeline_mode = #tpu.pipeline_mode<synchronous>, transform_indices = @transform_1, window_bounds = array<i64: 48, 64>}, {pipeline_mode = #tpu.pipeline_mode<synchronous>, transform_indices = @transform_2, window_bounds = array<i64: 1, 64>}, {pipeline_mode = #tpu.pipeline_mode<synchronous>, transform_indices = @transform_3, window_bounds = array<i64: 16, 64, 128>}, {pipeline_mode = #tpu.pipeline_mode<synchronous>, transform_indices = @transform_4, window_bounds = array<i64: 1, 128>}, {pipeline_mode = #tpu.pipeline_mode<synchronous>, transform_indices = @transform_5, window_bounds = array<i64: 16, 128, 256>}, {pipeline_mode = #tpu.pipeline_mode<synchronous>, transform_indices = @transform_6, window_bounds = array<i64: 1, 256>}, {pipeline_mode = #tpu.pipeline_mode<synchronous>, transform_indices = @transform_7, window_bounds = array<i64: 1, 256>}, {pipeline_mode = #tpu.pipeline_mode<synchronous>, transform_indices = @transform_8, window_bounds = array<i64: 1, 1>}, {transform_indices = @transform_9, window_bounds = array<i64: 2, 1, 1>}]} {
    %c0 = arith.constant 0 : index
    %c0_0 = arith.constant 0 : index
    %c0_1 = arith.constant 0 : index
    %0 = vector.load %arg1[%c0, %c0_0, %c0_1] : memref<2x64x48xbf16, #tpu.memory_space<vmem>>, vector<2x64x48xbf16>
    %1 = vector.shape_cast %0 : vector<2x64x48xbf16> to vector<128x48xbf16>
    %c0_2 = arith.constant 0 : index
    %c0_3 = arith.constant 0 : index
    %2 = vector.load %arg2[%c0_2, %c0_3] : memref<48x64xbf16, #tpu.memory_space<vmem>>, vector<48x64xbf16>
    %cst = arith.constant dense<0.000000e+00> : vector<128x64xf32>
    %3 = tpu.matmul %1, %2, %cst {dimension_numbers = #tpu.dot_dimension_numbers<[1], [0], [0], [1], [0, 0, 1, 1], [], []>} : vector<128x48xbf16>, vector<48x64xbf16>, vector<128x64xf32> -> vector<128x64xf32>
    %c0_4 = arith.constant 0 : index
    %c0_5 = arith.constant 0 : index
    %4 = vector.load %arg3[%c0_4, %c0_5] : memref<1x64xf32, #tpu.memory_space<vmem>>, vector<1x64xf32>
    %5 = vector.broadcast %4 : vector<1x64xf32> to vector<128x64xf32>
    %6 = arith.addf %3, %5 : vector<128x64xf32>
    %cst_6 = arith.constant 0.000000e+00 : f32
    %7 = vector.broadcast %cst_6 : f32 to vector<128x64xf32>
    %8 = arith.cmpf oge, %6, %7 : vector<128x64xf32>
    %cst_7 = arith.constant 2.000000e-01 : f32
    %9 = vector.broadcast %cst_7 : f32 to vector<128x64xf32>
    %10 = arith.mulf %9, %6 : vector<128x64xf32>
    %11 = arith.select %8, %6, %10 : vector<128x64xi1>, vector<128x64xf32>
    %12 = arith.truncf %11 : vector<128x64xf32> to vector<128x64xbf16>
    %13 = vector.shape_cast %12 : vector<128x64xbf16> to vector<2x4x2x4x2x64xbf16>
    %14 = vector.extract_strided_slice %13 {offsets = [0, 0, 0, 0, 0, 0], sizes = [2, 4, 1, 4, 1, 64], strides = [1, 1, 1, 1, 1, 1]} : vector<2x4x2x4x2x64xbf16> to vector<2x4x1x4x1x64xbf16>
    %15 = vector.shape_cast %14 : vector<2x4x1x4x1x64xbf16> to vector<2x4x4x64xbf16>
    %cst_8 = arith.constant 0.000000e+00 : bf16
    %16 = vector.broadcast %cst_8 : bf16 to vector<2x1x4x64xbf16>
    %17 = tpu.concatenate %15, %16 in 1 : vector<2x4x4x64xbf16>, vector<2x1x4x64xbf16> -> vector<2x5x4x64xbf16>
    %cst_9 = arith.constant 0.000000e+00 : bf16
    %18 = vector.broadcast %cst_9 : bf16 to vector<2x5x1x64xbf16>
    %19 = tpu.concatenate %17, %18 in 2 : vector<2x5x4x64xbf16>, vector<2x5x1x64xbf16> -> vector<2x5x5x64xbf16>
    %c0_10 = arith.constant 0 : index
    %c1 = arith.constant 1 : index
    %c1_11 = arith.constant 1 : index
    %c0_12 = arith.constant 0 : index
    %c0_13 = arith.constant 0 : index
    %c0_14 = arith.constant 0 : index
    %20 = vector.load %arg11[%c0_10, %c1, %c1_11, %c0_12, %c0_13, %c0_14] : memref<2x2x2x5x5x64xbf16, #tpu.memory_space<vmem>>, vector<2x1x1x5x5x64xbf16>
    %21 = vector.shape_cast %20 : vector<2x1x1x5x5x64xbf16> to vector<2x5x5x64xbf16>
    %22 = vector.shape_cast %19 : vector<2x5x5x64xbf16> to vector<2x1x1x5x5x64xbf16>
    tpu.vector_store %arg11[%c0_10, %c1, %c1_11, %c0_12, %c0_13, %c0_14], %22 {strides = array<i32>} : memref<2x2x2x5x5x64xbf16, #tpu.memory_space<vmem>>, vector<2x1x1x5x5x64xbf16>,
    %23 = vector.extract_strided_slice %13 {offsets = [0, 0, 0, 0, 1, 0], sizes = [2, 4, 1, 4, 1, 64], strides = [1, 1, 1, 1, 1, 1]} : vector<2x4x2x4x2x64xbf16> to vector<2x4x1x4x1x64xbf16>
    %24 = vector.shape_cast %23 : vector<2x4x1x4x1x64xbf16> to vector<2x4x4x64xbf16>
    %cst_15 = arith.constant 0.000000e+00 : bf16
    %25 = vector.broadcast %cst_15 : bf16 to vector<2x1x4x64xbf16>
    %26 = tpu.concatenate %24, %25 in 1 : vector<2x4x4x64xbf16>, vector<2x1x4x64xbf16> -> vector<2x5x4x64xbf16>
    %cst_16 = arith.constant 0.000000e+00 : bf16
    %27 = vector.broadcast %cst_16 : bf16 to vector<2x5x1x64xbf16>
    %28 = tpu.concatenate %27, %26 in 2 : vector<2x5x1x64xbf16>, vector<2x5x4x64xbf16> -> vector<2x5x5x64xbf16>
    %c0_17 = arith.constant 0 : index
    %c1_18 = arith.constant 1 : index
    %c0_19 = arith.constant 0 : index
    %c0_20 = arith.constant 0 : index
    %c0_21 = arith.constant 0 : index
    %c0_22 = arith.constant 0 : index
    %29 = vector.load %arg11[%c0_17, %c1_18, %c0_19, %c0_20, %c0_21, %c0_22] : memref<2x2x2x5x5x64xbf16, #tpu.memory_space<vmem>>, vector<2x1x1x5x5x64xbf16>
    %30 = vector.shape_cast %29 : vector<2x1x1x5x5x64xbf16> to vector<2x5x5x64xbf16>
    %31 = vector.shape_cast %28 : vector<2x5x5x64xbf16> to vector<2x1x1x5x5x64xbf16>
    tpu.vector_store %arg11[%c0_17, %c1_18, %c0_19, %c0_20, %c0_21, %c0_22], %31 {strides = array<i32>} : memref<2x2x2x5x5x64xbf16, #tpu.memory_space<vmem>>, vector<2x1x1x5x5x64xbf16>,
    %32 = vector.extract_strided_slice %13 {offsets = [0, 0, 1, 0, 0, 0], sizes = [2, 4, 1, 4, 1, 64], strides = [1, 1, 1, 1, 1, 1]} : vector<2x4x2x4x2x64xbf16> to vector<2x4x1x4x1x64xbf16>
    %33 = vector.shape_cast %32 : vector<2x4x1x4x1x64xbf16> to vector<2x4x4x64xbf16>
    %cst_23 = arith.constant 0.000000e+00 : bf16
    %34 = vector.broadcast %cst_23 : bf16 to vector<2x1x4x64xbf16>
    %35 = tpu.concatenate %34, %33 in 1 : vector<2x1x4x64xbf16>, vector<2x4x4x64xbf16> -> vector<2x5x4x64xbf16>
    %cst_24 = arith.constant 0.000000e+00 : bf16
    %36 = vector.broadcast %cst_24 : bf16 to vector<2x5x1x64xbf16>
    %37 = tpu.concatenate %35, %36 in 2 : vector<2x5x4x64xbf16>, vector<2x5x1x64xbf16> -> vector<2x5x5x64xbf16>
    %c0_25 = arith.constant 0 : index
    %c0_26 = arith.constant 0 : index
    %c1_27 = arith.constant 1 : index
    %c0_28 = arith.constant 0 : index
    %c0_29 = arith.constant 0 : index
    %c0_30 = arith.constant 0 : index
    %38 = vector.load %arg11[%c0_25, %c0_26, %c1_27, %c0_28, %c0_29, %c0_30] : memref<2x2x2x5x5x64xbf16, #tpu.memory_space<vmem>>, vector<2x1x1x5x5x64xbf16>
    %39 = vector.shape_cast %38 : vector<2x1x1x5x5x64xbf16> to vector<2x5x5x64xbf16>
    %40 = vector.shape_cast %37 : vector<2x5x5x64xbf16> to vector<2x1x1x5x5x64xbf16>
    tpu.vector_store %arg11[%c0_25, %c0_26, %c1_27, %c0_28, %c0_29, %c0_30], %40 {strides = array<i32>} : memref<2x2x2x5x5x64xbf16, #tpu.memory_space<vmem>>, vector<2x1x1x5x5x64xbf16>,
    %41 = vector.extract_strided_slice %13 {offsets = [0, 0, 1, 0, 1, 0], sizes = [2, 4, 1, 4, 1, 64], strides = [1, 1, 1, 1, 1, 1]} : vector<2x4x2x4x2x64xbf16> to vector<2x4x1x4x1x64xbf16>
    %42 = vector.shape_cast %41 : vector<2x4x1x4x1x64xbf16> to vector<2x4x4x64xbf16>
    %cst_31 = arith.constant 0.000000e+00 : bf16
    %43 = vector.broadcast %cst_31 : bf16 to vector<2x1x4x64xbf16>
    %44 = tpu.concatenate %43, %42 in 1 : vector<2x1x4x64xbf16>, vector<2x4x4x64xbf16> -> vector<2x5x4x64xbf16>
    %cst_32 = arith.constant 0.000000e+00 : bf16
    %45 = vector.broadcast %cst_32 : bf16 to vector<2x5x1x64xbf16>
    %46 = tpu.concatenate %45, %44 in 2 : vector<2x5x1x64xbf16>, vector<2x5x4x64xbf16> -> vector<2x5x5x64xbf16>
    %c0_33 = arith.constant 0 : index
    %c0_34 = arith.constant 0 : index
    %c0_35 = arith.constant 0 : index
    %c0_36 = arith.constant 0 : index
    %c0_37 = arith.constant 0 : index
    %c0_38 = arith.constant 0 : index
    %47 = vector.load %arg11[%c0_33, %c0_34, %c0_35, %c0_36, %c0_37, %c0_38] : memref<2x2x2x5x5x64xbf16, #tpu.memory_space<vmem>>, vector<2x1x1x5x5x64xbf16>
    %48 = vector.shape_cast %47 : vector<2x1x1x5x5x64xbf16> to vector<2x5x5x64xbf16>
    %49 = vector.shape_cast %46 : vector<2x5x5x64xbf16> to vector<2x1x1x5x5x64xbf16>
    tpu.vector_store %arg11[%c0_33, %c0_34, %c0_35, %c0_36, %c0_37, %c0_38], %49 {strides = array<i32>} : memref<2x2x2x5x5x64xbf16, #tpu.memory_space<vmem>>, vector<2x1x1x5x5x64xbf16>,
    %cst_39 = arith.constant 0.000000e+00 : f32
    %50 = vector.broadcast %cst_39 : f32 to vector<32x128xf32>
    %c0_40 = arith.constant 0 : index
    %c0_41 = arith.constant 0 : index
    %c0_42 = arith.constant 0 : index
    %c0_43 = arith.constant 0 : index
    %c0_44 = arith.constant 0 : index
    %c0_45 = arith.constant 0 : index
    %51 = vector.load %arg11[%c0_40, %c0_41, %c0_42, %c0_43, %c0_44, %c0_45] : memref<2x2x2x5x5x64xbf16, #tpu.memory_space<vmem>>, vector<2x1x1x4x4x64xbf16>
    %52 = vector.shape_cast %51 : vector<2x1x1x4x4x64xbf16> to vector<2x4x4x64xbf16>
    %53 = vector.shape_cast %52 : vector<2x4x4x64xbf16> to vector<32x64xbf16>
    %c0_46 = arith.constant 0 : index
    %c0_47 = arith.constant 0 : index
    %c0_48 = arith.constant 0 : index
    %54 = vector.load %arg4[%c0_46, %c0_47, %c0_48] : memref<16x64x128xbf16, #tpu.memory_space<vmem>>, vector<1x64x128xbf16>
    %55 = vector.shape_cast %54 : vector<1x64x128xbf16> to vector<64x128xbf16>
    %cst_49 = arith.constant dense<0.000000e+00> : vector<32x128xf32>
    %56 = tpu.matmul %53, %55, %cst_49 {dimension_numbers = #tpu.dot_dimension_numbers<[1], [0], [0], [1], [0, 0, 1, 1], [], []>} : vector<32x64xbf16>, vector<64x128xbf16>, vector<32x128xf32> -> vector<32x128xf32>
    %57 = arith.addf %50, %56 : vector<32x128xf32>
    %c0_50 = arith.constant 0 : index
    %c0_51 = arith.constant 0 : index
    %c1_52 = arith.constant 1 : index
    %c0_53 = arith.constant 0 : index
    %c0_54 = arith.constant 0 : index
    %c0_55 = arith.constant 0 : index
    %58 = vector.load %arg11[%c0_50, %c0_51, %c1_52, %c0_53, %c0_54, %c0_55] : memref<2x2x2x5x5x64xbf16, #tpu.memory_space<vmem>>, vector<2x1x1x4x4x64xbf16>
    %59 = vector.shape_cast %58 : vector<2x1x1x4x4x64xbf16> to vector<2x4x4x64xbf16>
    %60 = vector.shape_cast %59 : vector<2x4x4x64xbf16> to vector<32x64xbf16>
    %c1_56 = arith.constant 1 : index
    %c0_57 = arith.constant 0 : index
    %c0_58 = arith.constant 0 : index
    %61 = vector.load %arg4[%c1_56, %c0_57, %c0_58] : memref<16x64x128xbf16, #tpu.memory_space<vmem>>, vector<1x64x128xbf16>
    %62 = vector.shape_cast %61 : vector<1x64x128xbf16> to vector<64x128xbf16>
    %cst_59 = arith.constant dense<0.000000e+00> : vector<32x128xf32>
    %63 = tpu.matmul %60, %62, %cst_59 {dimension_numbers = #tpu.dot_dimension_numbers<[1], [0], [0], [1], [0, 0, 1, 1], [], []>} : vector<32x64xbf16>, vector<64x128xbf16>, vector<32x128xf32> -> vector<32x128xf32>
    %64 = arith.addf %57, %63 : vector<32x128xf32>
    %c0_60 = arith.constant 0 : index
    %c0_61 = arith.constant 0 : index
    %c0_62 = arith.constant 0 : index
    %c0_63 = arith.constant 0 : index
    %c1_64 = arith.constant 1 : index
    %c0_65 = arith.constant 0 : index
    %65 = vector.load %arg11[%c0_60, %c0_61, %c0_62, %c0_63, %c1_64, %c0_65] : memref<2x2x2x5x5x64xbf16, #tpu.memory_space<vmem>>, vector<2x1x1x4x4x64xbf16>
    %66 = vector.shape_cast %65 : vector<2x1x1x4x4x64xbf16> to vector<2x4x4x64xbf16>
    %67 = vector.shape_cast %66 : vector<2x4x4x64xbf16> to vector<32x64xbf16>
    %c2 = arith.constant 2 : index
    %c0_66 = arith.constant 0 : index
    %c0_67 = arith.constant 0 : index
    %68 = vector.load %arg4[%c2, %c0_66, %c0_67] : memref<16x64x128xbf16, #tpu.memory_space<vmem>>, vector<1x64x128xbf16>
    %69 = vector.shape_cast %68 : vector<1x64x128xbf16> to vector<64x128xbf16>
    %cst_68 = arith.constant dense<0.000000e+00> : vector<32x128xf32>
    %70 = tpu.matmul %67, %69, %cst_68 {dimension_numbers = #tpu.dot_dimension_numbers<[1], [0], [0], [1], [0, 0, 1, 1], [], []>} : vector<32x64xbf16>, vector<64x128xbf16>, vector<32x128xf32> -> vector<32x128xf32>
    %71 = arith.addf %64, %70 : vector<32x128xf32>
    %c0_69 = arith.constant 0 : index
    %c0_70 = arith.constant 0 : index
    %c1_71 = arith.constant 1 : index
    %c0_72 = arith.constant 0 : index
    %c1_73 = arith.constant 1 : index
    %c0_74 = arith.constant 0 : index
    %72 = vector.load %arg11[%c0_69, %c0_70, %c1_71, %c0_72, %c1_73, %c0_74] : memref<2x2x2x5x5x64xbf16, #tpu.memory_space<vmem>>, vector<2x1x1x4x4x64xbf16>
    %73 = vector.shape_cast %72 : vector<2x1x1x4x4x64xbf16> to vector<2x4x4x64xbf16>
    %74 = vector.shape_cast %73 : vector<2x4x4x64xbf16> to vector<32x64xbf16>
    %c3 = arith.constant 3 : index
    %c0_75 = arith.constant 0 : index
    %c0_76 = arith.constant 0 : index
    %75 = vector.load %arg4[%c3, %c0_75, %c0_76] : memref<16x64x128xbf16, #tpu.memory_space<vmem>>, vector<1x64x128xbf16>
    %76 = vector.shape_cast %75 : vector<1x64x128xbf16> to vector<64x128xbf16>
    %cst_77 = arith.constant dense<0.000000e+00> : vector<32x128xf32>
    %77 = tpu.matmul %74, %76, %cst_77 {dimension_numbers = #tpu.dot_dimension_numbers<[1], [0], [0], [1], [0, 0, 1, 1], [], []>} : vector<32x64xbf16>, vector<64x128xbf16>, vector<32x128xf32> -> vector<32x128xf32>
    %78 = arith.addf %71, %77 : vector<32x128xf32>
    %c0_78 = arith.constant 0 : index
    %c1_79 = arith.constant 1 : index
    %c0_80 = arith.constant 0 : index
    %c0_81 = arith.constant 0 : index
    %c0_82 = arith.constant 0 : index
    %c0_83 = arith.constant 0 : index
    %79 = vector.load %arg11[%c0_78, %c1_79, %c0_80, %c0_81, %c0_82, %c0_83] : memref<2x2x2x5x5x64xbf16, #tpu.memory_space<vmem>>, vector<2x1x1x4x4x64xbf16>
    %80 = vector.shape_cast %79 : vector<2x1x1x4x4x64xbf16> to vector<2x4x4x64xbf16>
    %81 = vector.shape_cast %80 : vector<2x4x4x64xbf16> to vector<32x64xbf16>
    %c4 = arith.constant 4 : index
    %c0_84 = arith.constant 0 : index
    %c0_85 = arith.constant 0 : index
    %82 = vector.load %arg4[%c4, %c0_84, %c0_85] : memref<16x64x128xbf16, #tpu.memory_space<vmem>>, vector<1x64x128xbf16>
    %83 = vector.shape_cast %82 : vector<1x64x128xbf16> to vector<64x128xbf16>
    %cst_86 = arith.constant dense<0.000000e+00> : vector<32x128xf32>
    %84 = tpu.matmul %81, %83, %cst_86 {dimension_numbers = #tpu.dot_dimension_numbers<[1], [0], [0], [1], [0, 0, 1, 1], [], []>} : vector<32x64xbf16>, vector<64x128xbf16>, vector<32x128xf32> -> vector<32x128xf32>
    %85 = arith.addf %78, %84 : vector<32x128xf32>
    %c0_87 = arith.constant 0 : index
    %c1_88 = arith.constant 1 : index
    %c1_89 = arith.constant 1 : index
    %c0_90 = arith.constant 0 : index
    %c0_91 = arith.constant 0 : index
    %c0_92 = arith.constant 0 : index
    %86 = vector.load %arg11[%c0_87, %c1_88, %c1_89, %c0_90, %c0_91, %c0_92] : memref<2x2x2x5x5x64xbf16, #tpu.memory_space<vmem>>, vector<2x1x1x4x4x64xbf16>
    %87 = vector.shape_cast %86 : vector<2x1x1x4x4x64xbf16> to vector<2x4x4x64xbf16>
    %88 = vector.shape_cast %87 : vector<2x4x4x64xbf16> to vector<32x64xbf16>
    %c5 = arith.constant 5 : index
    %c0_93 = arith.constant 0 : index
    %c0_94 = arith.constant 0 : index
    %89 = vector.load %arg4[%c5, %c0_93, %c0_94] : memref<16x64x128xbf16, #tpu.memory_space<vmem>>, vector<1x64x128xbf16>
    %90 = vector.shape_cast %89 : vector<1x64x128xbf16> to vector<64x128xbf16>
    %cst_95 = arith.constant dense<0.000000e+00> : vector<32x128xf32>
    %91 = tpu.matmul %88, %90, %cst_95 {dimension_numbers = #tpu.dot_dimension_numbers<[1], [0], [0], [1], [0, 0, 1, 1], [], []>} : vector<32x64xbf16>, vector<64x128xbf16>, vector<32x128xf32> -> vector<32x128xf32>
    %92 = arith.addf %85, %91 : vector<32x128xf32>
    %c0_96 = arith.constant 0 : index
    %c1_97 = arith.constant 1 : index
    %c0_98 = arith.constant 0 : index
    %c0_99 = arith.constant 0 : index
    %c1_100 = arith.constant 1 : index
    %c0_101 = arith.constant 0 : index
    %93 = vector.load %arg11[%c0_96, %c1_97, %c0_98, %c0_99, %c1_100, %c0_101] : memref<2x2x2x5x5x64xbf16, #tpu.memory_space<vmem>>, vector<2x1x1x4x4x64xbf16>
    %94 = vector.shape_cast %93 : vector<2x1x1x4x4x64xbf16> to vector<2x4x4x64xbf16>
    %95 = vector.shape_cast %94 : vector<2x4x4x64xbf16> to vector<32x64xbf16>
    %c6 = arith.constant 6 : index
    %c0_102 = arith.constant 0 : index
    %c0_103 = arith.constant 0 : index
    %96 = vector.load %arg4[%c6, %c0_102, %c0_103] : memref<16x64x128xbf16, #tpu.memory_space<vmem>>, vector<1x64x128xbf16>
    %97 = vector.shape_cast %96 : vector<1x64x128xbf16> to vector<64x128xbf16>
    %cst_104 = arith.constant dense<0.000000e+00> : vector<32x128xf32>
    %98 = tpu.matmul %95, %97, %cst_104 {dimension_numbers = #tpu.dot_dimension_numbers<[1], [0], [0], [1], [0, 0, 1, 1], [], []>} : vector<32x64xbf16>, vector<64x128xbf16>, vector<32x128xf32> -> vector<32x128xf32>
    %99 = arith.addf %92, %98 : vector<32x128xf32>
    %c0_105 = arith.constant 0 : index
    %c1_106 = arith.constant 1 : index
    %c1_107 = arith.constant 1 : index
    %c0_108 = arith.constant 0 : index
    %c1_109 = arith.constant 1 : index
    %c0_110 = arith.constant 0 : index
    %100 = vector.load %arg11[%c0_105, %c1_106, %c1_107, %c0_108, %c1_109, %c0_110] : memref<2x2x2x5x5x64xbf16, #tpu.memory_space<vmem>>, vector<2x1x1x4x4x64xbf16>
    %101 = vector.shape_cast %100 : vector<2x1x1x4x4x64xbf16> to vector<2x4x4x64xbf16>
    %102 = vector.shape_cast %101 : vector<2x4x4x64xbf16> to vector<32x64xbf16>
    %c7 = arith.constant 7 : index
    %c0_111 = arith.constant 0 : index
    %c0_112 = arith.constant 0 : index
    %103 = vector.load %arg4[%c7, %c0_111, %c0_112] : memref<16x64x128xbf16, #tpu.memory_space<vmem>>, vector<1x64x128xbf16>
    %104 = vector.shape_cast %103 : vector<1x64x128xbf16> to vector<64x128xbf16>
    %cst_113 = arith.constant dense<0.000000e+00> : vector<32x128xf32>
    %105 = tpu.matmul %102, %104, %cst_113 {dimension_numbers = #tpu.dot_dimension_numbers<[1], [0], [0], [1], [0, 0, 1, 1], [], []>} : vector<32x64xbf16>, vector<64x128xbf16>, vector<32x128xf32> -> vector<32x128xf32>
    %106 = arith.addf %99, %105 : vector<32x128xf32>
    %c0_114 = arith.constant 0 : index
    %c0_115 = arith.constant 0 : index
    %c0_116 = arith.constant 0 : index
    %c1_117 = arith.constant 1 : index
    %c0_118 = arith.constant 0 : index
    %c0_119 = arith.constant 0 : index
    %107 = vector.load %arg11[%c0_114, %c0_115, %c0_116, %c1_117, %c0_118, %c0_119] : memref<2x2x2x5x5x64xbf16, #tpu.memory_space<vmem>>, vector<2x1x1x4x4x64xbf16>
    %108 = vector.shape_cast %107 : vector<2x1x1x4x4x64xbf16> to vector<2x4x4x64xbf16>
    %109 = vector.shape_cast %108 : vector<2x4x4x64xbf16> to vector<32x64xbf16>
    %c8 = arith.constant 8 : index
    %c0_120 = arith.constant 0 : index
    %c0_121 = arith.constant 0 : index
    %110 = vector.load %arg4[%c8, %c0_120, %c0_121] : memref<16x64x128xbf16, #tpu.memory_space<vmem>>, vector<1x64x128xbf16>
    %111 = vector.shape_cast %110 : vector<1x64x128xbf16> to vector<64x128xbf16>
    %cst_122 = arith.constant dense<0.000000e+00> : vector<32x128xf32>
    %112 = tpu.matmul %109, %111, %cst_122 {dimension_numbers = #tpu.dot_dimension_numbers<[1], [0], [0], [1], [0, 0, 1, 1], [], []>} : vector<32x64xbf16>, vector<64x128xbf16>, vector<32x128xf32> -> vector<32x128xf32>
    %113 = arith.addf %106, %112 : vector<32x128xf32>
    %c0_123 = arith.constant 0 : index
    %c0_124 = arith.constant 0 : index
    %c1_125 = arith.constant 1 : index
    %c1_126 = arith.constant 1 : index
    %c0_127 = arith.constant 0 : index
    %c0_128 = arith.constant 0 : index
    %114 = vector.load %arg11[%c0_123, %c0_124, %c1_125, %c1_126, %c0_127, %c0_128] : memref<2x2x2x5x5x64xbf16, #tpu.memory_space<vmem>>, vector<2x1x1x4x4x64xbf16>
    %115 = vector.shape_cast %114 : vector<2x1x1x4x4x64xbf16> to vector<2x4x4x64xbf16>
    %116 = vector.shape_cast %115 : vector<2x4x4x64xbf16> to vector<32x64xbf16>
    %c9 = arith.constant 9 : index
    %c0_129 = arith.constant 0 : index
    %c0_130 = arith.constant 0 : index
    %117 = vector.load %arg4[%c9, %c0_129, %c0_130] : memref<16x64x128xbf16, #tpu.memory_space<vmem>>, vector<1x64x128xbf16>
    %118 = vector.shape_cast %117 : vector<1x64x128xbf16> to vector<64x128xbf16>
    %cst_131 = arith.constant dense<0.000000e+00> : vector<32x128xf32>
    %119 = tpu.matmul %116, %118, %cst_131 {dimension_numbers = #tpu.dot_dimension_numbers<[1], [0], [0], [1], [0, 0, 1, 1], [], []>} : vector<32x64xbf16>, vector<64x128xbf16>, vector<32x128xf32> -> vector<32x128xf32>
    %120 = arith.addf %113, %119 : vector<32x128xf32>
    %c0_132 = arith.constant 0 : index
    %c0_133 = arith.constant 0 : index
    %c0_134 = arith.constant 0 : index
    %c1_135 = arith.constant 1 : index
    %c1_136 = arith.constant 1 : index
    %c0_137 = arith.constant 0 : index
    %121 = vector.load %arg11[%c0_132, %c0_133, %c0_134, %c1_135, %c1_136, %c0_137] : memref<2x2x2x5x5x64xbf16, #tpu.memory_space<vmem>>, vector<2x1x1x4x4x64xbf16>
    %122 = vector.shape_cast %121 : vector<2x1x1x4x4x64xbf16> to vector<2x4x4x64xbf16>
    %123 = vector.shape_cast %122 : vector<2x4x4x64xbf16> to vector<32x64xbf16>
    %c10 = arith.constant 10 : index
    %c0_138 = arith.constant 0 : index
    %c0_139 = arith.constant 0 : index
    %124 = vector.load %arg4[%c10, %c0_138, %c0_139] : memref<16x64x128xbf16, #tpu.memory_space<vmem>>, vector<1x64x128xbf16>
    %125 = vector.shape_cast %124 : vector<1x64x128xbf16> to vector<64x128xbf16>
    %cst_140 = arith.constant dense<0.000000e+00> : vector<32x128xf32>
    %126 = tpu.matmul %123, %125, %cst_140 {dimension_numbers = #tpu.dot_dimension_numbers<[1], [0], [0], [1], [0, 0, 1, 1], [], []>} : vector<32x64xbf16>, vector<64x128xbf16>, vector<32x128xf32> -> vector<32x128xf32>
    %127 = arith.addf %120, %126 : vector<32x128xf32>
    %c0_141 = arith.constant 0 : index
    %c0_142 = arith.constant 0 : index
    %c1_143 = arith.constant 1 : index
    %c1_144 = arith.constant 1 : index
    %c1_145 = arith.constant 1 : index
    %c0_146 = arith.constant 0 : index
    %128 = vector.load %arg11[%c0_141, %c0_142, %c1_143, %c1_144, %c1_145, %c0_146] : memref<2x2x2x5x5x64xbf16, #tpu.memory_space<vmem>>, vector<2x1x1x4x4x64xbf16>
    %129 = vector.shape_cast %128 : vector<2x1x1x4x4x64xbf16> to vector<2x4x4x64xbf16>
    %130 = vector.shape_cast %129 : vector<2x4x4x64xbf16> to vector<32x64xbf16>
    %c11 = arith.constant 11 : index
    %c0_147 = arith.constant 0 : index
    %c0_148 = arith.constant 0 : index
    %131 = vector.load %arg4[%c11, %c0_147, %c0_148] : memref<16x64x128xbf16, #tpu.memory_space<vmem>>, vector<1x64x128xbf16>
    %132 = vector.shape_cast %131 : vector<1x64x128xbf16> to vector<64x128xbf16>
    %cst_149 = arith.constant dense<0.000000e+00> : vector<32x128xf32>
    %133 = tpu.matmul %130, %132, %cst_149 {dimension_numbers = #tpu.dot_dimension_numbers<[1], [0], [0], [1], [0, 0, 1, 1], [], []>} : vector<32x64xbf16>, vector<64x128xbf16>, vector<32x128xf32> -> vector<32x128xf32>
    %134 = arith.addf %127, %133 : vector<32x128xf32>
    %c0_150 = arith.constant 0 : index
    %c1_151 = arith.constant 1 : index
    %c0_152 = arith.constant 0 : index
    %c1_153 = arith.constant 1 : index
    %c0_154 = arith.constant 0 : index
    %c0_155 = arith.constant 0 : index
    %135 = vector.load %arg11[%c0_150, %c1_151, %c0_152, %c1_153, %c0_154, %c0_155] : memref<2x2x2x5x5x64xbf16, #tpu.memory_space<vmem>>, vector<2x1x1x4x4x64xbf16>
    %136 = vector.shape_cast %135 : vector<2x1x1x4x4x64xbf16> to vector<2x4x4x64xbf16>
    %137 = vector.shape_cast %136 : vector<2x4x4x64xbf16> to vector<32x64xbf16>
    %c12 = arith.constant 12 : index
    %c0_156 = arith.constant 0 : index
    %c0_157 = arith.constant 0 : index
    %138 = vector.load %arg4[%c12, %c0_156, %c0_157] : memref<16x64x128xbf16, #tpu.memory_space<vmem>>, vector<1x64x128xbf16>
    %139 = vector.shape_cast %138 : vector<1x64x128xbf16> to vector<64x128xbf16>
    %cst_158 = arith.constant dense<0.000000e+00> : vector<32x128xf32>
    %140 = tpu.matmul %137, %139, %cst_158 {dimension_numbers = #tpu.dot_dimension_numbers<[1], [0], [0], [1], [0, 0, 1, 1], [], []>} : vector<32x64xbf16>, vector<64x128xbf16>, vector<32x128xf32> -> vector<32x128xf32>
    %141 = arith.addf %134, %140 : vector<32x128xf32>
    %c0_159 = arith.constant 0 : index
    %c1_160 = arith.constant 1 : index
    %c1_161 = arith.constant 1 : index
    %c1_162 = arith.constant 1 : index
    %c0_163 = arith.constant 0 : index
    %c0_164 = arith.constant 0 : index
    %142 = vector.load %arg11[%c0_159, %c1_160, %c1_161, %c1_162, %c0_163, %c0_164] : memref<2x2x2x5x5x64xbf16, #tpu.memory_space<vmem>>, vector<2x1x1x4x4x64xbf16>
    %143 = vector.shape_cast %142 : vector<2x1x1x4x4x64xbf16> to vector<2x4x4x64xbf16>
    %144 = vector.shape_cast %143 : vector<2x4x4x64xbf16> to vector<32x64xbf16>
    %c13 = arith.constant 13 : index
    %c0_165 = arith.constant 0 : index
    %c0_166 = arith.constant 0 : index
    %145 = vector.load %arg4[%c13, %c0_165, %c0_166] : memref<16x64x128xbf16, #tpu.memory_space<vmem>>, vector<1x64x128xbf16>
    %146 = vector.shape_cast %145 : vector<1x64x128xbf16> to vector<64x128xbf16>
    %cst_167 = arith.constant dense<0.000000e+00> : vector<32x128xf32>
    %147 = tpu.matmul %144, %146, %cst_167 {dimension_numbers = #tpu.dot_dimension_numbers<[1], [0], [0], [1], [0, 0, 1, 1], [], []>} : vector<32x64xbf16>, vector<64x128xbf16>, vector<32x128xf32> -> vector<32x128xf32>
    %148 = arith.addf %141, %147 : vector<32x128xf32>
    %c0_168 = arith.constant 0 : index
    %c1_169 = arith.constant 1 : index
    %c0_170 = arith.constant 0 : index
    %c1_171 = arith.constant 1 : index
    %c1_172 = arith.constant 1 : index
    %c0_173 = arith.constant 0 : index
    %149 = vector.load %arg11[%c0_168, %c1_169, %c0_170, %c1_171, %c1_172, %c0_173] : memref<2x2x2x5x5x64xbf16, #tpu.memory_space<vmem>>, vector<2x1x1x4x4x64xbf16>
    %150 = vector.shape_cast %149 : vector<2x1x1x4x4x64xbf16> to vector<2x4x4x64xbf16>
    %151 = vector.shape_cast %150 : vector<2x4x4x64xbf16> to vector<32x64xbf16>
    %c14 = arith.constant 14 : index
    %c0_174 = arith.constant 0 : index
    %c0_175 = arith.constant 0 : index
    %152 = vector.load %arg4[%c14, %c0_174, %c0_175] : memref<16x64x128xbf16, #tpu.memory_space<vmem>>, vector<1x64x128xbf16>
    %153 = vector.shape_cast %152 : vector<1x64x128xbf16> to vector<64x128xbf16>
    %cst_176 = arith.constant dense<0.000000e+00> : vector<32x128xf32>
    %154 = tpu.matmul %151, %153, %cst_176 {dimension_numbers = #tpu.dot_dimension_numbers<[1], [0], [0], [1], [0, 0, 1, 1], [], []>} : vector<32x64xbf16>, vector<64x128xbf16>, vector<32x128xf32> -> vector<32x128xf32>
    %155 = arith.addf %148, %154 : vector<32x128xf32>
    %c0_177 = arith.constant 0 : index
    %c1_178 = arith.constant 1 : index
    %c1_179 = arith.constant 1 : index
    %c1_180 = arith.constant 1 : index
    %c1_181 = arith.constant 1 : index
    %c0_182 = arith.constant 0 : index
    %156 = vector.load %arg11[%c0_177, %c1_178, %c1_179, %c1_180, %c1_181, %c0_182] : memref<2x2x2x5x5x64xbf16, #tpu.memory_space<vmem>>, vector<2x1x1x4x4x64xbf16>
    %157 = vector.shape_cast %156 : vector<2x1x1x4x4x64xbf16> to vector<2x4x4x64xbf16>
    %158 = vector.shape_cast %157 : vector<2x4x4x64xbf16> to vector<32x64xbf16>
    %c15 = arith.constant 15 : index
    %c0_183 = arith.constant 0 : index
    %c0_184 = arith.constant 0 : index
    %159 = vector.load %arg4[%c15, %c0_183, %c0_184] : memref<16x64x128xbf16, #tpu.memory_space<vmem>>, vector<1x64x128xbf16>
    %160 = vector.shape_cast %159 : vector<1x64x128xbf16> to vector<64x128xbf16>
    %cst_185 = arith.constant dense<0.000000e+00> : vector<32x128xf32>
    %161 = tpu.matmul %158, %160, %cst_185 {dimension_numbers = #tpu.dot_dimension_numbers<[1], [0], [0], [1], [0, 0, 1, 1], [], []>} : vector<32x64xbf16>, vector<64x128xbf16>, vector<32x128xf32> -> vector<32x128xf32>
    %162 = arith.addf %155, %161 : vector<32x128xf32>
    %c0_186 = arith.constant 0 : index
    %c0_187 = arith.constant 0 : index
    %163 = vector.load %arg5[%c0_186, %c0_187] : memref<1x128xf32, #tpu.memory_space<vmem>>, vector<1x128xf32>
    %164 = vector.broadcast %163 : vector<1x128xf32> to vector<32x128xf32>
    %165 = arith.addf %162, %164 : vector<32x128xf32>
    %cst_188 = arith.constant 0.000000e+00 : f32
    %166 = vector.broadcast %cst_188 : f32 to vector<32x128xf32>
    %167 = arith.cmpf oge, %165, %166 : vector<32x128xf32>
    %cst_189 = arith.constant 2.000000e-01 : f32
    %168 = vector.broadcast %cst_189 : f32 to vector<32x128xf32>
    %169 = arith.mulf %168, %165 : vector<32x128xf32>
    %170 = arith.select %167, %165, %169 : vector<32x128xi1>, vector<32x128xf32>
    %171 = arith.truncf %170 : vector<32x128xf32> to vector<32x128xbf16>
    %172 = vector.shape_cast %171 : vector<32x128xbf16> to vector<2x2x2x2x2x128xbf16>
    %173 = vector.extract_strided_slice %172 {offsets = [0, 0, 0, 0, 0, 0], sizes = [2, 2, 1, 2, 1, 128], strides = [1, 1, 1, 1, 1, 1]} : vector<2x2x2x2x2x128xbf16> to vector<2x2x1x2x1x128xbf16>
    %174 = vector.shape_cast %173 : vector<2x2x1x2x1x128xbf16> to vector<2x2x2x128xbf16>
    %cst_190 = arith.constant 0.000000e+00 : bf16
    %175 = vector.broadcast %cst_190 : bf16 to vector<2x1x2x128xbf16>
    %176 = tpu.concatenate %174, %175 in 1 : vector<2x2x2x128xbf16>, vector<2x1x2x128xbf16> -> vector<2x3x2x128xbf16>
    %cst_191 = arith.constant 0.000000e+00 : bf16
    %177 = vector.broadcast %cst_191 : bf16 to vector<2x3x1x128xbf16>
    %178 = tpu.concatenate %176, %177 in 2 : vector<2x3x2x128xbf16>, vector<2x3x1x128xbf16> -> vector<2x3x3x128xbf16>
    %c0_192 = arith.constant 0 : index
    %c1_193 = arith.constant 1 : index
    %c1_194 = arith.constant 1 : index
    %c0_195 = arith.constant 0 : index
    %c0_196 = arith.constant 0 : index
    %c0_197 = arith.constant 0 : index
    %179 = vector.load %arg12[%c0_192, %c1_193, %c1_194, %c0_195, %c0_196, %c0_197] : memref<2x2x2x3x3x128xbf16, #tpu.memory_space<vmem>>, vector<2x1x1x3x3x128xbf16>
    %180 = vector.shape_cast %179 : vector<2x1x1x3x3x128xbf16> to vector<2x3x3x128xbf16>
    %181 = vector.shape_cast %178 : vector<2x3x3x128xbf16> to vector<2x1x1x3x3x128xbf16>
    tpu.vector_store %arg12[%c0_192, %c1_193, %c1_194, %c0_195, %c0_196, %c0_197], %181 {strides = array<i32>} : memref<2x2x2x3x3x128xbf16, #tpu.memory_space<vmem>>, vector<2x1x1x3x3x128xbf16>,
    %182 = vector.extract_strided_slice %172 {offsets = [0, 0, 0, 0, 1, 0], sizes = [2, 2, 1, 2, 1, 128], strides = [1, 1, 1, 1, 1, 1]} : vector<2x2x2x2x2x128xbf16> to vector<2x2x1x2x1x128xbf16>
    %183 = vector.shape_cast %182 : vector<2x2x1x2x1x128xbf16> to vector<2x2x2x128xbf16>
    %cst_198 = arith.constant 0.000000e+00 : bf16
    %184 = vector.broadcast %cst_198 : bf16 to vector<2x1x2x128xbf16>
    %185 = tpu.concatenate %183, %184 in 1 : vector<2x2x2x128xbf16>, vector<2x1x2x128xbf16> -> vector<2x3x2x128xbf16>
    %cst_199 = arith.constant 0.000000e+00 : bf16
    %186 = vector.broadcast %cst_199 : bf16 to vector<2x3x1x128xbf16>
    %187 = tpu.concatenate %186, %185 in 2 : vector<2x3x1x128xbf16>, vector<2x3x2x128xbf16> -> vector<2x3x3x128xbf16>
    %c0_200 = arith.constant 0 : index
    %c1_201 = arith.constant 1 : index
    %c0_202 = arith.constant 0 : index
    %c0_203 = arith.constant 0 : index
    %c0_204 = arith.constant 0 : index
    %c0_205 = arith.constant 0 : index
    %188 = vector.load %arg12[%c0_200, %c1_201, %c0_202, %c0_203, %c0_204, %c0_205] : memref<2x2x2x3x3x128xbf16, #tpu.memory_space<vmem>>, vector<2x1x1x3x3x128xbf16>
    %189 = vector.shape_cast %188 : vector<2x1x1x3x3x128xbf16> to vector<2x3x3x128xbf16>
    %190 = vector.shape_cast %187 : vector<2x3x3x128xbf16> to vector<2x1x1x3x3x128xbf16>
    tpu.vector_store %arg12[%c0_200, %c1_201, %c0_202, %c0_203, %c0_204, %c0_205], %190 {strides = array<i32>} : memref<2x2x2x3x3x128xbf16, #tpu.memory_space<vmem>>, vector<2x1x1x3x3x128xbf16>,
    %191 = vector.extract_strided_slice %172 {offsets = [0, 0, 1, 0, 0, 0], sizes = [2, 2, 1, 2, 1, 128], strides = [1, 1, 1, 1, 1, 1]} : vector<2x2x2x2x2x128xbf16> to vector<2x2x1x2x1x128xbf16>
    %192 = vector.shape_cast %191 : vector<2x2x1x2x1x128xbf16> to vector<2x2x2x128xbf16>
    %cst_206 = arith.constant 0.000000e+00 : bf16
    %193 = vector.broadcast %cst_206 : bf16 to vector<2x1x2x128xbf16>
    %194 = tpu.concatenate %193, %192 in 1 : vector<2x1x2x128xbf16>, vector<2x2x2x128xbf16> -> vector<2x3x2x128xbf16>
    %cst_207 = arith.constant 0.000000e+00 : bf16
    %195 = vector.broadcast %cst_207 : bf16 to vector<2x3x1x128xbf16>
    %196 = tpu.concatenate %194, %195 in 2 : vector<2x3x2x128xbf16>, vector<2x3x1x128xbf16> -> vector<2x3x3x128xbf16>
    %c0_208 = arith.constant 0 : index
    %c0_209 = arith.constant 0 : index
    %c1_210 = arith.constant 1 : index
    %c0_211 = arith.constant 0 : index
    %c0_212 = arith.constant 0 : index
    %c0_213 = arith.constant 0 : index
    %197 = vector.load %arg12[%c0_208, %c0_209, %c1_210, %c0_211, %c0_212, %c0_213] : memref<2x2x2x3x3x128xbf16, #tpu.memory_space<vmem>>, vector<2x1x1x3x3x128xbf16>
    %198 = vector.shape_cast %197 : vector<2x1x1x3x3x128xbf16> to vector<2x3x3x128xbf16>
    %199 = vector.shape_cast %196 : vector<2x3x3x128xbf16> to vector<2x1x1x3x3x128xbf16>
    tpu.vector_store %arg12[%c0_208, %c0_209, %c1_210, %c0_211, %c0_212, %c0_213], %199 {strides = array<i32>} : memref<2x2x2x3x3x128xbf16, #tpu.memory_space<vmem>>, vector<2x1x1x3x3x128xbf16>,
    %200 = vector.extract_strided_slice %172 {offsets = [0, 0, 1, 0, 1, 0], sizes = [2, 2, 1, 2, 1, 128], strides = [1, 1, 1, 1, 1, 1]} : vector<2x2x2x2x2x128xbf16> to vector<2x2x1x2x1x128xbf16>
    %201 = vector.shape_cast %200 : vector<2x2x1x2x1x128xbf16> to vector<2x2x2x128xbf16>
    %cst_214 = arith.constant 0.000000e+00 : bf16
    %202 = vector.broadcast %cst_214 : bf16 to vector<2x1x2x128xbf16>
    %203 = tpu.concatenate %202, %201 in 1 : vector<2x1x2x128xbf16>, vector<2x2x2x128xbf16> -> vector<2x3x2x128xbf16>
    %cst_215 = arith.constant 0.000000e+00 : bf16
    %204 = vector.broadcast %cst_215 : bf16 to vector<2x3x1x128xbf16>
    %205 = tpu.concatenate %204, %203 in 2 : vector<2x3x1x128xbf16>, vector<2x3x2x128xbf16> -> vector<2x3x3x128xbf16>
    %c0_216 = arith.constant 0 : index
    %c0_217 = arith.constant 0 : index
    %c0_218 = arith.constant 0 : index
    %c0_219 = arith.constant 0 : index
    %c0_220 = arith.constant 0 : index
    %c0_221 = arith.constant 0 : index
    %206 = vector.load %arg12[%c0_216, %c0_217, %c0_218, %c0_219, %c0_220, %c0_221] : memref<2x2x2x3x3x128xbf16, #tpu.memory_space<vmem>>, vector<2x1x1x3x3x128xbf16>
    %207 = vector.shape_cast %206 : vector<2x1x1x3x3x128xbf16> to vector<2x3x3x128xbf16>
    %208 = vector.shape_cast %205 : vector<2x3x3x128xbf16> to vector<2x1x1x3x3x128xbf16>
    tpu.vector_store %arg12[%c0_216, %c0_217, %c0_218, %c0_219, %c0_220, %c0_221], %208 {strides = array<i32>} : memref<2x2x2x3x3x128xbf16, #tpu.memory_space<vmem>>, vector<2x1x1x3x3x128xbf16>,
    %cst_222 = arith.constant 0.000000e+00 : f32
    %209 = vector.broadcast %cst_222 : f32 to vector<8x256xf32>
    %c0_223 = arith.constant 0 : index
    %c0_224 = arith.constant 0 : index
    %c0_225 = arith.constant 0 : index
    %c0_226 = arith.constant 0 : index
    %c0_227 = arith.constant 0 : index
    %c0_228 = arith.constant 0 : index
    %210 = vector.load %arg12[%c0_223, %c0_224, %c0_225, %c0_226, %c0_227, %c0_228] : memref<2x2x2x3x3x128xbf16, #tpu.memory_space<vmem>>, vector<2x1x1x2x2x128xbf16>
    %211 = vector.shape_cast %210 : vector<2x1x1x2x2x128xbf16> to vector<2x2x2x128xbf16>
    %212 = vector.shape_cast %211 : vector<2x2x2x128xbf16> to vector<8x128xbf16>
    %c0_229 = arith.constant 0 : index
    %c0_230 = arith.constant 0 : index
    %c0_231 = arith.constant 0 : index
    %213 = vector.load %arg6[%c0_229, %c0_230, %c0_231] : memref<16x128x256xbf16, #tpu.memory_space<vmem>>, vector<1x128x256xbf16>
    %214 = vector.shape_cast %213 : vector<1x128x256xbf16> to vector<128x256xbf16>
    %cst_232 = arith.constant dense<0.000000e+00> : vector<8x256xf32>
    %215 = tpu.matmul %212, %214, %cst_232 {dimension_numbers = #tpu.dot_dimension_numbers<[1], [0], [0], [1], [0, 0, 1, 1], [], []>} : vector<8x128xbf16>, vector<128x256xbf16>, vector<8x256xf32> -> vector<8x256xf32>
    %216 = arith.addf %209, %215 : vector<8x256xf32>
    %c0_233 = arith.constant 0 : index
    %c0_234 = arith.constant 0 : index
    %c1_235 = arith.constant 1 : index
    %c0_236 = arith.constant 0 : index
    %c0_237 = arith.constant 0 : index
    %c0_238 = arith.constant 0 : index
    %217 = vector.load %arg12[%c0_233, %c0_234, %c1_235, %c0_236, %c0_237, %c0_238] : memref<2x2x2x3x3x128xbf16, #tpu.memory_space<vmem>>, vector<2x1x1x2x2x128xbf16>
    %218 = vector.shape_cast %217 : vector<2x1x1x2x2x128xbf16> to vector<2x2x2x128xbf16>
    %219 = vector.shape_cast %218 : vector<2x2x2x128xbf16> to vector<8x128xbf16>
    %c1_239 = arith.constant 1 : index
    %c0_240 = arith.constant 0 : index
    %c0_241 = arith.constant 0 : index
    %220 = vector.load %arg6[%c1_239, %c0_240, %c0_241] : memref<16x128x256xbf16, #tpu.memory_space<vmem>>, vector<1x128x256xbf16>
    %221 = vector.shape_cast %220 : vector<1x128x256xbf16> to vector<128x256xbf16>
    %cst_242 = arith.constant dense<0.000000e+00> : vector<8x256xf32>
    %222 = tpu.matmul %219, %221, %cst_242 {dimension_numbers = #tpu.dot_dimension_numbers<[1], [0], [0], [1], [0, 0, 1, 1], [], []>} : vector<8x128xbf16>, vector<128x256xbf16>, vector<8x256xf32> -> vector<8x256xf32>
    %223 = arith.addf %216, %222 : vector<8x256xf32>
    %c0_243 = arith.constant 0 : index
    %c0_244 = arith.constant 0 : index
    %c0_245 = arith.constant 0 : index
    %c0_246 = arith.constant 0 : index
    %c1_247 = arith.constant 1 : index
    %c0_248 = arith.constant 0 : index
    %224 = vector.load %arg12[%c0_243, %c0_244, %c0_245, %c0_246, %c1_247, %c0_248] : memref<2x2x2x3x3x128xbf16, #tpu.memory_space<vmem>>, vector<2x1x1x2x2x128xbf16>
    %225 = vector.shape_cast %224 : vector<2x1x1x2x2x128xbf16> to vector<2x2x2x128xbf16>
    %226 = vector.shape_cast %225 : vector<2x2x2x128xbf16> to vector<8x128xbf16>
    %c2_249 = arith.constant 2 : index
    %c0_250 = arith.constant 0 : index
    %c0_251 = arith.constant 0 : index
    %227 = vector.load %arg6[%c2_249, %c0_250, %c0_251] : memref<16x128x256xbf16, #tpu.memory_space<vmem>>, vector<1x128x256xbf16>
    %228 = vector.shape_cast %227 : vector<1x128x256xbf16> to vector<128x256xbf16>
    %cst_252 = arith.constant dense<0.000000e+00> : vector<8x256xf32>
    %229 = tpu.matmul %226, %228, %cst_252 {dimension_numbers = #tpu.dot_dimension_numbers<[1], [0], [0], [1], [0, 0, 1, 1], [], []>} : vector<8x128xbf16>, vector<128x256xbf16>, vector<8x256xf32> -> vector<8x256xf32>
    %230 = arith.addf %223, %229 : vector<8x256xf32>
    %c0_253 = arith.constant 0 : index
    %c0_254 = arith.constant 0 : index
    %c1_255 = arith.constant 1 : index
    %c0_256 = arith.constant 0 : index
    %c1_257 = arith.constant 1 : index
    %c0_258 = arith.constant 0 : index
    %231 = vector.load %arg12[%c0_253, %c0_254, %c1_255, %c0_256, %c1_257, %c0_258] : memref<2x2x2x3x3x128xbf16, #tpu.memory_space<vmem>>, vector<2x1x1x2x2x128xbf16>
    %232 = vector.shape_cast %231 : vector<2x1x1x2x2x128xbf16> to vector<2x2x2x128xbf16>
    %233 = vector.shape_cast %232 : vector<2x2x2x128xbf16> to vector<8x128xbf16>
    %c3_259 = arith.constant 3 : index
    %c0_260 = arith.constant 0 : index
    %c0_261 = arith.constant 0 : index
    %234 = vector.load %arg6[%c3_259, %c0_260, %c0_261] : memref<16x128x256xbf16, #tpu.memory_space<vmem>>, vector<1x128x256xbf16>
    %235 = vector.shape_cast %234 : vector<1x128x256xbf16> to vector<128x256xbf16>
    %cst_262 = arith.constant dense<0.000000e+00> : vector<8x256xf32>
    %236 = tpu.matmul %233, %235, %cst_262 {dimension_numbers = #tpu.dot_dimension_numbers<[1], [0], [0], [1], [0, 0, 1, 1], [], []>} : vector<8x128xbf16>, vector<128x256xbf16>, vector<8x256xf32> -> vector<8x256xf32>
    %237 = arith.addf %230, %236 : vector<8x256xf32>
    %c0_263 = arith.constant 0 : index
    %c1_264 = arith.constant 1 : index
    %c0_265 = arith.constant 0 : index
    %c0_266 = arith.constant 0 : index
    %c0_267 = arith.constant 0 : index
    %c0_268 = arith.constant 0 : index
    %238 = vector.load %arg12[%c0_263, %c1_264, %c0_265, %c0_266, %c0_267, %c0_268] : memref<2x2x2x3x3x128xbf16, #tpu.memory_space<vmem>>, vector<2x1x1x2x2x128xbf16>
    %239 = vector.shape_cast %238 : vector<2x1x1x2x2x128xbf16> to vector<2x2x2x128xbf16>
    %240 = vector.shape_cast %239 : vector<2x2x2x128xbf16> to vector<8x128xbf16>
    %c4_269 = arith.constant 4 : index
    %c0_270 = arith.constant 0 : index
    %c0_271 = arith.constant 0 : index
    %241 = vector.load %arg6[%c4_269, %c0_270, %c0_271] : memref<16x128x256xbf16, #tpu.memory_space<vmem>>, vector<1x128x256xbf16>
    %242 = vector.shape_cast %241 : vector<1x128x256xbf16> to vector<128x256xbf16>
    %cst_272 = arith.constant dense<0.000000e+00> : vector<8x256xf32>
    %243 = tpu.matmul %240, %242, %cst_272 {dimension_numbers = #tpu.dot_dimension_numbers<[1], [0], [0], [1], [0, 0, 1, 1], [], []>} : vector<8x128xbf16>, vector<128x256xbf16>, vector<8x256xf32> -> vector<8x256xf32>
    %244 = arith.addf %237, %243 : vector<8x256xf32>
    %c0_273 = arith.constant 0 : index
    %c1_274 = arith.constant 1 : index
    %c1_275 = arith.constant 1 : index
    %c0_276 = arith.constant 0 : index
    %c0_277 = arith.constant 0 : index
    %c0_278 = arith.constant 0 : index
    %245 = vector.load %arg12[%c0_273, %c1_274, %c1_275, %c0_276, %c0_277, %c0_278] : memref<2x2x2x3x3x128xbf16, #tpu.memory_space<vmem>>, vector<2x1x1x2x2x128xbf16>
    %246 = vector.shape_cast %245 : vector<2x1x1x2x2x128xbf16> to vector<2x2x2x128xbf16>
    %247 = vector.shape_cast %246 : vector<2x2x2x128xbf16> to vector<8x128xbf16>
    %c5_279 = arith.constant 5 : index
    %c0_280 = arith.constant 0 : index
    %c0_281 = arith.constant 0 : index
    %248 = vector.load %arg6[%c5_279, %c0_280, %c0_281] : memref<16x128x256xbf16, #tpu.memory_space<vmem>>, vector<1x128x256xbf16>
    %249 = vector.shape_cast %248 : vector<1x128x256xbf16> to vector<128x256xbf16>
    %cst_282 = arith.constant dense<0.000000e+00> : vector<8x256xf32>
    %250 = tpu.matmul %247, %249, %cst_282 {dimension_numbers = #tpu.dot_dimension_numbers<[1], [0], [0], [1], [0, 0, 1, 1], [], []>} : vector<8x128xbf16>, vector<128x256xbf16>, vector<8x256xf32> -> vector<8x256xf32>
    %251 = arith.addf %244, %250 : vector<8x256xf32>
    %c0_283 = arith.constant 0 : index
    %c1_284 = arith.constant 1 : index
    %c0_285 = arith.constant 0 : index
    %c0_286 = arith.constant 0 : index
    %c1_287 = arith.constant 1 : index
    %c0_288 = arith.constant 0 : index
    %252 = vector.load %arg12[%c0_283, %c1_284, %c0_285, %c0_286, %c1_287, %c0_288] : memref<2x2x2x3x3x128xbf16, #tpu.memory_space<vmem>>, vector<2x1x1x2x2x128xbf16>
    %253 = vector.shape_cast %252 : vector<2x1x1x2x2x128xbf16> to vector<2x2x2x128xbf16>
    %254 = vector.shape_cast %253 : vector<2x2x2x128xbf16> to vector<8x128xbf16>
    %c6_289 = arith.constant 6 : index
    %c0_290 = arith.constant 0 : index
    %c0_291 = arith.constant 0 : index
    %255 = vector.load %arg6[%c6_289, %c0_290, %c0_291] : memref<16x128x256xbf16, #tpu.memory_space<vmem>>, vector<1x128x256xbf16>
    %256 = vector.shape_cast %255 : vector<1x128x256xbf16> to vector<128x256xbf16>
    %cst_292 = arith.constant dense<0.000000e+00> : vector<8x256xf32>
    %257 = tpu.matmul %254, %256, %cst_292 {dimension_numbers = #tpu.dot_dimension_numbers<[1], [0], [0], [1], [0, 0, 1, 1], [], []>} : vector<8x128xbf16>, vector<128x256xbf16>, vector<8x256xf32> -> vector<8x256xf32>
    %258 = arith.addf %251, %257 : vector<8x256xf32>
    %c0_293 = arith.constant 0 : index
    %c1_294 = arith.constant 1 : index
    %c1_295 = arith.constant 1 : index
    %c0_296 = arith.constant 0 : index
    %c1_297 = arith.constant 1 : index
    %c0_298 = arith.constant 0 : index
    %259 = vector.load %arg12[%c0_293, %c1_294, %c1_295, %c0_296, %c1_297, %c0_298] : memref<2x2x2x3x3x128xbf16, #tpu.memory_space<vmem>>, vector<2x1x1x2x2x128xbf16>
    %260 = vector.shape_cast %259 : vector<2x1x1x2x2x128xbf16> to vector<2x2x2x128xbf16>
    %261 = vector.shape_cast %260 : vector<2x2x2x128xbf16> to vector<8x128xbf16>
    %c7_299 = arith.constant 7 : index
    %c0_300 = arith.constant 0 : index
    %c0_301 = arith.constant 0 : index
    %262 = vector.load %arg6[%c7_299, %c0_300, %c0_301] : memref<16x128x256xbf16, #tpu.memory_space<vmem>>, vector<1x128x256xbf16>
    %263 = vector.shape_cast %262 : vector<1x128x256xbf16> to vector<128x256xbf16>
    %cst_302 = arith.constant dense<0.000000e+00> : vector<8x256xf32>
    %264 = tpu.matmul %261, %263, %cst_302 {dimension_numbers = #tpu.dot_dimension_numbers<[1], [0], [0], [1], [0, 0, 1, 1], [], []>} : vector<8x128xbf16>, vector<128x256xbf16>, vector<8x256xf32> -> vector<8x256xf32>
    %265 = arith.addf %258, %264 : vector<8x256xf32>
    %c0_303 = arith.constant 0 : index
    %c0_304 = arith.constant 0 : index
    %c0_305 = arith.constant 0 : index
    %c1_306 = arith.constant 1 : index
    %c0_307 = arith.constant 0 : index
    %c0_308 = arith.constant 0 : index
    %266 = vector.load %arg12[%c0_303, %c0_304, %c0_305, %c1_306, %c0_307, %c0_308] : memref<2x2x2x3x3x128xbf16, #tpu.memory_space<vmem>>, vector<2x1x1x2x2x128xbf16>
    %267 = vector.shape_cast %266 : vector<2x1x1x2x2x128xbf16> to vector<2x2x2x128xbf16>
    %268 = vector.shape_cast %267 : vector<2x2x2x128xbf16> to vector<8x128xbf16>
    %c8_309 = arith.constant 8 : index
    %c0_310 = arith.constant 0 : index
    %c0_311 = arith.constant 0 : index
    %269 = vector.load %arg6[%c8_309, %c0_310, %c0_311] : memref<16x128x256xbf16, #tpu.memory_space<vmem>>, vector<1x128x256xbf16>
    %270 = vector.shape_cast %269 : vector<1x128x256xbf16> to vector<128x256xbf16>
    %cst_312 = arith.constant dense<0.000000e+00> : vector<8x256xf32>
    %271 = tpu.matmul %268, %270, %cst_312 {dimension_numbers = #tpu.dot_dimension_numbers<[1], [0], [0], [1], [0, 0, 1, 1], [], []>} : vector<8x128xbf16>, vector<128x256xbf16>, vector<8x256xf32> -> vector<8x256xf32>
    %272 = arith.addf %265, %271 : vector<8x256xf32>
    %c0_313 = arith.constant 0 : index
    %c0_314 = arith.constant 0 : index
    %c1_315 = arith.constant 1 : index
    %c1_316 = arith.constant 1 : index
    %c0_317 = arith.constant 0 : index
    %c0_318 = arith.constant 0 : index
    %273 = vector.load %arg12[%c0_313, %c0_314, %c1_315, %c1_316, %c0_317, %c0_318] : memref<2x2x2x3x3x128xbf16, #tpu.memory_space<vmem>>, vector<2x1x1x2x2x128xbf16>
    %274 = vector.shape_cast %273 : vector<2x1x1x2x2x128xbf16> to vector<2x2x2x128xbf16>
    %275 = vector.shape_cast %274 : vector<2x2x2x128xbf16> to vector<8x128xbf16>
    %c9_319 = arith.constant 9 : index
    %c0_320 = arith.constant 0 : index
    %c0_321 = arith.constant 0 : index
    %276 = vector.load %arg6[%c9_319, %c0_320, %c0_321] : memref<16x128x256xbf16, #tpu.memory_space<vmem>>, vector<1x128x256xbf16>
    %277 = vector.shape_cast %276 : vector<1x128x256xbf16> to vector<128x256xbf16>
    %cst_322 = arith.constant dense<0.000000e+00> : vector<8x256xf32>
    %278 = tpu.matmul %275, %277, %cst_322 {dimension_numbers = #tpu.dot_dimension_numbers<[1], [0], [0], [1], [0, 0, 1, 1], [], []>} : vector<8x128xbf16>, vector<128x256xbf16>, vector<8x256xf32> -> vector<8x256xf32>
    %279 = arith.addf %272, %278 : vector<8x256xf32>
    %c0_323 = arith.constant 0 : index
    %c0_324 = arith.constant 0 : index
    %c0_325 = arith.constant 0 : index
    %c1_326 = arith.constant 1 : index
    %c1_327 = arith.constant 1 : index
    %c0_328 = arith.constant 0 : index
    %280 = vector.load %arg12[%c0_323, %c0_324, %c0_325, %c1_326, %c1_327, %c0_328] : memref<2x2x2x3x3x128xbf16, #tpu.memory_space<vmem>>, vector<2x1x1x2x2x128xbf16>
    %281 = vector.shape_cast %280 : vector<2x1x1x2x2x128xbf16> to vector<2x2x2x128xbf16>
    %282 = vector.shape_cast %281 : vector<2x2x2x128xbf16> to vector<8x128xbf16>
    %c10_329 = arith.constant 10 : index
    %c0_330 = arith.constant 0 : index
    %c0_331 = arith.constant 0 : index
    %283 = vector.load %arg6[%c10_329, %c0_330, %c0_331] : memref<16x128x256xbf16, #tpu.memory_space<vmem>>, vector<1x128x256xbf16>
    %284 = vector.shape_cast %283 : vector<1x128x256xbf16> to vector<128x256xbf16>
    %cst_332 = arith.constant dense<0.000000e+00> : vector<8x256xf32>
    %285 = tpu.matmul %282, %284, %cst_332 {dimension_numbers = #tpu.dot_dimension_numbers<[1], [0], [0], [1], [0, 0, 1, 1], [], []>} : vector<8x128xbf16>, vector<128x256xbf16>, vector<8x256xf32> -> vector<8x256xf32>
    %286 = arith.addf %279, %285 : vector<8x256xf32>
    %c0_333 = arith.constant 0 : index
    %c0_334 = arith.constant 0 : index
    %c1_335 = arith.constant 1 : index
    %c1_336 = arith.constant 1 : index
    %c1_337 = arith.constant 1 : index
    %c0_338 = arith.constant 0 : index
    %287 = vector.load %arg12[%c0_333, %c0_334, %c1_335, %c1_336, %c1_337, %c0_338] : memref<2x2x2x3x3x128xbf16, #tpu.memory_space<vmem>>, vector<2x1x1x2x2x128xbf16>
    %288 = vector.shape_cast %287 : vector<2x1x1x2x2x128xbf16> to vector<2x2x2x128xbf16>
    %289 = vector.shape_cast %288 : vector<2x2x2x128xbf16> to vector<8x128xbf16>
    %c11_339 = arith.constant 11 : index
    %c0_340 = arith.constant 0 : index
    %c0_341 = arith.constant 0 : index
    %290 = vector.load %arg6[%c11_339, %c0_340, %c0_341] : memref<16x128x256xbf16, #tpu.memory_space<vmem>>, vector<1x128x256xbf16>
    %291 = vector.shape_cast %290 : vector<1x128x256xbf16> to vector<128x256xbf16>
    %cst_342 = arith.constant dense<0.000000e+00> : vector<8x256xf32>
    %292 = tpu.matmul %289, %291, %cst_342 {dimension_numbers = #tpu.dot_dimension_numbers<[1], [0], [0], [1], [0, 0, 1, 1], [], []>} : vector<8x128xbf16>, vector<128x256xbf16>, vector<8x256xf32> -> vector<8x256xf32>
    %293 = arith.addf %286, %292 : vector<8x256xf32>
    %c0_343 = arith.constant 0 : index
    %c1_344 = arith.constant 1 : index
    %c0_345 = arith.constant 0 : index
    %c1_346 = arith.constant 1 : index
    %c0_347 = arith.constant 0 : index
    %c0_348 = arith.constant 0 : index
    %294 = vector.load %arg12[%c0_343, %c1_344, %c0_345, %c1_346, %c0_347, %c0_348] : memref<2x2x2x3x3x128xbf16, #tpu.memory_space<vmem>>, vector<2x1x1x2x2x128xbf16>
    %295 = vector.shape_cast %294 : vector<2x1x1x2x2x128xbf16> to vector<2x2x2x128xbf16>
    %296 = vector.shape_cast %295 : vector<2x2x2x128xbf16> to vector<8x128xbf16>
    %c12_349 = arith.constant 12 : index
    %c0_350 = arith.constant 0 : index
    %c0_351 = arith.constant 0 : index
    %297 = vector.load %arg6[%c12_349, %c0_350, %c0_351] : memref<16x128x256xbf16, #tpu.memory_space<vmem>>, vector<1x128x256xbf16>
    %298 = vector.shape_cast %297 : vector<1x128x256xbf16> to vector<128x256xbf16>
    %cst_352 = arith.constant dense<0.000000e+00> : vector<8x256xf32>
    %299 = tpu.matmul %296, %298, %cst_352 {dimension_numbers = #tpu.dot_dimension_numbers<[1], [0], [0], [1], [0, 0, 1, 1], [], []>} : vector<8x128xbf16>, vector<128x256xbf16>, vector<8x256xf32> -> vector<8x256xf32>
    %300 = arith.addf %293, %299 : vector<8x256xf32>
    %c0_353 = arith.constant 0 : index
    %c1_354 = arith.constant 1 : index
    %c1_355 = arith.constant 1 : index
    %c1_356 = arith.constant 1 : index
    %c0_357 = arith.constant 0 : index
    %c0_358 = arith.constant 0 : index
    %301 = vector.load %arg12[%c0_353, %c1_354, %c1_355, %c1_356, %c0_357, %c0_358] : memref<2x2x2x3x3x128xbf16, #tpu.memory_space<vmem>>, vector<2x1x1x2x2x128xbf16>
    %302 = vector.shape_cast %301 : vector<2x1x1x2x2x128xbf16> to vector<2x2x2x128xbf16>
    %303 = vector.shape_cast %302 : vector<2x2x2x128xbf16> to vector<8x128xbf16>
    %c13_359 = arith.constant 13 : index
    %c0_360 = arith.constant 0 : index
    %c0_361 = arith.constant 0 : index
    %304 = vector.load %arg6[%c13_359, %c0_360, %c0_361] : memref<16x128x256xbf16, #tpu.memory_space<vmem>>, vector<1x128x256xbf16>
    %305 = vector.shape_cast %304 : vector<1x128x256xbf16> to vector<128x256xbf16>
    %cst_362 = arith.constant dense<0.000000e+00> : vector<8x256xf32>
    %306 = tpu.matmul %303, %305, %cst_362 {dimension_numbers = #tpu.dot_dimension_numbers<[1], [0], [0], [1], [0, 0, 1, 1], [], []>} : vector<8x128xbf16>, vector<128x256xbf16>, vector<8x256xf32> -> vector<8x256xf32>
    %307 = arith.addf %300, %306 : vector<8x256xf32>
    %c0_363 = arith.constant 0 : index
    %c1_364 = arith.constant 1 : index
    %c0_365 = arith.constant 0 : index
    %c1_366 = arith.constant 1 : index
    %c1_367 = arith.constant 1 : index
    %c0_368 = arith.constant 0 : index
    %308 = vector.load %arg12[%c0_363, %c1_364, %c0_365, %c1_366, %c1_367, %c0_368] : memref<2x2x2x3x3x128xbf16, #tpu.memory_space<vmem>>, vector<2x1x1x2x2x128xbf16>
    %309 = vector.shape_cast %308 : vector<2x1x1x2x2x128xbf16> to vector<2x2x2x128xbf16>
    %310 = vector.shape_cast %309 : vector<2x2x2x128xbf16> to vector<8x128xbf16>
    %c14_369 = arith.constant 14 : index
    %c0_370 = arith.constant 0 : index
    %c0_371 = arith.constant 0 : index
    %311 = vector.load %arg6[%c14_369, %c0_370, %c0_371] : memref<16x128x256xbf16, #tpu.memory_space<vmem>>, vector<1x128x256xbf16>
    %312 = vector.shape_cast %311 : vector<1x128x256xbf16> to vector<128x256xbf16>
    %cst_372 = arith.constant dense<0.000000e+00> : vector<8x256xf32>
    %313 = tpu.matmul %310, %312, %cst_372 {dimension_numbers = #tpu.dot_dimension_numbers<[1], [0], [0], [1], [0, 0, 1, 1], [], []>} : vector<8x128xbf16>, vector<128x256xbf16>, vector<8x256xf32> -> vector<8x256xf32>
    %314 = arith.addf %307, %313 : vector<8x256xf32>
    %c0_373 = arith.constant 0 : index
    %c1_374 = arith.constant 1 : index
    %c1_375 = arith.constant 1 : index
    %c1_376 = arith.constant 1 : index
    %c1_377 = arith.constant 1 : index
    %c0_378 = arith.constant 0 : index
    %315 = vector.load %arg12[%c0_373, %c1_374, %c1_375, %c1_376, %c1_377, %c0_378] : memref<2x2x2x3x3x128xbf16, #tpu.memory_space<vmem>>, vector<2x1x1x2x2x128xbf16>
    %316 = vector.shape_cast %315 : vector<2x1x1x2x2x128xbf16> to vector<2x2x2x128xbf16>
    %317 = vector.shape_cast %316 : vector<2x2x2x128xbf16> to vector<8x128xbf16>
    %c15_379 = arith.constant 15 : index
    %c0_380 = arith.constant 0 : index
    %c0_381 = arith.constant 0 : index
    %318 = vector.load %arg6[%c15_379, %c0_380, %c0_381] : memref<16x128x256xbf16, #tpu.memory_space<vmem>>, vector<1x128x256xbf16>
    %319 = vector.shape_cast %318 : vector<1x128x256xbf16> to vector<128x256xbf16>
    %cst_382 = arith.constant dense<0.000000e+00> : vector<8x256xf32>
    %320 = tpu.matmul %317, %319, %cst_382 {dimension_numbers = #tpu.dot_dimension_numbers<[1], [0], [0], [1], [0, 0, 1, 1], [], []>} : vector<8x128xbf16>, vector<128x256xbf16>, vector<8x256xf32> -> vector<8x256xf32>
    %321 = arith.addf %314, %320 : vector<8x256xf32>
    %c0_383 = arith.constant 0 : index
    %c0_384 = arith.constant 0 : index
    %322 = vector.load %arg7[%c0_383, %c0_384] : memref<1x256xf32, #tpu.memory_space<vmem>>, vector<1x256xf32>
    %323 = vector.broadcast %322 : vector<1x256xf32> to vector<8x256xf32>
    %324 = arith.addf %321, %323 : vector<8x256xf32>
    %cst_385 = arith.constant 0.000000e+00 : f32
    %325 = vector.broadcast %cst_385 : f32 to vector<8x256xf32>
    %326 = arith.cmpf oge, %324, %325 : vector<8x256xf32>
    %cst_386 = arith.constant 2.000000e-01 : f32
    %327 = vector.broadcast %cst_386 : f32 to vector<8x256xf32>
    %328 = arith.mulf %327, %324 : vector<8x256xf32>
    %329 = arith.select %326, %324, %328 : vector<8x256xi1>, vector<8x256xf32>
    %330 = vector.shape_cast %329 : vector<8x256xf32> to vector<2x4x256xf32>
    %cst_387 = arith.constant dense<0.000000e+00> : vector<2x256xf32>
    %331 = vector.multi_reduction <add>, %330, %cst_387 [1] : vector<2x4x256xf32> to vector<2x256xf32>
    %cst_388 = arith.constant 4.000000e+00 : f32
    %332 = vector.broadcast %cst_388 : f32 to vector<2x256xf32>
    %333 = arith.divf %331, %332 : vector<2x256xf32>
    %c0_389 = arith.constant 0 : index
    %c0_390 = arith.constant 0 : index
    %334 = vector.load %arg8[%c0_389, %c0_390] : memref<1x256xf32, #tpu.memory_space<vmem>>, vector<1x256xf32>
    %335 = vector.broadcast %334 : vector<1x256xf32> to vector<2x256xf32>
    %336 = arith.mulf %333, %335 : vector<2x256xf32>
    %cst_391 = arith.constant dense<0.000000e+00> : vector<2xf32>
    %337 = vector.multi_reduction <add>, %336, %cst_391 [1] : vector<2x256xf32> to vector<2xf32>
    %338 = vector.shape_cast %337 : vector<2xf32> to vector<2x1xf32>
    %c0_392 = arith.constant 0 : index
    %c0_393 = arith.constant 0 : index
    %339 = vector.load %arg9[%c0_392, %c0_393] : memref<1x1xf32, #tpu.memory_space<vmem>>, vector<1x1xf32>
    %340 = vector.broadcast %339 : vector<1x1xf32> to vector<2x1xf32>
    %341 = arith.addf %338, %340 : vector<2x1xf32>
    %342 = vector.shape_cast %341 : vector<2x1xf32> to vector<2x1x1xf32>
    %c0_394 = arith.constant 0 : index
    %c0_395 = arith.constant 0 : index
    %c0_396 = arith.constant 0 : index
    %343 = vector.load %arg10[%c0_394, %c0_395, %c0_396] : memref<2x1x1xf32, #tpu.memory_space<vmem>>, vector<2x1x1xf32>
    tpu.vector_store %arg10[%c0_394, %c0_395, %c0_396], %342 {strides = array<i32>} : memref<2x1x1xf32, #tpu.memory_space<vmem>>, vector<2x1x1xf32>,
    return
  }
  func.func @transform_0(%arg0: i32) -> (i32, i32, i32) {
    %c0_i32 = arith.constant 0 : i32
    %c0_i32_0 = arith.constant 0 : i32
    %c0_i32_1 = arith.constant 0 : i32
    return %arg0, %c0_i32, %c0_i32_0 : i32, i32, i32
  }
  func.func @transform_1(%arg0: i32) -> (i32, i32) {
    %c0_i32 = arith.constant 0 : i32
    %c0_i32_0 = arith.constant 0 : i32
    %c0_i32_1 = arith.constant 0 : i32
    return %c0_i32, %c0_i32_0 : i32, i32
  }
  func.func @transform_2(%arg0: i32) -> (i32, i32) {
    %c0_i32 = arith.constant 0 : i32
    %c0_i32_0 = arith.constant 0 : i32
    %c0_i32_1 = arith.constant 0 : i32
    return %c0_i32, %c0_i32_0 : i32, i32
  }
  func.func @transform_3(%arg0: i32) -> (i32, i32, i32) {
    %c0_i32 = arith.constant 0 : i32
    %c0_i32_0 = arith.constant 0 : i32
    %c0_i32_1 = arith.constant 0 : i32
    %c0_i32_2 = arith.constant 0 : i32
    return %c0_i32, %c0_i32_0, %c0_i32_1 : i32, i32, i32
  }
  func.func @transform_4(%arg0: i32) -> (i32, i32) {
    %c0_i32 = arith.constant 0 : i32
    %c0_i32_0 = arith.constant 0 : i32
    %c0_i32_1 = arith.constant 0 : i32
    return %c0_i32, %c0_i32_0 : i32, i32
  }
  func.func @transform_5(%arg0: i32) -> (i32, i32, i32) {
    %c0_i32 = arith.constant 0 : i32
    %c0_i32_0 = arith.constant 0 : i32
    %c0_i32_1 = arith.constant 0 : i32
    %c0_i32_2 = arith.constant 0 : i32
    return %c0_i32, %c0_i32_0, %c0_i32_1 : i32, i32, i32
  }
  func.func @transform_6(%arg0: i32) -> (i32, i32) {
    %c0_i32 = arith.constant 0 : i32
    %c0_i32_0 = arith.constant 0 : i32
    %c0_i32_1 = arith.constant 0 : i32
    return %c0_i32, %c0_i32_0 : i32, i32
  }
  func.func @transform_7(%arg0: i32) -> (i32, i32) {
    %c0_i32 = arith.constant 0 : i32
    %c0_i32_0 = arith.constant 0 : i32
    %c0_i32_1 = arith.constant 0 : i32
    return %c0_i32, %c0_i32_0 : i32, i32
  }
  func.func @transform_8(%arg0: i32) -> (i32, i32) {
    %c0_i32 = arith.constant 0 : i32
    %c0_i32_0 = arith.constant 0 : i32
    %c0_i32_1 = arith.constant 0 : i32
    return %c0_i32, %c0_i32_0 : i32, i32
  }
  func.func @transform_9(%arg0: i32) -> (i32, i32, i32) {
    %c0_i32 = arith.constant 0 : i32
    %c0_i32_0 = arith.constant 0 : i32
    %c0_i32_1 = arith.constant 0 : i32
    return %arg0, %c0_i32, %c0_i32_0 : i32, i32, i32
  }
}

</mosaic_0001>

<llo_original>
// kernel: tpu_custom_call.1
$region0: #{tpu_custom_call.1}
  #allocation0 [shape = 'u32[]', space=smem, size = 0x4, offset = 0x4, fixed_abs, tag = 'smem constant byte address 0x4 - core index']
  #allocation1 [shape = 'u32[144,128]{1,0:T(1,128)}', space=vmem, size = 0x12000, scoped, tag = 'internal scratch']
  #allocation2 [shape = 'bf16[2,2,2,5,5,64]{5,4,3,2,1,0:T(8,128)(2,1)}', space=vmem, size = 0x14000, scoped, tag = 'scratch operand']
  #allocation3 [shape = 'bf16[2,2,2,3,3,128]{5,4,3,2,1,0:T(4,128)(2,1)}', space=vmem, size = 0x6000, scoped, tag = 'scratch operand']
  #allocation4 [shape = 'f32[1,1]{1,0:T(1,128)S(1)}', space=vmem, size = 0x200, scoped, tag = 'scoped memory for tpu_custom_call.1']
  %s0 = inlined_call_operand.vmem [shape: bf16[4,64,48], index: 0, kind: input, shape index: {}]
  %s1 = inlined_call_operand.vmem [shape: bf16[48,64], index: 1, kind: input, shape index: {}]
  %s2 = inlined_call_operand.vmem [shape: f32[1,64], index: 2, kind: input, shape index: {}]
  %s3 = inlined_call_operand.hbm [shape: bf16[16,64,128], index: 3, kind: input, shape index: {}]
  %s4 = inlined_call_operand.vmem [shape: f32[1,128], index: 4, kind: input, shape index: {}]
  %s5 = inlined_call_operand.hbm [shape: bf16[16,128,256], index: 5, kind: input, shape index: {}]
  %s6 = inlined_call_operand.vmem [shape: f32[1,256], index: 6, kind: input, shape index: {}]
  %s7 = inlined_call_operand.vmem [shape: f32[1,256], index: 7, kind: input, shape index: {}]
  %s8 = inlined_call_operand.<no memory space> [shape: f32[1,1], index: 8, kind: input, shape index: {}]
  %s9 = inlined_call_operand.vmem [shape: f32[4,1,1], index: 9, kind: output, shape index: {}]
  %s10 = sld [smem:[#allocation0]]
  $region77: #{tpu_custom_call.1} parent=0
    _
  %s12 = ssub.s32 1, %s10
  %s13 = scalar_select 0, %s12, %s10
  %v14 = vstv %s8
  %15 = vst [vmem:[#allocation4] sm:$0x1] %v14
  $region1: #{tpu_custom_call.1} parent=0
    #allocation5 [shape = 'u8[262144]{0}', space=vmem, size = 0x40000, scoped, tag = 'input window, operand 3, single buffered']
    #allocation6 [shape = 's32[2]{0}', space=sflag, size = 0x8, scoped, tag = 'scoped memory for tpu_custom_call.1']
    #allocation7 [shape = 'u8[1048576]{0}', space=vmem, size = 0x100000, scoped, tag = 'input window, operand 5, single buffered']
    #allocation8 [shape = 's32[1]{0}', space=sflag, size = 0x4, scoped, tag = 'scoped memory for tpu_custom_call.1']
    %16 = vsyncpa [#allocation6], 0
    %17 = vsyncpa [#allocation8], 0
    loop: start=0, step=1, limit=4
    $region2: #{tpu_custom_call.1} parent=1 // loop_pre_header
      _
    $region3: #{tpu_custom_call.1} parent=1 // loop_header
      %s19 = sphi 0, %s23
      %p20 = scmp.ge.s32.totalorder %s19, 4
      %s29 = sphi 0, %s31
      %s32 = sphi 0, %s29
      %s33 = sphi 0, %s32
      %s49 = sphi 0, %s33
      %s53 = sphi 0, %s53
      %s55 = sphi 0, %s53
      %s56 = sphi 0, %s55
      %s70 = sphi 0, %s56
      %s74 = sphi 0, %s74
      %s76 = sphi 0, %s74
      %s77 = sphi 0, %s76
      %s91 = sphi 0, %s77
      %s95 = sphi 0, %s95
      %s97 = sphi 0, %s95
      %s98 = sphi 0, %s97
      %s112 = sphi 0, %s98
      %s116 = sphi 0, %s116
      %s118 = sphi 0, %s116
      %s119 = sphi 0, %s118
      %s133 = sphi 0, %s119
      %s137 = sphi 0, %s137
      %s139 = sphi 0, %s137
      %s140 = sphi 0, %s139
      %s154 = sphi 0, %s140
      %s158 = sphi 0, %s158
      %s160 = sphi 0, %s158
      %s161 = sphi 0, %s160
      %s175 = sphi 0, %s161
      %s179 = sphi 0, %s179
      %s181 = sphi 0, %s179
      %s182 = sphi 0, %s181
      %s196 = sphi 0, %s182
      %s200 = sphi 0, %s200
      %s202 = sphi 0, %s200
      %s203 = sphi 0, %s202
      %s217 = sphi 0, %s203
      %s223 = sphi 0, %s225
      %s226 = sphi 0, %s223
      %s227 = sphi 0, %s226
      %s243 = sphi 0, %s227
    $region4: #{tpu_custom_call.1} parent=1 // loop_header_branch
      %22 = sbr.rel (%p20) target = $region8
    $region5: #{tpu_custom_call.1} parent=1 // loop_body
      %s24 = ssub.s32 %s19, 1
      %s25 = ssub.s32 %s19, 2
      %s26 = sadd.s32 %s19, 1
      %s27 = ssub.s32 %s19, %s26
      %p28 = scmp.eq.s32.totalorder %s27, 0
      %s30 = sadd.s32 %s29, 1
      %s31 = scalar_select %p28, %s29, %s30
      %p34 = pneg %p28
      %p35 = scmp.eq.s32.totalorder %s19, 1
      %p36 = por %p34, %p35
      %p37 = scmp.ne.s32.totalorder %s29, %s32
      %p38 = scmp.eq.s32.totalorder %s19, 0
      %p39 = por %p37, %p38
      %p40 = scmp.ne.s32.totalorder %s29, %s32
      %p41 = scmp.eq.s32.totalorder %s24, 1
      %p42 = por %p40, %p41
      %p43 = scmp.ne.s32.totalorder %s32, %s33
      %p44 = scmp.eq.s32.totalorder %s24, 0
      %p45 = por %p43, %p44
      %p46 = scmp.ne.s32.totalorder %s32, %s33
      %p47 = scmp.eq.s32.totalorder %s25, 1
      %p48 = por %p46, %p47
      %p50 = scmp.ne.s32.totalorder %s33, %s49
      %p51 = scmp.eq.s32.totalorder %s25, 0
      %p52 = por %p50, %p51
      %s54 = sadd.s32 %s53, 1
      %p57 = scmp.eq.s32.totalorder %s19, 1
      %p58 = scmp.ne.s32.totalorder %s53, %s55
      %p59 = scmp.eq.s32.totalorder %s19, 0
      %p60 = por %p58, %p59
      %p61 = scmp.ne.s32.totalorder %s53, %s55
      %p62 = scmp.eq.s32.totalorder %s24, 1
      %p63 = por %p61, %p62
      %p64 = scmp.ne.s32.totalorder %s55, %s56
      %p65 = scmp.eq.s32.totalorder %s24, 0
      %p66 = por %p64, %p65
      %p67 = scmp.ne.s32.totalorder %s55, %s56
      %p68 = scmp.eq.s32.totalorder %s25, 1
      %p69 = por %p67, %p68
      %p71 = scmp.ne.s32.totalorder %s56, %s70
      %p72 = scmp.eq.s32.totalorder %s25, 0
      %p73 = por %p71, %p72
      %s75 = sadd.s32 %s74, 1
      %p78 = scmp.eq.s32.totalorder %s19, 1
      %p79 = scmp.ne.s32.totalorder %s74, %s76
      %p80 = scmp.eq.s32.totalorder %s19, 0
      %p81 = por %p79, %p80
      %p82 = scmp.ne.s32.totalorder %s74, %s76
      %p83 = scmp.eq.s32.totalorder %s24, 1
      %p84 = por %p82, %p83
      %p85 = scmp.ne.s32.totalorder %s76, %s77
      %p86 = scmp.eq.s32.totalorder %s24, 0
      %p87 = por %p85, %p86
      %p88 = scmp.ne.s32.totalorder %s76, %s77
      %p89 = scmp.eq.s32.totalorder %s25, 1
      %p90 = por %p88, %p89
      %p92 = scmp.ne.s32.totalorder %s77, %s91
      %p93 = scmp.eq.s32.totalorder %s25, 0
      %p94 = por %p92, %p93
      %s96 = sadd.s32 %s95, 1
      %p99 = scmp.eq.s32.totalorder %s19, 1
      %p100 = scmp.ne.s32.totalorder %s95, %s97
      %p101 = scmp.eq.s32.totalorder %s19, 0
      %p102 = por %p100, %p101
      %p103 = scmp.ne.s32.totalorder %s95, %s97
      %p104 = scmp.eq.s32.totalorder %s24, 1
      %p105 = por %p103, %p104
      %p106 = scmp.ne.s32.totalorder %s97, %s98
      %p107 = scmp.eq.s32.totalorder %s24, 0
      %p108 = por %p106, %p107
      %p109 = scmp.ne.s32.totalorder %s97, %s98
      %p110 = scmp.eq.s32.totalorder %s25, 1
      %p111 = por %p109, %p110
      %p113 = scmp.ne.s32.totalorder %s98, %s112
      %p114 = scmp.eq.s32.totalorder %s25, 0
      %p115 = por %p113, %p114
      %s117 = sadd.s32 %s116, 1
      %p120 = scmp.eq.s32.totalorder %s19, 1
      %p121 = scmp.ne.s32.totalorder %s116, %s118
      %p122 = scmp.eq.s32.totalorder %s19, 0
      %p123 = por %p121, %p122
      %p124 = scmp.ne.s32.totalorder %s116, %s118
      %p125 = scmp.eq.s32.totalorder %s24, 1
      %p126 = por %p124, %p125
      %p127 = scmp.ne.s32.totalorder %s118, %s119
      %p128 = scmp.eq.s32.totalorder %s24, 0
      %p129 = por %p127, %p128
      %p130 = scmp.ne.s32.totalorder %s118, %s119
      %p131 = scmp.eq.s32.totalorder %s25, 1
      %p132 = por %p130, %p131
      %p134 = scmp.ne.s32.totalorder %s119, %s133
      %p135 = scmp.eq.s32.totalorder %s25, 0
      %p136 = por %p134, %p135
      %s138 = sadd.s32 %s137, 1
      %p141 = scmp.eq.s32.totalorder %s19, 1
      %p142 = scmp.ne.s32.totalorder %s137, %s139
      %p143 = scmp.eq.s32.totalorder %s19, 0
      %p144 = por %p142, %p143
      %p145 = scmp.ne.s32.totalorder %s137, %s139
      %p146 = scmp.eq.s32.totalorder %s24, 1
      %p147 = por %p145, %p146
      %p148 = scmp.ne.s32.totalorder %s139, %s140
      %p149 = scmp.eq.s32.totalorder %s24, 0
      %p150 = por %p148, %p149
      %p151 = scmp.ne.s32.totalorder %s139, %s140
      %p152 = scmp.eq.s32.totalorder %s25, 1
      %p153 = por %p151, %p152
      %p155 = scmp.ne.s32.totalorder %s140, %s154
      %p156 = scmp.eq.s32.totalorder %s25, 0
      %p157 = por %p155, %p156
      %s159 = sadd.s32 %s158, 1
      %p162 = scmp.eq.s32.totalorder %s19, 1
      %p163 = scmp.ne.s32.totalorder %s158, %s160
      %p164 = scmp.eq.s32.totalorder %s19, 0
      %p165 = por %p163, %p164
      %p166 = scmp.ne.s32.totalorder %s158, %s160
      %p167 = scmp.eq.s32.totalorder %s24, 1
      %p168 = por %p166, %p167
      %p169 = scmp.ne.s32.totalorder %s160, %s161
      %p170 = scmp.eq.s32.totalorder %s24, 0
      %p171 = por %p169, %p170
      %p172 = scmp.ne.s32.totalorder %s160, %s161
      %p173 = scmp.eq.s32.totalorder %s25, 1
      %p174 = por %p172, %p173
      %p176 = scmp.ne.s32.totalorder %s161, %s175
      %p177 = scmp.eq.s32.totalorder %s25, 0
      %p178 = por %p176, %p177
      %s180 = sadd.s32 %s179, 1
      %p183 = scmp.eq.s32.totalorder %s19, 1
      %p184 = scmp.ne.s32.totalorder %s179, %s181
      %p185 = scmp.eq.s32.totalorder %s19, 0
      %p186 = por %p184, %p185
      %p187 = scmp.ne.s32.totalorder %s179, %s181
      %p188 = scmp.eq.s32.totalorder %s24, 1
      %p189 = por %p187, %p188
      %p190 = scmp.ne.s32.totalorder %s181, %s182
      %p191 = scmp.eq.s32.totalorder %s24, 0
      %p192 = por %p190, %p191
      %p193 = scmp.ne.s32.totalorder %s181, %s182
      %p194 = scmp.eq.s32.totalorder %s25, 1
      %p195 = por %p193, %p194
      %p197 = scmp.ne.s32.totalorder %s182, %s196
      %p198 = scmp.eq.s32.totalorder %s25, 0
      %p199 = por %p197, %p198
      %s201 = sadd.s32 %s200, 1
      %p204 = scmp.eq.s32.totalorder %s19, 1
      %p205 = scmp.ne.s32.totalorder %s200, %s202
      %p206 = scmp.eq.s32.totalorder %s19, 0
      %p207 = por %p205, %p206
      %p208 = scmp.ne.s32.totalorder %s200, %s202
      %p209 = scmp.eq.s32.totalorder %s24, 1
      %p210 = por %p208, %p209
      %p211 = scmp.ne.s32.totalorder %s202, %s203
      %p212 = scmp.eq.s32.totalorder %s24, 0
      %p213 = por %p211, %p212
      %p214 = scmp.ne.s32.totalorder %s202, %s203
      %p215 = scmp.eq.s32.totalorder %s25, 1
      %p216 = por %p214, %p215
      %p218 = scmp.ne.s32.totalorder %s203, %s217
      %p219 = scmp.eq.s32.totalorder %s25, 0
      %p220 = por %p218, %p219
      %s221 = ssub.s32 %s19, %s26
      %p222 = scmp.eq.s32.totalorder %s221, 0
      %s224 = sadd.s32 %s223, 1
      %s225 = scalar_select %p222, %s223, %s224
      %p228 = pneg %p222
      %p229 = scmp.eq.s32.totalorder %s19, 1
      %p230 = por %p228, %p229
      %p231 = scmp.ne.s32.totalorder %s223, %s226
      %p232 = scmp.eq.s32.totalorder %s19, 0
      %p233 = por %p231, %p232
      %p234 = scmp.ne.s32.totalorder %s223, %s226
      %p235 = scmp.eq.s32.totalorder %s24, 1
      %p236 = por %p234, %p235
      %p237 = scmp.ne.s32.totalorder %s226, %s227
      %p238 = scmp.eq.s32.totalorder %s24, 0
      %p239 = por %p237, %p238
      %p240 = scmp.ne.s32.totalorder %s226, %s227
      %p241 = scmp.eq.s32.totalorder %s25, 1
      %p242 = por %p240, %p241
      %p244 = scmp.ne.s32.totalorder %s227, %s243
      %p245 = scmp.eq.s32.totalorder %s25, 0
      %p246 = por %p244, %p245
      %p247 = scmp.le.s32.totalorder 1, %s19
      %p248 = scmp.lt.s32.totalorder %s19, 3
      %p249 = pnand %p247, %p248
      %p250 = pneg %p249
      // Predicated region
      $region9: #{tpu_custom_call.1} parent=5 // pred_check
        _
      $region10: #{tpu_custom_call.1} parent=5 // pred_check_branch
        %252 = sbr.rel (%p249) target = $region12
      $region11: #{tpu_custom_call.1} parent=5 // pred_region
        %s253 = ssub.s32 %s19, 1
        // Predicated region
        $region13: #{tpu_custom_call.1} parent=11 // pred_check
          %p254 = pneg %p66
        $region14: #{tpu_custom_call.1} parent=11 // pred_check_branch
          %256 = sbr.rel (%p254) target = $region16
        $region15: #{tpu_custom_call.1} parent=11 // pred_region
          _
        $region16: #{tpu_custom_call.1} parent=11 // pred_fallthru
          _
        // Predicated region
        $region17: #{tpu_custom_call.1} parent=11 // pred_check
          %p257 = pneg %p87
        $region18: #{tpu_custom_call.1} parent=11 // pred_check_branch
          %259 = sbr.rel (%p257) target = $region20
        $region19: #{tpu_custom_call.1} parent=11 // pred_region
          _
        $region20: #{tpu_custom_call.1} parent=11 // pred_fallthru
          _
        // Predicated region
        $region21: #{tpu_custom_call.1} parent=11 // pred_check
          %p260 = pneg %p108
        $region22: #{tpu_custom_call.1} parent=11 // pred_check_branch
          %262 = sbr.rel (%p260) target = $region24
        $region23: #{tpu_custom_call.1} parent=11 // pred_region
          %s264 = ssub.s32 8192, 8192
          %265 = vsyncadd [#allocation6], %s264
          %s266 = sshll.u32 [#allocation5], 4
          %s267 = int_to_ptr.vmem [resolvable:$true] %s266
          %272 = dma.hbm_to_vmem [thread:$0]  %s3, 8192, %s267, [#allocation6], 64, 64, 4
        $region24: #{tpu_custom_call.1} parent=11 // pred_fallthru
          _
        // Predicated region
        $region25: #{tpu_custom_call.1} parent=11 // pred_check
          %p273 = pneg %p129
        $region26: #{tpu_custom_call.1} parent=11 // pred_check_branch
          %275 = sbr.rel (%p273) target = $region28
        $region27: #{tpu_custom_call.1} parent=11 // pred_region
          _
        $region28: #{tpu_custom_call.1} parent=11 // pred_fallthru
          _
        // Predicated region
        $region29: #{tpu_custom_call.1} parent=11 // pred_check
          %p276 = pneg %p150
        $region30: #{tpu_custom_call.1} parent=11 // pred_check_branch
          %278 = sbr.rel (%p276) target = $region32
        $region31: #{tpu_custom_call.1} parent=11 // pred_region
          %s280 = ssub.s32 32768, 32768
          %281 = vsyncadd [#allocation8], %s280
          %s282 = sshll.u32 [#allocation7], 4
          %s283 = int_to_ptr.vmem [resolvable:$true] %s282
          %288 = dma.hbm_to_vmem [thread:$0]  %s5, 32768, %s283, [#allocation8], 128, 128, 8
        $region32: #{tpu_custom_call.1} parent=11 // pred_fallthru
          _
        // Predicated region
        $region33: #{tpu_custom_call.1} parent=11 // pred_check
          %p289 = pneg %p171
        $region34: #{tpu_custom_call.1} parent=11 // pred_check_branch
          %291 = sbr.rel (%p289) target = $region36
        $region35: #{tpu_custom_call.1} parent=11 // pred_region
          _
        $region36: #{tpu_custom_call.1} parent=11 // pred_fallthru
          _
        // Predicated region
        $region37: #{tpu_custom_call.1} parent=11 // pred_check
          %p292 = pneg %p192
        $region38: #{tpu_custom_call.1} parent=11 // pred_check_branch
          %294 = sbr.rel (%p292) target = $region40
        $region39: #{tpu_custom_call.1} parent=11 // pred_region
          _
        $region40: #{tpu_custom_call.1} parent=11 // pred_fallthru
          _
        // Predicated region
        $region41: #{tpu_custom_call.1} parent=11 // pred_check
          %p295 = pneg %p213
        $region42: #{tpu_custom_call.1} parent=11 // pred_check_branch
          %297 = sbr.rel (%p295) target = $region44
        $region43: #{tpu_custom_call.1} parent=11 // pred_region
          _
        $region44: #{tpu_custom_call.1} parent=11 // pred_fallthru
          _
      $region12: #{tpu_custom_call.1} parent=5 // pred_fallthru
        _
      %p298 = scmp.lt.s32.totalorder %s19, 2
      // Predicated region
      $region45: #{tpu_custom_call.1} parent=5 // pred_check
        %p299 = pneg %p298
      $region46: #{tpu_custom_call.1} parent=5 // pred_check_branch
        %301 = sbr.rel (%p299) target = $region48
      $region47: #{tpu_custom_call.1} parent=5 // pred_region
        // Predicated region
        $region49: #{tpu_custom_call.1} parent=47 // pred_check
          %p302 = pneg %p39
        $region50: #{tpu_custom_call.1} parent=47 // pred_check_branch
          %304 = sbr.rel (%p302) target = $region52
        $region51: #{tpu_custom_call.1} parent=47 // pred_region
          %s305 = smul.u32 2, %s19
          %p306 = scmp.lt.s32.totalorder %s305, 3
          %s307 = scalar_select %p306, %s305, 3
          %s308 = smul.addr %s307, 8
          %s309 = smul.addr %s308, 4
          %s310 = scalar_lea.vmem %s0, %s309
          %s311 = smul.u32 2, %s19
        $region52: #{tpu_custom_call.1} parent=47 // pred_fallthru
          _
      $region48: #{tpu_custom_call.1} parent=5 // pred_fallthru
        _
      %p312 = scmp.le.s32.totalorder 1, %s19
      %p313 = scmp.lt.s32.totalorder %s19, 3
      %p314 = pnand %p312, %p313
      %p315 = pneg %p314
      // Predicated region
      $region53: #{tpu_custom_call.1} parent=5 // pred_check
        _
      $region54: #{tpu_custom_call.1} parent=5 // pred_check_branch
        %317 = sbr.rel (%p314) target = $region56
      $region55: #{tpu_custom_call.1} parent=5 // pred_region
        %s318 = ssub.s32 %s19, 1
        // Predicated region
        $region57: #{tpu_custom_call.1} parent=55 // pred_check
          %p319 = pneg %p108
        $region58: #{tpu_custom_call.1} parent=55 // pred_check_branch
          %321 = sbr.rel (%p319) target = $region60
        $region59: #{tpu_custom_call.1} parent=55 // pred_region
          %322 = dma.done [#allocation6], 8192
        $region60: #{tpu_custom_call.1} parent=55 // pred_fallthru
          _
        // Predicated region
        $region61: #{tpu_custom_call.1} parent=55 // pred_check
          %p323 = pneg %p150
        $region62: #{tpu_custom_call.1} parent=55 // pred_check_branch
          %325 = sbr.rel (%p323) target = $region64
        $region63: #{tpu_custom_call.1} parent=55 // pred_region
          %326 = dma.done [#allocation8], 32768
        $region64: #{tpu_custom_call.1} parent=55 // pred_fallthru
          _
        %s327 = smul.u32 2, %s24
        %p328 = scmp.lt.s32.totalorder %s327, 3
        %s329 = scalar_select %p328, %s327, 3
        %s330 = smul.addr %s329, 8
        %s331 = smul.addr %s330, 4
        %s332 = scalar_lea.vmem %s0, %s331
        %p333 = pneg %p45
        %p334 = pneg %p42
        %p335 = pneg %p66
        %p336 = pneg %p63
        %p337 = pneg %p87
        %p338 = pneg %p84
        %p339 = pneg %p108
        %p340 = pneg %p105
        %p341 = pneg %p129
        %p342 = pneg %p126
        %p343 = pneg %p150
        %p344 = pneg %p147
        %p345 = pneg %p171
        %p346 = pneg %p168
        %p347 = pneg %p192
        %p348 = pneg %p189
        %p349 = pneg %p213
        %p350 = pneg %p210
        %p351 = pneg %p239
        %p352 = pneg %p236
        %s353 = smul.u32 2, %s24
        %p354 = scmp.lt.s32.totalorder %s353, 3
        %s355 = scalar_select %p354, %s353, 3
        %s356 = scalar_lea.vmem %s9, %s355
        %s357 = smul.u32 2, %s24
        %p358 = scmp.lt.s32.totalorder %s357, 3
        %s359 = scalar_select %p358, %s357, 3
        %s360 = smul.addr %s359, 8
        %s361 = smul.addr %s360, 4
        %s362 = scalar_lea.vmem %s0, %s361
        %s363 = smul.u32 2, %s24
        %s364 = smul.u32 2, %s24
        %p365 = scmp.lt.s32.totalorder %s364, 3
        %s366 = scalar_select %p365, %s364, 3
        %s367 = scalar_lea.vmem %s9, %s366
        %s368 = smul.u32 2, %s24
        %v370 = vld [vmem:[%s362] sm:$0xf]
        %v371 = vld [vmem:[%s362 + $0x4] sm:$0xf]
        %v372 = vld [vmem:[%s362 + $0x8] sm:$0xf]
        %v373 = vld [vmem:[%s362 + $0xc] sm:$0xf]
        %v374 = vld [vmem:[%s362 + $0x10] sm:$0xf]
        %v375 = vld [vmem:[%s362 + $0x14] sm:$0xf]
        %v376 = vld [vmem:[%s362 + $0x18] sm:$0xf]
        %v377 = vld [vmem:[%s362 + $0x1c] sm:$0xf]
        %v378 = vld [vmem:[%s362 + $0x20] sm:$0xf]
        %v379 = vld [vmem:[%s362 + $0x24] sm:$0xf]
        %v380 = vld [vmem:[%s362 + $0x28] sm:$0xf]
        %v381 = vld [vmem:[%s362 + $0x2c] sm:$0xf]
        %v382 = vld [vmem:[%s362 + $0x30] sm:$0xf]
        %v383 = vld [vmem:[%s362 + $0x34] sm:$0xf]
        %v384 = vld [vmem:[%s362 + $0x38] sm:$0xf]
        %v385 = vld [vmem:[%s362 + $0x3c] sm:$0xf]
        %v386 = vld [vmem:[%s1] sm:$0xf]
        %v387 = vld [vmem:[%s1 + $0x4] sm:$0xf]
        %v388 = vld [vmem:[%s1 + $0x8] sm:$0xf]
        %v389 = vld [vmem:[%s1 + $0xc] sm:$0xf]
        %v390 = vld [vmem:[%s1 + $0x10] sm:$0xf]
        %v391 = vld [vmem:[%s1 + $0x14] sm:$0xf]
        %v392 = vld [vmem:[%s2] sm:$0x1]
        %v394 = vlaneseq
        %v395 = vshrl.u32 %v394, 7
        %v396 = vsub.s32 0, %v395
        %v397 = vrot.slane %v392, %v396
        %v415 = vunpack.c.l.b16 %v370
        %v416 = vunpack.c.l.b16 %v371
        %v417 = vunpack.c.l.b16 %v372
        %v418 = vunpack.c.l.b16 %v373
        %v419 = vunpack.c.l.b16 %v374
        %v420 = vunpack.c.l.b16 %v375
        %v421 = vunpack.c.l.b16 %v376
        %v422 = vunpack.c.l.b16 %v377
        %v423 = vunpack.c.l.b16 %v378
        %v424 = vunpack.c.l.b16 %v379
        %v425 = vunpack.c.l.b16 %v380
        %v426 = vunpack.c.l.b16 %v381
        %v427 = vunpack.c.l.b16 %v382
        %v428 = vunpack.c.l.b16 %v383
        %v429 = vunpack.c.l.b16 %v384
        %v430 = vunpack.c.l.b16 %v385
        %v431 = vpack.c.b16 %v416, %v415
        %v432 = vpack.c.b16 %v418, %v417
        %v433 = vpack.c.b16 %v420, %v419
        %v434 = vpack.c.b16 %v422, %v421
        %v435 = vpack.c.b16 %v424, %v423
        %v436 = vpack.c.b16 %v426, %v425
        %v437 = vpack.c.b16 %v428, %v427
        %v438 = vpack.c.b16 %v430, %v429
        %v445 = vunpack.c.l.b16 %v386
        %v446 = vunpack.c.l.b16 %v387
        %v447 = vunpack.c.l.b16 %v388
        %v448 = vunpack.c.l.b16 %v389
        %v449 = vunpack.c.l.b16 %v390
        %v450 = vunpack.c.l.b16 %v391
        %v451 = vpack.c.b16 %v446, %v445
        %v452 = vpack.c.b16 %v448, %v447
        %v453 = vpack.c.b16 %v450, %v449
        %vm457 = vcmask 392192
        %v459 = vsel %vm457, %v431, 0
        %v462 = vsel %vm457, %v432, 0
        %v465 = vsel %vm457, %v433, 0
        %v468 = vsel %vm457, %v434, 0
        %v471 = vsel %vm457, %v435, 0
        %v474 = vsel %vm457, %v436, 0
        %v477 = vsel %vm457, %v437, 0
        %v480 = vsel %vm457, %v438, 0
        %482 = vmatprep.subr.bf16.mxu0 0
        %483 = vmatpush1.bf16.msra.mxu0 %v451
        %484 = vmatprep.subr.bf16.mxu0 0
        %485 = vmatpush1.bf16.msra.mxu0 %v452
        %486 = vmatprep.subr.bf16.mxu0 0
        %487 = vmatpush1.bf16.msra.mxu0 %v453
        %488 = vmatprep.subr.bf16.mxu0 0
        %489 = vmatpush1.bf16.msra.mxu0 0
        %490 = vmatprep.subr.bf16.mxu0 0
        %491 = vmatpush1.bf16.msra.mxu0 0
        %492 = vmatprep.subr.bf16.mxu0 0
        %493 = vmatpush1.bf16.msra.mxu0 0
        %494 = vmatprep.subr.bf16.mxu0 0
        %495 = vmatpush1.bf16.msra.mxu0 0
        %496 = vmatprep.subr.bf16.mxu0 0
        %497 = vmatpush1.bf16.msra.mxu0 0
        %498 = vmatprep.subr.bf16.mxu0 0
        %499 = vmatpush1.bf16.msra.mxu0 0
        %500 = vmatprep.subr.bf16.mxu0 0
        %501 = vmatpush1.bf16.msra.mxu0 0
        %502 = vmatprep.subr.bf16.mxu0 0
        %503 = vmatpush1.bf16.msra.mxu0 0
        %504 = vmatprep.subr.bf16.mxu0 0
        %505 = vmatpush1.bf16.msra.mxu0 0
        %506 = vmatprep.subr.bf16.mxu0 0
        %507 = vmatpush1.bf16.msra.mxu0 0
        %508 = vmatprep.subr.bf16.mxu0 0
        %509 = vmatpush1.bf16.msra.mxu0 0
        %510 = vmatprep.subr.bf16.mxu0 0
        %511 = vmatpush1.bf16.msra.mxu0 0
        %512 = vmatprep.subr.bf16.mxu0 0
        %513 = vmatpush1.bf16.msra.mxu0 0
        %514 = vmatprep.mubr.bf16.mxu0 0
        %515 = vmatmul.mubr.bf16.gmra.mrb[0].mxu0 %v459
        %v516 = vpop.f32.mrb[0].mxu0
        %v517 = vadd.f32 %v397, %v516
        %v518 = vpop.f32.mrb[0].mxu0
        %v519 = vpop.f32.mrb[0].mxu0
        %v520 = vadd.f32 %v397, %v519
        %v521 = vpop.f32.mrb[0].mxu0
        %522 = vmatprep.mubr.bf16.mxu0 0
        %523 = vmatmul.mubr.bf16.gmra.mrb[0].mxu0 %v462
        %v524 = vpop.f32.mrb[0].mxu0
        %v525 = vadd.f32 %v397, %v524
        %v526 = vpop.f32.mrb[0].mxu0
        %v527 = vpop.f32.mrb[0].mxu0
        %v528 = vadd.f32 %v397, %v527
        %v529 = vpop.f32.mrb[0].mxu0
        %530 = vmatprep.mubr.bf16.mxu0 0
        %531 = vmatmul.mubr.bf16.gmra.mrb[0].mxu0 %v465
        %v532 = vpop.f32.mrb[0].mxu0
        %v533 = vadd.f32 %v397, %v532
        %v534 = vpop.f32.mrb[0].mxu0
        %v535 = vpop.f32.mrb[0].mxu0
        %v536 = vadd.f32 %v397, %v535
        %v537 = vpop.f32.mrb[0].mxu0
        %538 = vmatprep.mubr.bf16.mxu0 0
        %539 = vmatmul.mubr.bf16.gmra.mrb[0].mxu0 %v468
        %v540 = vpop.f32.mrb[0].mxu0
        %v541 = vadd.f32 %v397, %v540
        %v542 = vpop.f32.mrb[0].mxu0
        %v543 = vpop.f32.mrb[0].mxu0
        %v544 = vadd.f32 %v397, %v543
        %v545 = vpop.f32.mrb[0].mxu0
        %546 = vmatprep.mubr.bf16.mxu0 0
        %547 = vmatmul.mubr.bf16.gmra.mrb[0].mxu0 %v471
        %v548 = vpop.f32.mrb[0].mxu0
        %v549 = vadd.f32 %v397, %v548
        %v550 = vpop.f32.mrb[0].mxu0
        %v551 = vpop.f32.mrb[0].mxu0
        %v552 = vadd.f32 %v397, %v551
        %v553 = vpop.f32.mrb[0].mxu0
        %554 = vmatprep.mubr.bf16.mxu0 0
        %555 = vmatmul.mubr.bf16.gmra.mrb[0].mxu0 %v474
        %v556 = vpop.f32.mrb[0].mxu0
        %v557 = vadd.f32 %v397, %v556
        %v558 = vpop.f32.mrb[0].mxu0
        %v559 = vpop.f32.mrb[0].mxu0
        %v560 = vadd.f32 %v397, %v559
        %v561 = vpop.f32.mrb[0].mxu0
        %562 = vmatprep.mubr.bf16.mxu0 0
        %563 = vmatmul.mubr.bf16.gmra.mrb[0].mxu0 %v477
        %v564 = vpop.f32.mrb[0].mxu0
        %v565 = vadd.f32 %v397, %v564
        %v566 = vpop.f32.mrb[0].mxu0
        %v567 = vpop.f32.mrb[0].mxu0
        %v568 = vadd.f32 %v397, %v567
        %v569 = vpop.f32.mrb[0].mxu0
        %570 = vmatprep.mubr.bf16.mxu0 0
        %571 = vmatmul.mubr.bf16.gmra.mrb[0].mxu0 %v480
        %v572 = vpop.f32.mrb[0].mxu0
        %v573 = vadd.f32 %v397, %v572
        %v574 = vpop.f32.mrb[0].mxu0
        %v575 = vpop.f32.mrb[0].mxu0
        %v576 = vadd.f32 %v397, %v575
        %v577 = vpop.f32.mrb[0].mxu0
        %578 = vdwg.mxu0
        %vm579 = vcmp.ge.f32.partialorder %v517, 0.0
        %vm580 = vcmp.ge.f32.partialorder %v520, 0.0
        %vm581 = vcmp.ge.f32.partialorder %v525, 0.0
        %vm582 = vcmp.ge.f32.partialorder %v528, 0.0
        %vm583 = vcmp.ge.f32.partialorder %v533, 0.0
        %vm584 = vcmp.ge.f32.partialorder %v536, 0.0
        %vm585 = vcmp.ge.f32.partialorder %v541, 0.0
        %vm586 = vcmp.ge.f32.partialorder %v544, 0.0
        %vm587 = vcmp.ge.f32.partialorder %v549, 0.0
        %vm588 = vcmp.ge.f32.partialorder %v552, 0.0
        %vm589 = vcmp.ge.f32.partialorder %v557, 0.0
        %vm590 = vcmp.ge.f32.partialorder %v560, 0.0
        %vm591 = vcmp.ge.f32.partialorder %v565, 0.0
        %vm592 = vcmp.ge.f32.partialorder %v568, 0.0
        %vm593 = vcmp.ge.f32.partialorder %v573, 0.0
        %vm594 = vcmp.ge.f32.partialorder %v576, 0.0
        %v595 = vmul.f32 %v517, 0.2
        %v596 = vmul.f32 %v520, 0.2
        %v597 = vmul.f32 %v525, 0.2
        %v598 = vmul.f32 %v528, 0.2
        %v599 = vmul.f32 %v533, 0.2
        %v600 = vmul.f32 %v536, 0.2
        %v601 = vmul.f32 %v541, 0.2
        %v602 = vmul.f32 %v544, 0.2
        %v603 = vmul.f32 %v549, 0.2
        %v604 = vmul.f32 %v552, 0.2
        %v605 = vmul.f32 %v557, 0.2
        %v606 = vmul.f32 %v560, 0.2
        %v607 = vmul.f32 %v565, 0.2
        %v608 = vmul.f32 %v568, 0.2
        %v609 = vmul.f32 %v573, 0.2
        %v610 = vmul.f32 %v576, 0.2
        %v611 = vsel %vm579, %v517, %v595
        %v612 = vsel %vm580, %v520, %v596
        %v613 = vsel %vm581, %v525, %v597
        %v614 = vsel %vm582, %v528, %v598
        %v615 = vsel %vm583, %v533, %v599
        %v616 = vsel %vm584, %v536, %v600
        %v617 = vsel %vm585, %v541, %v601
        %v618 = vsel %vm586, %v544, %v602
        %v619 = vsel %vm587, %v549, %v603
        %v620 = vsel %vm588, %v552, %v604
        %v621 = vsel %vm589, %v557, %v605
        %v622 = vsel %vm590, %v560, %v606
        %v623 = vsel %vm591, %v565, %v607
        %v624 = vsel %vm592, %v568, %v608
        %v625 = vsel %vm593, %v573, %v609
        %v626 = vsel %vm594, %v576, %v610
        %v627 = vpack.c.bf16 %v612, %v611
        %v628 = vpack.c.bf16 %v614, %v613
        %v629 = vpack.c.bf16 %v616, %v615
        %v630 = vpack.c.bf16 %v618, %v617
        %v631 = vpack.c.bf16 %v620, %v619
        %v632 = vpack.c.bf16 %v622, %v621
        %v633 = vpack.c.bf16 %v624, %v623
        %v634 = vpack.c.bf16 %v626, %v625
        %v643 = vcombine.high %v627, %v627
        %v645 = vunpack.c.l.s4 1966171168
        %v646 = vunpack.c.0.s8 %v645
        %v647 = vlaneseq
        %v648 = vshrl.u32 %v647, 7
        %v649 = vsub.s32 %v646, %v648
        %v650 = vrot.slane %v627, %v649
        %v652 = vunpack.c.l.s4 1966171168
        %v653 = vunpack.c.0.s8 %v652
        %v654 = vlaneseq
        %v655 = vshrl.u32 %v654, 7
        %v656 = vsub.s32 %v653, %v655
        %v657 = vrot.slane %v643, %v656
        %v658 = vcombine.high %v650, %v650
        %v659 = vcombine.high %v657, %v657
        %v661 = vunpack.c.l.s4 1966171168
        %v662 = vunpack.c.0.s8 %v661
        %v663 = vlaneseq
        %v664 = vshrl.u32 %v663, 7
        %v665 = vsub.s32 %v662, %v664
        %v666 = vrot.slane %v650, %v665
        %v668 = vunpack.c.l.s4 1966171168
        %v669 = vunpack.c.0.s8 %v668
        %v670 = vlaneseq
        %v671 = vshrl.u32 %v670, 7
        %v672 = vsub.s32 %v669, %v671
        %v673 = vrot.slane %v657, %v672
        %v675 = vunpack.c.l.s4 1966171168
        %v676 = vunpack.c.0.s8 %v675
        %v677 = vlaneseq
        %v678 = vshrl.u32 %v677, 7
        %v679 = vsub.s32 %v676, %v678
        %v680 = vrot.slane %v658, %v679
        %v682 = vunpack.c.l.s4 1966171168
        %v683 = vunpack.c.0.s8 %v682
        %v684 = vlaneseq
        %v685 = vshrl.u32 %v684, 7
        %v686 = vsub.s32 %v683, %v685
        %v687 = vrot.slane %v659, %v686
        %v688 = vcombine.high %v666, %v666
        %v689 = vcombine.high %v673, %v673
        %v690 = vcombine.high %v680, %v680
        %v691 = vcombine.high %v687, %v687
        %v692 = vcombine.high %v628, %v628
        %v694 = vunpack.c.l.s4 1966171168
        %v695 = vunpack.c.0.s8 %v694
        %v696 = vlaneseq
        %v697 = vshrl.u32 %v696, 7
        %v698 = vsub.s32 %v695, %v697
        %v699 = vrot.slane %v628, %v698
        %v701 = vunpack.c.l.s4 1966171168
        %v702 = vunpack.c.0.s8 %v701
        %v703 = vlaneseq
        %v704 = vshrl.u32 %v703, 7
        %v705 = vsub.s32 %v702, %v704
        %v706 = vrot.slane %v692, %v705
        %v707 = vcombine.high %v699, %v699
        %v708 = vcombine.high %v706, %v706
        %v710 = vunpack.c.l.s4 1966171168
        %v711 = vunpack.c.0.s8 %v710
        %v712 = vlaneseq
        %v713 = vshrl.u32 %v712, 7
        %v714 = vsub.s32 %v711, %v713
        %v715 = vrot.slane %v699, %v714
        %v717 = vunpack.c.l.s4 1966171168
        %v718 = vunpack.c.0.s8 %v717
        %v719 = vlaneseq
        %v720 = vshrl.u32 %v719, 7
        %v721 = vsub.s32 %v718, %v720
        %v722 = vrot.slane %v706, %v721
        %v724 = vunpack.c.l.s4 1966171168
        %v725 = vunpack.c.0.s8 %v724
        %v726 = vlaneseq
        %v727 = vshrl.u32 %v726, 7
        %v728 = vsub.s32 %v725, %v727
        %v729 = vrot.slane %v707, %v728
        %v731 = vunpack.c.l.s4 1966171168
        %v732 = vunpack.c.0.s8 %v731
        %v733 = vlaneseq
        %v734 = vshrl.u32 %v733, 7
        %v735 = vsub.s32 %v732, %v734
        %v736 = vrot.slane %v708, %v735
        %v737 = vcombine.high %v715, %v715
        %v738 = vcombine.high %v722, %v722
        %v739 = vcombine.high %v729, %v729
        %v740 = vcombine.high %v736, %v736
        %v741 = vcombine.high %v629, %v629
        %v743 = vunpack.c.l.s4 1966171168
        %v744 = vunpack.c.0.s8 %v743
        %v745 = vlaneseq
        %v746 = vshrl.u32 %v745, 7
        %v747 = vsub.s32 %v744, %v746
        %v748 = vrot.slane %v629, %v747
        %v750 = vunpack.c.l.s4 1966171168
        %v751 = vunpack.c.0.s8 %v750
        %v752 = vlaneseq
        %v753 = vshrl.u32 %v752, 7
        %v754 = vsub.s32 %v751, %v753
        %v755 = vrot.slane %v741, %v754
        %v756 = vcombine.high %v748, %v748
        %v757 = vcombine.high %v755, %v755
        %v759 = vunpack.c.l.s4 1966171168
        %v760 = vunpack.c.0.s8 %v759
        %v761 = vlaneseq
        %v762 = vshrl.u32 %v761, 7
        %v763 = vsub.s32 %v760, %v762
        %v764 = vrot.slane %v748, %v763
        %v766 = vunpack.c.l.s4 1966171168
        %v767 = vunpack.c.0.s8 %v766
        %v768 = vlaneseq
        %v769 = vshrl.u32 %v768, 7
        %v770 = vsub.s32 %v767, %v769
        %v771 = vrot.slane %v755, %v770
        %v773 = vunpack.c.l.s4 1966171168
        %v774 = vunpack.c.0.s8 %v773
        %v775 = vlaneseq
        %v776 = vshrl.u32 %v775, 7
        %v777 = vsub.s32 %v774, %v776
        %v778 = vrot.slane %v756, %v777
        %v780 = vunpack.c.l.s4 1966171168
        %v781 = vunpack.c.0.s8 %v780
        %v782 = vlaneseq
        %v783 = vshrl.u32 %v782, 7
        %v784 = vsub.s32 %v781, %v783
        %v785 = vrot.slane %v757, %v784
        %v786 = vcombine.high %v764, %v764
        %v787 = vcombine.high %v771, %v771
        %v788 = vcombine.high %v778, %v778
        %v789 = vcombine.high %v785, %v785
        %v790 = vcombine.high %v630, %v630
        %v792 = vunpack.c.l.s4 1966171168
        %v793 = vunpack.c.0.s8 %v792
        %v794 = vlaneseq
        %v795 = vshrl.u32 %v794, 7
        %v796 = vsub.s32 %v793, %v795
        %v797 = vrot.slane %v630, %v796
        %v799 = vunpack.c.l.s4 1966171168
        %v800 = vunpack.c.0.s8 %v799
        %v801 = vlaneseq
        %v802 = vshrl.u32 %v801, 7
        %v803 = vsub.s32 %v800, %v802
        %v804 = vrot.slane %v790, %v803
        %v805 = vcombine.high %v797, %v797
        %v806 = vcombine.high %v804, %v804
        %v808 = vunpack.c.l.s4 1966171168
        %v809 = vunpack.c.0.s8 %v808
        %v810 = vlaneseq
        %v811 = vshrl.u32 %v810, 7
        %v812 = vsub.s32 %v809, %v811
        %v813 = vrot.slane %v797, %v812
        %v815 = vunpack.c.l.s4 1966171168
        %v816 = vunpack.c.0.s8 %v815
        %v817 = vlaneseq
        %v818 = vshrl.u32 %v817, 7
        %v819 = vsub.s32 %v816, %v818
        %v820 = vrot.slane %v804, %v819
        %v822 = vunpack.c.l.s4 1966171168
        %v823 = vunpack.c.0.s8 %v822
        %v824 = vlaneseq
        %v825 = vshrl.u32 %v824, 7
        %v826 = vsub.s32 %v823, %v825
        %v827 = vrot.slane %v805, %v826
        %v829 = vunpack.c.l.s4 1966171168
        %v830 = vunpack.c.0.s8 %v829
        %v831 = vlaneseq
        %v832 = vshrl.u32 %v831, 7
        %v833 = vsub.s32 %v830, %v832
        %v834 = vrot.slane %v806, %v833
        %v835 = vcombine.high %v813, %v813
        %v836 = vcombine.high %v820, %v820
        %v837 = vcombine.high %v827, %v827
        %v838 = vcombine.high %v834, %v834
        %v839 = vcombine.high %v631, %v631
        %v841 = vunpack.c.l.s4 1966171168
        %v842 = vunpack.c.0.s8 %v841
        %v843 = vlaneseq
        %v844 = vshrl.u32 %v843, 7
        %v845 = vsub.s32 %v842, %v844
        %v846 = vrot.slane %v631, %v845
        %v848 = vunpack.c.l.s4 1966171168
        %v849 = vunpack.c.0.s8 %v848
        %v850 = vlaneseq
        %v851 = vshrl.u32 %v850, 7
        %v852 = vsub.s32 %v849, %v851
        %v853 = vrot.slane %v839, %v852
        %v854 = vcombine.high %v846, %v846
        %v855 = vcombine.high %v853, %v853
        %v857 = vunpack.c.l.s4 1966171168
        %v858 = vunpack.c.0.s8 %v857
        %v859 = vlaneseq
        %v860 = vshrl.u32 %v859, 7
        %v861 = vsub.s32 %v858, %v860
        %v862 = vrot.slane %v846, %v861
        %v864 = vunpack.c.l.s4 1966171168
        %v865 = vunpack.c.0.s8 %v864
        %v866 = vlaneseq
        %v867 = vshrl.u32 %v866, 7
        %v868 = vsub.s32 %v865, %v867
        %v869 = vrot.slane %v853, %v868
        %v871 = vunpack.c.l.s4 1966171168
        %v872 = vunpack.c.0.s8 %v871
        %v873 = vlaneseq
        %v874 = vshrl.u32 %v873, 7
        %v875 = vsub.s32 %v872, %v874
        %v876 = vrot.slane %v854, %v875
        %v878 = vunpack.c.l.s4 1966171168
        %v879 = vunpack.c.0.s8 %v878
        %v880 = vlaneseq
        %v881 = vshrl.u32 %v880, 7
        %v882 = vsub.s32 %v879, %v881
        %v883 = vrot.slane %v855, %v882
        %v884 = vcombine.high %v862, %v862
        %v885 = vcombine.high %v869, %v869
        %v886 = vcombine.high %v876, %v876
        %v887 = vcombine.high %v883, %v883
        %v888 = vcombine.high %v632, %v632
        %v890 = vunpack.c.l.s4 1966171168
        %v891 = vunpack.c.0.s8 %v890
        %v892 = vlaneseq
        %v893 = vshrl.u32 %v892, 7
        %v894 = vsub.s32 %v891, %v893
        %v895 = vrot.slane %v632, %v894
        %v897 = vunpack.c.l.s4 1966171168
        %v898 = vunpack.c.0.s8 %v897
        %v899 = vlaneseq
        %v900 = vshrl.u32 %v899, 7
        %v901 = vsub.s32 %v898, %v900
        %v902 = vrot.slane %v888, %v901
        %v903 = vcombine.high %v895, %v895
        %v904 = vcombine.high %v902, %v902
        %v906 = vunpack.c.l.s4 1966171168
        %v907 = vunpack.c.0.s8 %v906
        %v908 = vlaneseq
        %v909 = vshrl.u32 %v908, 7
        %v910 = vsub.s32 %v907, %v909
        %v911 = vrot.slane %v895, %v910
        %v913 = vunpack.c.l.s4 1966171168
        %v914 = vunpack.c.0.s8 %v913
        %v915 = vlaneseq
        %v916 = vshrl.u32 %v915, 7
        %v917 = vsub.s32 %v914, %v916
        %v918 = vrot.slane %v902, %v917
        %v920 = vunpack.c.l.s4 1966171168
        %v921 = vunpack.c.0.s8 %v920
        %v922 = vlaneseq
        %v923 = vshrl.u32 %v922, 7
        %v924 = vsub.s32 %v921, %v923
        %v925 = vrot.slane %v903, %v924
        %v927 = vunpack.c.l.s4 1966171168
        %v928 = vunpack.c.0.s8 %v927
        %v929 = vlaneseq
        %v930 = vshrl.u32 %v929, 7
        %v931 = vsub.s32 %v928, %v930
        %v932 = vrot.slane %v904, %v931
        %v933 = vcombine.high %v911, %v911
        %v934 = vcombine.high %v918, %v918
        %v935 = vcombine.high %v925, %v925
        %v936 = vcombine.high %v932, %v932
        %v937 = vcombine.high %v633, %v633
        %v939 = vunpack.c.l.s4 1966171168
        %v940 = vunpack.c.0.s8 %v939
        %v941 = vlaneseq
        %v942 = vshrl.u32 %v941, 7
        %v943 = vsub.s32 %v940, %v942
        %v944 = vrot.slane %v633, %v943
        %v946 = vunpack.c.l.s4 1966171168
        %v947 = vunpack.c.0.s8 %v946
        %v948 = vlaneseq
        %v949 = vshrl.u32 %v948, 7
        %v950 = vsub.s32 %v947, %v949
        %v951 = vrot.slane %v937, %v950
        %v952 = vcombine.high %v944, %v944
        %v953 = vcombine.high %v951, %v951
        %v955 = vunpack.c.l.s4 1966171168
        %v956 = vunpack.c.0.s8 %v955
        %v957 = vlaneseq
        %v958 = vshrl.u32 %v957, 7
        %v959 = vsub.s32 %v956, %v958
        %v960 = vrot.slane %v944, %v959
        %v962 = vunpack.c.l.s4 1966171168
        %v963 = vunpack.c.0.s8 %v962
        %v964 = vlaneseq
        %v965 = vshrl.u32 %v964, 7
        %v966 = vsub.s32 %v963, %v965
        %v967 = vrot.slane %v951, %v966
        %v969 = vunpack.c.l.s4 1966171168
        %v970 = vunpack.c.0.s8 %v969
        %v971 = vlaneseq
        %v972 = vshrl.u32 %v971, 7
        %v973 = vsub.s32 %v970, %v972
        %v974 = vrot.slane %v952, %v973
        %v976 = vunpack.c.l.s4 1966171168
        %v977 = vunpack.c.0.s8 %v976
        %v978 = vlaneseq
        %v979 = vshrl.u32 %v978, 7
        %v980 = vsub.s32 %v977, %v979
        %v981 = vrot.slane %v953, %v980
        %v982 = vcombine.high %v960, %v960
        %v983 = vcombine.high %v967, %v967
        %v984 = vcombine.high %v974, %v974
        %v985 = vcombine.high %v981, %v981
        %v986 = vcombine.high %v634, %v634
        %v988 = vunpack.c.l.s4 1966171168
        %v989 = vunpack.c.0.s8 %v988
        %v990 = vlaneseq
        %v991 = vshrl.u32 %v990, 7
        %v992 = vsub.s32 %v989, %v991
        %v993 = vrot.slane %v634, %v992
        %v995 = vunpack.c.l.s4 1966171168
        %v996 = vunpack.c.0.s8 %v995
        %v997 = vlaneseq
        %v998 = vshrl.u32 %v997, 7
        %v999 = vsub.s32 %v996, %v998
        %v1000 = vrot.slane %v986, %v999
        %v1001 = vcombine.high %v993, %v993
        %v1002 = vcombine.high %v1000, %v1000
        %v1004 = vunpack.c.l.s4 1966171168
        %v1005 = vunpack.c.0.s8 %v1004
        %v1006 = vlaneseq
        %v1007 = vshrl.u32 %v1006, 7
        %v1008 = vsub.s32 %v1005, %v1007
        %v1009 = vrot.slane %v993, %v1008
        %v1011 = vunpack.c.l.s4 1966171168
        %v1012 = vunpack.c.0.s8 %v1011
        %v1013 = vlaneseq
        %v1014 = vshrl.u32 %v1013, 7
        %v1015 = vsub.s32 %v1012, %v1014
        %v1016 = vrot.slane %v1000, %v1015
        %v1018 = vunpack.c.l.s4 1966171168
        %v1019 = vunpack.c.0.s8 %v1018
        %v1020 = vlaneseq
        %v1021 = vshrl.u32 %v1020, 7
        %v1022 = vsub.s32 %v1019, %v1021
        %v1023 = vrot.slane %v1001, %v1022
        %v1025 = vunpack.c.l.s4 1966171168
        %v1026 = vunpack.c.0.s8 %v1025
        %v1027 = vlaneseq
        %v1028 = vshrl.u32 %v1027, 7
        %v1029 = vsub.s32 %v1026, %v1028
        %v1030 = vrot.slane %v1002, %v1029
        %v1031 = vcombine.high %v1009, %v1009
        %v1032 = vcombine.high %v1016, %v1016
        %v1033 = vcombine.high %v1023, %v1023
        %v1034 = vcombine.high %v1030, %v1030
        %v1037 = vunpack.c.l.s4 1966171168
        %v1038 = vunpack.c.0.s8 %v1037
        %v1039 = vlaneseq
        %v1040 = vshrl.u32 %v1039, 7
        %v1041 = vsub.s32 %v1038, %v1040
        %v1042 = vrot.slane %v666, %v1041
        %v1044 = vunpack.c.l.s4 1966171168
        %v1045 = vunpack.c.0.s8 %v1044
        %v1046 = vlaneseq
        %v1047 = vshrl.u32 %v1046, 7
        %v1048 = vsub.s32 %v1045, %v1047
        %v1049 = vrot.slane %v1042, %v1048
        %v1051 = vunpack.c.l.s4 1966171168
        %v1052 = vunpack.c.0.s8 %v1051
        %v1053 = vlaneseq
        %v1054 = vshrl.u32 %v1053, 7
        %v1055 = vsub.s32 %v1052, %v1054
        %v1056 = vrot.slane %v680, %v1055
        %v1058 = vunpack.c.l.s4 1966171168
        %v1059 = vunpack.c.0.s8 %v1058
        %v1060 = vlaneseq
        %v1061 = vshrl.u32 %v1060, 7
        %v1062 = vsub.s32 %v1059, %v1061
        %v1063 = vrot.slane %v1056, %v1062
        %v1065 = vunpack.c.l.s4 1966171168
        %v1066 = vunpack.c.0.s8 %v1065
        %v1067 = vlaneseq
        %v1068 = vshrl.u32 %v1067, 7
        %v1069 = vsub.s32 %v1066, %v1068
        %v1070 = vrot.slane %v688, %v1069
        %v1072 = vunpack.c.l.s4 1966171168
        %v1073 = vunpack.c.0.s8 %v1072
        %v1074 = vlaneseq
        %v1075 = vshrl.u32 %v1074, 7
        %v1076 = vsub.s32 %v1073, %v1075
        %v1077 = vrot.slane %v1070, %v1076
        %v1079 = vunpack.c.l.s4 1966171168
        %v1080 = vunpack.c.0.s8 %v1079
        %v1081 = vlaneseq
        %v1082 = vshrl.u32 %v1081, 7
        %v1083 = vsub.s32 %v1080, %v1082
        %v1084 = vrot.slane %v690, %v1083
        %v1086 = vunpack.c.l.s4 1966171168
        %v1087 = vunpack.c.0.s8 %v1086
        %v1088 = vlaneseq
        %v1089 = vshrl.u32 %v1088, 7
        %v1090 = vsub.s32 %v1087, %v1089
        %v1091 = vrot.slane %v1084, %v1090
        %v1093 = vunpack.c.l.s4 1966171168
        %v1094 = vunpack.c.0.s8 %v1093
        %v1095 = vlaneseq
        %v1096 = vshrl.u32 %v1095, 7
        %v1097 = vsub.s32 %v1094, %v1096
        %v1098 = vrot.slane %v715, %v1097
        %v1100 = vunpack.c.l.s4 1966171168
        %v1101 = vunpack.c.0.s8 %v1100
        %v1102 = vlaneseq
        %v1103 = vshrl.u32 %v1102, 7
        %v1104 = vsub.s32 %v1101, %v1103
        %v1105 = vrot.slane %v1098, %v1104
        %v1107 = vunpack.c.l.s4 1966171168
        %v1108 = vunpack.c.0.s8 %v1107
        %v1109 = vlaneseq
        %v1110 = vshrl.u32 %v1109, 7
        %v1111 = vsub.s32 %v1108, %v1110
        %v1112 = vrot.slane %v729, %v1111
        %v1114 = vunpack.c.l.s4 1966171168
        %v1115 = vunpack.c.0.s8 %v1114
        %v1116 = vlaneseq
        %v1117 = vshrl.u32 %v1116, 7
        %v1118 = vsub.s32 %v1115, %v1117
        %v1119 = vrot.slane %v1112, %v1118
        %v1121 = vunpack.c.l.s4 1966171168
        %v1122 = vunpack.c.0.s8 %v1121
        %v1123 = vlaneseq
        %v1124 = vshrl.u32 %v1123, 7
        %v1125 = vsub.s32 %v1122, %v1124
        %v1126 = vrot.slane %v737, %v1125
        %v1128 = vunpack.c.l.s4 1966171168
        %v1129 = vunpack.c.0.s8 %v1128
        %v1130 = vlaneseq
        %v1131 = vshrl.u32 %v1130, 7
        %v1132 = vsub.s32 %v1129, %v1131
        %v1133 = vrot.slane %v1126, %v1132
        %v1135 = vunpack.c.l.s4 1966171168
        %v1136 = vunpack.c.0.s8 %v1135
        %v1137 = vlaneseq
        %v1138 = vshrl.u32 %v1137, 7
        %v1139 = vsub.s32 %v1136, %v1138
        %v1140 = vrot.slane %v739, %v1139
        %v1142 = vunpack.c.l.s4 1966171168
        %v1143 = vunpack.c.0.s8 %v1142
        %v1144 = vlaneseq
        %v1145 = vshrl.u32 %v1144, 7
        %v1146 = vsub.s32 %v1143, %v1145
        %v1147 = vrot.slane %v1140, %v1146
        %v1149 = vunpack.c.l.s4 1966171168
        %v1150 = vunpack.c.0.s8 %v1149
        %v1151 = vlaneseq
        %v1152 = vshrl.u32 %v1151, 7
        %v1153 = vsub.s32 %v1150, %v1152
        %v1154 = vrot.slane %v764, %v1153
        %v1156 = vunpack.c.l.s4 1966171168
        %v1157 = vunpack.c.0.s8 %v1156
        %v1158 = vlaneseq
        %v1159 = vshrl.u32 %v1158, 7
        %v1160 = vsub.s32 %v1157, %v1159
        %v1161 = vrot.slane %v1154, %v1160
        %v1163 = vunpack.c.l.s4 1966171168
        %v1164 = vunpack.c.0.s8 %v1163
        %v1165 = vlaneseq
        %v1166 = vshrl.u32 %v1165, 7
        %v1167 = vsub.s32 %v1164, %v1166
        %v1168 = vrot.slane %v778, %v1167
        %v1170 = vunpack.c.l.s4 1966171168
        %v1171 = vunpack.c.0.s8 %v1170
        %v1172 = vlaneseq
        %v1173 = vshrl.u32 %v1172, 7
        %v1174 = vsub.s32 %v1171, %v1173
        %v1175 = vrot.slane %v1168, %v1174
        %v1177 = vunpack.c.l.s4 1966171168
        %v1178 = vunpack.c.0.s8 %v1177
        %v1179 = vlaneseq
        %v1180 = vshrl.u32 %v1179, 7
        %v1181 = vsub.s32 %v1178, %v1180
        %v1182 = vrot.slane %v786, %v1181
        %v1184 = vunpack.c.l.s4 1966171168
        %v1185 = vunpack.c.0.s8 %v1184
        %v1186 = vlaneseq
        %v1187 = vshrl.u32 %v1186, 7
        %v1188 = vsub.s32 %v1185, %v1187
        %v1189 = vrot.slane %v1182, %v1188
        %v1191 = vunpack.c.l.s4 1966171168
        %v1192 = vunpack.c.0.s8 %v1191
        %v1193 = vlaneseq
        %v1194 = vshrl.u32 %v1193, 7
        %v1195 = vsub.s32 %v1192, %v1194
        %v1196 = vrot.slane %v788, %v1195
        %v1198 = vunpack.c.l.s4 1966171168
        %v1199 = vunpack.c.0.s8 %v1198
        %v1200 = vlaneseq
        %v1201 = vshrl.u32 %v1200, 7
        %v1202 = vsub.s32 %v1199, %v1201
        %v1203 = vrot.slane %v1196, %v1202
        %v1205 = vunpack.c.l.s4 1966171168
        %v1206 = vunpack.c.0.s8 %v1205
        %v1207 = vlaneseq
        %v1208 = vshrl.u32 %v1207, 7
        %v1209 = vsub.s32 %v1206, %v1208
        %v1210 = vrot.slane %v813, %v1209
        %v1212 = vunpack.c.l.s4 1966171168
        %v1213 = vunpack.c.0.s8 %v1212
        %v1214 = vlaneseq
        %v1215 = vshrl.u32 %v1214, 7
        %v1216 = vsub.s32 %v1213, %v1215
        %v1217 = vrot.slane %v1210, %v1216
        %v1219 = vunpack.c.l.s4 1966171168
        %v1220 = vunpack.c.0.s8 %v1219
        %v1221 = vlaneseq
        %v1222 = vshrl.u32 %v1221, 7
        %v1223 = vsub.s32 %v1220, %v1222
        %v1224 = vrot.slane %v827, %v1223
        %v1226 = vunpack.c.l.s4 1966171168
        %v1227 = vunpack.c.0.s8 %v1226
        %v1228 = vlaneseq
        %v1229 = vshrl.u32 %v1228, 7
        %v1230 = vsub.s32 %v1227, %v1229
        %v1231 = vrot.slane %v1224, %v1230
        %v1233 = vunpack.c.l.s4 1966171168
        %v1234 = vunpack.c.0.s8 %v1233
        %v1235 = vlaneseq
        %v1236 = vshrl.u32 %v1235, 7
        %v1237 = vsub.s32 %v1234, %v1236
        %v1238 = vrot.slane %v835, %v1237
        %v1240 = vunpack.c.l.s4 1966171168
        %v1241 = vunpack.c.0.s8 %v1240
        %v1242 = vlaneseq
        %v1243 = vshrl.u32 %v1242, 7
        %v1244 = vsub.s32 %v1241, %v1243
        %v1245 = vrot.slane %v1238, %v1244
        %v1247 = vunpack.c.l.s4 1966171168
        %v1248 = vunpack.c.0.s8 %v1247
        %v1249 = vlaneseq
        %v1250 = vshrl.u32 %v1249, 7
        %v1251 = vsub.s32 %v1248, %v1250
        %v1252 = vrot.slane %v837, %v1251
        %v1254 = vunpack.c.l.s4 1966171168
        %v1255 = vunpack.c.0.s8 %v1254
        %v1256 = vlaneseq
        %v1257 = vshrl.u32 %v1256, 7
        %v1258 = vsub.s32 %v1255, %v1257
        %v1259 = vrot.slane %v1252, %v1258
        %v1261 = vunpack.c.l.s4 1966171168
        %v1262 = vunpack.c.0.s8 %v1261
        %v1263 = vlaneseq
        %v1264 = vshrl.u32 %v1263, 7
        %v1265 = vsub.s32 %v1262, %v1264
        %v1266 = vrot.slane 0, %v1265
        %v1268 = vunpack.c.l.s4 1966171168
        %v1269 = vunpack.c.0.s8 %v1268
        %v1270 = vlaneseq
        %v1271 = vshrl.u32 %v1270, 7
        %v1272 = vsub.s32 %v1269, %v1271
        %v1273 = vrot.slane %v1266, %v1272
        %v1275 = vunpack.c.l.s4 1966171168
        %v1276 = vunpack.c.0.s8 %v1275
        %v1277 = vlaneseq
        %v1278 = vshrl.u32 %v1277, 7
        %v1279 = vsub.s32 %v1276, %v1278
        %v1280 = vrot.slane %v862, %v1279
        %v1282 = vunpack.c.l.s4 1966171168
        %v1283 = vunpack.c.0.s8 %v1282
        %v1284 = vlaneseq
        %v1285 = vshrl.u32 %v1284, 7
        %v1286 = vsub.s32 %v1283, %v1285
        %v1287 = vrot.slane %v1280, %v1286
        %v1289 = vunpack.c.l.s4 1966171168
        %v1290 = vunpack.c.0.s8 %v1289
        %v1291 = vlaneseq
        %v1292 = vshrl.u32 %v1291, 7
        %v1293 = vsub.s32 %v1290, %v1292
        %v1294 = vrot.slane %v876, %v1293
        %v1296 = vunpack.c.l.s4 1966171168
        %v1297 = vunpack.c.0.s8 %v1296
        %v1298 = vlaneseq
        %v1299 = vshrl.u32 %v1298, 7
        %v1300 = vsub.s32 %v1297, %v1299
        %v1301 = vrot.slane %v1294, %v1300
        %v1303 = vunpack.c.l.s4 1966171168
        %v1304 = vunpack.c.0.s8 %v1303
        %v1305 = vlaneseq
        %v1306 = vshrl.u32 %v1305, 7
        %v1307 = vsub.s32 %v1304, %v1306
        %v1308 = vrot.slane %v884, %v1307
        %v1310 = vunpack.c.l.s4 1966171168
        %v1311 = vunpack.c.0.s8 %v1310
        %v1312 = vlaneseq
        %v1313 = vshrl.u32 %v1312, 7
        %v1314 = vsub.s32 %v1311, %v1313
        %v1315 = vrot.slane %v1308, %v1314
        %v1317 = vunpack.c.l.s4 1966171168
        %v1318 = vunpack.c.0.s8 %v1317
        %v1319 = vlaneseq
        %v1320 = vshrl.u32 %v1319, 7
        %v1321 = vsub.s32 %v1318, %v1320
        %v1322 = vrot.slane %v886, %v1321
        %v1324 = vunpack.c.l.s4 1966171168
        %v1325 = vunpack.c.0.s8 %v1324
        %v1326 = vlaneseq
        %v1327 = vshrl.u32 %v1326, 7
        %v1328 = vsub.s32 %v1325, %v1327
        %v1329 = vrot.slane %v1322, %v1328
        %v1331 = vunpack.c.l.s4 1966171168
        %v1332 = vunpack.c.0.s8 %v1331
        %v1333 = vlaneseq
        %v1334 = vshrl.u32 %v1333, 7
        %v1335 = vsub.s32 %v1332, %v1334
        %v1336 = vrot.slane %v911, %v1335
        %v1338 = vunpack.c.l.s4 1966171168
        %v1339 = vunpack.c.0.s8 %v1338
        %v1340 = vlaneseq
        %v1341 = vshrl.u32 %v1340, 7
        %v1342 = vsub.s32 %v1339, %v1341
        %v1343 = vrot.slane %v1336, %v1342
        %v1345 = vunpack.c.l.s4 1966171168
        %v1346 = vunpack.c.0.s8 %v1345
        %v1347 = vlaneseq
        %v1348 = vshrl.u32 %v1347, 7
        %v1349 = vsub.s32 %v1346, %v1348
        %v1350 = vrot.slane %v925, %v1349
        %v1352 = vunpack.c.l.s4 1966171168
        %v1353 = vunpack.c.0.s8 %v1352
        %v1354 = vlaneseq
        %v1355 = vshrl.u32 %v1354, 7
        %v1356 = vsub.s32 %v1353, %v1355
        %v1357 = vrot.slane %v1350, %v1356
        %v1359 = vunpack.c.l.s4 1966171168
        %v1360 = vunpack.c.0.s8 %v1359
        %v1361 = vlaneseq
        %v1362 = vshrl.u32 %v1361, 7
        %v1363 = vsub.s32 %v1360, %v1362
        %v1364 = vrot.slane %v933, %v1363
        %v1366 = vunpack.c.l.s4 1966171168
        %v1367 = vunpack.c.0.s8 %v1366
        %v1368 = vlaneseq
        %v1369 = vshrl.u32 %v1368, 7
        %v1370 = vsub.s32 %v1367, %v1369
        %v1371 = vrot.slane %v1364, %v1370
        %v1373 = vunpack.c.l.s4 1966171168
        %v1374 = vunpack.c.0.s8 %v1373
        %v1375 = vlaneseq
        %v1376 = vshrl.u32 %v1375, 7
        %v1377 = vsub.s32 %v1374, %v1376
        %v1378 = vrot.slane %v935, %v1377
        %v1380 = vunpack.c.l.s4 1966171168
        %v1381 = vunpack.c.0.s8 %v1380
        %v1382 = vlaneseq
        %v1383 = vshrl.u32 %v1382, 7
        %v1384 = vsub.s32 %v1381, %v1383
        %v1385 = vrot.slane %v1378, %v1384
        %v1387 = vunpack.c.l.s4 1966171168
        %v1388 = vunpack.c.0.s8 %v1387
        %v1389 = vlaneseq
        %v1390 = vshrl.u32 %v1389, 7
        %v1391 = vsub.s32 %v1388, %v1390
        %v1392 = vrot.slane %v960, %v1391
        %v1394 = vunpack.c.l.s4 1966171168
        %v1395 = vunpack.c.0.s8 %v1394
        %v1396 = vlaneseq
        %v1397 = vshrl.u32 %v1396, 7
        %v1398 = vsub.s32 %v1395, %v1397
        %v1399 = vrot.slane %v1392, %v1398
        %v1401 = vunpack.c.l.s4 1966171168
        %v1402 = vunpack.c.0.s8 %v1401
        %v1403 = vlaneseq
        %v1404 = vshrl.u32 %v1403, 7
        %v1405 = vsub.s32 %v1402, %v1404
        %v1406 = vrot.slane %v974, %v1405
        %v1408 = vunpack.c.l.s4 1966171168
        %v1409 = vunpack.c.0.s8 %v1408
        %v1410 = vlaneseq
        %v1411 = vshrl.u32 %v1410, 7
        %v1412 = vsub.s32 %v1409, %v1411
        %v1413 = vrot.slane %v1406, %v1412
        %v1415 = vunpack.c.l.s4 1966171168
        %v1416 = vunpack.c.0.s8 %v1415
        %v1417 = vlaneseq
        %v1418 = vshrl.u32 %v1417, 7
        %v1419 = vsub.s32 %v1416, %v1418
        %v1420 = vrot.slane %v982, %v1419
        %v1422 = vunpack.c.l.s4 1966171168
        %v1423 = vunpack.c.0.s8 %v1422
        %v1424 = vlaneseq
        %v1425 = vshrl.u32 %v1424, 7
        %v1426 = vsub.s32 %v1423, %v1425
        %v1427 = vrot.slane %v1420, %v1426
        %v1429 = vunpack.c.l.s4 1966171168
        %v1430 = vunpack.c.0.s8 %v1429
        %v1431 = vlaneseq
        %v1432 = vshrl.u32 %v1431, 7
        %v1433 = vsub.s32 %v1430, %v1432
        %v1434 = vrot.slane %v984, %v1433
        %v1436 = vunpack.c.l.s4 1966171168
        %v1437 = vunpack.c.0.s8 %v1436
        %v1438 = vlaneseq
        %v1439 = vshrl.u32 %v1438, 7
        %v1440 = vsub.s32 %v1437, %v1439
        %v1441 = vrot.slane %v1434, %v1440
        %v1443 = vunpack.c.l.s4 1966171168
        %v1444 = vunpack.c.0.s8 %v1443
        %v1445 = vlaneseq
        %v1446 = vshrl.u32 %v1445, 7
        %v1447 = vsub.s32 %v1444, %v1446
        %v1448 = vrot.slane %v1009, %v1447
        %v1450 = vunpack.c.l.s4 1966171168
        %v1451 = vunpack.c.0.s8 %v1450
        %v1452 = vlaneseq
        %v1453 = vshrl.u32 %v1452, 7
        %v1454 = vsub.s32 %v1451, %v1453
        %v1455 = vrot.slane %v1448, %v1454
        %v1457 = vunpack.c.l.s4 1966171168
        %v1458 = vunpack.c.0.s8 %v1457
        %v1459 = vlaneseq
        %v1460 = vshrl.u32 %v1459, 7
        %v1461 = vsub.s32 %v1458, %v1460
        %v1462 = vrot.slane %v1023, %v1461
        %v1464 = vunpack.c.l.s4 1966171168
        %v1465 = vunpack.c.0.s8 %v1464
        %v1466 = vlaneseq
        %v1467 = vshrl.u32 %v1466, 7
        %v1468 = vsub.s32 %v1465, %v1467
        %v1469 = vrot.slane %v1462, %v1468
        %v1471 = vunpack.c.l.s4 1966171168
        %v1472 = vunpack.c.0.s8 %v1471
        %v1473 = vlaneseq
        %v1474 = vshrl.u32 %v1473, 7
        %v1475 = vsub.s32 %v1472, %v1474
        %v1476 = vrot.slane %v1031, %v1475
        %v1478 = vunpack.c.l.s4 1966171168
        %v1479 = vunpack.c.0.s8 %v1478
        %v1480 = vlaneseq
        %v1481 = vshrl.u32 %v1480, 7
        %v1482 = vsub.s32 %v1479, %v1481
        %v1483 = vrot.slane %v1476, %v1482
        %v1485 = vunpack.c.l.s4 1966171168
        %v1486 = vunpack.c.0.s8 %v1485
        %v1487 = vlaneseq
        %v1488 = vshrl.u32 %v1487, 7
        %v1489 = vsub.s32 %v1486, %v1488
        %v1490 = vrot.slane %v1033, %v1489
        %v1492 = vunpack.c.l.s4 1966171168
        %v1493 = vunpack.c.0.s8 %v1492
        %v1494 = vlaneseq
        %v1495 = vshrl.u32 %v1494, 7
        %v1496 = vsub.s32 %v1493, %v1495
        %v1497 = vrot.slane %v1490, %v1496
        %v1498 = vunpack.c.l.b16 %v1049
        %v1499 = vunpack.c.l.b16 %v1063
        %v1500 = vunpack.c.l.b16 %v1077
        %v1501 = vunpack.c.l.b16 %v1091
        %v1502 = vunpack.c.l.b16 %v1105
        %v1503 = vunpack.c.l.b16 %v1119
        %v1504 = vunpack.c.l.b16 %v1133
        %v1505 = vunpack.c.l.b16 %v1147
        %v1506 = vunpack.c.l.b16 %v1161
        %v1507 = vunpack.c.l.b16 %v1175
        %v1508 = vunpack.c.l.b16 %v1189
        %v1509 = vunpack.c.l.b16 %v1203
        %v1510 = vunpack.c.l.b16 %v1217
        %v1511 = vunpack.c.l.b16 %v1231
        %v1512 = vunpack.c.l.b16 %v1245
        %v1513 = vunpack.c.l.b16 %v1259
        %v1514 = vunpack.c.l.b16 %v1273
        %v1515 = vunpack.c.l.b16 %v1287
        %v1516 = vunpack.c.l.b16 %v1301
        %v1517 = vunpack.c.l.b16 %v1315
        %v1518 = vunpack.c.l.b16 %v1329
        %v1519 = vunpack.c.l.b16 %v1343
        %v1520 = vunpack.c.l.b16 %v1357
        %v1521 = vunpack.c.l.b16 %v1371
        %v1522 = vunpack.c.l.b16 %v1385
        %v1523 = vunpack.c.l.b16 %v1399
        %v1524 = vunpack.c.l.b16 %v1413
        %v1525 = vunpack.c.l.b16 %v1427
        %v1526 = vunpack.c.l.b16 %v1441
        %v1527 = vunpack.c.l.b16 %v1455
        %v1528 = vunpack.c.l.b16 %v1469
        %v1529 = vunpack.c.l.b16 %v1483
        %v1530 = vunpack.c.l.b16 %v1497
        %v1531 = vrot.slane %v1499, 7
        %vm1532 = vcmask 1041409
        %v1533 = vsel %vm1532, %v1531, %v1498
        %v1534 = vrot.slane %v1500, 6
        %vm1535 = vcmask 1042434
        %v1536 = vsel %vm1535, %v1534, %v1533
        %v1537 = vrot.slane %v1501, 5
        %vm1538 = vcmask 1043459
        %v1539 = vsel %vm1538, %v1537, %v1536
        %v1540 = vrot.slane %v1503, 7
        %v1541 = vsel %vm1532, %v1540, %v1502
        %v1542 = vrot.slane %v1504, 6
        %v1543 = vsel %vm1535, %v1542, %v1541
        %v1544 = vrot.slane %v1505, 5
        %v1545 = vsel %vm1538, %v1544, %v1543
        %v1546 = vrot.slane %v1507, 7
        %v1547 = vsel %vm1532, %v1546, %v1506
        %v1548 = vrot.slane %v1508, 6
        %v1549 = vsel %vm1535, %v1548, %v1547
        %v1550 = vrot.slane %v1509, 5
        %v1551 = vsel %vm1538, %v1550, %v1549
        %v1552 = vrot.slane %v1511, 7
        %v1553 = vsel %vm1532, %v1552, %v1510
        %v1554 = vrot.slane %v1512, 6
        %v1555 = vsel %vm1535, %v1554, %v1553
        %v1556 = vrot.slane %v1513, 5
        %v1557 = vsel %vm1538, %v1556, %v1555
        %v1558 = vrot.slane %v1514, 7
        %v1559 = vsel %vm1532, %v1558, %v1514
        %v1560 = vrot.slane %v1514, 6
        %v1561 = vsel %vm1535, %v1560, %v1559
        %v1562 = vrot.slane %v1514, 5
        %v1563 = vsel %vm1538, %v1562, %v1561
        %v1564 = vrot.slane %v1516, 7
        %v1565 = vsel %vm1532, %v1564, %v1515
        %v1566 = vrot.slane %v1517, 6
        %v1567 = vsel %vm1535, %v1566, %v1565
        %v1568 = vrot.slane %v1518, 5
        %v1569 = vsel %vm1538, %v1568, %v1567
        %v1570 = vrot.slane %v1520, 7
        %v1571 = vsel %vm1532, %v1570, %v1519
        %v1572 = vrot.slane %v1521, 6
        %v1573 = vsel %vm1535, %v1572, %v1571
        %v1574 = vrot.slane %v1522, 5
        %v1575 = vsel %vm1538, %v1574, %v1573
        %v1576 = vrot.slane %v1524, 7
        %v1577 = vsel %vm1532, %v1576, %v1523
        %v1578 = vrot.slane %v1525, 6
        %v1579 = vsel %vm1535, %v1578, %v1577
        %v1580 = vrot.slane %v1526, 5
        %v1581 = vsel %vm1538, %v1580, %v1579
        %v1582 = vrot.slane %v1528, 7
        %v1583 = vsel %vm1532, %v1582, %v1527
        %v1584 = vrot.slane %v1529, 6
        %v1585 = vsel %vm1535, %v1584, %v1583
        %v1586 = vrot.slane %v1530, 5
        %v1587 = vsel %vm1538, %v1586, %v1585
        %v1588 = vpack.c.b16 %v1539, %v1539
        %v1589 = vpack.c.b16 %v1545, %v1545
        %v1590 = vpack.c.b16 %v1551, %v1551
        %v1591 = vpack.c.b16 %v1557, %v1557
        %v1592 = vpack.c.b16 %v1563, %v1563
        %v1593 = vpack.c.b16 %v1569, %v1569
        %v1594 = vpack.c.b16 %v1575, %v1575
        %v1595 = vpack.c.b16 %v1581, %v1581
        %v1596 = vpack.c.b16 %v1587, %v1587
        %vm1597 = vcmask 1041408
        %v1600 = vsel %vm1597, %v1588, 0
        %v1603 = vsel %vm1597, %v1589, 0
        %v1606 = vsel %vm1597, %v1590, 0
        %v1609 = vsel %vm1597, %v1591, 0
        %v1612 = vsel %vm1597, %v1592, 0
        %v1615 = vsel %vm1597, %v1593, 0
        %v1618 = vsel %vm1597, %v1594, 0
        %v1621 = vsel %vm1597, %v1595, 0
        %v1624 = vsel %vm1597, %v1596, 0
        %s1626 = scalar_lea.vmem [#allocation2], 60
        %vm1627 = vcmask 518144
        %vm1628 = vsmask.f32 2304
        %vm1629 = vmand %vm1627, %vm1628
        %v1630 = vld [vmem:[%s1626] sm:$0x7]
        %v1631 = vsel %vm1629, %v1600, %v1630
        %1632 = vst [vmem:[%s1626] sm:$0x7] %v1631
        %v1633 = vld [vmem:[%s1626 + $0x4] sm:$0x7]
        %v1634 = vsel %vm1629, %v1603, %v1633
        %1635 = vst [vmem:[%s1626 + $0x4] sm:$0x7] %v1634
        %v1636 = vld [vmem:[%s1626 + $0x8] sm:$0x7]
        %v1637 = vsel %vm1629, %v1606, %v1636
        %1638 = vst [vmem:[%s1626 + $0x8] sm:$0x7] %v1637
        %v1639 = vld [vmem:[%s1626 + $0xc] sm:$0x7]
        %v1640 = vsel %vm1629, %v1609, %v1639
        %1641 = vst [vmem:[%s1626 + $0xc] sm:$0x7] %v1640
        %v1642 = vld [vmem:[%s1626 + $0x10] sm:$0x7]
        %v1643 = vsel %vm1629, %v1612, %v1642
        %1644 = vst [vmem:[%s1626 + $0x10] sm:$0x7] %v1643
        %v1645 = vld [vmem:[%s1626 + $0x50] sm:$0x7]
        %v1646 = vsel %vm1629, %v1615, %v1645
        %1647 = vst [vmem:[%s1626 + $0x50] sm:$0x7] %v1646
        %v1648 = vld [vmem:[%s1626 + $0x54] sm:$0x7]
        %v1649 = vsel %vm1629, %v1618, %v1648
        %1650 = vst [vmem:[%s1626 + $0x54] sm:$0x7] %v1649
        %v1651 = vld [vmem:[%s1626 + $0x58] sm:$0x7]
        %v1652 = vsel %vm1629, %v1621, %v1651
        %1653 = vst [vmem:[%s1626 + $0x58] sm:$0x7] %v1652
        %v1654 = vld [vmem:[%s1626 + $0x5c] sm:$0x7]
        %v1655 = vsel %vm1629, %v1624, %v1654
        %1656 = vst [vmem:[%s1626 + $0x5c] sm:$0x7] %v1655
        %v1657 = vld [vmem:[%s1626 + $0x60] sm:$0x7]
        %v1658 = vsel %vm1629, %v1612, %v1657
        %1659 = vst [vmem:[%s1626 + $0x60] sm:$0x7] %v1658
        %v1660 = vsel %vm1535, %v1531, %v1498
        %v1661 = vsel %vm1538, %v1534, %v1660
        %vm1662 = vcmask 1044484
        %v1663 = vsel %vm1662, %v1537, %v1661
        %v1664 = vsel %vm1535, %v1540, %v1502
        %v1665 = vsel %vm1538, %v1542, %v1664
        %v1666 = vsel %vm1662, %v1544, %v1665
        %v1667 = vsel %vm1535, %v1546, %v1506
        %v1668 = vsel %vm1538, %v1548, %v1667
        %v1669 = vsel %vm1662, %v1550, %v1668
        %v1670 = vsel %vm1535, %v1552, %v1510
        %v1671 = vsel %vm1538, %v1554, %v1670
        %v1672 = vsel %vm1662, %v1556, %v1671
        %v1673 = vsel %vm1535, %v1558, %v1514
        %v1674 = vsel %vm1538, %v1560, %v1673
        %v1675 = vsel %vm1662, %v1562, %v1674
        %v1676 = vsel %vm1535, %v1564, %v1515
        %v1677 = vsel %vm1538, %v1566, %v1676
        %v1678 = vsel %vm1662, %v1568, %v1677
        %v1679 = vsel %vm1535, %v1570, %v1519
        %v1680 = vsel %vm1538, %v1572, %v1679
        %v1681 = vsel %vm1662, %v1574, %v1680
        %v1682 = vsel %vm1535, %v1576, %v1523
        %v1683 = vsel %vm1538, %v1578, %v1682
        %v1684 = vsel %vm1662, %v1580, %v1683
        %v1685 = vsel %vm1535, %v1582, %v1527
        %v1686 = vsel %vm1538, %v1584, %v1685
        %v1687 = vsel %vm1662, %v1586, %v1686
        %v1688 = vpack.c.b16 %v1663, %v1663
        %v1689 = vpack.c.b16 %v1666, %v1666
        %v1690 = vpack.c.b16 %v1669, %v1669
        %v1691 = vpack.c.b16 %v1672, %v1672
        %v1692 = vpack.c.b16 %v1675, %v1675
        %v1693 = vpack.c.b16 %v1678, %v1678
        %v1694 = vpack.c.b16 %v1681, %v1681
        %v1695 = vpack.c.b16 %v1684, %v1684
        %v1696 = vpack.c.b16 %v1687, %v1687
        %vm1706 = vcmask 1040384
        %vm1707 = vsmask.f32 256
        %vm1708 = vmand %vm1706, %vm1707
        %v1709 = vsel %vm1708, 0, %v1688
        %v1710 = vsel %vm1708, 0, %v1689
        %v1711 = vsel %vm1708, 0, %v1690
        %v1712 = vsel %vm1708, 0, %v1691
        %v1713 = vsel %vm1708, 0, %v1692
        %v1714 = vsel %vm1708, 0, %v1693
        %v1715 = vsel %vm1708, 0, %v1694
        %v1716 = vsel %vm1708, 0, %v1695
        %v1717 = vsel %vm1708, 0, %v1696
        %s1718 = scalar_lea.vmem [#allocation2], 40
        %v1719 = vld [vmem:[%s1718] sm:$0x7]
        %v1720 = vsel %vm1629, %v1709, %v1719
        %1721 = vst [vmem:[%s1718] sm:$0x7] %v1720
        %v1722 = vld [vmem:[%s1718 + $0x4] sm:$0x7]
        %v1723 = vsel %vm1629, %v1710, %v1722
        %1724 = vst [vmem:[%s1718 + $0x4] sm:$0x7] %v1723
        %v1725 = vld [vmem:[%s1718 + $0x8] sm:$0x7]
        %v1726 = vsel %vm1629, %v1711, %v1725
        %1727 = vst [vmem:[%s1718 + $0x8] sm:$0x7] %v1726
        %v1728 = vld [vmem:[%s1718 + $0xc] sm:$0x7]
        %v1729 = vsel %vm1629, %v1712, %v1728
        %1730 = vst [vmem:[%s1718 + $0xc] sm:$0x7] %v1729
        %v1731 = vld [vmem:[%s1718 + $0x10] sm:$0x7]
        %v1732 = vsel %vm1629, %v1713, %v1731
        %1733 = vst [vmem:[%s1718 + $0x10] sm:$0x7] %v1732
        %v1734 = vld [vmem:[%s1718 + $0x50] sm:$0x7]
        %v1735 = vsel %vm1629, %v1714, %v1734
        %1736 = vst [vmem:[%s1718 + $0x50] sm:$0x7] %v1735
        %v1737 = vld [vmem:[%s1718 + $0x54] sm:$0x7]
        %v1738 = vsel %vm1629, %v1715, %v1737
        %1739 = vst [vmem:[%s1718 + $0x54] sm:$0x7] %v1738
        %v1740 = vld [vmem:[%s1718 + $0x58] sm:$0x7]
        %v1741 = vsel %vm1629, %v1716, %v1740
        %1742 = vst [vmem:[%s1718 + $0x58] sm:$0x7] %v1741
        %v1743 = vld [vmem:[%s1718 + $0x5c] sm:$0x7]
        %v1744 = vsel %vm1629, %v1717, %v1743
        %1745 = vst [vmem:[%s1718 + $0x5c] sm:$0x7] %v1744
        %v1746 = vld [vmem:[%s1718 + $0x60] sm:$0x7]
        %v1747 = vsel %vm1629, %v1713, %v1746
        %1748 = vst [vmem:[%s1718 + $0x60] sm:$0x7] %v1747
        %v1750 = vunpack.c.l.s4 1966171168
        %v1751 = vunpack.c.0.s8 %v1750
        %v1752 = vlaneseq
        %v1753 = vshrl.u32 %v1752, 7
        %v1754 = vsub.s32 %v1751, %v1753
        %v1755 = vrot.slane %v673, %v1754
        %v1757 = vunpack.c.l.s4 1966171168
        %v1758 = vunpack.c.0.s8 %v1757
        %v1759 = vlaneseq
        %v1760 = vshrl.u32 %v1759, 7
        %v1761 = vsub.s32 %v1758, %v1760
        %v1762 = vrot.slane %v1755, %v1761
        %v1764 = vunpack.c.l.s4 1966171168
        %v1765 = vunpack.c.0.s8 %v1764
        %v1766 = vlaneseq
        %v1767 = vshrl.u32 %v1766, 7
        %v1768 = vsub.s32 %v1765, %v1767
        %v1769 = vrot.slane %v687, %v1768
        %v1771 = vunpack.c.l.s4 1966171168
        %v1772 = vunpack.c.0.s8 %v1771
        %v1773 = vlaneseq
        %v1774 = vshrl.u32 %v1773, 7
        %v1775 = vsub.s32 %v1772, %v1774
        %v1776 = vrot.slane %v1769, %v1775
        %v1778 = vunpack.c.l.s4 1966171168
        %v1779 = vunpack.c.0.s8 %v1778
        %v1780 = vlaneseq
        %v1781 = vshrl.u32 %v1780, 7
        %v1782 = vsub.s32 %v1779, %v1781
        %v1783 = vrot.slane %v689, %v1782
        %v1785 = vunpack.c.l.s4 1966171168
        %v1786 = vunpack.c.0.s8 %v1785
        %v1787 = vlaneseq
        %v1788 = vshrl.u32 %v1787, 7
        %v1789 = vsub.s32 %v1786, %v1788
        %v1790 = vrot.slane %v1783, %v1789
        %v1792 = vunpack.c.l.s4 1966171168
        %v1793 = vunpack.c.0.s8 %v1792
        %v1794 = vlaneseq
        %v1795 = vshrl.u32 %v1794, 7
        %v1796 = vsub.s32 %v1793, %v1795
        %v1797 = vrot.slane %v691, %v1796
        %v1799 = vunpack.c.l.s4 1966171168
        %v1800 = vunpack.c.0.s8 %v1799
        %v1801 = vlaneseq
        %v1802 = vshrl.u32 %v1801, 7
        %v1803 = vsub.s32 %v1800, %v1802
        %v1804 = vrot.slane %v1797, %v1803
        %v1806 = vunpack.c.l.s4 1966171168
        %v1807 = vunpack.c.0.s8 %v1806
        %v1808 = vlaneseq
        %v1809 = vshrl.u32 %v1808, 7
        %v1810 = vsub.s32 %v1807, %v1809
        %v1811 = vrot.slane %v722, %v1810
        %v1813 = vunpack.c.l.s4 1966171168
        %v1814 = vunpack.c.0.s8 %v1813
        %v1815 = vlaneseq
        %v1816 = vshrl.u32 %v1815, 7
        %v1817 = vsub.s32 %v1814, %v1816
        %v1818 = vrot.slane %v1811, %v1817
        %v1820 = vunpack.c.l.s4 1966171168
        %v1821 = vunpack.c.0.s8 %v1820
        %v1822 = vlaneseq
        %v1823 = vshrl.u32 %v1822, 7
        %v1824 = vsub.s32 %v1821, %v1823
        %v1825 = vrot.slane %v736, %v1824
        %v1827 = vunpack.c.l.s4 1966171168
        %v1828 = vunpack.c.0.s8 %v1827
        %v1829 = vlaneseq
        %v1830 = vshrl.u32 %v1829, 7
        %v1831 = vsub.s32 %v1828, %v1830
        %v1832 = vrot.slane %v1825, %v1831
        %v1834 = vunpack.c.l.s4 1966171168
        %v1835 = vunpack.c.0.s8 %v1834
        %v1836 = vlaneseq
        %v1837 = vshrl.u32 %v1836, 7
        %v1838 = vsub.s32 %v1835, %v1837
        %v1839 = vrot.slane %v738, %v1838
        %v1841 = vunpack.c.l.s4 1966171168
        %v1842 = vunpack.c.0.s8 %v1841
        %v1843 = vlaneseq
        %v1844 = vshrl.u32 %v1843, 7
        %v1845 = vsub.s32 %v1842, %v1844
        %v1846 = vrot.slane %v1839, %v1845
        %v1848 = vunpack.c.l.s4 1966171168
        %v1849 = vunpack.c.0.s8 %v1848
        %v1850 = vlaneseq
        %v1851 = vshrl.u32 %v1850, 7
        %v1852 = vsub.s32 %v1849, %v1851
        %v1853 = vrot.slane %v740, %v1852
        %v1855 = vunpack.c.l.s4 1966171168
        %v1856 = vunpack.c.0.s8 %v1855
        %v1857 = vlaneseq
        %v1858 = vshrl.u32 %v1857, 7
        %v1859 = vsub.s32 %v1856, %v1858
        %v1860 = vrot.slane %v1853, %v1859
        %v1862 = vunpack.c.l.s4 1966171168
        %v1863 = vunpack.c.0.s8 %v1862
        %v1864 = vlaneseq
        %v1865 = vshrl.u32 %v1864, 7
        %v1866 = vsub.s32 %v1863, %v1865
        %v1867 = vrot.slane %v771, %v1866
        %v1869 = vunpack.c.l.s4 1966171168
        %v1870 = vunpack.c.0.s8 %v1869
        %v1871 = vlaneseq
        %v1872 = vshrl.u32 %v1871, 7
        %v1873 = vsub.s32 %v1870, %v1872
        %v1874 = vrot.slane %v1867, %v1873
        %v1876 = vunpack.c.l.s4 1966171168
        %v1877 = vunpack.c.0.s8 %v1876
        %v1878 = vlaneseq
        %v1879 = vshrl.u32 %v1878, 7
        %v1880 = vsub.s32 %v1877, %v1879
        %v1881 = vrot.slane %v785, %v1880
        %v1883 = vunpack.c.l.s4 1966171168
        %v1884 = vunpack.c.0.s8 %v1883
        %v1885 = vlaneseq
        %v1886 = vshrl.u32 %v1885, 7
        %v1887 = vsub.s32 %v1884, %v1886
        %v1888 = vrot.slane %v1881, %v1887
        %v1890 = vunpack.c.l.s4 1966171168
        %v1891 = vunpack.c.0.s8 %v1890
        %v1892 = vlaneseq
        %v1893 = vshrl.u32 %v1892, 7
        %v1894 = vsub.s32 %v1891, %v1893
        %v1895 = vrot.slane %v787, %v1894
        %v1897 = vunpack.c.l.s4 1966171168
        %v1898 = vunpack.c.0.s8 %v1897
        %v1899 = vlaneseq
        %v1900 = vshrl.u32 %v1899, 7
        %v1901 = vsub.s32 %v1898, %v1900
        %v1902 = vrot.slane %v1895, %v1901
        %v1904 = vunpack.c.l.s4 1966171168
        %v1905 = vunpack.c.0.s8 %v1904
        %v1906 = vlaneseq
        %v1907 = vshrl.u32 %v1906, 7
        %v1908 = vsub.s32 %v1905, %v1907
        %v1909 = vrot.slane %v789, %v1908
        %v1911 = vunpack.c.l.s4 1966171168
        %v1912 = vunpack.c.0.s8 %v1911
        %v1913 = vlaneseq
        %v1914 = vshrl.u32 %v1913, 7
        %v1915 = vsub.s32 %v1912, %v1914
        %v1916 = vrot.slane %v1909, %v1915
        %v1918 = vunpack.c.l.s4 1966171168
        %v1919 = vunpack.c.0.s8 %v1918
        %v1920 = vlaneseq
        %v1921 = vshrl.u32 %v1920, 7
        %v1922 = vsub.s32 %v1919, %v1921
        %v1923 = vrot.slane %v820, %v1922
        %v1925 = vunpack.c.l.s4 1966171168
        %v1926 = vunpack.c.0.s8 %v1925
        %v1927 = vlaneseq
        %v1928 = vshrl.u32 %v1927, 7
        %v1929 = vsub.s32 %v1926, %v1928
        %v1930 = vrot.slane %v1923, %v1929
        %v1932 = vunpack.c.l.s4 1966171168
        %v1933 = vunpack.c.0.s8 %v1932
        %v1934 = vlaneseq
        %v1935 = vshrl.u32 %v1934, 7
        %v1936 = vsub.s32 %v1933, %v1935
        %v1937 = vrot.slane %v834, %v1936
        %v1939 = vunpack.c.l.s4 1966171168
        %v1940 = vunpack.c.0.s8 %v1939
        %v1941 = vlaneseq
        %v1942 = vshrl.u32 %v1941, 7
        %v1943 = vsub.s32 %v1940, %v1942
        %v1944 = vrot.slane %v1937, %v1943
        %v1946 = vunpack.c.l.s4 1966171168
        %v1947 = vunpack.c.0.s8 %v1946
        %v1948 = vlaneseq
        %v1949 = vshrl.u32 %v1948, 7
        %v1950 = vsub.s32 %v1947, %v1949
        %v1951 = vrot.slane %v836, %v1950
        %v1953 = vunpack.c.l.s4 1966171168
        %v1954 = vunpack.c.0.s8 %v1953
        %v1955 = vlaneseq
        %v1956 = vshrl.u32 %v1955, 7
        %v1957 = vsub.s32 %v1954, %v1956
        %v1958 = vrot.slane %v1951, %v1957
        %v1960 = vunpack.c.l.s4 1966171168
        %v1961 = vunpack.c.0.s8 %v1960
        %v1962 = vlaneseq
        %v1963 = vshrl.u32 %v1962, 7
        %v1964 = vsub.s32 %v1961, %v1963
        %v1965 = vrot.slane %v838, %v1964
        %v1967 = vunpack.c.l.s4 1966171168
        %v1968 = vunpack.c.0.s8 %v1967
        %v1969 = vlaneseq
        %v1970 = vshrl.u32 %v1969, 7
        %v1971 = vsub.s32 %v1968, %v1970
        %v1972 = vrot.slane %v1965, %v1971
        %v1974 = vunpack.c.l.s4 1966171168
        %v1975 = vunpack.c.0.s8 %v1974
        %v1976 = vlaneseq
        %v1977 = vshrl.u32 %v1976, 7
        %v1978 = vsub.s32 %v1975, %v1977
        %v1979 = vrot.slane %v869, %v1978
        %v1981 = vunpack.c.l.s4 1966171168
        %v1982 = vunpack.c.0.s8 %v1981
        %v1983 = vlaneseq
        %v1984 = vshrl.u32 %v1983, 7
        %v1985 = vsub.s32 %v1982, %v1984
        %v1986 = vrot.slane %v1979, %v1985
        %v1988 = vunpack.c.l.s4 1966171168
        %v1989 = vunpack.c.0.s8 %v1988
        %v1990 = vlaneseq
        %v1991 = vshrl.u32 %v1990, 7
        %v1992 = vsub.s32 %v1989, %v1991
        %v1993 = vrot.slane %v883, %v1992
        %v1995 = vunpack.c.l.s4 1966171168
        %v1996 = vunpack.c.0.s8 %v1995
        %v1997 = vlaneseq
        %v1998 = vshrl.u32 %v1997, 7
        %v1999 = vsub.s32 %v1996, %v1998
        %v2000 = vrot.slane %v1993, %v1999
        %v2002 = vunpack.c.l.s4 1966171168
        %v2003 = vunpack.c.0.s8 %v2002
        %v2004 = vlaneseq
        %v2005 = vshrl.u32 %v2004, 7
        %v2006 = vsub.s32 %v2003, %v2005
        %v2007 = vrot.slane %v885, %v2006
        %v2009 = vunpack.c.l.s4 1966171168
        %v2010 = vunpack.c.0.s8 %v2009
        %v2011 = vlaneseq
        %v2012 = vshrl.u32 %v2011, 7
        %v2013 = vsub.s32 %v2010, %v2012
        %v2014 = vrot.slane %v2007, %v2013
        %v2016 = vunpack.c.l.s4 1966171168
        %v2017 = vunpack.c.0.s8 %v2016
        %v2018 = vlaneseq
        %v2019 = vshrl.u32 %v2018, 7
        %v2020 = vsub.s32 %v2017, %v2019
        %v2021 = vrot.slane %v887, %v2020
        %v2023 = vunpack.c.l.s4 1966171168
        %v2024 = vunpack.c.0.s8 %v2023
        %v2025 = vlaneseq
        %v2026 = vshrl.u32 %v2025, 7
        %v2027 = vsub.s32 %v2024, %v2026
        %v2028 = vrot.slane %v2021, %v2027
        %v2030 = vunpack.c.l.s4 1966171168
        %v2031 = vunpack.c.0.s8 %v2030
        %v2032 = vlaneseq
        %v2033 = vshrl.u32 %v2032, 7
        %v2034 = vsub.s32 %v2031, %v2033
        %v2035 = vrot.slane %v918, %v2034
        %v2037 = vunpack.c.l.s4 1966171168
        %v2038 = vunpack.c.0.s8 %v2037
        %v2039 = vlaneseq
        %v2040 = vshrl.u32 %v2039, 7
        %v2041 = vsub.s32 %v2038, %v2040
        %v2042 = vrot.slane %v2035, %v2041
        %v2044 = vunpack.c.l.s4 1966171168
        %v2045 = vunpack.c.0.s8 %v2044
        %v2046 = vlaneseq
        %v2047 = vshrl.u32 %v2046, 7
        %v2048 = vsub.s32 %v2045, %v2047
        %v2049 = vrot.slane %v932, %v2048
        %v2051 = vunpack.c.l.s4 1966171168
        %v2052 = vunpack.c.0.s8 %v2051
        %v2053 = vlaneseq
        %v2054 = vshrl.u32 %v2053, 7
        %v2055 = vsub.s32 %v2052, %v2054
        %v2056 = vrot.slane %v2049, %v2055
        %v2058 = vunpack.c.l.s4 1966171168
        %v2059 = vunpack.c.0.s8 %v2058
        %v2060 = vlaneseq
        %v2061 = vshrl.u32 %v2060, 7
        %v2062 = vsub.s32 %v2059, %v2061
        %v2063 = vrot.slane %v934, %v2062
        %v2065 = vunpack.c.l.s4 1966171168
        %v2066 = vunpack.c.0.s8 %v2065
        %v2067 = vlaneseq
        %v2068 = vshrl.u32 %v2067, 7
        %v2069 = vsub.s32 %v2066, %v2068
        %v2070 = vrot.slane %v2063, %v2069
        %v2072 = vunpack.c.l.s4 1966171168
        %v2073 = vunpack.c.0.s8 %v2072
        %v2074 = vlaneseq
        %v2075 = vshrl.u32 %v2074, 7
        %v2076 = vsub.s32 %v2073, %v2075
        %v2077 = vrot.slane %v936, %v2076
        %v2079 = vunpack.c.l.s4 1966171168
        %v2080 = vunpack.c.0.s8 %v2079
        %v2081 = vlaneseq
        %v2082 = vshrl.u32 %v2081, 7
        %v2083 = vsub.s32 %v2080, %v2082
        %v2084 = vrot.slane %v2077, %v2083
        %v2086 = vunpack.c.l.s4 1966171168
        %v2087 = vunpack.c.0.s8 %v2086
        %v2088 = vlaneseq
        %v2089 = vshrl.u32 %v2088, 7
        %v2090 = vsub.s32 %v2087, %v2089
        %v2091 = vrot.slane %v967, %v2090
        %v2093 = vunpack.c.l.s4 1966171168
        %v2094 = vunpack.c.0.s8 %v2093
        %v2095 = vlaneseq
        %v2096 = vshrl.u32 %v2095, 7
        %v2097 = vsub.s32 %v2094, %v2096
        %v2098 = vrot.slane %v2091, %v2097
        %v2100 = vunpack.c.l.s4 1966171168
        %v2101 = vunpack.c.0.s8 %v2100
        %v2102 = vlaneseq
        %v2103 = vshrl.u32 %v2102, 7
        %v2104 = vsub.s32 %v2101, %v2103
        %v2105 = vrot.slane %v981, %v2104
        %v2107 = vunpack.c.l.s4 1966171168
        %v2108 = vunpack.c.0.s8 %v2107
        %v2109 = vlaneseq
        %v2110 = vshrl.u32 %v2109, 7
        %v2111 = vsub.s32 %v2108, %v2110
        %v2112 = vrot.slane %v2105, %v2111
        %v2114 = vunpack.c.l.s4 1966171168
        %v2115 = vunpack.c.0.s8 %v2114
        %v2116 = vlaneseq
        %v2117 = vshrl.u32 %v2116, 7
        %v2118 = vsub.s32 %v2115, %v2117
        %v2119 = vrot.slane %v983, %v2118
        %v2121 = vunpack.c.l.s4 1966171168
        %v2122 = vunpack.c.0.s8 %v2121
        %v2123 = vlaneseq
        %v2124 = vshrl.u32 %v2123, 7
        %v2125 = vsub.s32 %v2122, %v2124
        %v2126 = vrot.slane %v2119, %v2125
        %v2128 = vunpack.c.l.s4 1966171168
        %v2129 = vunpack.c.0.s8 %v2128
        %v2130 = vlaneseq
        %v2131 = vshrl.u32 %v2130, 7
        %v2132 = vsub.s32 %v2129, %v2131
        %v2133 = vrot.slane %v985, %v2132
        %v2135 = vunpack.c.l.s4 1966171168
        %v2136 = vunpack.c.0.s8 %v2135
        %v2137 = vlaneseq
        %v2138 = vshrl.u32 %v2137, 7
        %v2139 = vsub.s32 %v2136, %v2138
        %v2140 = vrot.slane %v2133, %v2139
        %v2142 = vunpack.c.l.s4 1966171168
        %v2143 = vunpack.c.0.s8 %v2142
        %v2144 = vlaneseq
        %v2145 = vshrl.u32 %v2144, 7
        %v2146 = vsub.s32 %v2143, %v2145
        %v2147 = vrot.slane %v1016, %v2146
        %v2149 = vunpack.c.l.s4 1966171168
        %v2150 = vunpack.c.0.s8 %v2149
        %v2151 = vlaneseq
        %v2152 = vshrl.u32 %v2151, 7
        %v2153 = vsub.s32 %v2150, %v2152
        %v2154 = vrot.slane %v2147, %v2153
        %v2156 = vunpack.c.l.s4 1966171168
        %v2157 = vunpack.c.0.s8 %v2156
        %v2158 = vlaneseq
        %v2159 = vshrl.u32 %v2158, 7
        %v2160 = vsub.s32 %v2157, %v2159
        %v2161 = vrot.slane %v1030, %v2160
        %v2163 = vunpack.c.l.s4 1966171168
        %v2164 = vunpack.c.0.s8 %v2163
        %v2165 = vlaneseq
        %v2166 = vshrl.u32 %v2165, 7
        %v2167 = vsub.s32 %v2164, %v2166
        %v2168 = vrot.slane %v2161, %v2167
        %v2170 = vunpack.c.l.s4 1966171168
        %v2171 = vunpack.c.0.s8 %v2170
        %v2172 = vlaneseq
        %v2173 = vshrl.u32 %v2172, 7
        %v2174 = vsub.s32 %v2171, %v2173
        %v2175 = vrot.slane %v1032, %v2174
        %v2177 = vunpack.c.l.s4 1966171168
        %v2178 = vunpack.c.0.s8 %v2177
        %v2179 = vlaneseq
        %v2180 = vshrl.u32 %v2179, 7
        %v2181 = vsub.s32 %v2178, %v2180
        %v2182 = vrot.slane %v2175, %v2181
        %v2184 = vunpack.c.l.s4 1966171168
        %v2185 = vunpack.c.0.s8 %v2184
        %v2186 = vlaneseq
        %v2187 = vshrl.u32 %v2186, 7
        %v2188 = vsub.s32 %v2185, %v2187
        %v2189 = vrot.slane %v1034, %v2188
        %v2191 = vunpack.c.l.s4 1966171168
        %v2192 = vunpack.c.0.s8 %v2191
        %v2193 = vlaneseq
        %v2194 = vshrl.u32 %v2193, 7
        %v2195 = vsub.s32 %v2192, %v2194
        %v2196 = vrot.slane %v2189, %v2195
        %v2197 = vunpack.c.l.b16 %v1762
        %v2198 = vunpack.c.l.b16 %v1776
        %v2199 = vunpack.c.l.b16 %v1790
        %v2200 = vunpack.c.l.b16 %v1804
        %v2201 = vunpack.c.l.b16 %v1818
        %v2202 = vunpack.c.l.b16 %v1832
        %v2203 = vunpack.c.l.b16 %v1846
        %v2204 = vunpack.c.l.b16 %v1860
        %v2205 = vunpack.c.l.b16 %v1874
        %v2206 = vunpack.c.l.b16 %v1888
        %v2207 = vunpack.c.l.b16 %v1902
        %v2208 = vunpack.c.l.b16 %v1916
        %v2209 = vunpack.c.l.b16 %v1930
        %v2210 = vunpack.c.l.b16 %v1944
        %v2211 = vunpack.c.l.b16 %v1958
        %v2212 = vunpack.c.l.b16 %v1972
        %v2213 = vunpack.c.l.b16 %v1986
        %v2214 = vunpack.c.l.b16 %v2000
        %v2215 = vunpack.c.l.b16 %v2014
        %v2216 = vunpack.c.l.b16 %v2028
        %v2217 = vunpack.c.l.b16 %v2042
        %v2218 = vunpack.c.l.b16 %v2056
        %v2219 = vunpack.c.l.b16 %v2070
        %v2220 = vunpack.c.l.b16 %v2084
        %v2221 = vunpack.c.l.b16 %v2098
        %v2222 = vunpack.c.l.b16 %v2112
        %v2223 = vunpack.c.l.b16 %v2126
        %v2224 = vunpack.c.l.b16 %v2140
        %v2225 = vunpack.c.l.b16 %v2154
        %v2226 = vunpack.c.l.b16 %v2168
        %v2227 = vunpack.c.l.b16 %v2182
        %v2228 = vunpack.c.l.b16 %v2196
        %v2229 = vrot.slane %v2198, 7
        %v2230 = vsel %vm1532, %v2229, %v2197
        %v2231 = vrot.slane %v2199, 6
        %v2232 = vsel %vm1535, %v2231, %v2230
        %v2233 = vrot.slane %v2200, 5
        %v2234 = vsel %vm1538, %v2233, %v2232
        %v2235 = vrot.slane %v2202, 7
        %v2236 = vsel %vm1532, %v2235, %v2201
        %v2237 = vrot.slane %v2203, 6
        %v2238 = vsel %vm1535, %v2237, %v2236
        %v2239 = vrot.slane %v2204, 5
        %v2240 = vsel %vm1538, %v2239, %v2238
        %v2241 = vrot.slane %v2206, 7
        %v2242 = vsel %vm1532, %v2241, %v2205
        %v2243 = vrot.slane %v2207, 6
        %v2244 = vsel %vm1535, %v2243, %v2242
        %v2245 = vrot.slane %v2208, 5
        %v2246 = vsel %vm1538, %v2245, %v2244
        %v2247 = vrot.slane %v2210, 7
        %v2248 = vsel %vm1532, %v2247, %v2209
        %v2249 = vrot.slane %v2211, 6
        %v2250 = vsel %vm1535, %v2249, %v2248
        %v2251 = vrot.slane %v2212, 5
        %v2252 = vsel %vm1538, %v2251, %v2250
        %v2253 = vrot.slane %v2214, 7
        %v2254 = vsel %vm1532, %v2253, %v2213
        %v2255 = vrot.slane %v2215, 6
        %v2256 = vsel %vm1535, %v2255, %v2254
        %v2257 = vrot.slane %v2216, 5
        %v2258 = vsel %vm1538, %v2257, %v2256
        %v2259 = vrot.slane %v2218, 7
        %v2260 = vsel %vm1532, %v2259, %v2217
        %v2261 = vrot.slane %v2219, 6
        %v2262 = vsel %vm1535, %v2261, %v2260
        %v2263 = vrot.slane %v2220, 5
        %v2264 = vsel %vm1538, %v2263, %v2262
        %v2265 = vrot.slane %v2222, 7
        %v2266 = vsel %vm1532, %v2265, %v2221
        %v2267 = vrot.slane %v2223, 6
        %v2268 = vsel %vm1535, %v2267, %v2266
        %v2269 = vrot.slane %v2224, 5
        %v2270 = vsel %vm1538, %v2269, %v2268
        %v2271 = vrot.slane %v2226, 7
        %v2272 = vsel %vm1532, %v2271, %v2225
        %v2273 = vrot.slane %v2227, 6
        %v2274 = vsel %vm1535, %v2273, %v2272
        %v2275 = vrot.slane %v2228, 5
        %v2276 = vsel %vm1538, %v2275, %v2274
        %v2277 = vpack.c.b16 %v2234, %v2234
        %v2278 = vpack.c.b16 %v2240, %v2240
        %v2279 = vpack.c.b16 %v2246, %v2246
        %v2280 = vpack.c.b16 %v2252, %v2252
        %v2281 = vpack.c.b16 %v2258, %v2258
        %v2282 = vpack.c.b16 %v2264, %v2264
        %v2283 = vpack.c.b16 %v2270, %v2270
        %v2284 = vpack.c.b16 %v2276, %v2276
        %v2287 = vsel %vm1597, %v2277, 0
        %v2290 = vsel %vm1597, %v2278, 0
        %v2293 = vsel %vm1597, %v2279, 0
        %v2296 = vsel %vm1597, %v2280, 0
        %v2299 = vsel %vm1597, %v2281, 0
        %v2302 = vsel %vm1597, %v2282, 0
        %v2305 = vsel %vm1597, %v2283, 0
        %v2308 = vsel %vm1597, %v2284, 0
        %s2310 = scalar_lea.vmem [#allocation2], 20
        %v2311 = vld [vmem:[%s2310] sm:$0x7]
        %v2312 = vsel %vm1629, 0, %v2311
        %2313 = vst [vmem:[%s2310] sm:$0x7] %v2312
        %v2314 = vld [vmem:[%s2310 + $0x4] sm:$0x7]
        %v2315 = vsel %vm1629, %v2287, %v2314
        %2316 = vst [vmem:[%s2310 + $0x4] sm:$0x7] %v2315
        %v2317 = vld [vmem:[%s2310 + $0x8] sm:$0x7]
        %v2318 = vsel %vm1629, %v2290, %v2317
        %2319 = vst [vmem:[%s2310 + $0x8] sm:$0x7] %v2318
        %v2320 = vld [vmem:[%s2310 + $0xc] sm:$0x7]
        %v2321 = vsel %vm1629, %v2293, %v2320
        %2322 = vst [vmem:[%s2310 + $0xc] sm:$0x7] %v2321
        %v2323 = vld [vmem:[%s2310 + $0x10] sm:$0x7]
        %v2324 = vsel %vm1629, %v2296, %v2323
        %2325 = vst [vmem:[%s2310 + $0x10] sm:$0x7] %v2324
        %v2326 = vld [vmem:[%s2310 + $0x50] sm:$0x7]
        %v2327 = vsel %vm1629, 0, %v2326
        %2328 = vst [vmem:[%s2310 + $0x50] sm:$0x7] %v2327
        %v2329 = vld [vmem:[%s2310 + $0x54] sm:$0x7]
        %v2330 = vsel %vm1629, %v2299, %v2329
        %2331 = vst [vmem:[%s2310 + $0x54] sm:$0x7] %v2330
        %v2332 = vld [vmem:[%s2310 + $0x58] sm:$0x7]
        %v2333 = vsel %vm1629, %v2302, %v2332
        %2334 = vst [vmem:[%s2310 + $0x58] sm:$0x7] %v2333
        %v2335 = vld [vmem:[%s2310 + $0x5c] sm:$0x7]
        %v2336 = vsel %vm1629, %v2305, %v2335
        %2337 = vst [vmem:[%s2310 + $0x5c] sm:$0x7] %v2336
        %v2338 = vld [vmem:[%s2310 + $0x60] sm:$0x7]
        %v2339 = vsel %vm1629, %v2308, %v2338
        %2340 = vst [vmem:[%s2310 + $0x60] sm:$0x7] %v2339
        %v2341 = vrot.slane %v2197, 1
        %v2342 = vsel %vm1532, %v2198, %v2341
        %v2343 = vrot.slane %v2199, 7
        %v2344 = vsel %vm1535, %v2343, %v2342
        %v2345 = vrot.slane %v2200, 6
        %v2346 = vsel %vm1538, %v2345, %v2344
        %v2347 = vrot.slane %v2201, 1
        %v2348 = vsel %vm1532, %v2202, %v2347
        %v2349 = vrot.slane %v2203, 7
        %v2350 = vsel %vm1535, %v2349, %v2348
        %v2351 = vrot.slane %v2204, 6
        %v2352 = vsel %vm1538, %v2351, %v2350
        %v2353 = vrot.slane %v2205, 1
        %v2354 = vsel %vm1532, %v2206, %v2353
        %v2355 = vrot.slane %v2207, 7
        %v2356 = vsel %vm1535, %v2355, %v2354
        %v2357 = vrot.slane %v2208, 6
        %v2358 = vsel %vm1538, %v2357, %v2356
        %v2359 = vrot.slane %v2209, 1
        %v2360 = vsel %vm1532, %v2210, %v2359
        %v2361 = vrot.slane %v2211, 7
        %v2362 = vsel %vm1535, %v2361, %v2360
        %v2363 = vrot.slane %v2212, 6
        %v2364 = vsel %vm1538, %v2363, %v2362
        %v2365 = vrot.slane %v2213, 1
        %v2366 = vsel %vm1532, %v2214, %v2365
        %v2367 = vrot.slane %v2215, 7
        %v2368 = vsel %vm1535, %v2367, %v2366
        %v2369 = vrot.slane %v2216, 6
        %v2370 = vsel %vm1538, %v2369, %v2368
        %v2371 = vrot.slane %v2217, 1
        %v2372 = vsel %vm1532, %v2218, %v2371
        %v2373 = vrot.slane %v2219, 7
        %v2374 = vsel %vm1535, %v2373, %v2372
        %v2375 = vrot.slane %v2220, 6
        %v2376 = vsel %vm1538, %v2375, %v2374
        %v2377 = vrot.slane %v2221, 1
        %v2378 = vsel %vm1532, %v2222, %v2377
        %v2379 = vrot.slane %v2223, 7
        %v2380 = vsel %vm1535, %v2379, %v2378
        %v2381 = vrot.slane %v2224, 6
        %v2382 = vsel %vm1538, %v2381, %v2380
        %v2383 = vrot.slane %v2225, 1
        %v2384 = vsel %vm1532, %v2226, %v2383
        %v2385 = vrot.slane %v2227, 7
        %v2386 = vsel %vm1535, %v2385, %v2384
        %v2387 = vrot.slane %v2228, 6
        %v2388 = vsel %vm1538, %v2387, %v2386
        %v2389 = vpack.c.b16 %v2346, %v2346
        %v2390 = vpack.c.b16 %v2352, %v2352
        %v2391 = vpack.c.b16 %v2358, %v2358
        %v2392 = vpack.c.b16 %v2364, %v2364
        %v2393 = vpack.c.b16 %v2370, %v2370
        %v2394 = vpack.c.b16 %v2376, %v2376
        %v2395 = vpack.c.b16 %v2382, %v2382
        %v2396 = vpack.c.b16 %v2388, %v2388
        %v2397 = vshrl.u32 0, 16
        %v2399 = vrot.slane %v2397, 7
        %v2400 = vshll.u32 0, 16
        %v2402 = vor.u32 %v2399, %v2400
        %v2404 = vshrl.u32 %v2389, 16
        %v2406 = vrot.slane %v2404, 7
        %v2407 = vshll.u32 %v2389, 16
        %v2409 = vor.u32 %v2406, %v2407
        %v2411 = vshrl.u32 %v2390, 16
        %v2413 = vrot.slane %v2411, 7
        %v2414 = vshll.u32 %v2390, 16
        %v2416 = vor.u32 %v2413, %v2414
        %v2418 = vshrl.u32 %v2391, 16
        %v2420 = vrot.slane %v2418, 7
        %v2421 = vshll.u32 %v2391, 16
        %v2423 = vor.u32 %v2420, %v2421
        %v2425 = vshrl.u32 %v2392, 16
        %v2427 = vrot.slane %v2425, 7
        %v2428 = vshll.u32 %v2392, 16
        %v2430 = vor.u32 %v2427, %v2428
        %v2432 = vshrl.u32 %v2393, 16
        %v2434 = vrot.slane %v2432, 7
        %v2435 = vshll.u32 %v2393, 16
        %v2437 = vor.u32 %v2434, %v2435
        %v2439 = vshrl.u32 %v2394, 16
        %v2441 = vrot.slane %v2439, 7
        %v2442 = vshll.u32 %v2394, 16
        %v2444 = vor.u32 %v2441, %v2442
        %v2446 = vshrl.u32 %v2395, 16
        %v2448 = vrot.slane %v2446, 7
        %v2449 = vshll.u32 %v2395, 16
        %v2451 = vor.u32 %v2448, %v2449
        %v2453 = vshrl.u32 %v2396, 16
        %v2455 = vrot.slane %v2453, 7
        %v2456 = vshll.u32 %v2396, 16
        %v2458 = vor.u32 %v2455, %v2456
        %v2468 = vsel %vm1708, 0, %v2402
        %v2469 = vsel %vm1708, 0, %v2409
        %v2470 = vsel %vm1708, 0, %v2416
        %v2471 = vsel %vm1708, 0, %v2423
        %v2472 = vsel %vm1708, 0, %v2430
        %v2473 = vsel %vm1708, 0, %v2437
        %v2474 = vsel %vm1708, 0, %v2444
        %v2475 = vsel %vm1708, 0, %v2451
        %v2476 = vsel %vm1708, 0, %v2458
        %v2477 = vld [vmem:[#allocation2] sm:$0x7]
        %v2478 = vsel %vm1629, %v2468, %v2477
        %2479 = vst [vmem:[#allocation2] sm:$0x7] %v2478
        %v2480 = vld [vmem:[#allocation2 + $0x4] sm:$0x7]
        %v2481 = vsel %vm1629, %v2469, %v2480
        %2482 = vst [vmem:[#allocation2 + $0x4] sm:$0x7] %v2481
        %v2483 = vld [vmem:[#allocation2 + $0x8] sm:$0x7]
        %v2484 = vsel %vm1629, %v2470, %v2483
        %2485 = vst [vmem:[#allocation2 + $0x8] sm:$0x7] %v2484
        %v2486 = vld [vmem:[#allocation2 + $0xc] sm:$0x7]
        %v2487 = vsel %vm1629, %v2471, %v2486
        %2488 = vst [vmem:[#allocation2 + $0xc] sm:$0x7] %v2487
        %v2489 = vld [vmem:[#allocation2 + $0x10] sm:$0x7]
        %v2490 = vsel %vm1629, %v2472, %v2489
        %2491 = vst [vmem:[#allocation2 + $0x10] sm:$0x7] %v2490
        %v2492 = vld [vmem:[#allocation2 + $0x50] sm:$0x7]
        %v2493 = vsel %vm1629, %v2468, %v2492
        %2494 = vst [vmem:[#allocation2 + $0x50] sm:$0x7] %v2493
        %v2495 = vld [vmem:[#allocation2 + $0x54] sm:$0x7]
        %v2496 = vsel %vm1629, %v2473, %v2495
        %2497 = vst [vmem:[#allocation2 + $0x54] sm:$0x7] %v2496
        %v2498 = vld [vmem:[#allocation2 + $0x58] sm:$0x7]
        %v2499 = vsel %vm1629, %v2474, %v2498
        %2500 = vst [vmem:[#allocation2 + $0x58] sm:$0x7] %v2499
        %v2501 = vld [vmem:[#allocation2 + $0x5c] sm:$0x7]
        %v2502 = vsel %vm1629, %v2475, %v2501
        %2503 = vst [vmem:[#allocation2 + $0x5c] sm:$0x7] %v2502
        %v2504 = vld [vmem:[#allocation2 + $0x60] sm:$0x7]
        %v2505 = vsel %vm1629, %v2476, %v2504
        %2506 = vst [vmem:[#allocation2 + $0x60] sm:$0x7] %v2505
        %v2507 = vld [vmem:[#allocation2] sm:$0x3]
        %v2508 = vld [vmem:[#allocation2 + $0x4] sm:$0x3]
        %v2509 = vld [vmem:[#allocation2 + $0x8] sm:$0x3]
        %v2510 = vld [vmem:[#allocation2 + $0xc] sm:$0x3]
        %v2511 = vld [vmem:[#allocation2 + $0x50] sm:$0x3]
        %v2512 = vld [vmem:[#allocation2 + $0x54] sm:$0x3]
        %v2513 = vld [vmem:[#allocation2 + $0x58] sm:$0x3]
        %v2514 = vld [vmem:[#allocation2 + $0x5c] sm:$0x3]
        %v2515 = vld [vmem:[#allocation5] sm:$0xf]
        %v2516 = vld [vmem:[#allocation5 + $0x4] sm:$0xf]
        %v2517 = vld [vmem:[#allocation5 + $0x8] sm:$0xf]
        %v2518 = vld [vmem:[#allocation5 + $0xc] sm:$0xf]
        %v2519 = vld [vmem:[#allocation5 + $0x10] sm:$0xf]
        %v2520 = vld [vmem:[#allocation5 + $0x14] sm:$0xf]
        %v2521 = vld [vmem:[#allocation5 + $0x18] sm:$0xf]
        %v2522 = vld [vmem:[#allocation5 + $0x1c] sm:$0xf]
        %v2523 = vld [vmem:[%s2310] sm:$0x3]
        %v2524 = vld [vmem:[%s2310 + $0x4] sm:$0x3]
        %v2525 = vld [vmem:[%s2310 + $0x8] sm:$0x3]
        %v2526 = vld [vmem:[%s2310 + $0xc] sm:$0x3]
        %v2527 = vld [vmem:[%s2310 + $0x50] sm:$0x3]
        %v2528 = vld [vmem:[%s2310 + $0x54] sm:$0x3]
        %v2529 = vld [vmem:[%s2310 + $0x58] sm:$0x3]
        %v2530 = vld [vmem:[%s2310 + $0x5c] sm:$0x3]
        %s2531 = scalar_lea.vmem [#allocation5], 32
        %v2532 = vld [vmem:[%s2531] sm:$0xf]
        %v2533 = vld [vmem:[%s2531 + $0x4] sm:$0xf]
        %v2534 = vld [vmem:[%s2531 + $0x8] sm:$0xf]
        %v2535 = vld [vmem:[%s2531 + $0xc] sm:$0xf]
        %v2536 = vld [vmem:[%s2531 + $0x10] sm:$0xf]
        %v2537 = vld [vmem:[%s2531 + $0x14] sm:$0xf]
        %v2538 = vld [vmem:[%s2531 + $0x18] sm:$0xf]
        %v2539 = vld [vmem:[%s2531 + $0x1c] sm:$0xf]
        %v2548 = vcombine.low %v2523, %v2524
        %v2549 = vcombine.low %v2525, %v2526
        %v2551 = vunpack.c.l.s4 1983009808
        %v2552 = vunpack.c.0.s8 %v2551
        %v2553 = vlaneseq
        %v2554 = vshrl.u32 %v2553, 7
        %v2555 = vsub.s32 %v2552, %v2554
        %v2556 = vrot.slane %v2548, %v2555
        %v2558 = vunpack.c.l.s4 1983009808
        %v2559 = vunpack.c.0.s8 %v2558
        %v2560 = vlaneseq
        %v2561 = vshrl.u32 %v2560, 7
        %v2562 = vsub.s32 %v2559, %v2561
        %v2563 = vrot.slane %v2549, %v2562
        %v2564 = vcombine.low %v2556, %v2563
        %v2565 = vcombine.low %v2527, %v2528
        %v2566 = vcombine.low %v2529, %v2530
        %v2568 = vunpack.c.l.s4 1983009808
        %v2569 = vunpack.c.0.s8 %v2568
        %v2570 = vlaneseq
        %v2571 = vshrl.u32 %v2570, 7
        %v2572 = vsub.s32 %v2569, %v2571
        %v2573 = vrot.slane %v2565, %v2572
        %v2575 = vunpack.c.l.s4 1983009808
        %v2576 = vunpack.c.0.s8 %v2575
        %v2577 = vlaneseq
        %v2578 = vshrl.u32 %v2577, 7
        %v2579 = vsub.s32 %v2576, %v2578
        %v2580 = vrot.slane %v2566, %v2579
        %v2581 = vcombine.low %v2573, %v2580
        %v2590 = vunpack.c.l.b16 %v2532
        %v2591 = vunpack.c.l.b16 %v2533
        %v2592 = vunpack.c.l.b16 %v2534
        %v2593 = vunpack.c.l.b16 %v2535
        %v2594 = vunpack.c.l.b16 %v2536
        %v2595 = vunpack.c.l.b16 %v2537
        %v2596 = vunpack.c.l.b16 %v2538
        %v2597 = vunpack.c.l.b16 %v2539
        %v2598 = vpack.c.b16 %v2591, %v2590
        %v2599 = vpack.c.b16 %v2593, %v2592
        %v2600 = vpack.c.b16 %v2595, %v2594
        %v2601 = vpack.c.b16 %v2597, %v2596
        %vm2606 = vcmask 523264
        %v2608 = vsel %vm2606, %v2564, 0
        %v2611 = vsel %vm2606, %v2581, 0
        %2613 = vmatprep.subr.bf16.mxu0 0
        %2614 = vmatpush1.bf16.msra.mxu0 %v2598
        %2615 = vmatprep.subr.bf16.mxu0 0
        %2616 = vmatpush1.bf16.msra.mxu0 %v2599
        %2617 = vmatprep.subr.bf16.mxu0 0
        %2618 = vmatpush1.bf16.msra.mxu0 %v2600
        %2619 = vmatprep.subr.bf16.mxu0 0
        %2620 = vmatpush1.bf16.msra.mxu0 %v2601
        %2621 = vmatprep.subr.bf16.mxu0 0
        %2622 = vmatpush1.bf16.msra.mxu0 0
        %2623 = vmatprep.subr.bf16.mxu0 0
        %2624 = vmatpush1.bf16.msra.mxu0 0
        %2625 = vmatprep.subr.bf16.mxu0 0
        %2626 = vmatpush1.bf16.msra.mxu0 0
        %2627 = vmatprep.subr.bf16.mxu0 0
        %2628 = vmatpush1.bf16.msra.mxu0 0
        %2629 = vmatprep.subr.bf16.mxu0 0
        %2630 = vmatpush1.bf16.msra.mxu0 0
        %2631 = vmatprep.subr.bf16.mxu0 0
        %2632 = vmatpush1.bf16.msra.mxu0 0
        %2633 = vmatprep.subr.bf16.mxu0 0
        %2634 = vmatpush1.bf16.msra.mxu0 0
        %2635 = vmatprep.subr.bf16.mxu0 0
        %2636 = vmatpush1.bf16.msra.mxu0 0
        %2637 = vmatprep.subr.bf16.mxu0 0
        %2638 = vmatpush1.bf16.msra.mxu0 0
        %2639 = vmatprep.subr.bf16.mxu0 0
        %2640 = vmatpush1.bf16.msra.mxu0 0
        %2641 = vmatprep.subr.bf16.mxu0 0
        %2642 = vmatpush1.bf16.msra.mxu0 0
        %2643 = vmatprep.subr.bf16.mxu0 0
        %2644 = vmatpush1.bf16.msra.mxu0 0
        %2645 = vmatprep.mubr.bf16.mxu0 0
        %2646 = vmatmul.mubr.bf16.gmra.mrb[0].mxu0 %v2608
        %v2647 = vpop.f32.mrb[0].mxu0
        %v2648 = vadd.f32 0.0, %v2647
        %v2649 = vpop.f32.mrb[0].mxu0
        %v2650 = vpop.f32.mrb[0].mxu0
        %v2651 = vadd.f32 0.0, %v2650
        %v2652 = vpop.f32.mrb[0].mxu0
        %2653 = vmatprep.mubr.bf16.mxu0 0
        %2654 = vmatmul.mubr.bf16.gmra.mrb[0].mxu0 %v2611
        %v2655 = vpop.f32.mrb[0].mxu0
        %v2656 = vadd.f32 0.0, %v2655
        %v2657 = vpop.f32.mrb[0].mxu0
        %v2658 = vpop.f32.mrb[0].mxu0
        %v2659 = vadd.f32 0.0, %v2658
        %v2660 = vpop.f32.mrb[0].mxu0
        %2661 = vdwg.mxu0
        %v2670 = vcombine.low %v2507, %v2508
        %v2671 = vcombine.low %v2509, %v2510
        %v2673 = vunpack.c.l.s4 1983009808
        %v2674 = vunpack.c.0.s8 %v2673
        %v2675 = vlaneseq
        %v2676 = vshrl.u32 %v2675, 7
        %v2677 = vsub.s32 %v2674, %v2676
        %v2678 = vrot.slane %v2670, %v2677
        %v2680 = vunpack.c.l.s4 1983009808
        %v2681 = vunpack.c.0.s8 %v2680
        %v2682 = vlaneseq
        %v2683 = vshrl.u32 %v2682, 7
        %v2684 = vsub.s32 %v2681, %v2683
        %v2685 = vrot.slane %v2671, %v2684
        %v2686 = vcombine.low %v2678, %v2685
        %v2687 = vcombine.low %v2511, %v2512
        %v2688 = vcombine.low %v2513, %v2514
        %v2690 = vunpack.c.l.s4 1983009808
        %v2691 = vunpack.c.0.s8 %v2690
        %v2692 = vlaneseq
        %v2693 = vshrl.u32 %v2692, 7
        %v2694 = vsub.s32 %v2691, %v2693
        %v2695 = vrot.slane %v2687, %v2694
        %v2697 = vunpack.c.l.s4 1983009808
        %v2698 = vunpack.c.0.s8 %v2697
        %v2699 = vlaneseq
        %v2700 = vshrl.u32 %v2699, 7
        %v2701 = vsub.s32 %v2698, %v2700
        %v2702 = vrot.slane %v2688, %v2701
        %v2703 = vcombine.low %v2695, %v2702
        %v2712 = vunpack.c.l.b16 %v2515
        %v2713 = vunpack.c.l.b16 %v2516
        %v2714 = vunpack.c.l.b16 %v2517
        %v2715 = vunpack.c.l.b16 %v2518
        %v2716 = vunpack.c.l.b16 %v2519
        %v2717 = vunpack.c.l.b16 %v2520
        %v2718 = vunpack.c.l.b16 %v2521
        %v2719 = vunpack.c.l.b16 %v2522
        %v2720 = vpack.c.b16 %v2713, %v2712
        %v2721 = vpack.c.b16 %v2715, %v2714
        %v2722 = vpack.c.b16 %v2717, %v2716
        %v2723 = vpack.c.b16 %v2719, %v2718
        %v2729 = vsel %vm2606, %v2686, 0
        %v2732 = vsel %vm2606, %v2703, 0
        %2734 = vmatprep.subr.bf16.mxu0 0
        %2735 = vmatpush1.bf16.msra.mxu0 %v2720
        %2736 = vmatprep.subr.bf16.mxu0 0
        %2737 = vmatpush1.bf16.msra.mxu0 %v2721
        %2738 = vmatprep.subr.bf16.mxu0 0
        %2739 = vmatpush1.bf16.msra.mxu0 %v2722
        %2740 = vmatprep.subr.bf16.mxu0 0
        %2741 = vmatpush1.bf16.msra.mxu0 %v2723
        %2742 = vmatprep.subr.bf16.mxu0 0
        %2743 = vmatpush1.bf16.msra.mxu0 0
        %2744 = vmatprep.subr.bf16.mxu0 0
        %2745 = vmatpush1.bf16.msra.mxu0 0
        %2746 = vmatprep.subr.bf16.mxu0 0
        %2747 = vmatpush1.bf16.msra.mxu0 0
        %2748 = vmatprep.subr.bf16.mxu0 0
        %2749 = vmatpush1.bf16.msra.mxu0 0
        %2750 = vmatprep.subr.bf16.mxu0 0
        %2751 = vmatpush1.bf16.msra.mxu0 0
        %2752 = vmatprep.subr.bf16.mxu0 0
        %2753 = vmatpush1.bf16.msra.mxu0 0
        %2754 = vmatprep.subr.bf16.mxu0 0
        %2755 = vmatpush1.bf16.msra.mxu0 0
        %2756 = vmatprep.subr.bf16.mxu0 0
        %2757 = vmatpush1.bf16.msra.mxu0 0
        %2758 = vmatprep.subr.bf16.mxu0 0
        %2759 = vmatpush1.bf16.msra.mxu0 0
        %2760 = vmatprep.subr.bf16.mxu0 0
        %2761 = vmatpush1.bf16.msra.mxu0 0
        %2762 = vmatprep.subr.bf16.mxu0 0
        %2763 = vmatpush1.bf16.msra.mxu0 0
        %2764 = vmatprep.subr.bf16.mxu0 0
        %2765 = vmatpush1.bf16.msra.mxu0 0
        %2766 = vmatprep.mubr.bf16.mxu0 0
        %2767 = vmatmul.mubr.bf16.gmra.mrb[0].mxu0 %v2729
        %v2768 = vpop.f32.mrb[0].mxu0
        %v2769 = vadd.f32 %v2648, %v2768
        %v2770 = vpop.f32.mrb[0].mxu0
        %v2771 = vpop.f32.mrb[0].mxu0
        %v2772 = vadd.f32 %v2651, %v2771
        %v2773 = vpop.f32.mrb[0].mxu0
        %2774 = vmatprep.mubr.bf16.mxu0 0
        %2775 = vmatmul.mubr.bf16.gmra.mrb[0].mxu0 %v2732
        %v2776 = vpop.f32.mrb[0].mxu0
        %v2777 = vadd.f32 %v2656, %v2776
        %v2778 = vpop.f32.mrb[0].mxu0
        %v2779 = vpop.f32.mrb[0].mxu0
        %v2780 = vadd.f32 %v2659, %v2779
        %v2781 = vpop.f32.mrb[0].mxu0
        %2782 = vdwg.mxu0
        %v2783 = vld [vmem:[#allocation2] sm:$0x7]
        %v2784 = vld [vmem:[#allocation2 + $0x4] sm:$0x7]
        %v2785 = vld [vmem:[#allocation2 + $0x8] sm:$0x7]
        %v2786 = vld [vmem:[#allocation2 + $0xc] sm:$0x7]
        %v2787 = vld [vmem:[#allocation2 + $0x50] sm:$0x7]
        %v2788 = vld [vmem:[#allocation2 + $0x54] sm:$0x7]
        %v2789 = vld [vmem:[#allocation2 + $0x58] sm:$0x7]
        %v2790 = vld [vmem:[#allocation2 + $0x5c] sm:$0x7]
        %v2800 = vunpack.c.l.s4 1983009808
        %v2801 = vunpack.c.0.s8 %v2800
        %v2802 = vlaneseq
        %v2803 = vshrl.u32 %v2802, 7
        %v2804 = vsub.s32 %v2801, %v2803
        %v2805 = vrot.slane %v2783, %v2804
        %v2806 = vcombine.high %v2805, %v2805
        %v2808 = vunpack.c.l.s4 1983009808
        %v2809 = vunpack.c.0.s8 %v2808
        %v2810 = vlaneseq
        %v2811 = vshrl.u32 %v2810, 7
        %v2812 = vsub.s32 %v2809, %v2811
        %v2813 = vrot.slane %v2784, %v2812
        %v2814 = vcombine.high %v2813, %v2813
        %v2816 = vunpack.c.l.s4 1983009808
        %v2817 = vunpack.c.0.s8 %v2816
        %v2818 = vlaneseq
        %v2819 = vshrl.u32 %v2818, 7
        %v2820 = vsub.s32 %v2817, %v2819
        %v2821 = vrot.slane %v2785, %v2820
        %v2822 = vcombine.high %v2821, %v2821
        %v2824 = vunpack.c.l.s4 1983009808
        %v2825 = vunpack.c.0.s8 %v2824
        %v2826 = vlaneseq
        %v2827 = vshrl.u32 %v2826, 7
        %v2828 = vsub.s32 %v2825, %v2827
        %v2829 = vrot.slane %v2786, %v2828
        %v2830 = vcombine.high %v2829, %v2829
        %v2832 = vunpack.c.l.s4 1983009808
        %v2833 = vunpack.c.0.s8 %v2832
        %v2834 = vlaneseq
        %v2835 = vshrl.u32 %v2834, 7
        %v2836 = vsub.s32 %v2833, %v2835
        %v2837 = vrot.slane %v2787, %v2836
        %v2838 = vcombine.high %v2837, %v2837
        %v2840 = vunpack.c.l.s4 1983009808
        %v2841 = vunpack.c.0.s8 %v2840
        %v2842 = vlaneseq
        %v2843 = vshrl.u32 %v2842, 7
        %v2844 = vsub.s32 %v2841, %v2843
        %v2845 = vrot.slane %v2788, %v2844
        %v2846 = vcombine.high %v2845, %v2845
        %v2848 = vunpack.c.l.s4 1983009808
        %v2849 = vunpack.c.0.s8 %v2848
        %v2850 = vlaneseq
        %v2851 = vshrl.u32 %v2850, 7
        %v2852 = vsub.s32 %v2849, %v2851
        %v2853 = vrot.slane %v2789, %v2852
        %v2854 = vcombine.high %v2853, %v2853
        %v2856 = vunpack.c.l.s4 1983009808
        %v2857 = vunpack.c.0.s8 %v2856
        %v2858 = vlaneseq
        %v2859 = vshrl.u32 %v2858, 7
        %v2860 = vsub.s32 %v2857, %v2859
        %v2861 = vrot.slane %v2790, %v2860
        %v2862 = vcombine.high %v2861, %v2861
        %vm2863 = vsmask.f32 1280
        %vm2864 = vsmask.f32 3336
        %vm2865 = vmor %vm2863, %vm2864
        %vm2866 = vsmask.f32 5392
        %vm2867 = vmor %vm2865, %vm2866
        %vm2868 = vsmask.f32 7448
        %vm2869 = vmor %vm2867, %vm2868
        %v2871 = vshrl.u32 %v2805, 16
        %v2873 = vrot.slane %v2871, 6
        %v2874 = vshll.u32 %v2805, 16
        %v2876 = vrot.slane %v2874, 7
        %v2877 = vor.u32 %v2873, %v2876
        %v2878 = vrot.slane %v2877, 2
        %v2880 = vshll.u32 %v2806, 16
        %v2882 = vrot.slane %v2880, 7
        %v2883 = vsel %vm2869, %v2878, %v2882
        %v2885 = vshrl.u32 %v2813, 16
        %v2887 = vrot.slane %v2885, 6
        %v2888 = vshll.u32 %v2813, 16
        %v2890 = vrot.slane %v2888, 7
        %v2891 = vor.u32 %v2887, %v2890
        %v2892 = vrot.slane %v2891, 2
        %v2894 = vshll.u32 %v2814, 16
        %v2896 = vrot.slane %v2894, 7
        %v2897 = vsel %vm2869, %v2892, %v2896
        %v2899 = vshrl.u32 %v2821, 16
        %v2901 = vrot.slane %v2899, 6
        %v2902 = vshll.u32 %v2821, 16
        %v2904 = vrot.slane %v2902, 7
        %v2905 = vor.u32 %v2901, %v2904
        %v2906 = vrot.slane %v2905, 2
        %v2908 = vshll.u32 %v2822, 16
        %v2910 = vrot.slane %v2908, 7
        %v2911 = vsel %vm2869, %v2906, %v2910
        %v2913 = vshrl.u32 %v2829, 16
        %v2915 = vrot.slane %v2913, 6
        %v2916 = vshll.u32 %v2829, 16
        %v2918 = vrot.slane %v2916, 7
        %v2919 = vor.u32 %v2915, %v2918
        %v2920 = vrot.slane %v2919, 2
        %v2922 = vshll.u32 %v2830, 16
        %v2924 = vrot.slane %v2922, 7
        %v2925 = vsel %vm2869, %v2920, %v2924
        %v2927 = vshrl.u32 %v2837, 16
        %v2929 = vrot.slane %v2927, 6
        %v2930 = vshll.u32 %v2837, 16
        %v2932 = vrot.slane %v2930, 7
        %v2933 = vor.u32 %v2929, %v2932
        %v2934 = vrot.slane %v2933, 2
        %v2936 = vshll.u32 %v2838, 16
        %v2938 = vrot.slane %v2936, 7
        %v2939 = vsel %vm2869, %v2934, %v2938
        %v2941 = vshrl.u32 %v2845, 16
        %v2943 = vrot.slane %v2941, 6
        %v2944 = vshll.u32 %v2845, 16
        %v2946 = vrot.slane %v2944, 7
        %v2947 = vor.u32 %v2943, %v2946
        %v2948 = vrot.slane %v2947, 2
        %v2950 = vshll.u32 %v2846, 16
        %v2952 = vrot.slane %v2950, 7
        %v2953 = vsel %vm2869, %v2948, %v2952
        %v2955 = vshrl.u32 %v2853, 16
        %v2957 = vrot.slane %v2955, 6
        %v2958 = vshll.u32 %v2853, 16
        %v2960 = vrot.slane %v2958, 7
        %v2961 = vor.u32 %v2957, %v2960
        %v2962 = vrot.slane %v2961, 2
        %v2964 = vshll.u32 %v2854, 16
        %v2966 = vrot.slane %v2964, 7
        %v2967 = vsel %vm2869, %v2962, %v2966
        %v2969 = vshrl.u32 %v2861, 16
        %v2971 = vrot.slane %v2969, 6
        %v2972 = vshll.u32 %v2861, 16
        %v2974 = vrot.slane %v2972, 7
        %v2975 = vor.u32 %v2971, %v2974
        %v2976 = vrot.slane %v2975, 2
        %v2978 = vshll.u32 %v2862, 16
        %v2980 = vrot.slane %v2978, 7
        %v2981 = vsel %vm2869, %v2976, %v2980
        %s2982 = scalar_lea.vmem [#allocation5], 64
        %v2983 = vld [vmem:[%s2982] sm:$0xf]
        %v2984 = vld [vmem:[%s2982 + $0x4] sm:$0xf]
        %v2985 = vld [vmem:[%s2982 + $0x8] sm:$0xf]
        %v2986 = vld [vmem:[%s2982 + $0xc] sm:$0xf]
        %v2987 = vld [vmem:[%s2982 + $0x10] sm:$0xf]
        %v2988 = vld [vmem:[%s2982 + $0x14] sm:$0xf]
        %v2989 = vld [vmem:[%s2982 + $0x18] sm:$0xf]
        %v2990 = vld [vmem:[%s2982 + $0x1c] sm:$0xf]
        %v2991 = vcombine.low %v2883, %v2897
        %v2992 = vcombine.low %v2911, %v2925
        %v2994 = vunpack.c.l.s4 1983009808
        %v2995 = vunpack.c.0.s8 %v2994
        %v2996 = vlaneseq
        %v2997 = vshrl.u32 %v2996, 7
        %v2998 = vsub.s32 %v2995, %v2997
        %v2999 = vrot.slane %v2991, %v2998
        %v3001 = vunpack.c.l.s4 1983009808
        %v3002 = vunpack.c.0.s8 %v3001
        %v3003 = vlaneseq
        %v3004 = vshrl.u32 %v3003, 7
        %v3005 = vsub.s32 %v3002, %v3004
        %v3006 = vrot.slane %v2992, %v3005
        %v3007 = vcombine.low %v2999, %v3006
        %v3008 = vcombine.low %v2939, %v2953
        %v3009 = vcombine.low %v2967, %v2981
        %v3011 = vunpack.c.l.s4 1983009808
        %v3012 = vunpack.c.0.s8 %v3011
        %v3013 = vlaneseq
        %v3014 = vshrl.u32 %v3013, 7
        %v3015 = vsub.s32 %v3012, %v3014
        %v3016 = vrot.slane %v3008, %v3015
        %v3018 = vunpack.c.l.s4 1983009808
        %v3019 = vunpack.c.0.s8 %v3018
        %v3020 = vlaneseq
        %v3021 = vshrl.u32 %v3020, 7
        %v3022 = vsub.s32 %v3019, %v3021
        %v3023 = vrot.slane %v3009, %v3022
        %v3024 = vcombine.low %v3016, %v3023
        %v3033 = vunpack.c.l.b16 %v2983
        %v3034 = vunpack.c.l.b16 %v2984
        %v3035 = vunpack.c.l.b16 %v2985
        %v3036 = vunpack.c.l.b16 %v2986
        %v3037 = vunpack.c.l.b16 %v2987
        %v3038 = vunpack.c.l.b16 %v2988
        %v3039 = vunpack.c.l.b16 %v2989
        %v3040 = vunpack.c.l.b16 %v2990
        %v3041 = vpack.c.b16 %v3034, %v3033
        %v3042 = vpack.c.b16 %v3036, %v3035
        %v3043 = vpack.c.b16 %v3038, %v3037
        %v3044 = vpack.c.b16 %v3040, %v3039
        %v3050 = vsel %vm2606, %v3007, 0
        %v3053 = vsel %vm2606, %v3024, 0
        %3055 = vmatprep.subr.bf16.mxu0 0
        %3056 = vmatpush1.bf16.msra.mxu0 %v3041
        %3057 = vmatprep.subr.bf16.mxu0 0
        %3058 = vmatpush1.bf16.msra.mxu0 %v3042
        %3059 = vmatprep.subr.bf16.mxu0 0
        %3060 = vmatpush1.bf16.msra.mxu0 %v3043
        %3061 = vmatprep.subr.bf16.mxu0 0
        %3062 = vmatpush1.bf16.msra.mxu0 %v3044
        %3063 = vmatprep.subr.bf16.mxu0 0
        %3064 = vmatpush1.bf16.msra.mxu0 0
        %3065 = vmatprep.subr.bf16.mxu0 0
        %3066 = vmatpush1.bf16.msra.mxu0 0
        %3067 = vmatprep.subr.bf16.mxu0 0
        %3068 = vmatpush1.bf16.msra.mxu0 0
        %3069 = vmatprep.subr.bf16.mxu0 0
        %3070 = vmatpush1.bf16.msra.mxu0 0
        %3071 = vmatprep.subr.bf16.mxu0 0
        %3072 = vmatpush1.bf16.msra.mxu0 0
        %3073 = vmatprep.subr.bf16.mxu0 0
        %3074 = vmatpush1.bf16.msra.mxu0 0
        %3075 = vmatprep.subr.bf16.mxu0 0
        %3076 = vmatpush1.bf16.msra.mxu0 0
        %3077 = vmatprep.subr.bf16.mxu0 0
        %3078 = vmatpush1.bf16.msra.mxu0 0
        %3079 = vmatprep.subr.bf16.mxu0 0
        %3080 = vmatpush1.bf16.msra.mxu0 0
        %3081 = vmatprep.subr.bf16.mxu0 0
        %3082 = vmatpush1.bf16.msra.mxu0 0
        %3083 = vmatprep.subr.bf16.mxu0 0
        %3084 = vmatpush1.bf16.msra.mxu0 0
        %3085 = vmatprep.subr.bf16.mxu0 0
        %3086 = vmatpush1.bf16.msra.mxu0 0
        %3087 = vmatprep.mubr.bf16.mxu0 0
        %3088 = vmatmul.mubr.bf16.gmra.mrb[0].mxu0 %v3050
        %v3089 = vpop.f32.mrb[0].mxu0
        %v3090 = vadd.f32 0.0, %v3089
        %v3091 = vpop.f32.mrb[0].mxu0
        %v3092 = vpop.f32.mrb[0].mxu0
        %v3093 = vadd.f32 0.0, %v3092
        %v3094 = vpop.f32.mrb[0].mxu0
        %3095 = vmatprep.mubr.bf16.mxu0 0
        %3096 = vmatmul.mubr.bf16.gmra.mrb[0].mxu0 %v3053
        %v3097 = vpop.f32.mrb[0].mxu0
        %v3098 = vadd.f32 0.0, %v3097
        %v3099 = vpop.f32.mrb[0].mxu0
        %v3100 = vpop.f32.mrb[0].mxu0
        %v3101 = vadd.f32 0.0, %v3100
        %v3102 = vpop.f32.mrb[0].mxu0
        %3103 = vdwg.mxu0
        %v3104 = vadd.f32 %v2769, %v3090
        %v3105 = vadd.f32 %v2772, %v3093
        %v3106 = vadd.f32 %v2777, %v3098
        %v3107 = vadd.f32 %v2780, %v3101
        %v3108 = vld [vmem:[%s2310] sm:$0x7]
        %v3109 = vld [vmem:[%s2310 + $0x4] sm:$0x7]
        %v3110 = vld [vmem:[%s2310 + $0x8] sm:$0x7]
        %v3111 = vld [vmem:[%s2310 + $0xc] sm:$0x7]
        %v3112 = vld [vmem:[%s2310 + $0x50] sm:$0x7]
        %v3113 = vld [vmem:[%s2310 + $0x54] sm:$0x7]
        %v3114 = vld [vmem:[%s2310 + $0x58] sm:$0x7]
        %v3115 = vld [vmem:[%s2310 + $0x5c] sm:$0x7]
        %v3125 = vunpack.c.l.s4 1983009808
        %v3126 = vunpack.c.0.s8 %v3125
        %v3127 = vlaneseq
        %v3128 = vshrl.u32 %v3127, 7
        %v3129 = vsub.s32 %v3126, %v3128
        %v3130 = vrot.slane %v3108, %v3129
        %v3131 = vcombine.high %v3130, %v3130
        %v3133 = vunpack.c.l.s4 1983009808
        %v3134 = vunpack.c.0.s8 %v3133
        %v3135 = vlaneseq
        %v3136 = vshrl.u32 %v3135, 7
        %v3137 = vsub.s32 %v3134, %v3136
        %v3138 = vrot.slane %v3109, %v3137
        %v3139 = vcombine.high %v3138, %v3138
        %v3141 = vunpack.c.l.s4 1983009808
        %v3142 = vunpack.c.0.s8 %v3141
        %v3143 = vlaneseq
        %v3144 = vshrl.u32 %v3143, 7
        %v3145 = vsub.s32 %v3142, %v3144
        %v3146 = vrot.slane %v3110, %v3145
        %v3147 = vcombine.high %v3146, %v3146
        %v3149 = vunpack.c.l.s4 1983009808
        %v3150 = vunpack.c.0.s8 %v3149
        %v3151 = vlaneseq
        %v3152 = vshrl.u32 %v3151, 7
        %v3153 = vsub.s32 %v3150, %v3152
        %v3154 = vrot.slane %v3111, %v3153
        %v3155 = vcombine.high %v3154, %v3154
        %v3157 = vunpack.c.l.s4 1983009808
        %v3158 = vunpack.c.0.s8 %v3157
        %v3159 = vlaneseq
        %v3160 = vshrl.u32 %v3159, 7
        %v3161 = vsub.s32 %v3158, %v3160
        %v3162 = vrot.slane %v3112, %v3161
        %v3163 = vcombine.high %v3162, %v3162
        %v3165 = vunpack.c.l.s4 1983009808
        %v3166 = vunpack.c.0.s8 %v3165
        %v3167 = vlaneseq
        %v3168 = vshrl.u32 %v3167, 7
        %v3169 = vsub.s32 %v3166, %v3168
        %v3170 = vrot.slane %v3113, %v3169
        %v3171 = vcombine.high %v3170, %v3170
        %v3173 = vunpack.c.l.s4 1983009808
        %v3174 = vunpack.c.0.s8 %v3173
        %v3175 = vlaneseq
        %v3176 = vshrl.u32 %v3175, 7
        %v3177 = vsub.s32 %v3174, %v3176
        %v3178 = vrot.slane %v3114, %v3177
        %v3179 = vcombine.high %v3178, %v3178
        %v3181 = vunpack.c.l.s4 1983009808
        %v3182 = vunpack.c.0.s8 %v3181
        %v3183 = vlaneseq
        %v3184 = vshrl.u32 %v3183, 7
        %v3185 = vsub.s32 %v3182, %v3184
        %v3186 = vrot.slane %v3115, %v3185
        %v3187 = vcombine.high %v3186, %v3186
        %v3189 = vshrl.u32 %v3130, 16
        %v3191 = vrot.slane %v3189, 6
        %v3192 = vshll.u32 %v3130, 16
        %v3194 = vrot.slane %v3192, 7
        %v3195 = vor.u32 %v3191, %v3194
        %v3196 = vrot.slane %v3195, 2
        %v3198 = vshll.u32 %v3131, 16
        %v3200 = vrot.slane %v3198, 7
        %v3201 = vsel %vm2869, %v3196, %v3200
        %v3203 = vshrl.u32 %v3138, 16
        %v3205 = vrot.slane %v3203, 6
        %v3206 = vshll.u32 %v3138, 16
        %v3208 = vrot.slane %v3206, 7
        %v3209 = vor.u32 %v3205, %v3208
        %v3210 = vrot.slane %v3209, 2
        %v3212 = vshll.u32 %v3139, 16
        %v3214 = vrot.slane %v3212, 7
        %v3215 = vsel %vm2869, %v3210, %v3214
        %v3217 = vshrl.u32 %v3146, 16
        %v3219 = vrot.slane %v3217, 6
        %v3220 = vshll.u32 %v3146, 16
        %v3222 = vrot.slane %v3220, 7
        %v3223 = vor.u32 %v3219, %v3222
        %v3224 = vrot.slane %v3223, 2
        %v3226 = vshll.u32 %v3147, 16
        %v3228 = vrot.slane %v3226, 7
        %v3229 = vsel %vm2869, %v3224, %v3228
        %v3231 = vshrl.u32 %v3154, 16
        %v3233 = vrot.slane %v3231, 6
        %v3234 = vshll.u32 %v3154, 16
        %v3236 = vrot.slane %v3234, 7
        %v3237 = vor.u32 %v3233, %v3236
        %v3238 = vrot.slane %v3237, 2
        %v3240 = vshll.u32 %v3155, 16
        %v3242 = vrot.slane %v3240, 7
        %v3243 = vsel %vm2869, %v3238, %v3242
        %v3245 = vshrl.u32 %v3162, 16
        %v3247 = vrot.slane %v3245, 6
        %v3248 = vshll.u32 %v3162, 16
        %v3250 = vrot.slane %v3248, 7
        %v3251 = vor.u32 %v3247, %v3250
        %v3252 = vrot.slane %v3251, 2
        %v3254 = vshll.u32 %v3163, 16
        %v3256 = vrot.slane %v3254, 7
        %v3257 = vsel %vm2869, %v3252, %v3256
        %v3259 = vshrl.u32 %v3170, 16
        %v3261 = vrot.slane %v3259, 6
        %v3262 = vshll.u32 %v3170, 16
        %v3264 = vrot.slane %v3262, 7
        %v3265 = vor.u32 %v3261, %v3264
        %v3266 = vrot.slane %v3265, 2
        %v3268 = vshll.u32 %v3171, 16
        %v3270 = vrot.slane %v3268, 7
        %v3271 = vsel %vm2869, %v3266, %v3270
        %v3273 = vshrl.u32 %v3178, 16
        %v3275 = vrot.slane %v3273, 6
        %v3276 = vshll.u32 %v3178, 16
        %v3278 = vrot.slane %v3276, 7
        %v3279 = vor.u32 %v3275, %v3278
        %v3280 = vrot.slane %v3279, 2
        %v3282 = vshll.u32 %v3179, 16
        %v3284 = vrot.slane %v3282, 7
        %v3285 = vsel %vm2869, %v3280, %v3284
        %v3287 = vshrl.u32 %v3186, 16
        %v3289 = vrot.slane %v3287, 6
        %v3290 = vshll.u32 %v3186, 16
        %v3292 = vrot.slane %v3290, 7
        %v3293 = vor.u32 %v3289, %v3292
        %v3294 = vrot.slane %v3293, 2
        %v3296 = vshll.u32 %v3187, 16
        %v3298 = vrot.slane %v3296, 7
        %v3299 = vsel %vm2869, %v3294, %v3298
        %s3300 = scalar_lea.vmem [#allocation5], 96
        %v3301 = vld [vmem:[%s3300] sm:$0xf]
        %v3302 = vld [vmem:[%s3300 + $0x4] sm:$0xf]
        %v3303 = vld [vmem:[%s3300 + $0x8] sm:$0xf]
        %v3304 = vld [vmem:[%s3300 + $0xc] sm:$0xf]
        %v3305 = vld [vmem:[%s3300 + $0x10] sm:$0xf]
        %v3306 = vld [vmem:[%s3300 + $0x14] sm:$0xf]
        %v3307 = vld [vmem:[%s3300 + $0x18] sm:$0xf]
        %v3308 = vld [vmem:[%s3300 + $0x1c] sm:$0xf]
        %v3309 = vcombine.low %v3201, %v3215
        %v3310 = vcombine.low %v3229, %v3243
        %v3312 = vunpack.c.l.s4 1983009808
        %v3313 = vunpack.c.0.s8 %v3312
        %v3314 = vlaneseq
        %v3315 = vshrl.u32 %v3314, 7
        %v3316 = vsub.s32 %v3313, %v3315
        %v3317 = vrot.slane %v3309, %v3316
        %v3319 = vunpack.c.l.s4 1983009808
        %v3320 = vunpack.c.0.s8 %v3319
        %v3321 = vlaneseq
        %v3322 = vshrl.u32 %v3321, 7
        %v3323 = vsub.s32 %v3320, %v3322
        %v3324 = vrot.slane %v3310, %v3323
        %v3325 = vcombine.low %v3317, %v3324
        %v3326 = vcombine.low %v3257, %v3271
        %v3327 = vcombine.low %v3285, %v3299
        %v3329 = vunpack.c.l.s4 1983009808
        %v3330 = vunpack.c.0.s8 %v3329
        %v3331 = vlaneseq
        %v3332 = vshrl.u32 %v3331, 7
        %v3333 = vsub.s32 %v3330, %v3332
        %v3334 = vrot.slane %v3326, %v3333
        %v3336 = vunpack.c.l.s4 1983009808
        %v3337 = vunpack.c.0.s8 %v3336
        %v3338 = vlaneseq
        %v3339 = vshrl.u32 %v3338, 7
        %v3340 = vsub.s32 %v3337, %v3339
        %v3341 = vrot.slane %v3327, %v3340
        %v3342 = vcombine.low %v3334, %v3341
        %v3351 = vunpack.c.l.b16 %v3301
        %v3352 = vunpack.c.l.b16 %v3302
        %v3353 = vunpack.c.l.b16 %v3303
        %v3354 = vunpack.c.l.b16 %v3304
        %v3355 = vunpack.c.l.b16 %v3305
        %v3356 = vunpack.c.l.b16 %v3306
        %v3357 = vunpack.c.l.b16 %v3307
        %v3358 = vunpack.c.l.b16 %v3308
        %v3359 = vpack.c.b16 %v3352, %v3351
        %v3360 = vpack.c.b16 %v3354, %v3353
        %v3361 = vpack.c.b16 %v3356, %v3355
        %v3362 = vpack.c.b16 %v3358, %v3357
        %v3368 = vsel %vm2606, %v3325, 0
        %v3371 = vsel %vm2606, %v3342, 0
        %3373 = vmatprep.subr.bf16.mxu0 0
        %3374 = vmatpush1.bf16.msra.mxu0 %v3359
        %3375 = vmatprep.subr.bf16.mxu0 0
        %3376 = vmatpush1.bf16.msra.mxu0 %v3360
        %3377 = vmatprep.subr.bf16.mxu0 0
        %3378 = vmatpush1.bf16.msra.mxu0 %v3361
        %3379 = vmatprep.subr.bf16.mxu0 0
        %3380 = vmatpush1.bf16.msra.mxu0 %v3362
        %3381 = vmatprep.subr.bf16.mxu0 0
        %3382 = vmatpush1.bf16.msra.mxu0 0
        %3383 = vmatprep.subr.bf16.mxu0 0
        %3384 = vmatpush1.bf16.msra.mxu0 0
        %3385 = vmatprep.subr.bf16.mxu0 0
        %3386 = vmatpush1.bf16.msra.mxu0 0
        %3387 = vmatprep.subr.bf16.mxu0 0
        %3388 = vmatpush1.bf16.msra.mxu0 0
        %3389 = vmatprep.subr.bf16.mxu0 0
        %3390 = vmatpush1.bf16.msra.mxu0 0
        %3391 = vmatprep.subr.bf16.mxu0 0
        %3392 = vmatpush1.bf16.msra.mxu0 0
        %3393 = vmatprep.subr.bf16.mxu0 0
        %3394 = vmatpush1.bf16.msra.mxu0 0
        %3395 = vmatprep.subr.bf16.mxu0 0
        %3396 = vmatpush1.bf16.msra.mxu0 0
        %3397 = vmatprep.subr.bf16.mxu0 0
        %3398 = vmatpush1.bf16.msra.mxu0 0
        %3399 = vmatprep.subr.bf16.mxu0 0
        %3400 = vmatpush1.bf16.msra.mxu0 0
        %3401 = vmatprep.subr.bf16.mxu0 0
        %3402 = vmatpush1.bf16.msra.mxu0 0
        %3403 = vmatprep.subr.bf16.mxu0 0
        %3404 = vmatpush1.bf16.msra.mxu0 0
        %3405 = vmatprep.mubr.bf16.mxu0 0
        %3406 = vmatmul.mubr.bf16.gmra.mrb[0].mxu0 %v3368
        %v3407 = vpop.f32.mrb[0].mxu0
        %v3408 = vadd.f32 0.0, %v3407
        %v3409 = vpop.f32.mrb[0].mxu0
        %v3410 = vpop.f32.mrb[0].mxu0
        %v3411 = vadd.f32 0.0, %v3410
        %v3412 = vpop.f32.mrb[0].mxu0
        %3413 = vmatprep.mubr.bf16.mxu0 0
        %3414 = vmatmul.mubr.bf16.gmra.mrb[0].mxu0 %v3371
        %v3415 = vpop.f32.mrb[0].mxu0
        %v3416 = vadd.f32 0.0, %v3415
        %v3417 = vpop.f32.mrb[0].mxu0
        %v3418 = vpop.f32.mrb[0].mxu0
        %v3419 = vadd.f32 0.0, %v3418
        %v3420 = vpop.f32.mrb[0].mxu0
        %3421 = vdwg.mxu0
        %v3422 = vadd.f32 %v3104, %v3408
        %v3423 = vadd.f32 %v3105, %v3411
        %v3424 = vadd.f32 %v3106, %v3416
        %v3425 = vadd.f32 %v3107, %v3419
        %v3426 = vld [vmem:[%s1718] sm:$0x3]
        %v3427 = vld [vmem:[%s1718 + $0x4] sm:$0x3]
        %v3428 = vld [vmem:[%s1718 + $0x8] sm:$0x3]
        %v3429 = vld [vmem:[%s1718 + $0xc] sm:$0x3]
        %v3430 = vld [vmem:[%s1718 + $0x50] sm:$0x3]
        %v3431 = vld [vmem:[%s1718 + $0x54] sm:$0x3]
        %v3432 = vld [vmem:[%s1718 + $0x58] sm:$0x3]
        %v3433 = vld [vmem:[%s1718 + $0x5c] sm:$0x3]
        %s3434 = scalar_lea.vmem [#allocation5], 128
        %v3435 = vld [vmem:[%s3434] sm:$0xf]
        %v3436 = vld [vmem:[%s3434 + $0x4] sm:$0xf]
        %v3437 = vld [vmem:[%s3434 + $0x8] sm:$0xf]
        %v3438 = vld [vmem:[%s3434 + $0xc] sm:$0xf]
        %v3439 = vld [vmem:[%s3434 + $0x10] sm:$0xf]
        %v3440 = vld [vmem:[%s3434 + $0x14] sm:$0xf]
        %v3441 = vld [vmem:[%s3434 + $0x18] sm:$0xf]
        %v3442 = vld [vmem:[%s3434 + $0x1c] sm:$0xf]
        %v3451 = vcombine.low %v3426, %v3427
        %v3452 = vcombine.low %v3428, %v3429
        %v3454 = vunpack.c.l.s4 1983009808
        %v3455 = vunpack.c.0.s8 %v3454
        %v3456 = vlaneseq
        %v3457 = vshrl.u32 %v3456, 7
        %v3458 = vsub.s32 %v3455, %v3457
        %v3459 = vrot.slane %v3451, %v3458
        %v3461 = vunpack.c.l.s4 1983009808
        %v3462 = vunpack.c.0.s8 %v3461
        %v3463 = vlaneseq
        %v3464 = vshrl.u32 %v3463, 7
        %v3465 = vsub.s32 %v3462, %v3464
        %v3466 = vrot.slane %v3452, %v3465
        %v3467 = vcombine.low %v3459, %v3466
        %v3468 = vcombine.low %v3430, %v3431
        %v3469 = vcombine.low %v3432, %v3433
        %v3471 = vunpack.c.l.s4 1983009808
        %v3472 = vunpack.c.0.s8 %v3471
        %v3473 = vlaneseq
        %v3474 = vshrl.u32 %v3473, 7
        %v3475 = vsub.s32 %v3472, %v3474
        %v3476 = vrot.slane %v3468, %v3475
        %v3478 = vunpack.c.l.s4 1983009808
        %v3479 = vunpack.c.0.s8 %v3478
        %v3480 = vlaneseq
        %v3481 = vshrl.u32 %v3480, 7
        %v3482 = vsub.s32 %v3479, %v3481
        %v3483 = vrot.slane %v3469, %v3482
        %v3484 = vcombine.low %v3476, %v3483
        %v3493 = vunpack.c.l.b16 %v3435
        %v3494 = vunpack.c.l.b16 %v3436
        %v3495 = vunpack.c.l.b16 %v3437
        %v3496 = vunpack.c.l.b16 %v3438
        %v3497 = vunpack.c.l.b16 %v3439
        %v3498 = vunpack.c.l.b16 %v3440
        %v3499 = vunpack.c.l.b16 %v3441
        %v3500 = vunpack.c.l.b16 %v3442
        %v3501 = vpack.c.b16 %v3494, %v3493
        %v3502 = vpack.c.b16 %v3496, %v3495
        %v3503 = vpack.c.b16 %v3498, %v3497
        %v3504 = vpack.c.b16 %v3500, %v3499
        %v3510 = vsel %vm2606, %v3467, 0
        %v3513 = vsel %vm2606, %v3484, 0
        %3515 = vmatprep.subr.bf16.mxu0 0
        %3516 = vmatpush1.bf16.msra.mxu0 %v3501
        %3517 = vmatprep.subr.bf16.mxu0 0
        %3518 = vmatpush1.bf16.msra.mxu0 %v3502
        %3519 = vmatprep.subr.bf16.mxu0 0
        %3520 = vmatpush1.bf16.msra.mxu0 %v3503
        %3521 = vmatprep.subr.bf16.mxu0 0
        %3522 = vmatpush1.bf16.msra.mxu0 %v3504
        %3523 = vmatprep.subr.bf16.mxu0 0
        %3524 = vmatpush1.bf16.msra.mxu0 0
        %3525 = vmatprep.subr.bf16.mxu0 0
        %3526 = vmatpush1.bf16.msra.mxu0 0
        %3527 = vmatprep.subr.bf16.mxu0 0
        %3528 = vmatpush1.bf16.msra.mxu0 0
        %3529 = vmatprep.subr.bf16.mxu0 0
        %3530 = vmatpush1.bf16.msra.mxu0 0
        %3531 = vmatprep.subr.bf16.mxu0 0
        %3532 = vmatpush1.bf16.msra.mxu0 0
        %3533 = vmatprep.subr.bf16.mxu0 0
        %3534 = vmatpush1.bf16.msra.mxu0 0
        %3535 = vmatprep.subr.bf16.mxu0 0
        %3536 = vmatpush1.bf16.msra.mxu0 0
        %3537 = vmatprep.subr.bf16.mxu0 0
        %3538 = vmatpush1.bf16.msra.mxu0 0
        %3539 = vmatprep.subr.bf16.mxu0 0
        %3540 = vmatpush1.bf16.msra.mxu0 0
        %3541 = vmatprep.subr.bf16.mxu0 0
        %3542 = vmatpush1.bf16.msra.mxu0 0
        %3543 = vmatprep.subr.bf16.mxu0 0
        %3544 = vmatpush1.bf16.msra.mxu0 0
        %3545 = vmatprep.subr.bf16.mxu0 0
        %3546 = vmatpush1.bf16.msra.mxu0 0
        %3547 = vmatprep.mubr.bf16.mxu0 0
        %3548 = vmatmul.mubr.bf16.gmra.mrb[0].mxu0 %v3510
        %v3549 = vpop.f32.mrb[0].mxu0
        %v3550 = vadd.f32 0.0, %v3549
        %v3551 = vpop.f32.mrb[0].mxu0
        %v3552 = vpop.f32.mrb[0].mxu0
        %v3553 = vadd.f32 0.0, %v3552
        %v3554 = vpop.f32.mrb[0].mxu0
        %3555 = vmatprep.mubr.bf16.mxu0 0
        %3556 = vmatmul.mubr.bf16.gmra.mrb[0].mxu0 %v3513
        %v3557 = vpop.f32.mrb[0].mxu0
        %v3558 = vadd.f32 0.0, %v3557
        %v3559 = vpop.f32.mrb[0].mxu0
        %v3560 = vpop.f32.mrb[0].mxu0
        %v3561 = vadd.f32 0.0, %v3560
        %v3562 = vpop.f32.mrb[0].mxu0
        %3563 = vdwg.mxu0
        %v3564 = vadd.f32 %v3422, %v3550
        %v3565 = vadd.f32 %v3423, %v3553
        %v3566 = vadd.f32 %v3424, %v3558
        %v3567 = vadd.f32 %v3425, %v3561
        %v3568 = vld [vmem:[%s1626] sm:$0x3]
        %v3569 = vld [vmem:[%s1626 + $0x4] sm:$0x3]
        %v3570 = vld [vmem:[%s1626 + $0x8] sm:$0x3]
        %v3571 = vld [vmem:[%s1626 + $0xc] sm:$0x3]
        %v3572 = vld [vmem:[%s1626 + $0x50] sm:$0x3]
        %v3573 = vld [vmem:[%s1626 + $0x54] sm:$0x3]
        %v3574 = vld [vmem:[%s1626 + $0x58] sm:$0x3]
        %v3575 = vld [vmem:[%s1626 + $0x5c] sm:$0x3]
        %s3576 = scalar_lea.vmem [#allocation5], 160
        %v3577 = vld [vmem:[%s3576] sm:$0xf]
        %v3578 = vld [vmem:[%s3576 + $0x4] sm:$0xf]
        %v3579 = vld [vmem:[%s3576 + $0x8] sm:$0xf]
        %v3580 = vld [vmem:[%s3576 + $0xc] sm:$0xf]
        %v3581 = vld [vmem:[%s3576 + $0x10] sm:$0xf]
        %v3582 = vld [vmem:[%s3576 + $0x14] sm:$0xf]
        %v3583 = vld [vmem:[%s3576 + $0x18] sm:$0xf]
        %v3584 = vld [vmem:[%s3576 + $0x1c] sm:$0xf]
        %v3593 = vcombine.low %v3568, %v3569
        %v3594 = vcombine.low %v3570, %v3571
        %v3596 = vunpack.c.l.s4 1983009808
        %v3597 = vunpack.c.0.s8 %v3596
        %v3598 = vlaneseq
        %v3599 = vshrl.u32 %v3598, 7
        %v3600 = vsub.s32 %v3597, %v3599
        %v3601 = vrot.slane %v3593, %v3600
        %v3603 = vunpack.c.l.s4 1983009808
        %v3604 = vunpack.c.0.s8 %v3603
        %v3605 = vlaneseq
        %v3606 = vshrl.u32 %v3605, 7
        %v3607 = vsub.s32 %v3604, %v3606
        %v3608 = vrot.slane %v3594, %v3607
        %v3609 = vcombine.low %v3601, %v3608
        %v3610 = vcombine.low %v3572, %v3573
        %v3611 = vcombine.low %v3574, %v3575
        %v3613 = vunpack.c.l.s4 1983009808
        %v3614 = vunpack.c.0.s8 %v3613
        %v3615 = vlaneseq
        %v3616 = vshrl.u32 %v3615, 7
        %v3617 = vsub.s32 %v3614, %v3616
        %v3618 = vrot.slane %v3610, %v3617
        %v3620 = vunpack.c.l.s4 1983009808
        %v3621 = vunpack.c.0.s8 %v3620
        %v3622 = vlaneseq
        %v3623 = vshrl.u32 %v3622, 7
        %v3624 = vsub.s32 %v3621, %v3623
        %v3625 = vrot.slane %v3611, %v3624
        %v3626 = vcombine.low %v3618, %v3625
        %v3635 = vunpack.c.l.b16 %v3577
        %v3636 = vunpack.c.l.b16 %v3578
        %v3637 = vunpack.c.l.b16 %v3579
        %v3638 = vunpack.c.l.b16 %v3580
        %v3639 = vunpack.c.l.b16 %v3581
        %v3640 = vunpack.c.l.b16 %v3582
        %v3641 = vunpack.c.l.b16 %v3583
        %v3642 = vunpack.c.l.b16 %v3584
        %v3643 = vpack.c.b16 %v3636, %v3635
        %v3644 = vpack.c.b16 %v3638, %v3637
        %v3645 = vpack.c.b16 %v3640, %v3639
        %v3646 = vpack.c.b16 %v3642, %v3641
        %v3652 = vsel %vm2606, %v3609, 0
        %v3655 = vsel %vm2606, %v3626, 0
        %3657 = vmatprep.subr.bf16.mxu0 0
        %3658 = vmatpush1.bf16.msra.mxu0 %v3643
        %3659 = vmatprep.subr.bf16.mxu0 0
        %3660 = vmatpush1.bf16.msra.mxu0 %v3644
        %3661 = vmatprep.subr.bf16.mxu0 0
        %3662 = vmatpush1.bf16.msra.mxu0 %v3645
        %3663 = vmatprep.subr.bf16.mxu0 0
        %3664 = vmatpush1.bf16.msra.mxu0 %v3646
        %3665 = vmatprep.subr.bf16.mxu0 0
        %3666 = vmatpush1.bf16.msra.mxu0 0
        %3667 = vmatprep.subr.bf16.mxu0 0
        %3668 = vmatpush1.bf16.msra.mxu0 0
        %3669 = vmatprep.subr.bf16.mxu0 0
        %3670 = vmatpush1.bf16.msra.mxu0 0
        %3671 = vmatprep.subr.bf16.mxu0 0
        %3672 = vmatpush1.bf16.msra.mxu0 0
        %3673 = vmatprep.subr.bf16.mxu0 0
        %3674 = vmatpush1.bf16.msra.mxu0 0
        %3675 = vmatprep.subr.bf16.mxu0 0
        %3676 = vmatpush1.bf16.msra.mxu0 0
        %3677 = vmatprep.subr.bf16.mxu0 0
        %3678 = vmatpush1.bf16.msra.mxu0 0
        %3679 = vmatprep.subr.bf16.mxu0 0
        %3680 = vmatpush1.bf16.msra.mxu0 0
        %3681 = vmatprep.subr.bf16.mxu0 0
        %3682 = vmatpush1.bf16.msra.mxu0 0
        %3683 = vmatprep.subr.bf16.mxu0 0
        %3684 = vmatpush1.bf16.msra.mxu0 0
        %3685 = vmatprep.subr.bf16.mxu0 0
        %3686 = vmatpush1.bf16.msra.mxu0 0
        %3687 = vmatprep.subr.bf16.mxu0 0
        %3688 = vmatpush1.bf16.msra.mxu0 0
        %3689 = vmatprep.mubr.bf16.mxu0 0
        %3690 = vmatmul.mubr.bf16.gmra.mrb[0].mxu0 %v3652
        %v3691 = vpop.f32.mrb[0].mxu0
        %v3692 = vadd.f32 0.0, %v3691
        %v3693 = vpop.f32.mrb[0].mxu0
        %v3694 = vpop.f32.mrb[0].mxu0
        %v3695 = vadd.f32 0.0, %v3694
        %v3696 = vpop.f32.mrb[0].mxu0
        %3697 = vmatprep.mubr.bf16.mxu0 0
        %3698 = vmatmul.mubr.bf16.gmra.mrb[0].mxu0 %v3655
        %v3699 = vpop.f32.mrb[0].mxu0
        %v3700 = vadd.f32 0.0, %v3699
        %v3701 = vpop.f32.mrb[0].mxu0
        %v3702 = vpop.f32.mrb[0].mxu0
        %v3703 = vadd.f32 0.0, %v3702
        %v3704 = vpop.f32.mrb[0].mxu0
        %3705 = vdwg.mxu0
        %v3706 = vadd.f32 %v3564, %v3692
        %v3707 = vadd.f32 %v3565, %v3695
        %v3708 = vadd.f32 %v3566, %v3700
        %v3709 = vadd.f32 %v3567, %v3703
        %v3710 = vld [vmem:[%s1718] sm:$0x7]
        %v3711 = vld [vmem:[%s1718 + $0x4] sm:$0x7]
        %v3712 = vld [vmem:[%s1718 + $0x8] sm:$0x7]
        %v3713 = vld [vmem:[%s1718 + $0xc] sm:$0x7]
        %v3714 = vld [vmem:[%s1718 + $0x50] sm:$0x7]
        %v3715 = vld [vmem:[%s1718 + $0x54] sm:$0x7]
        %v3716 = vld [vmem:[%s1718 + $0x58] sm:$0x7]
        %v3717 = vld [vmem:[%s1718 + $0x5c] sm:$0x7]
        %v3727 = vunpack.c.l.s4 1983009808
        %v3728 = vunpack.c.0.s8 %v3727
        %v3729 = vlaneseq
        %v3730 = vshrl.u32 %v3729, 7
        %v3731 = vsub.s32 %v3728, %v3730
        %v3732 = vrot.slane %v3710, %v3731
        %v3733 = vcombine.high %v3732, %v3732
        %v3735 = vunpack.c.l.s4 1983009808
        %v3736 = vunpack.c.0.s8 %v3735
        %v3737 = vlaneseq
        %v3738 = vshrl.u32 %v3737, 7
        %v3739 = vsub.s32 %v3736, %v3738
        %v3740 = vrot.slane %v3711, %v3739
        %v3741 = vcombine.high %v3740, %v3740
        %v3743 = vunpack.c.l.s4 1983009808
        %v3744 = vunpack.c.0.s8 %v3743
        %v3745 = vlaneseq
        %v3746 = vshrl.u32 %v3745, 7
        %v3747 = vsub.s32 %v3744, %v3746
        %v3748 = vrot.slane %v3712, %v3747
        %v3749 = vcombine.high %v3748, %v3748
        %v3751 = vunpack.c.l.s4 1983009808
        %v3752 = vunpack.c.0.s8 %v3751
        %v3753 = vlaneseq
        %v3754 = vshrl.u32 %v3753, 7
        %v3755 = vsub.s32 %v3752, %v3754
        %v3756 = vrot.slane %v3713, %v3755
        %v3757 = vcombine.high %v3756, %v3756
        %v3759 = vunpack.c.l.s4 1983009808
        %v3760 = vunpack.c.0.s8 %v3759
        %v3761 = vlaneseq
        %v3762 = vshrl.u32 %v3761, 7
        %v3763 = vsub.s32 %v3760, %v3762
        %v3764 = vrot.slane %v3714, %v3763
        %v3765 = vcombine.high %v3764, %v3764
        %v3767 = vunpack.c.l.s4 1983009808
        %v3768 = vunpack.c.0.s8 %v3767
        %v3769 = vlaneseq
        %v3770 = vshrl.u32 %v3769, 7
        %v3771 = vsub.s32 %v3768, %v3770
        %v3772 = vrot.slane %v3715, %v3771
        %v3773 = vcombine.high %v3772, %v3772
        %v3775 = vunpack.c.l.s4 1983009808
        %v3776 = vunpack.c.0.s8 %v3775
        %v3777 = vlaneseq
        %v3778 = vshrl.u32 %v3777, 7
        %v3779 = vsub.s32 %v3776, %v3778
        %v3780 = vrot.slane %v3716, %v3779
        %v3781 = vcombine.high %v3780, %v3780
        %v3783 = vunpack.c.l.s4 1983009808
        %v3784 = vunpack.c.0.s8 %v3783
        %v3785 = vlaneseq
        %v3786 = vshrl.u32 %v3785, 7
        %v3787 = vsub.s32 %v3784, %v3786
        %v3788 = vrot.slane %v3717, %v3787
        %v3789 = vcombine.high %v3788, %v3788
        %v3791 = vshrl.u32 %v3732, 16
        %v3793 = vrot.slane %v3791, 6
        %v3794 = vshll.u32 %v3732, 16
        %v3796 = vrot.slane %v3794, 7
        %v3797 = vor.u32 %v3793, %v3796
        %v3798 = vrot.slane %v3797, 2
        %v3800 = vshll.u32 %v3733, 16
        %v3802 = vrot.slane %v3800, 7
        %v3803 = vsel %vm2869, %v3798, %v3802
        %v3805 = vshrl.u32 %v3740, 16
        %v3807 = vrot.slane %v3805, 6
        %v3808 = vshll.u32 %v3740, 16
        %v3810 = vrot.slane %v3808, 7
        %v3811 = vor.u32 %v3807, %v3810
        %v3812 = vrot.slane %v3811, 2
        %v3814 = vshll.u32 %v3741, 16
        %v3816 = vrot.slane %v3814, 7
        %v3817 = vsel %vm2869, %v3812, %v3816
        %v3819 = vshrl.u32 %v3748, 16
        %v3821 = vrot.slane %v3819, 6
        %v3822 = vshll.u32 %v3748, 16
        %v3824 = vrot.slane %v3822, 7
        %v3825 = vor.u32 %v3821, %v3824
        %v3826 = vrot.slane %v3825, 2
        %v3828 = vshll.u32 %v3749, 16
        %v3830 = vrot.slane %v3828, 7
        %v3831 = vsel %vm2869, %v3826, %v3830
        %v3833 = vshrl.u32 %v3756, 16
        %v3835 = vrot.slane %v3833, 6
        %v3836 = vshll.u32 %v3756, 16
        %v3838 = vrot.slane %v3836, 7
        %v3839 = vor.u32 %v3835, %v3838
        %v3840 = vrot.slane %v3839, 2
        %v3842 = vshll.u32 %v3757, 16
        %v3844 = vrot.slane %v3842, 7
        %v3845 = vsel %vm2869, %v3840, %v3844
        %v3847 = vshrl.u32 %v3764, 16
        %v3849 = vrot.slane %v3847, 6
        %v3850 = vshll.u32 %v3764, 16
        %v3852 = vrot.slane %v3850, 7
        %v3853 = vor.u32 %v3849, %v3852
        %v3854 = vrot.slane %v3853, 2
        %v3856 = vshll.u32 %v3765, 16
        %v3858 = vrot.slane %v3856, 7
        %v3859 = vsel %vm2869, %v3854, %v3858
        %v3861 = vshrl.u32 %v3772, 16
        %v3863 = vrot.slane %v3861, 6
        %v3864 = vshll.u32 %v3772, 16
        %v3866 = vrot.slane %v3864, 7
        %v3867 = vor.u32 %v3863, %v3866
        %v3868 = vrot.slane %v3867, 2
        %v3870 = vshll.u32 %v3773, 16
        %v3872 = vrot.slane %v3870, 7
        %v3873 = vsel %vm2869, %v3868, %v3872
        %v3875 = vshrl.u32 %v3780, 16
        %v3877 = vrot.slane %v3875, 6
        %v3878 = vshll.u32 %v3780, 16
        %v3880 = vrot.slane %v3878, 7
        %v3881 = vor.u32 %v3877, %v3880
        %v3882 = vrot.slane %v3881, 2
        %v3884 = vshll.u32 %v3781, 16
        %v3886 = vrot.slane %v3884, 7
        %v3887 = vsel %vm2869, %v3882, %v3886
        %v3889 = vshrl.u32 %v3788, 16
        %v3891 = vrot.slane %v3889, 6
        %v3892 = vshll.u32 %v3788, 16
        %v3894 = vrot.slane %v3892, 7
        %v3895 = vor.u32 %v3891, %v3894
        %v3896 = vrot.slane %v3895, 2
        %v3898 = vshll.u32 %v3789, 16
        %v3900 = vrot.slane %v3898, 7
        %v3901 = vsel %vm2869, %v3896, %v3900
        %s3902 = scalar_lea.vmem [#allocation5], 192
        %v3903 = vld [vmem:[%s3902] sm:$0xf]
        %v3904 = vld [vmem:[%s3902 + $0x4] sm:$0xf]
        %v3905 = vld [vmem:[%s3902 + $0x8] sm:$0xf]
        %v3906 = vld [vmem:[%s3902 + $0xc] sm:$0xf]
        %v3907 = vld [vmem:[%s3902 + $0x10] sm:$0xf]
        %v3908 = vld [vmem:[%s3902 + $0x14] sm:$0xf]
        %v3909 = vld [vmem:[%s3902 + $0x18] sm:$0xf]
        %v3910 = vld [vmem:[%s3902 + $0x1c] sm:$0xf]
        %v3911 = vcombine.low %v3803, %v3817
        %v3912 = vcombine.low %v3831, %v3845
        %v3914 = vunpack.c.l.s4 1983009808
        %v3915 = vunpack.c.0.s8 %v3914
        %v3916 = vlaneseq
        %v3917 = vshrl.u32 %v3916, 7
        %v3918 = vsub.s32 %v3915, %v3917
        %v3919 = vrot.slane %v3911, %v3918
        %v3921 = vunpack.c.l.s4 1983009808
        %v3922 = vunpack.c.0.s8 %v3921
        %v3923 = vlaneseq
        %v3924 = vshrl.u32 %v3923, 7
        %v3925 = vsub.s32 %v3922, %v3924
        %v3926 = vrot.slane %v3912, %v3925
        %v3927 = vcombine.low %v3919, %v3926
        %v3928 = vcombine.low %v3859, %v3873
        %v3929 = vcombine.low %v3887, %v3901
        %v3931 = vunpack.c.l.s4 1983009808
        %v3932 = vunpack.c.0.s8 %v3931
        %v3933 = vlaneseq
        %v3934 = vshrl.u32 %v3933, 7
        %v3935 = vsub.s32 %v3932, %v3934
        %v3936 = vrot.slane %v3928, %v3935
        %v3938 = vunpack.c.l.s4 1983009808
        %v3939 = vunpack.c.0.s8 %v3938
        %v3940 = vlaneseq
        %v3941 = vshrl.u32 %v3940, 7
        %v3942 = vsub.s32 %v3939, %v3941
        %v3943 = vrot.slane %v3929, %v3942
        %v3944 = vcombine.low %v3936, %v3943
        %v3953 = vunpack.c.l.b16 %v3903
        %v3954 = vunpack.c.l.b16 %v3904
        %v3955 = vunpack.c.l.b16 %v3905
        %v3956 = vunpack.c.l.b16 %v3906
        %v3957 = vunpack.c.l.b16 %v3907
        %v3958 = vunpack.c.l.b16 %v3908
        %v3959 = vunpack.c.l.b16 %v3909
        %v3960 = vunpack.c.l.b16 %v3910
        %v3961 = vpack.c.b16 %v3954, %v3953
        %v3962 = vpack.c.b16 %v3956, %v3955
        %v3963 = vpack.c.b16 %v3958, %v3957
        %v3964 = vpack.c.b16 %v3960, %v3959
        %v3970 = vsel %vm2606, %v3927, 0
        %v3973 = vsel %vm2606, %v3944, 0
        %3975 = vmatprep.subr.bf16.mxu0 0
        %3976 = vmatpush1.bf16.msra.mxu0 %v3961
        %3977 = vmatprep.subr.bf16.mxu0 0
        %3978 = vmatpush1.bf16.msra.mxu0 %v3962
        %3979 = vmatprep.subr.bf16.mxu0 0
        %3980 = vmatpush1.bf16.msra.mxu0 %v3963
        %3981 = vmatprep.subr.bf16.mxu0 0
        %3982 = vmatpush1.bf16.msra.mxu0 %v3964
        %3983 = vmatprep.subr.bf16.mxu0 0
        %3984 = vmatpush1.bf16.msra.mxu0 0
        %3985 = vmatprep.subr.bf16.mxu0 0
        %3986 = vmatpush1.bf16.msra.mxu0 0
        %3987 = vmatprep.subr.bf16.mxu0 0
        %3988 = vmatpush1.bf16.msra.mxu0 0
        %3989 = vmatprep.subr.bf16.mxu0 0
        %3990 = vmatpush1.bf16.msra.mxu0 0
        %3991 = vmatprep.subr.bf16.mxu0 0
        %3992 = vmatpush1.bf16.msra.mxu0 0
        %3993 = vmatprep.subr.bf16.mxu0 0
        %3994 = vmatpush1.bf16.msra.mxu0 0
        %3995 = vmatprep.subr.bf16.mxu0 0
        %3996 = vmatpush1.bf16.msra.mxu0 0
        %3997 = vmatprep.subr.bf16.mxu0 0
        %3998 = vmatpush1.bf16.msra.mxu0 0
        %3999 = vmatprep.subr.bf16.mxu0 0
        %4000 = vmatpush1.bf16.msra.mxu0 0
        %4001 = vmatprep.subr.bf16.mxu0 0
        %4002 = vmatpush1.bf16.msra.mxu0 0
        %4003 = vmatprep.subr.bf16.mxu0 0
        %4004 = vmatpush1.bf16.msra.mxu0 0
        %4005 = vmatprep.subr.bf16.mxu0 0
        %4006 = vmatpush1.bf16.msra.mxu0 0
        %4007 = vmatprep.mubr.bf16.mxu0 0
        %4008 = vmatmul.mubr.bf16.gmra.mrb[0].mxu0 %v3970
        %v4009 = vpop.f32.mrb[0].mxu0
        %v4010 = vadd.f32 0.0, %v4009
        %v4011 = vpop.f32.mrb[0].mxu0
        %v4012 = vpop.f32.mrb[0].mxu0
        %v4013 = vadd.f32 0.0, %v4012
        %v4014 = vpop.f32.mrb[0].mxu0
        %4015 = vmatprep.mubr.bf16.mxu0 0
        %4016 = vmatmul.mubr.bf16.gmra.mrb[0].mxu0 %v3973
        %v4017 = vpop.f32.mrb[0].mxu0
        %v4018 = vadd.f32 0.0, %v4017
        %v4019 = vpop.f32.mrb[0].mxu0
        %v4020 = vpop.f32.mrb[0].mxu0
        %v4021 = vadd.f32 0.0, %v4020
        %v4022 = vpop.f32.mrb[0].mxu0
        %4023 = vdwg.mxu0
        %v4024 = vadd.f32 %v3706, %v4010
        %v4025 = vadd.f32 %v3707, %v4013
        %v4026 = vadd.f32 %v3708, %v4018
        %v4027 = vadd.f32 %v3709, %v4021
        %v4028 = vld [vmem:[%s1626] sm:$0x7]
        %v4029 = vld [vmem:[%s1626 + $0x4] sm:$0x7]
        %v4030 = vld [vmem:[%s1626 + $0x8] sm:$0x7]
        %v4031 = vld [vmem:[%s1626 + $0xc] sm:$0x7]
        %v4032 = vld [vmem:[%s1626 + $0x50] sm:$0x7]
        %v4033 = vld [vmem:[%s1626 + $0x54] sm:$0x7]
        %v4034 = vld [vmem:[%s1626 + $0x58] sm:$0x7]
        %v4035 = vld [vmem:[%s1626 + $0x5c] sm:$0x7]
        %v4045 = vunpack.c.l.s4 1983009808
        %v4046 = vunpack.c.0.s8 %v4045
        %v4047 = vlaneseq
        %v4048 = vshrl.u32 %v4047, 7
        %v4049 = vsub.s32 %v4046, %v4048
        %v4050 = vrot.slane %v4028, %v4049
        %v4051 = vcombine.high %v4050, %v4050
        %v4053 = vunpack.c.l.s4 1983009808
        %v4054 = vunpack.c.0.s8 %v4053
        %v4055 = vlaneseq
        %v4056 = vshrl.u32 %v4055, 7
        %v4057 = vsub.s32 %v4054, %v4056
        %v4058 = vrot.slane %v4029, %v4057
        %v4059 = vcombine.high %v4058, %v4058
        %v4061 = vunpack.c.l.s4 1983009808
        %v4062 = vunpack.c.0.s8 %v4061
        %v4063 = vlaneseq
        %v4064 = vshrl.u32 %v4063, 7
        %v4065 = vsub.s32 %v4062, %v4064
        %v4066 = vrot.slane %v4030, %v4065
        %v4067 = vcombine.high %v4066, %v4066
        %v4069 = vunpack.c.l.s4 1983009808
        %v4070 = vunpack.c.0.s8 %v4069
        %v4071 = vlaneseq
        %v4072 = vshrl.u32 %v4071, 7
        %v4073 = vsub.s32 %v4070, %v4072
        %v4074 = vrot.slane %v4031, %v4073
        %v4075 = vcombine.high %v4074, %v4074
        %v4077 = vunpack.c.l.s4 1983009808
        %v4078 = vunpack.c.0.s8 %v4077
        %v4079 = vlaneseq
        %v4080 = vshrl.u32 %v4079, 7
        %v4081 = vsub.s32 %v4078, %v4080
        %v4082 = vrot.slane %v4032, %v4081
        %v4083 = vcombine.high %v4082, %v4082
        %v4085 = vunpack.c.l.s4 1983009808
        %v4086 = vunpack.c.0.s8 %v4085
        %v4087 = vlaneseq
        %v4088 = vshrl.u32 %v4087, 7
        %v4089 = vsub.s32 %v4086, %v4088
        %v4090 = vrot.slane %v4033, %v4089
        %v4091 = vcombine.high %v4090, %v4090
        %v4093 = vunpack.c.l.s4 1983009808
        %v4094 = vunpack.c.0.s8 %v4093
        %v4095 = vlaneseq
        %v4096 = vshrl.u32 %v4095, 7
        %v4097 = vsub.s32 %v4094, %v4096
        %v4098 = vrot.slane %v4034, %v4097
        %v4099 = vcombine.high %v4098, %v4098
        %v4101 = vunpack.c.l.s4 1983009808
        %v4102 = vunpack.c.0.s8 %v4101
        %v4103 = vlaneseq
        %v4104 = vshrl.u32 %v4103, 7
        %v4105 = vsub.s32 %v4102, %v4104
        %v4106 = vrot.slane %v4035, %v4105
        %v4107 = vcombine.high %v4106, %v4106
        %v4109 = vshrl.u32 %v4050, 16
        %v4111 = vrot.slane %v4109, 6
        %v4112 = vshll.u32 %v4050, 16
        %v4114 = vrot.slane %v4112, 7
        %v4115 = vor.u32 %v4111, %v4114
        %v4116 = vrot.slane %v4115, 2
        %v4118 = vshll.u32 %v4051, 16
        %v4120 = vrot.slane %v4118, 7
        %v4121 = vsel %vm2869, %v4116, %v4120
        %v4123 = vshrl.u32 %v4058, 16
        %v4125 = vrot.slane %v4123, 6
        %v4126 = vshll.u32 %v4058, 16
        %v4128 = vrot.slane %v4126, 7
        %v4129 = vor.u32 %v4125, %v4128
        %v4130 = vrot.slane %v4129, 2
        %v4132 = vshll.u32 %v4059, 16
        %v4134 = vrot.slane %v4132, 7
        %v4135 = vsel %vm2869, %v4130, %v4134
        %v4137 = vshrl.u32 %v4066, 16
        %v4139 = vrot.slane %v4137, 6
        %v4140 = vshll.u32 %v4066, 16
        %v4142 = vrot.slane %v4140, 7
        %v4143 = vor.u32 %v4139, %v4142
        %v4144 = vrot.slane %v4143, 2
        %v4146 = vshll.u32 %v4067, 16
        %v4148 = vrot.slane %v4146, 7
        %v4149 = vsel %vm2869, %v4144, %v4148
        %v4151 = vshrl.u32 %v4074, 16
        %v4153 = vrot.slane %v4151, 6
        %v4154 = vshll.u32 %v4074, 16
        %v4156 = vrot.slane %v4154, 7
        %v4157 = vor.u32 %v4153, %v4156
        %v4158 = vrot.slane %v4157, 2
        %v4160 = vshll.u32 %v4075, 16
        %v4162 = vrot.slane %v4160, 7
        %v4163 = vsel %vm2869, %v4158, %v4162
        %v4165 = vshrl.u32 %v4082, 16
        %v4167 = vrot.slane %v4165, 6
        %v4168 = vshll.u32 %v4082, 16
        %v4170 = vrot.slane %v4168, 7
        %v4171 = vor.u32 %v4167, %v4170
        %v4172 = vrot.slane %v4171, 2
        %v4174 = vshll.u32 %v4083, 16
        %v4176 = vrot.slane %v4174, 7
        %v4177 = vsel %vm2869, %v4172, %v4176
        %v4179 = vshrl.u32 %v4090, 16
        %v4181 = vrot.slane %v4179, 6
        %v4182 = vshll.u32 %v4090, 16
        %v4184 = vrot.slane %v4182, 7
        %v4185 = vor.u32 %v4181, %v4184
        %v4186 = vrot.slane %v4185, 2
        %v4188 = vshll.u32 %v4091, 16
        %v4190 = vrot.slane %v4188, 7
        %v4191 = vsel %vm2869, %v4186, %v4190
        %v4193 = vshrl.u32 %v4098, 16
        %v4195 = vrot.slane %v4193, 6
        %v4196 = vshll.u32 %v4098, 16
        %v4198 = vrot.slane %v4196, 7
        %v4199 = vor.u32 %v4195, %v4198
        %v4200 = vrot.slane %v4199, 2
        %v4202 = vshll.u32 %v4099, 16
        %v4204 = vrot.slane %v4202, 7
        %v4205 = vsel %vm2869, %v4200, %v4204
        %v4207 = vshrl.u32 %v4106, 16
        %v4209 = vrot.slane %v4207, 6
        %v4210 = vshll.u32 %v4106, 16
        %v4212 = vrot.slane %v4210, 7
        %v4213 = vor.u32 %v4209, %v4212
        %v4214 = vrot.slane %v4213, 2
        %v4216 = vshll.u32 %v4107, 16
        %v4218 = vrot.slane %v4216, 7
        %v4219 = vsel %vm2869, %v4214, %v4218
        %s4220 = scalar_lea.vmem [#allocation5], 224
        %v4221 = vld [vmem:[%s4220] sm:$0xf]
        %v4222 = vld [vmem:[%s4220 + $0x4] sm:$0xf]
        %v4223 = vld [vmem:[%s4220 + $0x8] sm:$0xf]
        %v4224 = vld [vmem:[%s4220 + $0xc] sm:$0xf]
        %v4225 = vld [vmem:[%s4220 + $0x10] sm:$0xf]
        %v4226 = vld [vmem:[%s4220 + $0x14] sm:$0xf]
        %v4227 = vld [vmem:[%s4220 + $0x18] sm:$0xf]
        %v4228 = vld [vmem:[%s4220 + $0x1c] sm:$0xf]
        %v4229 = vcombine.low %v4121, %v4135
        %v4230 = vcombine.low %v4149, %v4163
        %v4232 = vunpack.c.l.s4 1983009808
        %v4233 = vunpack.c.0.s8 %v4232
        %v4234 = vlaneseq
        %v4235 = vshrl.u32 %v4234, 7
        %v4236 = vsub.s32 %v4233, %v4235
        %v4237 = vrot.slane %v4229, %v4236
        %v4239 = vunpack.c.l.s4 1983009808
        %v4240 = vunpack.c.0.s8 %v4239
        %v4241 = vlaneseq
        %v4242 = vshrl.u32 %v4241, 7
        %v4243 = vsub.s32 %v4240, %v4242
        %v4244 = vrot.slane %v4230, %v4243
        %v4245 = vcombine.low %v4237, %v4244
        %v4246 = vcombine.low %v4177, %v4191
        %v4247 = vcombine.low %v4205, %v4219
        %v4249 = vunpack.c.l.s4 1983009808
        %v4250 = vunpack.c.0.s8 %v4249
        %v4251 = vlaneseq
        %v4252 = vshrl.u32 %v4251, 7
        %v4253 = vsub.s32 %v4250, %v4252
        %v4254 = vrot.slane %v4246, %v4253
        %v4256 = vunpack.c.l.s4 1983009808
        %v4257 = vunpack.c.0.s8 %v4256
        %v4258 = vlaneseq
        %v4259 = vshrl.u32 %v4258, 7
        %v4260 = vsub.s32 %v4257, %v4259
        %v4261 = vrot.slane %v4247, %v4260
        %v4262 = vcombine.low %v4254, %v4261
        %v4271 = vunpack.c.l.b16 %v4221
        %v4272 = vunpack.c.l.b16 %v4222
        %v4273 = vunpack.c.l.b16 %v4223
        %v4274 = vunpack.c.l.b16 %v4224
        %v4275 = vunpack.c.l.b16 %v4225
        %v4276 = vunpack.c.l.b16 %v4226
        %v4277 = vunpack.c.l.b16 %v4227
        %v4278 = vunpack.c.l.b16 %v4228
        %v4279 = vpack.c.b16 %v4272, %v4271
        %v4280 = vpack.c.b16 %v4274, %v4273
        %v4281 = vpack.c.b16 %v4276, %v4275
        %v4282 = vpack.c.b16 %v4278, %v4277
        %v4288 = vsel %vm2606, %v4245, 0
        %v4291 = vsel %vm2606, %v4262, 0
        %4293 = vmatprep.subr.bf16.mxu0 0
        %4294 = vmatpush1.bf16.msra.mxu0 %v4279
        %4295 = vmatprep.subr.bf16.mxu0 0
        %4296 = vmatpush1.bf16.msra.mxu0 %v4280
        %4297 = vmatprep.subr.bf16.mxu0 0
        %4298 = vmatpush1.bf16.msra.mxu0 %v4281
        %4299 = vmatprep.subr.bf16.mxu0 0
        %4300 = vmatpush1.bf16.msra.mxu0 %v4282
        %4301 = vmatprep.subr.bf16.mxu0 0
        %4302 = vmatpush1.bf16.msra.mxu0 0
        %4303 = vmatprep.subr.bf16.mxu0 0
        %4304 = vmatpush1.bf16.msra.mxu0 0
        %4305 = vmatprep.subr.bf16.mxu0 0
        %4306 = vmatpush1.bf16.msra.mxu0 0
        %4307 = vmatprep.subr.bf16.mxu0 0
        %4308 = vmatpush1.bf16.msra.mxu0 0
        %4309 = vmatprep.subr.bf16.mxu0 0
        %4310 = vmatpush1.bf16.msra.mxu0 0
        %4311 = vmatprep.subr.bf16.mxu0 0
        %4312 = vmatpush1.bf16.msra.mxu0 0
        %4313 = vmatprep.subr.bf16.mxu0 0
        %4314 = vmatpush1.bf16.msra.mxu0 0
        %4315 = vmatprep.subr.bf16.mxu0 0
        %4316 = vmatpush1.bf16.msra.mxu0 0
        %4317 = vmatprep.subr.bf16.mxu0 0
        %4318 = vmatpush1.bf16.msra.mxu0 0
        %4319 = vmatprep.subr.bf16.mxu0 0
        %4320 = vmatpush1.bf16.msra.mxu0 0
        %4321 = vmatprep.subr.bf16.mxu0 0
        %4322 = vmatpush1.bf16.msra.mxu0 0
        %4323 = vmatprep.subr.bf16.mxu0 0
        %4324 = vmatpush1.bf16.msra.mxu0 0
        %4325 = vmatprep.mubr.bf16.mxu0 0
        %4326 = vmatmul.mubr.bf16.gmra.mrb[0].mxu0 %v4288
        %v4327 = vpop.f32.mrb[0].mxu0
        %v4328 = vadd.f32 0.0, %v4327
        %v4329 = vpop.f32.mrb[0].mxu0
        %v4330 = vpop.f32.mrb[0].mxu0
        %v4331 = vadd.f32 0.0, %v4330
        %v4332 = vpop.f32.mrb[0].mxu0
        %4333 = vmatprep.mubr.bf16.mxu0 0
        %4334 = vmatmul.mubr.bf16.gmra.mrb[0].mxu0 %v4291
        %v4335 = vpop.f32.mrb[0].mxu0
        %v4336 = vadd.f32 0.0, %v4335
        %v4337 = vpop.f32.mrb[0].mxu0
        %v4338 = vpop.f32.mrb[0].mxu0
        %v4339 = vadd.f32 0.0, %v4338
        %v4340 = vpop.f32.mrb[0].mxu0
        %4341 = vdwg.mxu0
        %v4342 = vadd.f32 %v4024, %v4328
        %v4343 = vadd.f32 %v4025, %v4331
        %v4344 = vadd.f32 %v4026, %v4336
        %v4345 = vadd.f32 %v4027, %v4339
        %s4346 = scalar_lea.vmem [#allocation2], 4
        %v4347 = vld [vmem:[%s4346] sm:$0x3]
        %v4348 = vld [vmem:[%s4346 + $0x4] sm:$0x3]
        %v4349 = vld [vmem:[%s4346 + $0x8] sm:$0x3]
        %v4350 = vld [vmem:[%s4346 + $0xc] sm:$0x3]
        %v4351 = vld [vmem:[%s4346 + $0x50] sm:$0x3]
        %v4352 = vld [vmem:[%s4346 + $0x54] sm:$0x3]
        %v4353 = vld [vmem:[%s4346 + $0x58] sm:$0x3]
        %v4354 = vld [vmem:[%s4346 + $0x5c] sm:$0x3]
        %s4355 = scalar_lea.vmem [#allocation5], 256
        %v4356 = vld [vmem:[%s4355] sm:$0xf]
        %v4357 = vld [vmem:[%s4355 + $0x4] sm:$0xf]
        %v4358 = vld [vmem:[%s4355 + $0x8] sm:$0xf]
        %v4359 = vld [vmem:[%s4355 + $0xc] sm:$0xf]
        %v4360 = vld [vmem:[%s4355 + $0x10] sm:$0xf]
        %v4361 = vld [vmem:[%s4355 + $0x14] sm:$0xf]
        %v4362 = vld [vmem:[%s4355 + $0x18] sm:$0xf]
        %v4363 = vld [vmem:[%s4355 + $0x1c] sm:$0xf]
        %v4372 = vcombine.low %v4347, %v4348
        %v4373 = vcombine.low %v4349, %v4350
        %v4375 = vunpack.c.l.s4 1983009808
        %v4376 = vunpack.c.0.s8 %v4375
        %v4377 = vlaneseq
        %v4378 = vshrl.u32 %v4377, 7
        %v4379 = vsub.s32 %v4376, %v4378
        %v4380 = vrot.slane %v4372, %v4379
        %v4382 = vunpack.c.l.s4 1983009808
        %v4383 = vunpack.c.0.s8 %v4382
        %v4384 = vlaneseq
        %v4385 = vshrl.u32 %v4384, 7
        %v4386 = vsub.s32 %v4383, %v4385
        %v4387 = vrot.slane %v4373, %v4386
        %v4388 = vcombine.low %v4380, %v4387
        %v4389 = vcombine.low %v4351, %v4352
        %v4390 = vcombine.low %v4353, %v4354
        %v4392 = vunpack.c.l.s4 1983009808
        %v4393 = vunpack.c.0.s8 %v4392
        %v4394 = vlaneseq
        %v4395 = vshrl.u32 %v4394, 7
        %v4396 = vsub.s32 %v4393, %v4395
        %v4397 = vrot.slane %v4389, %v4396
        %v4399 = vunpack.c.l.s4 1983009808
        %v4400 = vunpack.c.0.s8 %v4399
        %v4401 = vlaneseq
        %v4402 = vshrl.u32 %v4401, 7
        %v4403 = vsub.s32 %v4400, %v4402
        %v4404 = vrot.slane %v4390, %v4403
        %v4405 = vcombine.low %v4397, %v4404
        %v4414 = vunpack.c.l.b16 %v4356
        %v4415 = vunpack.c.l.b16 %v4357
        %v4416 = vunpack.c.l.b16 %v4358
        %v4417 = vunpack.c.l.b16 %v4359
        %v4418 = vunpack.c.l.b16 %v4360
        %v4419 = vunpack.c.l.b16 %v4361
        %v4420 = vunpack.c.l.b16 %v4362
        %v4421 = vunpack.c.l.b16 %v4363
        %v4422 = vpack.c.b16 %v4415, %v4414
        %v4423 = vpack.c.b16 %v4417, %v4416
        %v4424 = vpack.c.b16 %v4419, %v4418
        %v4425 = vpack.c.b16 %v4421, %v4420
        %v4431 = vsel %vm2606, %v4388, 0
        %v4434 = vsel %vm2606, %v4405, 0
        %4436 = vmatprep.subr.bf16.mxu0 0
        %4437 = vmatpush1.bf16.msra.mxu0 %v4422
        %4438 = vmatprep.subr.bf16.mxu0 0
        %4439 = vmatpush1.bf16.msra.mxu0 %v4423
        %4440 = vmatprep.subr.bf16.mxu0 0
        %4441 = vmatpush1.bf16.msra.mxu0 %v4424
        %4442 = vmatprep.subr.bf16.mxu0 0
        %4443 = vmatpush1.bf16.msra.mxu0 %v4425
        %4444 = vmatprep.subr.bf16.mxu0 0
        %4445 = vmatpush1.bf16.msra.mxu0 0
        %4446 = vmatprep.subr.bf16.mxu0 0
        %4447 = vmatpush1.bf16.msra.mxu0 0
        %4448 = vmatprep.subr.bf16.mxu0 0
        %4449 = vmatpush1.bf16.msra.mxu0 0
        %4450 = vmatprep.subr.bf16.mxu0 0
        %4451 = vmatpush1.bf16.msra.mxu0 0
        %4452 = vmatprep.subr.bf16.mxu0 0
        %4453 = vmatpush1.bf16.msra.mxu0 0
        %4454 = vmatprep.subr.bf16.mxu0 0
        %4455 = vmatpush1.bf16.msra.mxu0 0
        %4456 = vmatprep.subr.bf16.mxu0 0
        %4457 = vmatpush1.bf16.msra.mxu0 0
        %4458 = vmatprep.subr.bf16.mxu0 0
        %4459 = vmatpush1.bf16.msra.mxu0 0
        %4460 = vmatprep.subr.bf16.mxu0 0
        %4461 = vmatpush1.bf16.msra.mxu0 0
        %4462 = vmatprep.subr.bf16.mxu0 0
        %4463 = vmatpush1.bf16.msra.mxu0 0
        %4464 = vmatprep.subr.bf16.mxu0 0
        %4465 = vmatpush1.bf16.msra.mxu0 0
        %4466 = vmatprep.subr.bf16.mxu0 0
        %4467 = vmatpush1.bf16.msra.mxu0 0
        %4468 = vmatprep.mubr.bf16.mxu0 0
        %4469 = vmatmul.mubr.bf16.gmra.mrb[0].mxu0 %v4431
        %v4470 = vpop.f32.mrb[0].mxu0
        %v4471 = vadd.f32 0.0, %v4470
        %v4472 = vpop.f32.mrb[0].mxu0
        %v4473 = vpop.f32.mrb[0].mxu0
        %v4474 = vadd.f32 0.0, %v4473
        %v4475 = vpop.f32.mrb[0].mxu0
        %4476 = vmatprep.mubr.bf16.mxu0 0
        %4477 = vmatmul.mubr.bf16.gmra.mrb[0].mxu0 %v4434
        %v4478 = vpop.f32.mrb[0].mxu0
        %v4479 = vadd.f32 0.0, %v4478
        %v4480 = vpop.f32.mrb[0].mxu0
        %v4481 = vpop.f32.mrb[0].mxu0
        %v4482 = vadd.f32 0.0, %v4481
        %v4483 = vpop.f32.mrb[0].mxu0
        %4484 = vdwg.mxu0
        %v4485 = vadd.f32 %v4342, %v4471
        %v4486 = vadd.f32 %v4343, %v4474
        %v4487 = vadd.f32 %v4344, %v4479
        %v4488 = vadd.f32 %v4345, %v4482
        %s4489 = scalar_lea.vmem [#allocation2], 24
        %v4490 = vld [vmem:[%s4489] sm:$0x3]
        %v4491 = vld [vmem:[%s4489 + $0x4] sm:$0x3]
        %v4492 = vld [vmem:[%s4489 + $0x8] sm:$0x3]
        %v4493 = vld [vmem:[%s4489 + $0xc] sm:$0x3]
        %v4494 = vld [vmem:[%s4489 + $0x50] sm:$0x3]
        %v4495 = vld [vmem:[%s4489 + $0x54] sm:$0x3]
        %v4496 = vld [vmem:[%s4489 + $0x58] sm:$0x3]
        %v4497 = vld [vmem:[%s4489 + $0x5c] sm:$0x3]
        %s4498 = scalar_lea.vmem [#allocation5], 288
        %v4499 = vld [vmem:[%s4498] sm:$0xf]
        %v4500 = vld [vmem:[%s4498 + $0x4] sm:$0xf]
        %v4501 = vld [vmem:[%s4498 + $0x8] sm:$0xf]
        %v4502 = vld [vmem:[%s4498 + $0xc] sm:$0xf]
        %v4503 = vld [vmem:[%s4498 + $0x10] sm:$0xf]
        %v4504 = vld [vmem:[%s4498 + $0x14] sm:$0xf]
        %v4505 = vld [vmem:[%s4498 + $0x18] sm:$0xf]
        %v4506 = vld [vmem:[%s4498 + $0x1c] sm:$0xf]
        %v4515 = vcombine.low %v4490, %v4491
        %v4516 = vcombine.low %v4492, %v4493
        %v4518 = vunpack.c.l.s4 1983009808
        %v4519 = vunpack.c.0.s8 %v4518
        %v4520 = vlaneseq
        %v4521 = vshrl.u32 %v4520, 7
        %v4522 = vsub.s32 %v4519, %v4521
        %v4523 = vrot.slane %v4515, %v4522
        %v4525 = vunpack.c.l.s4 1983009808
        %v4526 = vunpack.c.0.s8 %v4525
        %v4527 = vlaneseq
        %v4528 = vshrl.u32 %v4527, 7
        %v4529 = vsub.s32 %v4526, %v4528
        %v4530 = vrot.slane %v4516, %v4529
        %v4531 = vcombine.low %v4523, %v4530
        %v4532 = vcombine.low %v4494, %v4495
        %v4533 = vcombine.low %v4496, %v4497
        %v4535 = vunpack.c.l.s4 1983009808
        %v4536 = vunpack.c.0.s8 %v4535
        %v4537 = vlaneseq
        %v4538 = vshrl.u32 %v4537, 7
        %v4539 = vsub.s32 %v4536, %v4538
        %v4540 = vrot.slane %v4532, %v4539
        %v4542 = vunpack.c.l.s4 1983009808
        %v4543 = vunpack.c.0.s8 %v4542
        %v4544 = vlaneseq
        %v4545 = vshrl.u32 %v4544, 7
        %v4546 = vsub.s32 %v4543, %v4545
        %v4547 = vrot.slane %v4533, %v4546
        %v4548 = vcombine.low %v4540, %v4547
        %v4557 = vunpack.c.l.b16 %v4499
        %v4558 = vunpack.c.l.b16 %v4500
        %v4559 = vunpack.c.l.b16 %v4501
        %v4560 = vunpack.c.l.b16 %v4502
        %v4561 = vunpack.c.l.b16 %v4503
        %v4562 = vunpack.c.l.b16 %v4504
        %v4563 = vunpack.c.l.b16 %v4505
        %v4564 = vunpack.c.l.b16 %v4506
        %v4565 = vpack.c.b16 %v4558, %v4557
        %v4566 = vpack.c.b16 %v4560, %v4559
        %v4567 = vpack.c.b16 %v4562, %v4561
        %v4568 = vpack.c.b16 %v4564, %v4563
        %v4574 = vsel %vm2606, %v4531, 0
        %v4577 = vsel %vm2606, %v4548, 0
        %4579 = vmatprep.subr.bf16.mxu0 0
        %4580 = vmatpush1.bf16.msra.mxu0 %v4565
        %4581 = vmatprep.subr.bf16.mxu0 0
        %4582 = vmatpush1.bf16.msra.mxu0 %v4566
        %4583 = vmatprep.subr.bf16.mxu0 0
        %4584 = vmatpush1.bf16.msra.mxu0 %v4567
        %4585 = vmatprep.subr.bf16.mxu0 0
        %4586 = vmatpush1.bf16.msra.mxu0 %v4568
        %4587 = vmatprep.subr.bf16.mxu0 0
        %4588 = vmatpush1.bf16.msra.mxu0 0
        %4589 = vmatprep.subr.bf16.mxu0 0
        %4590 = vmatpush1.bf16.msra.mxu0 0
        %4591 = vmatprep.subr.bf16.mxu0 0
        %4592 = vmatpush1.bf16.msra.mxu0 0
        %4593 = vmatprep.subr.bf16.mxu0 0
        %4594 = vmatpush1.bf16.msra.mxu0 0
        %4595 = vmatprep.subr.bf16.mxu0 0
        %4596 = vmatpush1.bf16.msra.mxu0 0
        %4597 = vmatprep.subr.bf16.mxu0 0
        %4598 = vmatpush1.bf16.msra.mxu0 0
        %4599 = vmatprep.subr.bf16.mxu0 0
        %4600 = vmatpush1.bf16.msra.mxu0 0
        %4601 = vmatprep.subr.bf16.mxu0 0
        %4602 = vmatpush1.bf16.msra.mxu0 0
        %4603 = vmatprep.subr.bf16.mxu0 0
        %4604 = vmatpush1.bf16.msra.mxu0 0
        %4605 = vmatprep.subr.bf16.mxu0 0
        %4606 = vmatpush1.bf16.msra.mxu0 0
        %4607 = vmatprep.subr.bf16.mxu0 0
        %4608 = vmatpush1.bf16.msra.mxu0 0
        %4609 = vmatprep.subr.bf16.mxu0 0
        %4610 = vmatpush1.bf16.msra.mxu0 0
        %4611 = vmatprep.mubr.bf16.mxu0 0
        %4612 = vmatmul.mubr.bf16.gmra.mrb[0].mxu0 %v4574
        %v4613 = vpop.f32.mrb[0].mxu0
        %v4614 = vadd.f32 0.0, %v4613
        %v4615 = vpop.f32.mrb[0].mxu0
        %v4616 = vpop.f32.mrb[0].mxu0
        %v4617 = vadd.f32 0.0, %v4616
        %v4618 = vpop.f32.mrb[0].mxu0
        %4619 = vmatprep.mubr.bf16.mxu0 0
        %4620 = vmatmul.mubr.bf16.gmra.mrb[0].mxu0 %v4577
        %v4621 = vpop.f32.mrb[0].mxu0
        %v4622 = vadd.f32 0.0, %v4621
        %v4623 = vpop.f32.mrb[0].mxu0
        %v4624 = vpop.f32.mrb[0].mxu0
        %v4625 = vadd.f32 0.0, %v4624
        %v4626 = vpop.f32.mrb[0].mxu0
        %4627 = vdwg.mxu0
        %v4628 = vadd.f32 %v4485, %v4614
        %v4629 = vadd.f32 %v4486, %v4617
        %v4630 = vadd.f32 %v4487, %v4622
        %v4631 = vadd.f32 %v4488, %v4625
        %v4632 = vld [vmem:[%s4346] sm:$0x7]
        %v4633 = vld [vmem:[%s4346 + $0x4] sm:$0x7]
        %v4634 = vld [vmem:[%s4346 + $0x8] sm:$0x7]
        %v4635 = vld [vmem:[%s4346 + $0xc] sm:$0x7]
        %v4636 = vld [vmem:[%s4346 + $0x50] sm:$0x7]
        %v4637 = vld [vmem:[%s4346 + $0x54] sm:$0x7]
        %v4638 = vld [vmem:[%s4346 + $0x58] sm:$0x7]
        %v4639 = vld [vmem:[%s4346 + $0x5c] sm:$0x7]
        %v4649 = vunpack.c.l.s4 1983009808
        %v4650 = vunpack.c.0.s8 %v4649
        %v4651 = vlaneseq
        %v4652 = vshrl.u32 %v4651, 7
        %v4653 = vsub.s32 %v4650, %v4652
        %v4654 = vrot.slane %v4632, %v4653
        %v4655 = vcombine.high %v4654, %v4654
        %v4657 = vunpack.c.l.s4 1983009808
        %v4658 = vunpack.c.0.s8 %v4657
        %v4659 = vlaneseq
        %v4660 = vshrl.u32 %v4659, 7
        %v4661 = vsub.s32 %v4658, %v4660
        %v4662 = vrot.slane %v4633, %v4661
        %v4663 = vcombine.high %v4662, %v4662
        %v4665 = vunpack.c.l.s4 1983009808
        %v4666 = vunpack.c.0.s8 %v4665
        %v4667 = vlaneseq
        %v4668 = vshrl.u32 %v4667, 7
        %v4669 = vsub.s32 %v4666, %v4668
        %v4670 = vrot.slane %v4634, %v4669
        %v4671 = vcombine.high %v4670, %v4670
        %v4673 = vunpack.c.l.s4 1983009808
        %v4674 = vunpack.c.0.s8 %v4673
        %v4675 = vlaneseq
        %v4676 = vshrl.u32 %v4675, 7
        %v4677 = vsub.s32 %v4674, %v4676
        %v4678 = vrot.slane %v4635, %v4677
        %v4679 = vcombine.high %v4678, %v4678
        %v4681 = vunpack.c.l.s4 1983009808
        %v4682 = vunpack.c.0.s8 %v4681
        %v4683 = vlaneseq
        %v4684 = vshrl.u32 %v4683, 7
        %v4685 = vsub.s32 %v4682, %v4684
        %v4686 = vrot.slane %v4636, %v4685
        %v4687 = vcombine.high %v4686, %v4686
        %v4689 = vunpack.c.l.s4 1983009808
        %v4690 = vunpack.c.0.s8 %v4689
        %v4691 = vlaneseq
        %v4692 = vshrl.u32 %v4691, 7
        %v4693 = vsub.s32 %v4690, %v4692
        %v4694 = vrot.slane %v4637, %v4693
        %v4695 = vcombine.high %v4694, %v4694
        %v4697 = vunpack.c.l.s4 1983009808
        %v4698 = vunpack.c.0.s8 %v4697
        %v4699 = vlaneseq
        %v4700 = vshrl.u32 %v4699, 7
        %v4701 = vsub.s32 %v4698, %v4700
        %v4702 = vrot.slane %v4638, %v4701
        %v4703 = vcombine.high %v4702, %v4702
        %v4705 = vunpack.c.l.s4 1983009808
        %v4706 = vunpack.c.0.s8 %v4705
        %v4707 = vlaneseq
        %v4708 = vshrl.u32 %v4707, 7
        %v4709 = vsub.s32 %v4706, %v4708
        %v4710 = vrot.slane %v4639, %v4709
        %v4711 = vcombine.high %v4710, %v4710
        %v4713 = vshrl.u32 %v4654, 16
        %v4715 = vrot.slane %v4713, 6
        %v4716 = vshll.u32 %v4654, 16
        %v4718 = vrot.slane %v4716, 7
        %v4719 = vor.u32 %v4715, %v4718
        %v4720 = vrot.slane %v4719, 2
        %v4722 = vshll.u32 %v4655, 16
        %v4724 = vrot.slane %v4722, 7
        %v4725 = vsel %vm2869, %v4720, %v4724
        %v4727 = vshrl.u32 %v4662, 16
        %v4729 = vrot.slane %v4727, 6
        %v4730 = vshll.u32 %v4662, 16
        %v4732 = vrot.slane %v4730, 7
        %v4733 = vor.u32 %v4729, %v4732
        %v4734 = vrot.slane %v4733, 2
        %v4736 = vshll.u32 %v4663, 16
        %v4738 = vrot.slane %v4736, 7
        %v4739 = vsel %vm2869, %v4734, %v4738
        %v4741 = vshrl.u32 %v4670, 16
        %v4743 = vrot.slane %v4741, 6
        %v4744 = vshll.u32 %v4670, 16
        %v4746 = vrot.slane %v4744, 7
        %v4747 = vor.u32 %v4743, %v4746
        %v4748 = vrot.slane %v4747, 2
        %v4750 = vshll.u32 %v4671, 16
        %v4752 = vrot.slane %v4750, 7
        %v4753 = vsel %vm2869, %v4748, %v4752
        %v4755 = vshrl.u32 %v4678, 16
        %v4757 = vrot.slane %v4755, 6
        %v4758 = vshll.u32 %v4678, 16
        %v4760 = vrot.slane %v4758, 7
        %v4761 = vor.u32 %v4757, %v4760
        %v4762 = vrot.slane %v4761, 2
        %v4764 = vshll.u32 %v4679, 16
        %v4766 = vrot.slane %v4764, 7
        %v4767 = vsel %vm2869, %v4762, %v4766
        %v4769 = vshrl.u32 %v4686, 16
        %v4771 = vrot.slane %v4769, 6
        %v4772 = vshll.u32 %v4686, 16
        %v4774 = vrot.slane %v4772, 7
        %v4775 = vor.u32 %v4771, %v4774
        %v4776 = vrot.slane %v4775, 2
        %v4778 = vshll.u32 %v4687, 16
        %v4780 = vrot.slane %v4778, 7
        %v4781 = vsel %vm2869, %v4776, %v4780
        %v4783 = vshrl.u32 %v4694, 16
        %v4785 = vrot.slane %v4783, 6
        %v4786 = vshll.u32 %v4694, 16
        %v4788 = vrot.slane %v4786, 7
        %v4789 = vor.u32 %v4785, %v4788
        %v4790 = vrot.slane %v4789, 2
        %v4792 = vshll.u32 %v4695, 16
        %v4794 = vrot.slane %v4792, 7
        %v4795 = vsel %vm2869, %v4790, %v4794
        %v4797 = vshrl.u32 %v4702, 16
        %v4799 = vrot.slane %v4797, 6
        %v4800 = vshll.u32 %v4702, 16
        %v4802 = vrot.slane %v4800, 7
        %v4803 = vor.u32 %v4799, %v4802
        %v4804 = vrot.slane %v4803, 2
        %v4806 = vshll.u32 %v4703, 16
        %v4808 = vrot.slane %v4806, 7
        %v4809 = vsel %vm2869, %v4804, %v4808
        %v4811 = vshrl.u32 %v4710, 16
        %v4813 = vrot.slane %v4811, 6
        %v4814 = vshll.u32 %v4710, 16
        %v4816 = vrot.slane %v4814, 7
        %v4817 = vor.u32 %v4813, %v4816
        %v4818 = vrot.slane %v4817, 2
        %v4820 = vshll.u32 %v4711, 16
        %v4822 = vrot.slane %v4820, 7
        %v4823 = vsel %vm2869, %v4818, %v4822
        %s4824 = scalar_lea.vmem [#allocation5], 320
        %v4825 = vld [vmem:[%s4824] sm:$0xf]
        %v4826 = vld [vmem:[%s4824 + $0x4] sm:$0xf]
        %v4827 = vld [vmem:[%s4824 + $0x8] sm:$0xf]
        %v4828 = vld [vmem:[%s4824 + $0xc] sm:$0xf]
        %v4829 = vld [vmem:[%s4824 + $0x10] sm:$0xf]
        %v4830 = vld [vmem:[%s4824 + $0x14] sm:$0xf]
        %v4831 = vld [vmem:[%s4824 + $0x18] sm:$0xf]
        %v4832 = vld [vmem:[%s4824 + $0x1c] sm:$0xf]
        %v4833 = vcombine.low %v4725, %v4739
        %v4834 = vcombine.low %v4753, %v4767
        %v4836 = vunpack.c.l.s4 1983009808
        %v4837 = vunpack.c.0.s8 %v4836
        %v4838 = vlaneseq
        %v4839 = vshrl.u32 %v4838, 7
        %v4840 = vsub.s32 %v4837, %v4839
        %v4841 = vrot.slane %v4833, %v4840
        %v4843 = vunpack.c.l.s4 1983009808
        %v4844 = vunpack.c.0.s8 %v4843
        %v4845 = vlaneseq
        %v4846 = vshrl.u32 %v4845, 7
        %v4847 = vsub.s32 %v4844, %v4846
        %v4848 = vrot.slane %v4834, %v4847
        %v4849 = vcombine.low %v4841, %v4848
        %v4850 = vcombine.low %v4781, %v4795
        %v4851 = vcombine.low %v4809, %v4823
        %v4853 = vunpack.c.l.s4 1983009808
        %v4854 = vunpack.c.0.s8 %v4853
        %v4855 = vlaneseq
        %v4856 = vshrl.u32 %v4855, 7
        %v4857 = vsub.s32 %v4854, %v4856
        %v4858 = vrot.slane %v4850, %v4857
        %v4860 = vunpack.c.l.s4 1983009808
        %v4861 = vunpack.c.0.s8 %v4860
        %v4862 = vlaneseq
        %v4863 = vshrl.u32 %v4862, 7
        %v4864 = vsub.s32 %v4861, %v4863
        %v4865 = vrot.slane %v4851, %v4864
        %v4866 = vcombine.low %v4858, %v4865
        %v4875 = vunpack.c.l.b16 %v4825
        %v4876 = vunpack.c.l.b16 %v4826
        %v4877 = vunpack.c.l.b16 %v4827
        %v4878 = vunpack.c.l.b16 %v4828
        %v4879 = vunpack.c.l.b16 %v4829
        %v4880 = vunpack.c.l.b16 %v4830
        %v4881 = vunpack.c.l.b16 %v4831
        %v4882 = vunpack.c.l.b16 %v4832
        %v4883 = vpack.c.b16 %v4876, %v4875
        %v4884 = vpack.c.b16 %v4878, %v4877
        %v4885 = vpack.c.b16 %v4880, %v4879
        %v4886 = vpack.c.b16 %v4882, %v4881
        %v4892 = vsel %vm2606, %v4849, 0
        %v4895 = vsel %vm2606, %v4866, 0
        %4897 = vmatprep.subr.bf16.mxu0 0
        %4898 = vmatpush1.bf16.msra.mxu0 %v4883
        %4899 = vmatprep.subr.bf16.mxu0 0
        %4900 = vmatpush1.bf16.msra.mxu0 %v4884
        %4901 = vmatprep.subr.bf16.mxu0 0
        %4902 = vmatpush1.bf16.msra.mxu0 %v4885
        %4903 = vmatprep.subr.bf16.mxu0 0
        %4904 = vmatpush1.bf16.msra.mxu0 %v4886
        %4905 = vmatprep.subr.bf16.mxu0 0
        %4906 = vmatpush1.bf16.msra.mxu0 0
        %4907 = vmatprep.subr.bf16.mxu0 0
        %4908 = vmatpush1.bf16.msra.mxu0 0
        %4909 = vmatprep.subr.bf16.mxu0 0
        %4910 = vmatpush1.bf16.msra.mxu0 0
        %4911 = vmatprep.subr.bf16.mxu0 0
        %4912 = vmatpush1.bf16.msra.mxu0 0
        %4913 = vmatprep.subr.bf16.mxu0 0
        %4914 = vmatpush1.bf16.msra.mxu0 0
        %4915 = vmatprep.subr.bf16.mxu0 0
        %4916 = vmatpush1.bf16.msra.mxu0 0
        %4917 = vmatprep.subr.bf16.mxu0 0
        %4918 = vmatpush1.bf16.msra.mxu0 0
        %4919 = vmatprep.subr.bf16.mxu0 0
        %4920 = vmatpush1.bf16.msra.mxu0 0
        %4921 = vmatprep.subr.bf16.mxu0 0
        %4922 = vmatpush1.bf16.msra.mxu0 0
        %4923 = vmatprep.subr.bf16.mxu0 0
        %4924 = vmatpush1.bf16.msra.mxu0 0
        %4925 = vmatprep.subr.bf16.mxu0 0
        %4926 = vmatpush1.bf16.msra.mxu0 0
        %4927 = vmatprep.subr.bf16.mxu0 0
        %4928 = vmatpush1.bf16.msra.mxu0 0
        %4929 = vmatprep.mubr.bf16.mxu0 0
        %4930 = vmatmul.mubr.bf16.gmra.mrb[0].mxu0 %v4892
        %v4931 = vpop.f32.mrb[0].mxu0
        %v4932 = vadd.f32 0.0, %v4931
        %v4933 = vpop.f32.mrb[0].mxu0
        %v4934 = vpop.f32.mrb[0].mxu0
        %v4935 = vadd.f32 0.0, %v4934
        %v4936 = vpop.f32.mrb[0].mxu0
        %4937 = vmatprep.mubr.bf16.mxu0 0
        %4938 = vmatmul.mubr.bf16.gmra.mrb[0].mxu0 %v4895
        %v4939 = vpop.f32.mrb[0].mxu0
        %v4940 = vadd.f32 0.0, %v4939
        %v4941 = vpop.f32.mrb[0].mxu0
        %v4942 = vpop.f32.mrb[0].mxu0
        %v4943 = vadd.f32 0.0, %v4942
        %v4944 = vpop.f32.mrb[0].mxu0
        %4945 = vdwg.mxu0
        %v4946 = vadd.f32 %v4628, %v4932
        %v4947 = vadd.f32 %v4629, %v4935
        %v4948 = vadd.f32 %v4630, %v4940
        %v4949 = vadd.f32 %v4631, %v4943
        %v4950 = vld [vmem:[%s4489] sm:$0x7]
        %v4951 = vld [vmem:[%s4489 + $0x4] sm:$0x7]
        %v4952 = vld [vmem:[%s4489 + $0x8] sm:$0x7]
        %v4953 = vld [vmem:[%s4489 + $0xc] sm:$0x7]
        %v4954 = vld [vmem:[%s4489 + $0x50] sm:$0x7]
        %v4955 = vld [vmem:[%s4489 + $0x54] sm:$0x7]
        %v4956 = vld [vmem:[%s4489 + $0x58] sm:$0x7]
        %v4957 = vld [vmem:[%s4489 + $0x5c] sm:$0x7]
        %v4967 = vunpack.c.l.s4 1983009808
        %v4968 = vunpack.c.0.s8 %v4967
        %v4969 = vlaneseq
        %v4970 = vshrl.u32 %v4969, 7
        %v4971 = vsub.s32 %v4968, %v4970
        %v4972 = vrot.slane %v4950, %v4971
        %v4973 = vcombine.high %v4972, %v4972
        %v4975 = vunpack.c.l.s4 1983009808
        %v4976 = vunpack.c.0.s8 %v4975
        %v4977 = vlaneseq
        %v4978 = vshrl.u32 %v4977, 7
        %v4979 = vsub.s32 %v4976, %v4978
        %v4980 = vrot.slane %v4951, %v4979
        %v4981 = vcombine.high %v4980, %v4980
        %v4983 = vunpack.c.l.s4 1983009808
        %v4984 = vunpack.c.0.s8 %v4983
        %v4985 = vlaneseq
        %v4986 = vshrl.u32 %v4985, 7
        %v4987 = vsub.s32 %v4984, %v4986
        %v4988 = vrot.slane %v4952, %v4987
        %v4989 = vcombine.high %v4988, %v4988
        %v4991 = vunpack.c.l.s4 1983009808
        %v4992 = vunpack.c.0.s8 %v4991
        %v4993 = vlaneseq
        %v4994 = vshrl.u32 %v4993, 7
        %v4995 = vsub.s32 %v4992, %v4994
        %v4996 = vrot.slane %v4953, %v4995
        %v4997 = vcombine.high %v4996, %v4996
        %v4999 = vunpack.c.l.s4 1983009808
        %v5000 = vunpack.c.0.s8 %v4999
        %v5001 = vlaneseq
        %v5002 = vshrl.u32 %v5001, 7
        %v5003 = vsub.s32 %v5000, %v5002
        %v5004 = vrot.slane %v4954, %v5003
        %v5005 = vcombine.high %v5004, %v5004
        %v5007 = vunpack.c.l.s4 1983009808
        %v5008 = vunpack.c.0.s8 %v5007
        %v5009 = vlaneseq
        %v5010 = vshrl.u32 %v5009, 7
        %v5011 = vsub.s32 %v5008, %v5010
        %v5012 = vrot.slane %v4955, %v5011
        %v5013 = vcombine.high %v5012, %v5012
        %v5015 = vunpack.c.l.s4 1983009808
        %v5016 = vunpack.c.0.s8 %v5015
        %v5017 = vlaneseq
        %v5018 = vshrl.u32 %v5017, 7
        %v5019 = vsub.s32 %v5016, %v5018
        %v5020 = vrot.slane %v4956, %v5019
        %v5021 = vcombine.high %v5020, %v5020
        %v5023 = vunpack.c.l.s4 1983009808
        %v5024 = vunpack.c.0.s8 %v5023
        %v5025 = vlaneseq
        %v5026 = vshrl.u32 %v5025, 7
        %v5027 = vsub.s32 %v5024, %v5026
        %v5028 = vrot.slane %v4957, %v5027
        %v5029 = vcombine.high %v5028, %v5028
        %v5031 = vshrl.u32 %v4972, 16
        %v5033 = vrot.slane %v5031, 6
        %v5034 = vshll.u32 %v4972, 16
        %v5036 = vrot.slane %v5034, 7
        %v5037 = vor.u32 %v5033, %v5036
        %v5038 = vrot.slane %v5037, 2
        %v5040 = vshll.u32 %v4973, 16
        %v5042 = vrot.slane %v5040, 7
        %v5043 = vsel %vm2869, %v5038, %v5042
        %v5045 = vshrl.u32 %v4980, 16
        %v5047 = vrot.slane %v5045, 6
        %v5048 = vshll.u32 %v4980, 16
        %v5050 = vrot.slane %v5048, 7
        %v5051 = vor.u32 %v5047, %v5050
        %v5052 = vrot.slane %v5051, 2
        %v5054 = vshll.u32 %v4981, 16
        %v5056 = vrot.slane %v5054, 7
        %v5057 = vsel %vm2869, %v5052, %v5056
        %v5059 = vshrl.u32 %v4988, 16
        %v5061 = vrot.slane %v5059, 6
        %v5062 = vshll.u32 %v4988, 16
        %v5064 = vrot.slane %v5062, 7
        %v5065 = vor.u32 %v5061, %v5064
        %v5066 = vrot.slane %v5065, 2
        %v5068 = vshll.u32 %v4989, 16
        %v5070 = vrot.slane %v5068, 7
        %v5071 = vsel %vm2869, %v5066, %v5070
        %v5073 = vshrl.u32 %v4996, 16
        %v5075 = vrot.slane %v5073, 6
        %v5076 = vshll.u32 %v4996, 16
        %v5078 = vrot.slane %v5076, 7
        %v5079 = vor.u32 %v5075, %v5078
        %v5080 = vrot.slane %v5079, 2
        %v5082 = vshll.u32 %v4997, 16
        %v5084 = vrot.slane %v5082, 7
        %v5085 = vsel %vm2869, %v5080, %v5084
        %v5087 = vshrl.u32 %v5004, 16
        %v5089 = vrot.slane %v5087, 6
        %v5090 = vshll.u32 %v5004, 16
        %v5092 = vrot.slane %v5090, 7
        %v5093 = vor.u32 %v5089, %v5092
        %v5094 = vrot.slane %v5093, 2
        %v5096 = vshll.u32 %v5005, 16
        %v5098 = vrot.slane %v5096, 7
        %v5099 = vsel %vm2869, %v5094, %v5098
        %v5101 = vshrl.u32 %v5012, 16
        %v5103 = vrot.slane %v5101, 6
        %v5104 = vshll.u32 %v5012, 16
        %v5106 = vrot.slane %v5104, 7
        %v5107 = vor.u32 %v5103, %v5106
        %v5108 = vrot.slane %v5107, 2
        %v5110 = vshll.u32 %v5013, 16
        %v5112 = vrot.slane %v5110, 7
        %v5113 = vsel %vm2869, %v5108, %v5112
        %v5115 = vshrl.u32 %v5020, 16
        %v5117 = vrot.slane %v5115, 6
        %v5118 = vshll.u32 %v5020, 16
        %v5120 = vrot.slane %v5118, 7
        %v5121 = vor.u32 %v5117, %v5120
        %v5122 = vrot.slane %v5121, 2
        %v5124 = vshll.u32 %v5021, 16
        %v5126 = vrot.slane %v5124, 7
        %v5127 = vsel %vm2869, %v5122, %v5126
        %v5129 = vshrl.u32 %v5028, 16
        %v5131 = vrot.slane %v5129, 6
        %v5132 = vshll.u32 %v5028, 16
        %v5134 = vrot.slane %v5132, 7
        %v5135 = vor.u32 %v5131, %v5134
        %v5136 = vrot.slane %v5135, 2
        %v5138 = vshll.u32 %v5029, 16
        %v5140 = vrot.slane %v5138, 7
        %v5141 = vsel %vm2869, %v5136, %v5140
        %s5142 = scalar_lea.vmem [#allocation5], 352
        %v5143 = vld [vmem:[%s5142] sm:$0xf]
        %v5144 = vld [vmem:[%s5142 + $0x4] sm:$0xf]
        %v5145 = vld [vmem:[%s5142 + $0x8] sm:$0xf]
        %v5146 = vld [vmem:[%s5142 + $0xc] sm:$0xf]
        %v5147 = vld [vmem:[%s5142 + $0x10] sm:$0xf]
        %v5148 = vld [vmem:[%s5142 + $0x14] sm:$0xf]
        %v5149 = vld [vmem:[%s5142 + $0x18] sm:$0xf]
        %v5150 = vld [vmem:[%s5142 + $0x1c] sm:$0xf]
        %v5151 = vcombine.low %v5043, %v5057
        %v5152 = vcombine.low %v5071, %v5085
        %v5154 = vunpack.c.l.s4 1983009808
        %v5155 = vunpack.c.0.s8 %v5154
        %v5156 = vlaneseq
        %v5157 = vshrl.u32 %v5156, 7
        %v5158 = vsub.s32 %v5155, %v5157
        %v5159 = vrot.slane %v5151, %v5158
        %v5161 = vunpack.c.l.s4 1983009808
        %v5162 = vunpack.c.0.s8 %v5161
        %v5163 = vlaneseq
        %v5164 = vshrl.u32 %v5163, 7
        %v5165 = vsub.s32 %v5162, %v5164
        %v5166 = vrot.slane %v5152, %v5165
        %v5167 = vcombine.low %v5159, %v5166
        %v5168 = vcombine.low %v5099, %v5113
        %v5169 = vcombine.low %v5127, %v5141
        %v5171 = vunpack.c.l.s4 1983009808
        %v5172 = vunpack.c.0.s8 %v5171
        %v5173 = vlaneseq
        %v5174 = vshrl.u32 %v5173, 7
        %v5175 = vsub.s32 %v5172, %v5174
        %v5176 = vrot.slane %v5168, %v5175
        %v5178 = vunpack.c.l.s4 1983009808
        %v5179 = vunpack.c.0.s8 %v5178
        %v5180 = vlaneseq
        %v5181 = vshrl.u32 %v5180, 7
        %v5182 = vsub.s32 %v5179, %v5181
        %v5183 = vrot.slane %v5169, %v5182
        %v5184 = vcombine.low %v5176, %v5183
        %v5193 = vunpack.c.l.b16 %v5143
        %v5194 = vunpack.c.l.b16 %v5144
        %v5195 = vunpack.c.l.b16 %v5145
        %v5196 = vunpack.c.l.b16 %v5146
        %v5197 = vunpack.c.l.b16 %v5147
        %v5198 = vunpack.c.l.b16 %v5148
        %v5199 = vunpack.c.l.b16 %v5149
        %v5200 = vunpack.c.l.b16 %v5150
        %v5201 = vpack.c.b16 %v5194, %v5193
        %v5202 = vpack.c.b16 %v5196, %v5195
        %v5203 = vpack.c.b16 %v5198, %v5197
        %v5204 = vpack.c.b16 %v5200, %v5199
        %v5210 = vsel %vm2606, %v5167, 0
        %v5213 = vsel %vm2606, %v5184, 0
        %5215 = vmatprep.subr.bf16.mxu0 0
        %5216 = vmatpush1.bf16.msra.mxu0 %v5201
        %5217 = vmatprep.subr.bf16.mxu0 0
        %5218 = vmatpush1.bf16.msra.mxu0 %v5202
        %5219 = vmatprep.subr.bf16.mxu0 0
        %5220 = vmatpush1.bf16.msra.mxu0 %v5203
        %5221 = vmatprep.subr.bf16.mxu0 0
        %5222 = vmatpush1.bf16.msra.mxu0 %v5204
        %5223 = vmatprep.subr.bf16.mxu0 0
        %5224 = vmatpush1.bf16.msra.mxu0 0
        %5225 = vmatprep.subr.bf16.mxu0 0
        %5226 = vmatpush1.bf16.msra.mxu0 0
        %5227 = vmatprep.subr.bf16.mxu0 0
        %5228 = vmatpush1.bf16.msra.mxu0 0
        %5229 = vmatprep.subr.bf16.mxu0 0
        %5230 = vmatpush1.bf16.msra.mxu0 0
        %5231 = vmatprep.subr.bf16.mxu0 0
        %5232 = vmatpush1.bf16.msra.mxu0 0
        %5233 = vmatprep.subr.bf16.mxu0 0
        %5234 = vmatpush1.bf16.msra.mxu0 0
        %5235 = vmatprep.subr.bf16.mxu0 0
        %5236 = vmatpush1.bf16.msra.mxu0 0
        %5237 = vmatprep.subr.bf16.mxu0 0
        %5238 = vmatpush1.bf16.msra.mxu0 0
        %5239 = vmatprep.subr.bf16.mxu0 0
        %5240 = vmatpush1.bf16.msra.mxu0 0
        %5241 = vmatprep.subr.bf16.mxu0 0
        %5242 = vmatpush1.bf16.msra.mxu0 0
        %5243 = vmatprep.subr.bf16.mxu0 0
        %5244 = vmatpush1.bf16.msra.mxu0 0
        %5245 = vmatprep.subr.bf16.mxu0 0
        %5246 = vmatpush1.bf16.msra.mxu0 0
        %5247 = vmatprep.mubr.bf16.mxu0 0
        %5248 = vmatmul.mubr.bf16.gmra.mrb[0].mxu0 %v5210
        %v5249 = vpop.f32.mrb[0].mxu0
        %v5250 = vadd.f32 0.0, %v5249
        %v5251 = vpop.f32.mrb[0].mxu0
        %v5252 = vpop.f32.mrb[0].mxu0
        %v5253 = vadd.f32 0.0, %v5252
        %v5254 = vpop.f32.mrb[0].mxu0
        %5255 = vmatprep.mubr.bf16.mxu0 0
        %5256 = vmatmul.mubr.bf16.gmra.mrb[0].mxu0 %v5213
        %v5257 = vpop.f32.mrb[0].mxu0
        %v5258 = vadd.f32 0.0, %v5257
        %v5259 = vpop.f32.mrb[0].mxu0
        %v5260 = vpop.f32.mrb[0].mxu0
        %v5261 = vadd.f32 0.0, %v5260
        %v5262 = vpop.f32.mrb[0].mxu0
        %5263 = vdwg.mxu0
        %v5264 = vadd.f32 %v4946, %v5250
        %v5265 = vadd.f32 %v4947, %v5253
        %v5266 = vadd.f32 %v4948, %v5258
        %v5267 = vadd.f32 %v4949, %v5261
        %s5268 = scalar_lea.vmem [#allocation2], 44
        %v5269 = vld [vmem:[%s5268] sm:$0x3]
        %v5270 = vld [vmem:[%s5268 + $0x4] sm:$0x3]
        %v5271 = vld [vmem:[%s5268 + $0x8] sm:$0x3]
        %v5272 = vld [vmem:[%s5268 + $0xc] sm:$0x3]
        %v5273 = vld [vmem:[%s5268 + $0x50] sm:$0x3]
        %v5274 = vld [vmem:[%s5268 + $0x54] sm:$0x3]
        %v5275 = vld [vmem:[%s5268 + $0x58] sm:$0x3]
        %v5276 = vld [vmem:[%s5268 + $0x5c] sm:$0x3]
        %s5277 = scalar_lea.vmem [#allocation5], 384
        %v5278 = vld [vmem:[%s5277] sm:$0xf]
        %v5279 = vld [vmem:[%s5277 + $0x4] sm:$0xf]
        %v5280 = vld [vmem:[%s5277 + $0x8] sm:$0xf]
        %v5281 = vld [vmem:[%s5277 + $0xc] sm:$0xf]
        %v5282 = vld [vmem:[%s5277 + $0x10] sm:$0xf]
        %v5283 = vld [vmem:[%s5277 + $0x14] sm:$0xf]
        %v5284 = vld [vmem:[%s5277 + $0x18] sm:$0xf]
        %v5285 = vld [vmem:[%s5277 + $0x1c] sm:$0xf]
        %v5294 = vcombine.low %v5269, %v5270
        %v5295 = vcombine.low %v5271, %v5272
        %v5297 = vunpack.c.l.s4 1983009808
        %v5298 = vunpack.c.0.s8 %v5297
        %v5299 = vlaneseq
        %v5300 = vshrl.u32 %v5299, 7
        %v5301 = vsub.s32 %v5298, %v5300
        %v5302 = vrot.slane %v5294, %v5301
        %v5304 = vunpack.c.l.s4 1983009808
        %v5305 = vunpack.c.0.s8 %v5304
        %v5306 = vlaneseq
        %v5307 = vshrl.u32 %v5306, 7
        %v5308 = vsub.s32 %v5305, %v5307
        %v5309 = vrot.slane %v5295, %v5308
        %v5310 = vcombine.low %v5302, %v5309
        %v5311 = vcombine.low %v5273, %v5274
        %v5312 = vcombine.low %v5275, %v5276
        %v5314 = vunpack.c.l.s4 1983009808
        %v5315 = vunpack.c.0.s8 %v5314
        %v5316 = vlaneseq
        %v5317 = vshrl.u32 %v5316, 7
        %v5318 = vsub.s32 %v5315, %v5317
        %v5319 = vrot.slane %v5311, %v5318
        %v5321 = vunpack.c.l.s4 1983009808
        %v5322 = vunpack.c.0.s8 %v5321
        %v5323 = vlaneseq
        %v5324 = vshrl.u32 %v5323, 7
        %v5325 = vsub.s32 %v5322, %v5324
        %v5326 = vrot.slane %v5312, %v5325
        %v5327 = vcombine.low %v5319, %v5326
        %v5336 = vunpack.c.l.b16 %v5278
        %v5337 = vunpack.c.l.b16 %v5279
        %v5338 = vunpack.c.l.b16 %v5280
        %v5339 = vunpack.c.l.b16 %v5281
        %v5340 = vunpack.c.l.b16 %v5282
        %v5341 = vunpack.c.l.b16 %v5283
        %v5342 = vunpack.c.l.b16 %v5284
        %v5343 = vunpack.c.l.b16 %v5285
        %v5344 = vpack.c.b16 %v5337, %v5336
        %v5345 = vpack.c.b16 %v5339, %v5338
        %v5346 = vpack.c.b16 %v5341, %v5340
        %v5347 = vpack.c.b16 %v5343, %v5342
        %v5353 = vsel %vm2606, %v5310, 0
        %v5356 = vsel %vm2606, %v5327, 0
        %5358 = vmatprep.subr.bf16.mxu0 0
        %5359 = vmatpush1.bf16.msra.mxu0 %v5344
        %5360 = vmatprep.subr.bf16.mxu0 0
        %5361 = vmatpush1.bf16.msra.mxu0 %v5345
        %5362 = vmatprep.subr.bf16.mxu0 0
        %5363 = vmatpush1.bf16.msra.mxu0 %v5346
        %5364 = vmatprep.subr.bf16.mxu0 0
        %5365 = vmatpush1.bf16.msra.mxu0 %v5347
        %5366 = vmatprep.subr.bf16.mxu0 0
        %5367 = vmatpush1.bf16.msra.mxu0 0
        %5368 = vmatprep.subr.bf16.mxu0 0
        %5369 = vmatpush1.bf16.msra.mxu0 0
        %5370 = vmatprep.subr.bf16.mxu0 0
        %5371 = vmatpush1.bf16.msra.mxu0 0
        %5372 = vmatprep.subr.bf16.mxu0 0
        %5373 = vmatpush1.bf16.msra.mxu0 0
        %5374 = vmatprep.subr.bf16.mxu0 0
        %5375 = vmatpush1.bf16.msra.mxu0 0
        %5376 = vmatprep.subr.bf16.mxu0 0
        %5377 = vmatpush1.bf16.msra.mxu0 0
        %5378 = vmatprep.subr.bf16.mxu0 0
        %5379 = vmatpush1.bf16.msra.mxu0 0
        %5380 = vmatprep.subr.bf16.mxu0 0
        %5381 = vmatpush1.bf16.msra.mxu0 0
        %5382 = vmatprep.subr.bf16.mxu0 0
        %5383 = vmatpush1.bf16.msra.mxu0 0
        %5384 = vmatprep.subr.bf16.mxu0 0
        %5385 = vmatpush1.bf16.msra.mxu0 0
        %5386 = vmatprep.subr.bf16.mxu0 0
        %5387 = vmatpush1.bf16.msra.mxu0 0
        %5388 = vmatprep.subr.bf16.mxu0 0
        %5389 = vmatpush1.bf16.msra.mxu0 0
        %5390 = vmatprep.mubr.bf16.mxu0 0
        %5391 = vmatmul.mubr.bf16.gmra.mrb[0].mxu0 %v5353
        %v5392 = vpop.f32.mrb[0].mxu0
        %v5393 = vadd.f32 0.0, %v5392
        %v5394 = vpop.f32.mrb[0].mxu0
        %v5395 = vpop.f32.mrb[0].mxu0
        %v5396 = vadd.f32 0.0, %v5395
        %v5397 = vpop.f32.mrb[0].mxu0
        %5398 = vmatprep.mubr.bf16.mxu0 0
        %5399 = vmatmul.mubr.bf16.gmra.mrb[0].mxu0 %v5356
        %v5400 = vpop.f32.mrb[0].mxu0
        %v5401 = vadd.f32 0.0, %v5400
        %v5402 = vpop.f32.mrb[0].mxu0
        %v5403 = vpop.f32.mrb[0].mxu0
        %v5404 = vadd.f32 0.0, %v5403
        %v5405 = vpop.f32.mrb[0].mxu0
        %5406 = vdwg.mxu0
        %v5407 = vadd.f32 %v5264, %v5393
        %v5408 = vadd.f32 %v5265, %v5396
        %v5409 = vadd.f32 %v5266, %v5401
        %v5410 = vadd.f32 %v5267, %v5404
        %s5411 = scalar_lea.vmem [#allocation2], 64
        %v5412 = vld [vmem:[%s5411] sm:$0x3]
        %v5413 = vld [vmem:[%s5411 + $0x4] sm:$0x3]
        %v5414 = vld [vmem:[%s5411 + $0x8] sm:$0x3]
        %v5415 = vld [vmem:[%s5411 + $0xc] sm:$0x3]
        %v5416 = vld [vmem:[%s5411 + $0x50] sm:$0x3]
        %v5417 = vld [vmem:[%s5411 + $0x54] sm:$0x3]
        %v5418 = vld [vmem:[%s5411 + $0x58] sm:$0x3]
        %v5419 = vld [vmem:[%s5411 + $0x5c] sm:$0x3]
        %s5420 = scalar_lea.vmem [#allocation5], 416
        %v5421 = vld [vmem:[%s5420] sm:$0xf]
        %v5422 = vld [vmem:[%s5420 + $0x4] sm:$0xf]
        %v5423 = vld [vmem:[%s5420 + $0x8] sm:$0xf]
        %v5424 = vld [vmem:[%s5420 + $0xc] sm:$0xf]
        %v5425 = vld [vmem:[%s5420 + $0x10] sm:$0xf]
        %v5426 = vld [vmem:[%s5420 + $0x14] sm:$0xf]
        %v5427 = vld [vmem:[%s5420 + $0x18] sm:$0xf]
        %v5428 = vld [vmem:[%s5420 + $0x1c] sm:$0xf]
        %v5437 = vcombine.low %v5412, %v5413
        %v5438 = vcombine.low %v5414, %v5415
        %v5440 = vunpack.c.l.s4 1983009808
        %v5441 = vunpack.c.0.s8 %v5440
        %v5442 = vlaneseq
        %v5443 = vshrl.u32 %v5442, 7
        %v5444 = vsub.s32 %v5441, %v5443
        %v5445 = vrot.slane %v5437, %v5444
        %v5447 = vunpack.c.l.s4 1983009808
        %v5448 = vunpack.c.0.s8 %v5447
        %v5449 = vlaneseq
        %v5450 = vshrl.u32 %v5449, 7
        %v5451 = vsub.s32 %v5448, %v5450
        %v5452 = vrot.slane %v5438, %v5451
        %v5453 = vcombine.low %v5445, %v5452
        %v5454 = vcombine.low %v5416, %v5417
        %v5455 = vcombine.low %v5418, %v5419
        %v5457 = vunpack.c.l.s4 1983009808
        %v5458 = vunpack.c.0.s8 %v5457
        %v5459 = vlaneseq
        %v5460 = vshrl.u32 %v5459, 7
        %v5461 = vsub.s32 %v5458, %v5460
        %v5462 = vrot.slane %v5454, %v5461
        %v5464 = vunpack.c.l.s4 1983009808
        %v5465 = vunpack.c.0.s8 %v5464
        %v5466 = vlaneseq
        %v5467 = vshrl.u32 %v5466, 7
        %v5468 = vsub.s32 %v5465, %v5467
        %v5469 = vrot.slane %v5455, %v5468
        %v5470 = vcombine.low %v5462, %v5469
        %v5479 = vunpack.c.l.b16 %v5421
        %v5480 = vunpack.c.l.b16 %v5422
        %v5481 = vunpack.c.l.b16 %v5423
        %v5482 = vunpack.c.l.b16 %v5424
        %v5483 = vunpack.c.l.b16 %v5425
        %v5484 = vunpack.c.l.b16 %v5426
        %v5485 = vunpack.c.l.b16 %v5427
        %v5486 = vunpack.c.l.b16 %v5428
        %v5487 = vpack.c.b16 %v5480, %v5479
        %v5488 = vpack.c.b16 %v5482, %v5481
        %v5489 = vpack.c.b16 %v5484, %v5483
        %v5490 = vpack.c.b16 %v5486, %v5485
        %v5496 = vsel %vm2606, %v5453, 0
        %v5499 = vsel %vm2606, %v5470, 0
        %5501 = vmatprep.subr.bf16.mxu0 0
        %5502 = vmatpush1.bf16.msra.mxu0 %v5487
        %5503 = vmatprep.subr.bf16.mxu0 0
        %5504 = vmatpush1.bf16.msra.mxu0 %v5488
        %5505 = vmatprep.subr.bf16.mxu0 0
        %5506 = vmatpush1.bf16.msra.mxu0 %v5489
        %5507 = vmatprep.subr.bf16.mxu0 0
        %5508 = vmatpush1.bf16.msra.mxu0 %v5490
        %5509 = vmatprep.subr.bf16.mxu0 0
        %5510 = vmatpush1.bf16.msra.mxu0 0
        %5511 = vmatprep.subr.bf16.mxu0 0
        %5512 = vmatpush1.bf16.msra.mxu0 0
        %5513 = vmatprep.subr.bf16.mxu0 0
        %5514 = vmatpush1.bf16.msra.mxu0 0
        %5515 = vmatprep.subr.bf16.mxu0 0
        %5516 = vmatpush1.bf16.msra.mxu0 0
        %5517 = vmatprep.subr.bf16.mxu0 0
        %5518 = vmatpush1.bf16.msra.mxu0 0
        %5519 = vmatprep.subr.bf16.mxu0 0
        %5520 = vmatpush1.bf16.msra.mxu0 0
        %5521 = vmatprep.subr.bf16.mxu0 0
        %5522 = vmatpush1.bf16.msra.mxu0 0
        %5523 = vmatprep.subr.bf16.mxu0 0
        %5524 = vmatpush1.bf16.msra.mxu0 0
        %5525 = vmatprep.subr.bf16.mxu0 0
        %5526 = vmatpush1.bf16.msra.mxu0 0
        %5527 = vmatprep.subr.bf16.mxu0 0
        %5528 = vmatpush1.bf16.msra.mxu0 0
        %5529 = vmatprep.subr.bf16.mxu0 0
        %5530 = vmatpush1.bf16.msra.mxu0 0
        %5531 = vmatprep.subr.bf16.mxu0 0
        %5532 = vmatpush1.bf16.msra.mxu0 0
        %5533 = vmatprep.mubr.bf16.mxu0 0
        %5534 = vmatmul.mubr.bf16.gmra.mrb[0].mxu0 %v5496
        %v5535 = vpop.f32.mrb[0].mxu0
        %v5536 = vadd.f32 0.0, %v5535
        %v5537 = vpop.f32.mrb[0].mxu0
        %v5538 = vpop.f32.mrb[0].mxu0
        %v5539 = vadd.f32 0.0, %v5538
        %v5540 = vpop.f32.mrb[0].mxu0
        %5541 = vmatprep.mubr.bf16.mxu0 0
        %5542 = vmatmul.mubr.bf16.gmra.mrb[0].mxu0 %v5499
        %v5543 = vpop.f32.mrb[0].mxu0
        %v5544 = vadd.f32 0.0, %v5543
        %v5545 = vpop.f32.mrb[0].mxu0
        %v5546 = vpop.f32.mrb[0].mxu0
        %v5547 = vadd.f32 0.0, %v5546
        %v5548 = vpop.f32.mrb[0].mxu0
        %5549 = vdwg.mxu0
        %v5550 = vadd.f32 %v5407, %v5536
        %v5551 = vadd.f32 %v5408, %v5539
        %v5552 = vadd.f32 %v5409, %v5544
        %v5553 = vadd.f32 %v5410, %v5547
        %v5554 = vld [vmem:[%s5268] sm:$0x7]
        %v5555 = vld [vmem:[%s5268 + $0x4] sm:$0x7]
        %v5556 = vld [vmem:[%s5268 + $0x8] sm:$0x7]
        %v5557 = vld [vmem:[%s5268 + $0xc] sm:$0x7]
        %v5558 = vld [vmem:[%s5268 + $0x50] sm:$0x7]
        %v5559 = vld [vmem:[%s5268 + $0x54] sm:$0x7]
        %v5560 = vld [vmem:[%s5268 + $0x58] sm:$0x7]
        %v5561 = vld [vmem:[%s5268 + $0x5c] sm:$0x7]
        %v5571 = vunpack.c.l.s4 1983009808
        %v5572 = vunpack.c.0.s8 %v5571
        %v5573 = vlaneseq
        %v5574 = vshrl.u32 %v5573, 7
        %v5575 = vsub.s32 %v5572, %v5574
        %v5576 = vrot.slane %v5554, %v5575
        %v5577 = vcombine.high %v5576, %v5576
        %v5579 = vunpack.c.l.s4 1983009808
        %v5580 = vunpack.c.0.s8 %v5579
        %v5581 = vlaneseq
        %v5582 = vshrl.u32 %v5581, 7
        %v5583 = vsub.s32 %v5580, %v5582
        %v5584 = vrot.slane %v5555, %v5583
        %v5585 = vcombine.high %v5584, %v5584
        %v5587 = vunpack.c.l.s4 1983009808
        %v5588 = vunpack.c.0.s8 %v5587
        %v5589 = vlaneseq
        %v5590 = vshrl.u32 %v5589, 7
        %v5591 = vsub.s32 %v5588, %v5590
        %v5592 = vrot.slane %v5556, %v5591
        %v5593 = vcombine.high %v5592, %v5592
        %v5595 = vunpack.c.l.s4 1983009808
        %v5596 = vunpack.c.0.s8 %v5595
        %v5597 = vlaneseq
        %v5598 = vshrl.u32 %v5597, 7
        %v5599 = vsub.s32 %v5596, %v5598
        %v5600 = vrot.slane %v5557, %v5599
        %v5601 = vcombine.high %v5600, %v5600
        %v5603 = vunpack.c.l.s4 1983009808
        %v5604 = vunpack.c.0.s8 %v5603
        %v5605 = vlaneseq
        %v5606 = vshrl.u32 %v5605, 7
        %v5607 = vsub.s32 %v5604, %v5606
        %v5608 = vrot.slane %v5558, %v5607
        %v5609 = vcombine.high %v5608, %v5608
        %v5611 = vunpack.c.l.s4 1983009808
        %v5612 = vunpack.c.0.s8 %v5611
        %v5613 = vlaneseq
        %v5614 = vshrl.u32 %v5613, 7
        %v5615 = vsub.s32 %v5612, %v5614
        %v5616 = vrot.slane %v5559, %v5615
        %v5617 = vcombine.high %v5616, %v5616
        %v5619 = vunpack.c.l.s4 1983009808
        %v5620 = vunpack.c.0.s8 %v5619
        %v5621 = vlaneseq
        %v5622 = vshrl.u32 %v5621, 7
        %v5623 = vsub.s32 %v5620, %v5622
        %v5624 = vrot.slane %v5560, %v5623
        %v5625 = vcombine.high %v5624, %v5624
        %v5627 = vunpack.c.l.s4 1983009808
        %v5628 = vunpack.c.0.s8 %v5627
        %v5629 = vlaneseq
        %v5630 = vshrl.u32 %v5629, 7
        %v5631 = vsub.s32 %v5628, %v5630
        %v5632 = vrot.slane %v5561, %v5631
        %v5633 = vcombine.high %v5632, %v5632
        %v5635 = vshrl.u32 %v5576, 16
        %v5637 = vrot.slane %v5635, 6
        %v5638 = vshll.u32 %v5576, 16
        %v5640 = vrot.slane %v5638, 7
        %v5641 = vor.u32 %v5637, %v5640
        %v5642 = vrot.slane %v5641, 2
        %v5644 = vshll.u32 %v5577, 16
        %v5646 = vrot.slane %v5644, 7
        %v5647 = vsel %vm2869, %v5642, %v5646
        %v5649 = vshrl.u32 %v5584, 16
        %v5651 = vrot.slane %v5649, 6
        %v5652 = vshll.u32 %v5584, 16
        %v5654 = vrot.slane %v5652, 7
        %v5655 = vor.u32 %v5651, %v5654
        %v5656 = vrot.slane %v5655, 2
        %v5658 = vshll.u32 %v5585, 16
        %v5660 = vrot.slane %v5658, 7
        %v5661 = vsel %vm2869, %v5656, %v5660
        %v5663 = vshrl.u32 %v5592, 16
        %v5665 = vrot.slane %v5663, 6
        %v5666 = vshll.u32 %v5592, 16
        %v5668 = vrot.slane %v5666, 7
        %v5669 = vor.u32 %v5665, %v5668
        %v5670 = vrot.slane %v5669, 2
        %v5672 = vshll.u32 %v5593, 16
        %v5674 = vrot.slane %v5672, 7
        %v5675 = vsel %vm2869, %v5670, %v5674
        %v5677 = vshrl.u32 %v5600, 16
        %v5679 = vrot.slane %v5677, 6
        %v5680 = vshll.u32 %v5600, 16
        %v5682 = vrot.slane %v5680, 7
        %v5683 = vor.u32 %v5679, %v5682
        %v5684 = vrot.slane %v5683, 2
        %v5686 = vshll.u32 %v5601, 16
        %v5688 = vrot.slane %v5686, 7
        %v5689 = vsel %vm2869, %v5684, %v5688
        %v5691 = vshrl.u32 %v5608, 16
        %v5693 = vrot.slane %v5691, 6
        %v5694 = vshll.u32 %v5608, 16
        %v5696 = vrot.slane %v5694, 7
        %v5697 = vor.u32 %v5693, %v5696
        %v5698 = vrot.slane %v5697, 2
        %v5700 = vshll.u32 %v5609, 16
        %v5702 = vrot.slane %v5700, 7
        %v5703 = vsel %vm2869, %v5698, %v5702
        %v5705 = vshrl.u32 %v5616, 16
        %v5707 = vrot.slane %v5705, 6
        %v5708 = vshll.u32 %v5616, 16
        %v5710 = vrot.slane %v5708, 7
        %v5711 = vor.u32 %v5707, %v5710
        %v5712 = vrot.slane %v5711, 2
        %v5714 = vshll.u32 %v5617, 16
        %v5716 = vrot.slane %v5714, 7
        %v5717 = vsel %vm2869, %v5712, %v5716
        %v5719 = vshrl.u32 %v5624, 16
        %v5721 = vrot.slane %v5719, 6
        %v5722 = vshll.u32 %v5624, 16
        %v5724 = vrot.slane %v5722, 7
        %v5725 = vor.u32 %v5721, %v5724
        %v5726 = vrot.slane %v5725, 2
        %v5728 = vshll.u32 %v5625, 16
        %v5730 = vrot.slane %v5728, 7
        %v5731 = vsel %vm2869, %v5726, %v5730
        %v5733 = vshrl.u32 %v5632, 16
        %v5735 = vrot.slane %v5733, 6
        %v5736 = vshll.u32 %v5632, 16
        %v5738 = vrot.slane %v5736, 7
        %v5739 = vor.u32 %v5735, %v5738
        %v5740 = vrot.slane %v5739, 2
        %v5742 = vshll.u32 %v5633, 16
        %v5744 = vrot.slane %v5742, 7
        %v5745 = vsel %vm2869, %v5740, %v5744
        %s5746 = scalar_lea.vmem [#allocation5], 448
        %v5747 = vld [vmem:[%s5746] sm:$0xf]
        %v5748 = vld [vmem:[%s5746 + $0x4] sm:$0xf]
        %v5749 = vld [vmem:[%s5746 + $0x8] sm:$0xf]
        %v5750 = vld [vmem:[%s5746 + $0xc] sm:$0xf]
        %v5751 = vld [vmem:[%s5746 + $0x10] sm:$0xf]
        %v5752 = vld [vmem:[%s5746 + $0x14] sm:$0xf]
        %v5753 = vld [vmem:[%s5746 + $0x18] sm:$0xf]
        %v5754 = vld [vmem:[%s5746 + $0x1c] sm:$0xf]
        %v5755 = vcombine.low %v5647, %v5661
        %v5756 = vcombine.low %v5675, %v5689
        %v5758 = vunpack.c.l.s4 1983009808
        %v5759 = vunpack.c.0.s8 %v5758
        %v5760 = vlaneseq
        %v5761 = vshrl.u32 %v5760, 7
        %v5762 = vsub.s32 %v5759, %v5761
        %v5763 = vrot.slane %v5755, %v5762
        %v5765 = vunpack.c.l.s4 1983009808
        %v5766 = vunpack.c.0.s8 %v5765
        %v5767 = vlaneseq
        %v5768 = vshrl.u32 %v5767, 7
        %v5769 = vsub.s32 %v5766, %v5768
        %v5770 = vrot.slane %v5756, %v5769
        %v5771 = vcombine.low %v5763, %v5770
        %v5772 = vcombine.low %v5703, %v5717
        %v5773 = vcombine.low %v5731, %v5745
        %v5775 = vunpack.c.l.s4 1983009808
        %v5776 = vunpack.c.0.s8 %v5775
        %v5777 = vlaneseq
        %v5778 = vshrl.u32 %v5777, 7
        %v5779 = vsub.s32 %v5776, %v5778
        %v5780 = vrot.slane %v5772, %v5779
        %v5782 = vunpack.c.l.s4 1983009808
        %v5783 = vunpack.c.0.s8 %v5782
        %v5784 = vlaneseq
        %v5785 = vshrl.u32 %v5784, 7
        %v5786 = vsub.s32 %v5783, %v5785
        %v5787 = vrot.slane %v5773, %v5786
        %v5788 = vcombine.low %v5780, %v5787
        %v5797 = vunpack.c.l.b16 %v5747
        %v5798 = vunpack.c.l.b16 %v5748
        %v5799 = vunpack.c.l.b16 %v5749
        %v5800 = vunpack.c.l.b16 %v5750
        %v5801 = vunpack.c.l.b16 %v5751
        %v5802 = vunpack.c.l.b16 %v5752
        %v5803 = vunpack.c.l.b16 %v5753
        %v5804 = vunpack.c.l.b16 %v5754
        %v5805 = vpack.c.b16 %v5798, %v5797
        %v5806 = vpack.c.b16 %v5800, %v5799
        %v5807 = vpack.c.b16 %v5802, %v5801
        %v5808 = vpack.c.b16 %v5804, %v5803
        %v5814 = vsel %vm2606, %v5771, 0
        %v5817 = vsel %vm2606, %v5788, 0
        %5819 = vmatprep.subr.bf16.mxu0 0
        %5820 = vmatpush1.bf16.msra.mxu0 %v5805
        %5821 = vmatprep.subr.bf16.mxu0 0
        %5822 = vmatpush1.bf16.msra.mxu0 %v5806
        %5823 = vmatprep.subr.bf16.mxu0 0
        %5824 = vmatpush1.bf16.msra.mxu0 %v5807
        %5825 = vmatprep.subr.bf16.mxu0 0
        %5826 = vmatpush1.bf16.msra.mxu0 %v5808
        %5827 = vmatprep.subr.bf16.mxu0 0
        %5828 = vmatpush1.bf16.msra.mxu0 0
        %5829 = vmatprep.subr.bf16.mxu0 0
        %5830 = vmatpush1.bf16.msra.mxu0 0
        %5831 = vmatprep.subr.bf16.mxu0 0
        %5832 = vmatpush1.bf16.msra.mxu0 0
        %5833 = vmatprep.subr.bf16.mxu0 0
        %5834 = vmatpush1.bf16.msra.mxu0 0
        %5835 = vmatprep.subr.bf16.mxu0 0
        %5836 = vmatpush1.bf16.msra.mxu0 0
        %5837 = vmatprep.subr.bf16.mxu0 0
        %5838 = vmatpush1.bf16.msra.mxu0 0
        %5839 = vmatprep.subr.bf16.mxu0 0
        %5840 = vmatpush1.bf16.msra.mxu0 0
        %5841 = vmatprep.subr.bf16.mxu0 0
        %5842 = vmatpush1.bf16.msra.mxu0 0
        %5843 = vmatprep.subr.bf16.mxu0 0
        %5844 = vmatpush1.bf16.msra.mxu0 0
        %5845 = vmatprep.subr.bf16.mxu0 0
        %5846 = vmatpush1.bf16.msra.mxu0 0
        %5847 = vmatprep.subr.bf16.mxu0 0
        %5848 = vmatpush1.bf16.msra.mxu0 0
        %5849 = vmatprep.subr.bf16.mxu0 0
        %5850 = vmatpush1.bf16.msra.mxu0 0
        %5851 = vmatprep.mubr.bf16.mxu0 0
        %5852 = vmatmul.mubr.bf16.gmra.mrb[0].mxu0 %v5814
        %v5853 = vpop.f32.mrb[0].mxu0
        %v5854 = vadd.f32 0.0, %v5853
        %v5855 = vpop.f32.mrb[0].mxu0
        %v5856 = vpop.f32.mrb[0].mxu0
        %v5857 = vadd.f32 0.0, %v5856
        %v5858 = vpop.f32.mrb[0].mxu0
        %5859 = vmatprep.mubr.bf16.mxu0 0
        %5860 = vmatmul.mubr.bf16.gmra.mrb[0].mxu0 %v5817
        %v5861 = vpop.f32.mrb[0].mxu0
        %v5862 = vadd.f32 0.0, %v5861
        %v5863 = vpop.f32.mrb[0].mxu0
        %v5864 = vpop.f32.mrb[0].mxu0
        %v5865 = vadd.f32 0.0, %v5864
        %v5866 = vpop.f32.mrb[0].mxu0
        %5867 = vdwg.mxu0
        %v5868 = vadd.f32 %v5550, %v5854
        %v5869 = vadd.f32 %v5551, %v5857
        %v5870 = vadd.f32 %v5552, %v5862
        %v5871 = vadd.f32 %v5553, %v5865
        %v5872 = vld [vmem:[%s5411] sm:$0x7]
        %v5873 = vld [vmem:[%s5411 + $0x4] sm:$0x7]
        %v5874 = vld [vmem:[%s5411 + $0x8] sm:$0x7]
        %v5875 = vld [vmem:[%s5411 + $0xc] sm:$0x7]
        %v5876 = vld [vmem:[%s5411 + $0x50] sm:$0x7]
        %v5877 = vld [vmem:[%s5411 + $0x54] sm:$0x7]
        %v5878 = vld [vmem:[%s5411 + $0x58] sm:$0x7]
        %v5879 = vld [vmem:[%s5411 + $0x5c] sm:$0x7]
        %v5889 = vunpack.c.l.s4 1983009808
        %v5890 = vunpack.c.0.s8 %v5889
        %v5891 = vlaneseq
        %v5892 = vshrl.u32 %v5891, 7
        %v5893 = vsub.s32 %v5890, %v5892
        %v5894 = vrot.slane %v5872, %v5893
        %v5895 = vcombine.high %v5894, %v5894
        %v5897 = vunpack.c.l.s4 1983009808
        %v5898 = vunpack.c.0.s8 %v5897
        %v5899 = vlaneseq
        %v5900 = vshrl.u32 %v5899, 7
        %v5901 = vsub.s32 %v5898, %v5900
        %v5902 = vrot.slane %v5873, %v5901
        %v5903 = vcombine.high %v5902, %v5902
        %v5905 = vunpack.c.l.s4 1983009808
        %v5906 = vunpack.c.0.s8 %v5905
        %v5907 = vlaneseq
        %v5908 = vshrl.u32 %v5907, 7
        %v5909 = vsub.s32 %v5906, %v5908
        %v5910 = vrot.slane %v5874, %v5909
        %v5911 = vcombine.high %v5910, %v5910
        %v5913 = vunpack.c.l.s4 1983009808
        %v5914 = vunpack.c.0.s8 %v5913
        %v5915 = vlaneseq
        %v5916 = vshrl.u32 %v5915, 7
        %v5917 = vsub.s32 %v5914, %v5916
        %v5918 = vrot.slane %v5875, %v5917
        %v5919 = vcombine.high %v5918, %v5918
        %v5921 = vunpack.c.l.s4 1983009808
        %v5922 = vunpack.c.0.s8 %v5921
        %v5923 = vlaneseq
        %v5924 = vshrl.u32 %v5923, 7
        %v5925 = vsub.s32 %v5922, %v5924
        %v5926 = vrot.slane %v5876, %v5925
        %v5927 = vcombine.high %v5926, %v5926
        %v5929 = vunpack.c.l.s4 1983009808
        %v5930 = vunpack.c.0.s8 %v5929
        %v5931 = vlaneseq
        %v5932 = vshrl.u32 %v5931, 7
        %v5933 = vsub.s32 %v5930, %v5932
        %v5934 = vrot.slane %v5877, %v5933
        %v5935 = vcombine.high %v5934, %v5934
        %v5937 = vunpack.c.l.s4 1983009808
        %v5938 = vunpack.c.0.s8 %v5937
        %v5939 = vlaneseq
        %v5940 = vshrl.u32 %v5939, 7
        %v5941 = vsub.s32 %v5938, %v5940
        %v5942 = vrot.slane %v5878, %v5941
        %v5943 = vcombine.high %v5942, %v5942
        %v5945 = vunpack.c.l.s4 1983009808
        %v5946 = vunpack.c.0.s8 %v5945
        %v5947 = vlaneseq
        %v5948 = vshrl.u32 %v5947, 7
        %v5949 = vsub.s32 %v5946, %v5948
        %v5950 = vrot.slane %v5879, %v5949
        %v5951 = vcombine.high %v5950, %v5950
        %v5953 = vshrl.u32 %v5894, 16
        %v5955 = vrot.slane %v5953, 6
        %v5956 = vshll.u32 %v5894, 16
        %v5958 = vrot.slane %v5956, 7
        %v5959 = vor.u32 %v5955, %v5958
        %v5960 = vrot.slane %v5959, 2
        %v5962 = vshll.u32 %v5895, 16
        %v5964 = vrot.slane %v5962, 7
        %v5965 = vsel %vm2869, %v5960, %v5964
        %v5967 = vshrl.u32 %v5902, 16
        %v5969 = vrot.slane %v5967, 6
        %v5970 = vshll.u32 %v5902, 16
        %v5972 = vrot.slane %v5970, 7
        %v5973 = vor.u32 %v5969, %v5972
        %v5974 = vrot.slane %v5973, 2
        %v5976 = vshll.u32 %v5903, 16
        %v5978 = vrot.slane %v5976, 7
        %v5979 = vsel %vm2869, %v5974, %v5978
        %v5981 = vshrl.u32 %v5910, 16
        %v5983 = vrot.slane %v5981, 6
        %v5984 = vshll.u32 %v5910, 16
        %v5986 = vrot.slane %v5984, 7
        %v5987 = vor.u32 %v5983, %v5986
        %v5988 = vrot.slane %v5987, 2
        %v5990 = vshll.u32 %v5911, 16
        %v5992 = vrot.slane %v5990, 7
        %v5993 = vsel %vm2869, %v5988, %v5992
        %v5995 = vshrl.u32 %v5918, 16
        %v5997 = vrot.slane %v5995, 6
        %v5998 = vshll.u32 %v5918, 16
        %v6000 = vrot.slane %v5998, 7
        %v6001 = vor.u32 %v5997, %v6000
        %v6002 = vrot.slane %v6001, 2
        %v6004 = vshll.u32 %v5919, 16
        %v6006 = vrot.slane %v6004, 7
        %v6007 = vsel %vm2869, %v6002, %v6006
        %v6009 = vshrl.u32 %v5926, 16
        %v6011 = vrot.slane %v6009, 6
        %v6012 = vshll.u32 %v5926, 16
        %v6014 = vrot.slane %v6012, 7
        %v6015 = vor.u32 %v6011, %v6014
        %v6016 = vrot.slane %v6015, 2
        %v6018 = vshll.u32 %v5927, 16
        %v6020 = vrot.slane %v6018, 7
        %v6021 = vsel %vm2869, %v6016, %v6020
        %v6023 = vshrl.u32 %v5934, 16
        %v6025 = vrot.slane %v6023, 6
        %v6026 = vshll.u32 %v5934, 16
        %v6028 = vrot.slane %v6026, 7
        %v6029 = vor.u32 %v6025, %v6028
        %v6030 = vrot.slane %v6029, 2
        %v6032 = vshll.u32 %v5935, 16
        %v6034 = vrot.slane %v6032, 7
        %v6035 = vsel %vm2869, %v6030, %v6034
        %v6037 = vshrl.u32 %v5942, 16
        %v6039 = vrot.slane %v6037, 6
        %v6040 = vshll.u32 %v5942, 16
        %v6042 = vrot.slane %v6040, 7
        %v6043 = vor.u32 %v6039, %v6042
        %v6044 = vrot.slane %v6043, 2
        %v6046 = vshll.u32 %v5943, 16
        %v6048 = vrot.slane %v6046, 7
        %v6049 = vsel %vm2869, %v6044, %v6048
        %v6051 = vshrl.u32 %v5950, 16
        %v6053 = vrot.slane %v6051, 6
        %v6054 = vshll.u32 %v5950, 16
        %v6056 = vrot.slane %v6054, 7
        %v6057 = vor.u32 %v6053, %v6056
        %v6058 = vrot.slane %v6057, 2
        %v6060 = vshll.u32 %v5951, 16
        %v6062 = vrot.slane %v6060, 7
        %v6063 = vsel %vm2869, %v6058, %v6062
        %s6064 = scalar_lea.vmem [#allocation5], 480
        %v6065 = vld [vmem:[%s6064] sm:$0xf]
        %v6066 = vld [vmem:[%s6064 + $0x4] sm:$0xf]
        %v6067 = vld [vmem:[%s6064 + $0x8] sm:$0xf]
        %v6068 = vld [vmem:[%s6064 + $0xc] sm:$0xf]
        %v6069 = vld [vmem:[%s6064 + $0x10] sm:$0xf]
        %v6070 = vld [vmem:[%s6064 + $0x14] sm:$0xf]
        %v6071 = vld [vmem:[%s6064 + $0x18] sm:$0xf]
        %v6072 = vld [vmem:[%s6064 + $0x1c] sm:$0xf]
        %v6073 = vcombine.low %v5965, %v5979
        %v6074 = vcombine.low %v5993, %v6007
        %v6076 = vunpack.c.l.s4 1983009808
        %v6077 = vunpack.c.0.s8 %v6076
        %v6078 = vlaneseq
        %v6079 = vshrl.u32 %v6078, 7
        %v6080 = vsub.s32 %v6077, %v6079
        %v6081 = vrot.slane %v6073, %v6080
        %v6083 = vunpack.c.l.s4 1983009808
        %v6084 = vunpack.c.0.s8 %v6083
        %v6085 = vlaneseq
        %v6086 = vshrl.u32 %v6085, 7
        %v6087 = vsub.s32 %v6084, %v6086
        %v6088 = vrot.slane %v6074, %v6087
        %v6089 = vcombine.low %v6081, %v6088
        %v6090 = vcombine.low %v6021, %v6035
        %v6091 = vcombine.low %v6049, %v6063
        %v6093 = vunpack.c.l.s4 1983009808
        %v6094 = vunpack.c.0.s8 %v6093
        %v6095 = vlaneseq
        %v6096 = vshrl.u32 %v6095, 7
        %v6097 = vsub.s32 %v6094, %v6096
        %v6098 = vrot.slane %v6090, %v6097
        %v6100 = vunpack.c.l.s4 1983009808
        %v6101 = vunpack.c.0.s8 %v6100
        %v6102 = vlaneseq
        %v6103 = vshrl.u32 %v6102, 7
        %v6104 = vsub.s32 %v6101, %v6103
        %v6105 = vrot.slane %v6091, %v6104
        %v6106 = vcombine.low %v6098, %v6105
        %v6115 = vunpack.c.l.b16 %v6065
        %v6116 = vunpack.c.l.b16 %v6066
        %v6117 = vunpack.c.l.b16 %v6067
        %v6118 = vunpack.c.l.b16 %v6068
        %v6119 = vunpack.c.l.b16 %v6069
        %v6120 = vunpack.c.l.b16 %v6070
        %v6121 = vunpack.c.l.b16 %v6071
        %v6122 = vunpack.c.l.b16 %v6072
        %v6123 = vpack.c.b16 %v6116, %v6115
        %v6124 = vpack.c.b16 %v6118, %v6117
        %v6125 = vpack.c.b16 %v6120, %v6119
        %v6126 = vpack.c.b16 %v6122, %v6121
        %v6132 = vsel %vm2606, %v6089, 0
        %v6135 = vsel %vm2606, %v6106, 0
        %6137 = vmatprep.subr.bf16.mxu0 0
        %6138 = vmatpush1.bf16.msra.mxu0 %v6123
        %6139 = vmatprep.subr.bf16.mxu0 0
        %6140 = vmatpush1.bf16.msra.mxu0 %v6124
        %6141 = vmatprep.subr.bf16.mxu0 0
        %6142 = vmatpush1.bf16.msra.mxu0 %v6125
        %6143 = vmatprep.subr.bf16.mxu0 0
        %6144 = vmatpush1.bf16.msra.mxu0 %v6126
        %6145 = vmatprep.subr.bf16.mxu0 0
        %6146 = vmatpush1.bf16.msra.mxu0 0
        %6147 = vmatprep.subr.bf16.mxu0 0
        %6148 = vmatpush1.bf16.msra.mxu0 0
        %6149 = vmatprep.subr.bf16.mxu0 0
        %6150 = vmatpush1.bf16.msra.mxu0 0
        %6151 = vmatprep.subr.bf16.mxu0 0
        %6152 = vmatpush1.bf16.msra.mxu0 0
        %6153 = vmatprep.subr.bf16.mxu0 0
        %6154 = vmatpush1.bf16.msra.mxu0 0
        %6155 = vmatprep.subr.bf16.mxu0 0
        %6156 = vmatpush1.bf16.msra.mxu0 0
        %6157 = vmatprep.subr.bf16.mxu0 0
        %6158 = vmatpush1.bf16.msra.mxu0 0
        %6159 = vmatprep.subr.bf16.mxu0 0
        %6160 = vmatpush1.bf16.msra.mxu0 0
        %6161 = vmatprep.subr.bf16.mxu0 0
        %6162 = vmatpush1.bf16.msra.mxu0 0
        %6163 = vmatprep.subr.bf16.mxu0 0
        %6164 = vmatpush1.bf16.msra.mxu0 0
        %6165 = vmatprep.subr.bf16.mxu0 0
        %6166 = vmatpush1.bf16.msra.mxu0 0
        %6167 = vmatprep.subr.bf16.mxu0 0
        %6168 = vmatpush1.bf16.msra.mxu0 0
        %6169 = vmatprep.mubr.bf16.mxu0 0
        %6170 = vmatmul.mubr.bf16.gmra.mrb[0].mxu0 %v6132
        %v6171 = vpop.f32.mrb[0].mxu0
        %v6172 = vadd.f32 0.0, %v6171
        %v6173 = vpop.f32.mrb[0].mxu0
        %v6174 = vpop.f32.mrb[0].mxu0
        %v6175 = vadd.f32 0.0, %v6174
        %v6176 = vpop.f32.mrb[0].mxu0
        %6177 = vmatprep.mubr.bf16.mxu0 0
        %6178 = vmatmul.mubr.bf16.gmra.mrb[0].mxu0 %v6135
        %v6179 = vpop.f32.mrb[0].mxu0
        %v6180 = vadd.f32 0.0, %v6179
        %v6181 = vpop.f32.mrb[0].mxu0
        %v6182 = vpop.f32.mrb[0].mxu0
        %v6183 = vadd.f32 0.0, %v6182
        %v6184 = vpop.f32.mrb[0].mxu0
        %6185 = vdwg.mxu0
        %v6186 = vadd.f32 %v5868, %v6172
        %v6187 = vadd.f32 %v5869, %v6175
        %v6188 = vadd.f32 %v5870, %v6180
        %v6189 = vadd.f32 %v5871, %v6183
        %v6190 = vld [vmem:[%s4] sm:$0x1]
        %v6192 = vlaneseq
        %v6193 = vshrl.u32 %v6192, 7
        %v6194 = vsub.s32 0, %v6193
        %v6195 = vrot.slane %v6190, %v6194
        %v6197 = vadd.f32 %v6186, %v6195
        %v6198 = vadd.f32 %v6187, %v6195
        %v6199 = vadd.f32 %v6188, %v6195
        %v6200 = vadd.f32 %v6189, %v6195
        %vm6201 = vcmp.ge.f32.partialorder %v6197, 0.0
        %vm6202 = vcmp.ge.f32.partialorder %v6198, 0.0
        %vm6203 = vcmp.ge.f32.partialorder %v6199, 0.0
        %vm6204 = vcmp.ge.f32.partialorder %v6200, 0.0
        %v6205 = vmul.f32 %v6197, 0.2
        %v6206 = vmul.f32 %v6198, 0.2
        %v6207 = vmul.f32 %v6199, 0.2
        %v6208 = vmul.f32 %v6200, 0.2
        %v6209 = vsel %vm6201, %v6197, %v6205
        %v6210 = vsel %vm6202, %v6198, %v6206
        %v6211 = vsel %vm6203, %v6199, %v6207
        %v6212 = vsel %vm6204, %v6200, %v6208
        %v6213 = vpack.c.bf16 %v6210, %v6209
        %v6214 = vpack.c.bf16 %v6212, %v6211
        %v6217 = vcombine.high %v6213, %v6213
        %v6219 = vunpack.c.l.s4 1966171168
        %v6220 = vunpack.c.0.s8 %v6219
        %v6221 = vlaneseq
        %v6222 = vshrl.u32 %v6221, 7
        %v6223 = vsub.s32 %v6220, %v6222
        %v6224 = vrot.slane %v6213, %v6223
        %v6226 = vunpack.c.l.s4 1966171168
        %v6227 = vunpack.c.0.s8 %v6226
        %v6228 = vlaneseq
        %v6229 = vshrl.u32 %v6228, 7
        %v6230 = vsub.s32 %v6227, %v6229
        %v6231 = vrot.slane %v6217, %v6230
        %v6232 = vcombine.high %v6224, %v6224
        %v6233 = vcombine.high %v6231, %v6231
        %v6235 = vunpack.c.l.s4 1966171168
        %v6236 = vunpack.c.0.s8 %v6235
        %v6237 = vlaneseq
        %v6238 = vshrl.u32 %v6237, 7
        %v6239 = vsub.s32 %v6236, %v6238
        %v6240 = vrot.slane %v6224, %v6239
        %v6242 = vunpack.c.l.s4 1966171168
        %v6243 = vunpack.c.0.s8 %v6242
        %v6244 = vlaneseq
        %v6245 = vshrl.u32 %v6244, 7
        %v6246 = vsub.s32 %v6243, %v6245
        %v6247 = vrot.slane %v6231, %v6246
        %v6249 = vunpack.c.l.s4 1966171168
        %v6250 = vunpack.c.0.s8 %v6249
        %v6251 = vlaneseq
        %v6252 = vshrl.u32 %v6251, 7
        %v6253 = vsub.s32 %v6250, %v6252
        %v6254 = vrot.slane %v6232, %v6253
        %v6256 = vunpack.c.l.s4 1966171168
        %v6257 = vunpack.c.0.s8 %v6256
        %v6258 = vlaneseq
        %v6259 = vshrl.u32 %v6258, 7
        %v6260 = vsub.s32 %v6257, %v6259
        %v6261 = vrot.slane %v6233, %v6260
        %v6262 = vcombine.high %v6240, %v6240
        %v6263 = vcombine.high %v6247, %v6247
        %v6264 = vcombine.high %v6254, %v6254
        %v6265 = vcombine.high %v6261, %v6261
        %v6266 = vcombine.high %v6214, %v6214
        %v6268 = vunpack.c.l.s4 1966171168
        %v6269 = vunpack.c.0.s8 %v6268
        %v6270 = vlaneseq
        %v6271 = vshrl.u32 %v6270, 7
        %v6272 = vsub.s32 %v6269, %v6271
        %v6273 = vrot.slane %v6214, %v6272
        %v6275 = vunpack.c.l.s4 1966171168
        %v6276 = vunpack.c.0.s8 %v6275
        %v6277 = vlaneseq
        %v6278 = vshrl.u32 %v6277, 7
        %v6279 = vsub.s32 %v6276, %v6278
        %v6280 = vrot.slane %v6266, %v6279
        %v6281 = vcombine.high %v6273, %v6273
        %v6282 = vcombine.high %v6280, %v6280
        %v6284 = vunpack.c.l.s4 1966171168
        %v6285 = vunpack.c.0.s8 %v6284
        %v6286 = vlaneseq
        %v6287 = vshrl.u32 %v6286, 7
        %v6288 = vsub.s32 %v6285, %v6287
        %v6289 = vrot.slane %v6273, %v6288
        %v6291 = vunpack.c.l.s4 1966171168
        %v6292 = vunpack.c.0.s8 %v6291
        %v6293 = vlaneseq
        %v6294 = vshrl.u32 %v6293, 7
        %v6295 = vsub.s32 %v6292, %v6294
        %v6296 = vrot.slane %v6280, %v6295
        %v6298 = vunpack.c.l.s4 1966171168
        %v6299 = vunpack.c.0.s8 %v6298
        %v6300 = vlaneseq
        %v6301 = vshrl.u32 %v6300, 7
        %v6302 = vsub.s32 %v6299, %v6301
        %v6303 = vrot.slane %v6281, %v6302
        %v6305 = vunpack.c.l.s4 1966171168
        %v6306 = vunpack.c.0.s8 %v6305
        %v6307 = vlaneseq
        %v6308 = vshrl.u32 %v6307, 7
        %v6309 = vsub.s32 %v6306, %v6308
        %v6310 = vrot.slane %v6282, %v6309
        %v6311 = vcombine.high %v6289, %v6289
        %v6312 = vcombine.high %v6296, %v6296
        %v6313 = vcombine.high %v6303, %v6303
        %v6314 = vcombine.high %v6310, %v6310
        %v6316 = vunpack.c.l.s4 1966171168
        %v6317 = vunpack.c.0.s8 %v6316
        %v6318 = vlaneseq
        %v6319 = vshrl.u32 %v6318, 7
        %v6320 = vsub.s32 %v6317, %v6319
        %v6321 = vrot.slane %v6240, %v6320
        %v6323 = vunpack.c.l.s4 1966171168
        %v6324 = vunpack.c.0.s8 %v6323
        %v6325 = vlaneseq
        %v6326 = vshrl.u32 %v6325, 7
        %v6327 = vsub.s32 %v6324, %v6326
        %v6328 = vrot.slane %v6321, %v6327
        %v6330 = vunpack.c.l.s4 1966171168
        %v6331 = vunpack.c.0.s8 %v6330
        %v6332 = vlaneseq
        %v6333 = vshrl.u32 %v6332, 7
        %v6334 = vsub.s32 %v6331, %v6333
        %v6335 = vrot.slane %v6254, %v6334
        %v6337 = vunpack.c.l.s4 1966171168
        %v6338 = vunpack.c.0.s8 %v6337
        %v6339 = vlaneseq
        %v6340 = vshrl.u32 %v6339, 7
        %v6341 = vsub.s32 %v6338, %v6340
        %v6342 = vrot.slane %v6335, %v6341
        %v6344 = vunpack.c.l.s4 1966171168
        %v6345 = vunpack.c.0.s8 %v6344
        %v6346 = vlaneseq
        %v6347 = vshrl.u32 %v6346, 7
        %v6348 = vsub.s32 %v6345, %v6347
        %v6349 = vrot.slane %v6247, %v6348
        %v6351 = vunpack.c.l.s4 1966171168
        %v6352 = vunpack.c.0.s8 %v6351
        %v6353 = vlaneseq
        %v6354 = vshrl.u32 %v6353, 7
        %v6355 = vsub.s32 %v6352, %v6354
        %v6356 = vrot.slane %v6349, %v6355
        %v6358 = vunpack.c.l.s4 1966171168
        %v6359 = vunpack.c.0.s8 %v6358
        %v6360 = vlaneseq
        %v6361 = vshrl.u32 %v6360, 7
        %v6362 = vsub.s32 %v6359, %v6361
        %v6363 = vrot.slane %v6261, %v6362
        %v6365 = vunpack.c.l.s4 1966171168
        %v6366 = vunpack.c.0.s8 %v6365
        %v6367 = vlaneseq
        %v6368 = vshrl.u32 %v6367, 7
        %v6369 = vsub.s32 %v6366, %v6368
        %v6370 = vrot.slane %v6363, %v6369
        %v6372 = vunpack.c.l.s4 1966171168
        %v6373 = vunpack.c.0.s8 %v6372
        %v6374 = vlaneseq
        %v6375 = vshrl.u32 %v6374, 7
        %v6376 = vsub.s32 %v6373, %v6375
        %v6377 = vrot.slane %v6289, %v6376
        %v6379 = vunpack.c.l.s4 1966171168
        %v6380 = vunpack.c.0.s8 %v6379
        %v6381 = vlaneseq
        %v6382 = vshrl.u32 %v6381, 7
        %v6383 = vsub.s32 %v6380, %v6382
        %v6384 = vrot.slane %v6377, %v6383
        %v6386 = vunpack.c.l.s4 1966171168
        %v6387 = vunpack.c.0.s8 %v6386
        %v6388 = vlaneseq
        %v6389 = vshrl.u32 %v6388, 7
        %v6390 = vsub.s32 %v6387, %v6389
        %v6391 = vrot.slane %v6303, %v6390
        %v6393 = vunpack.c.l.s4 1966171168
        %v6394 = vunpack.c.0.s8 %v6393
        %v6395 = vlaneseq
        %v6396 = vshrl.u32 %v6395, 7
        %v6397 = vsub.s32 %v6394, %v6396
        %v6398 = vrot.slane %v6391, %v6397
        %v6400 = vunpack.c.l.s4 1966171168
        %v6401 = vunpack.c.0.s8 %v6400
        %v6402 = vlaneseq
        %v6403 = vshrl.u32 %v6402, 7
        %v6404 = vsub.s32 %v6401, %v6403
        %v6405 = vrot.slane %v6296, %v6404
        %v6407 = vunpack.c.l.s4 1966171168
        %v6408 = vunpack.c.0.s8 %v6407
        %v6409 = vlaneseq
        %v6410 = vshrl.u32 %v6409, 7
        %v6411 = vsub.s32 %v6408, %v6410
        %v6412 = vrot.slane %v6405, %v6411
        %v6414 = vunpack.c.l.s4 1966171168
        %v6415 = vunpack.c.0.s8 %v6414
        %v6416 = vlaneseq
        %v6417 = vshrl.u32 %v6416, 7
        %v6418 = vsub.s32 %v6415, %v6417
        %v6419 = vrot.slane %v6310, %v6418
        %v6421 = vunpack.c.l.s4 1966171168
        %v6422 = vunpack.c.0.s8 %v6421
        %v6423 = vlaneseq
        %v6424 = vshrl.u32 %v6423, 7
        %v6425 = vsub.s32 %v6422, %v6424
        %v6426 = vrot.slane %v6419, %v6425
        %v6427 = vunpack.c.l.b16 %v6328
        %v6428 = vunpack.c.l.b16 %v6342
        %v6429 = vunpack.c.l.b16 %v6356
        %v6430 = vunpack.c.l.b16 %v6370
        %v6431 = vunpack.c.l.b16 %v6384
        %v6432 = vunpack.c.l.b16 %v6398
        %v6433 = vunpack.c.l.b16 %v6412
        %v6434 = vunpack.c.l.b16 %v6426
        %v6435 = vrot.slane %v6428, 7
        %v6436 = vsel %vm1532, %v6435, %v6427
        %v6437 = vrot.slane %v6430, 7
        %v6438 = vsel %vm1532, %v6437, %v6429
        %v6439 = vrot.slane %v6432, 7
        %v6440 = vsel %vm1532, %v6439, %v6431
        %v6441 = vrot.slane %v6434, 7
        %v6442 = vsel %vm1532, %v6441, %v6433
        %v6443 = vpack.c.b16 %v6436, %v6436
        %v6444 = vpack.c.b16 %v6438, %v6438
        %v6445 = vpack.c.b16 %v1559, %v1559
        %v6446 = vpack.c.b16 %v6440, %v6440
        %v6447 = vpack.c.b16 %v6442, %v6442
        %vm6448 = vcmask 1040384
        %v6450 = vsel %vm6448, %v6443, 0
        %v6453 = vsel %vm6448, %v6444, 0
        %v6456 = vsel %vm6448, %v6445, 0
        %v6459 = vsel %vm6448, %v6446, 0
        %v6462 = vsel %vm6448, %v6447, 0
        %s6464 = scalar_lea.vmem [#allocation3], 18
        %vm6465 = vcmask 1041408
        %vm6466 = vmand %vm6465, %vm2863
        %v6467 = vld [vmem:[%s6464] sm:$0x3]
        %v6468 = vsel %vm6466, %v6450, %v6467
        %6469 = vst [vmem:[%s6464] sm:$0x3] %v6468
        %v6470 = vld [vmem:[%s6464 + $0x2] sm:$0x3]
        %v6471 = vsel %vm6466, %v6453, %v6470
        %6472 = vst [vmem:[%s6464 + $0x2] sm:$0x3] %v6471
        %v6473 = vld [vmem:[%s6464 + $0x4] sm:$0x3]
        %v6474 = vsel %vm6466, %v6456, %v6473
        %6475 = vst [vmem:[%s6464 + $0x4] sm:$0x3] %v6474
        %v6476 = vld [vmem:[%s6464 + $0x18] sm:$0x3]
        %v6477 = vsel %vm6466, %v6459, %v6476
        %6478 = vst [vmem:[%s6464 + $0x18] sm:$0x3] %v6477
        %v6479 = vld [vmem:[%s6464 + $0x1a] sm:$0x3]
        %v6480 = vsel %vm6466, %v6462, %v6479
        %6481 = vst [vmem:[%s6464 + $0x1a] sm:$0x3] %v6480
        %v6482 = vld [vmem:[%s6464 + $0x1c] sm:$0x3]
        %v6483 = vsel %vm6466, %v6456, %v6482
        %6484 = vst [vmem:[%s6464 + $0x1c] sm:$0x3] %v6483
        %v6485 = vsel %vm1535, %v6435, %v6427
        %v6486 = vsel %vm1535, %v6437, %v6429
        %v6487 = vsel %vm1535, %v6439, %v6431
        %v6488 = vsel %vm1535, %v6441, %v6433
        %v6489 = vpack.c.b16 %v6485, %v6485
        %v6490 = vpack.c.b16 %v6486, %v6486
        %v6491 = vpack.c.b16 %v1673, %v1673
        %v6492 = vpack.c.b16 %v6487, %v6487
        %v6493 = vpack.c.b16 %v6488, %v6488
        %v6499 = vsel %vm1708, 0, %v6489
        %v6500 = vsel %vm1708, 0, %v6490
        %v6501 = vsel %vm1708, 0, %v6491
        %v6502 = vsel %vm1708, 0, %v6492
        %v6503 = vsel %vm1708, 0, %v6493
        %s6504 = scalar_lea.vmem [#allocation3], 12
        %v6505 = vld [vmem:[%s6504] sm:$0x3]
        %v6506 = vsel %vm6466, %v6499, %v6505
        %6507 = vst [vmem:[%s6504] sm:$0x3] %v6506
        %v6508 = vld [vmem:[%s6504 + $0x2] sm:$0x3]
        %v6509 = vsel %vm6466, %v6500, %v6508
        %6510 = vst [vmem:[%s6504 + $0x2] sm:$0x3] %v6509
        %v6511 = vld [vmem:[%s6504 + $0x4] sm:$0x3]
        %v6512 = vsel %vm6466, %v6501, %v6511
        %6513 = vst [vmem:[%s6504 + $0x4] sm:$0x3] %v6512
        %v6514 = vld [vmem:[%s6504 + $0x18] sm:$0x3]
        %v6515 = vsel %vm6466, %v6502, %v6514
        %6516 = vst [vmem:[%s6504 + $0x18] sm:$0x3] %v6515
        %v6517 = vld [vmem:[%s6504 + $0x1a] sm:$0x3]
        %v6518 = vsel %vm6466, %v6503, %v6517
        %6519 = vst [vmem:[%s6504 + $0x1a] sm:$0x3] %v6518
        %v6520 = vld [vmem:[%s6504 + $0x1c] sm:$0x3]
        %v6521 = vsel %vm6466, %v6501, %v6520
        %6522 = vst [vmem:[%s6504 + $0x1c] sm:$0x3] %v6521
        %v6524 = vunpack.c.l.s4 1966171168
        %v6525 = vunpack.c.0.s8 %v6524
        %v6526 = vlaneseq
        %v6527 = vshrl.u32 %v6526, 7
        %v6528 = vsub.s32 %v6525, %v6527
        %v6529 = vrot.slane %v6262, %v6528
        %v6531 = vunpack.c.l.s4 1966171168
        %v6532 = vunpack.c.0.s8 %v6531
        %v6533 = vlaneseq
        %v6534 = vshrl.u32 %v6533, 7
        %v6535 = vsub.s32 %v6532, %v6534
        %v6536 = vrot.slane %v6529, %v6535
        %v6538 = vunpack.c.l.s4 1966171168
        %v6539 = vunpack.c.0.s8 %v6538
        %v6540 = vlaneseq
        %v6541 = vshrl.u32 %v6540, 7
        %v6542 = vsub.s32 %v6539, %v6541
        %v6543 = vrot.slane %v6264, %v6542
        %v6545 = vunpack.c.l.s4 1966171168
        %v6546 = vunpack.c.0.s8 %v6545
        %v6547 = vlaneseq
        %v6548 = vshrl.u32 %v6547, 7
        %v6549 = vsub.s32 %v6546, %v6548
        %v6550 = vrot.slane %v6543, %v6549
        %v6552 = vunpack.c.l.s4 1966171168
        %v6553 = vunpack.c.0.s8 %v6552
        %v6554 = vlaneseq
        %v6555 = vshrl.u32 %v6554, 7
        %v6556 = vsub.s32 %v6553, %v6555
        %v6557 = vrot.slane %v6263, %v6556
        %v6559 = vunpack.c.l.s4 1966171168
        %v6560 = vunpack.c.0.s8 %v6559
        %v6561 = vlaneseq
        %v6562 = vshrl.u32 %v6561, 7
        %v6563 = vsub.s32 %v6560, %v6562
        %v6564 = vrot.slane %v6557, %v6563
        %v6566 = vunpack.c.l.s4 1966171168
        %v6567 = vunpack.c.0.s8 %v6566
        %v6568 = vlaneseq
        %v6569 = vshrl.u32 %v6568, 7
        %v6570 = vsub.s32 %v6567, %v6569
        %v6571 = vrot.slane %v6265, %v6570
        %v6573 = vunpack.c.l.s4 1966171168
        %v6574 = vunpack.c.0.s8 %v6573
        %v6575 = vlaneseq
        %v6576 = vshrl.u32 %v6575, 7
        %v6577 = vsub.s32 %v6574, %v6576
        %v6578 = vrot.slane %v6571, %v6577
        %v6580 = vunpack.c.l.s4 1966171168
        %v6581 = vunpack.c.0.s8 %v6580
        %v6582 = vlaneseq
        %v6583 = vshrl.u32 %v6582, 7
        %v6584 = vsub.s32 %v6581, %v6583
        %v6585 = vrot.slane %v6311, %v6584
        %v6587 = vunpack.c.l.s4 1966171168
        %v6588 = vunpack.c.0.s8 %v6587
        %v6589 = vlaneseq
        %v6590 = vshrl.u32 %v6589, 7
        %v6591 = vsub.s32 %v6588, %v6590
        %v6592 = vrot.slane %v6585, %v6591
        %v6594 = vunpack.c.l.s4 1966171168
        %v6595 = vunpack.c.0.s8 %v6594
        %v6596 = vlaneseq
        %v6597 = vshrl.u32 %v6596, 7
        %v6598 = vsub.s32 %v6595, %v6597
        %v6599 = vrot.slane %v6313, %v6598
        %v6601 = vunpack.c.l.s4 1966171168
        %v6602 = vunpack.c.0.s8 %v6601
        %v6603 = vlaneseq
        %v6604 = vshrl.u32 %v6603, 7
        %v6605 = vsub.s32 %v6602, %v6604
        %v6606 = vrot.slane %v6599, %v6605
        %v6608 = vunpack.c.l.s4 1966171168
        %v6609 = vunpack.c.0.s8 %v6608
        %v6610 = vlaneseq
        %v6611 = vshrl.u32 %v6610, 7
        %v6612 = vsub.s32 %v6609, %v6611
        %v6613 = vrot.slane %v6312, %v6612
        %v6615 = vunpack.c.l.s4 1966171168
        %v6616 = vunpack.c.0.s8 %v6615
        %v6617 = vlaneseq
        %v6618 = vshrl.u32 %v6617, 7
        %v6619 = vsub.s32 %v6616, %v6618
        %v6620 = vrot.slane %v6613, %v6619
        %v6622 = vunpack.c.l.s4 1966171168
        %v6623 = vunpack.c.0.s8 %v6622
        %v6624 = vlaneseq
        %v6625 = vshrl.u32 %v6624, 7
        %v6626 = vsub.s32 %v6623, %v6625
        %v6627 = vrot.slane %v6314, %v6626
        %v6629 = vunpack.c.l.s4 1966171168
        %v6630 = vunpack.c.0.s8 %v6629
        %v6631 = vlaneseq
        %v6632 = vshrl.u32 %v6631, 7
        %v6633 = vsub.s32 %v6630, %v6632
        %v6634 = vrot.slane %v6627, %v6633
        %v6635 = vunpack.c.l.b16 %v6536
        %v6636 = vunpack.c.l.b16 %v6550
        %v6637 = vunpack.c.l.b16 %v6564
        %v6638 = vunpack.c.l.b16 %v6578
        %v6639 = vunpack.c.l.b16 %v6592
        %v6640 = vunpack.c.l.b16 %v6606
        %v6641 = vunpack.c.l.b16 %v6620
        %v6642 = vunpack.c.l.b16 %v6634
        %v6643 = vrot.slane %v6636, 7
        %v6644 = vsel %vm1532, %v6643, %v6635
        %v6645 = vrot.slane %v6638, 7
        %v6646 = vsel %vm1532, %v6645, %v6637
        %v6647 = vrot.slane %v6640, 7
        %v6648 = vsel %vm1532, %v6647, %v6639
        %v6649 = vrot.slane %v6642, 7
        %v6650 = vsel %vm1532, %v6649, %v6641
        %v6651 = vpack.c.b16 %v6644, %v6644
        %v6652 = vpack.c.b16 %v6646, %v6646
        %v6653 = vpack.c.b16 %v6648, %v6648
        %v6654 = vpack.c.b16 %v6650, %v6650
        %v6656 = vsel %vm6448, %v6651, 0
        %v6659 = vsel %vm6448, %v6652, 0
        %v6662 = vsel %vm6448, %v6653, 0
        %v6665 = vsel %vm6448, %v6654, 0
        %s6667 = scalar_lea.vmem [#allocation3], 6
        %v6668 = vld [vmem:[%s6667] sm:$0x3]
        %v6669 = vsel %vm6466, 0, %v6668
        %6670 = vst [vmem:[%s6667] sm:$0x3] %v6669
        %v6671 = vld [vmem:[%s6667 + $0x2] sm:$0x3]
        %v6672 = vsel %vm6466, %v6656, %v6671
        %6673 = vst [vmem:[%s6667 + $0x2] sm:$0x3] %v6672
        %v6674 = vld [vmem:[%s6667 + $0x4] sm:$0x3]
        %v6675 = vsel %vm6466, %v6659, %v6674
        %6676 = vst [vmem:[%s6667 + $0x4] sm:$0x3] %v6675
        %v6677 = vld [vmem:[%s6667 + $0x18] sm:$0x3]
        %v6678 = vsel %vm6466, 0, %v6677
        %6679 = vst [vmem:[%s6667 + $0x18] sm:$0x3] %v6678
        %v6680 = vld [vmem:[%s6667 + $0x1a] sm:$0x3]
        %v6681 = vsel %vm6466, %v6662, %v6680
        %6682 = vst [vmem:[%s6667 + $0x1a] sm:$0x3] %v6681
        %v6683 = vld [vmem:[%s6667 + $0x1c] sm:$0x3]
        %v6684 = vsel %vm6466, %v6665, %v6683
        %6685 = vst [vmem:[%s6667 + $0x1c] sm:$0x3] %v6684
        %v6686 = vrot.slane %v6635, 1
        %v6687 = vsel %vm1532, %v6636, %v6686
        %v6688 = vrot.slane %v6637, 1
        %v6689 = vsel %vm1532, %v6638, %v6688
        %v6690 = vrot.slane %v6639, 1
        %v6691 = vsel %vm1532, %v6640, %v6690
        %v6692 = vrot.slane %v6641, 1
        %v6693 = vsel %vm1532, %v6642, %v6692
        %v6694 = vpack.c.b16 %v6687, %v6687
        %v6695 = vpack.c.b16 %v6689, %v6689
        %v6696 = vpack.c.b16 %v6691, %v6691
        %v6697 = vpack.c.b16 %v6693, %v6693
        %v6699 = vshrl.u32 %v6694, 16
        %v6701 = vrot.slane %v6699, 7
        %v6702 = vshll.u32 %v6694, 16
        %v6704 = vor.u32 %v6701, %v6702
        %v6706 = vshrl.u32 %v6695, 16
        %v6708 = vrot.slane %v6706, 7
        %v6709 = vshll.u32 %v6695, 16
        %v6711 = vor.u32 %v6708, %v6709
        %v6713 = vshrl.u32 %v6696, 16
        %v6715 = vrot.slane %v6713, 7
        %v6716 = vshll.u32 %v6696, 16
        %v6718 = vor.u32 %v6715, %v6716
        %v6720 = vshrl.u32 %v6697, 16
        %v6722 = vrot.slane %v6720, 7
        %v6723 = vshll.u32 %v6697, 16
        %v6725 = vor.u32 %v6722, %v6723
        %v6730 = vsel %vm1708, 0, %v6704
        %v6731 = vsel %vm1708, 0, %v6711
        %v6732 = vsel %vm1708, 0, %v6718
        %v6733 = vsel %vm1708, 0, %v6725
        %v6734 = vld [vmem:[#allocation3] sm:$0x3]
        %v6735 = vsel %vm6466, %v2468, %v6734
        %6736 = vst [vmem:[#allocation3] sm:$0x3] %v6735
        %v6737 = vld [vmem:[#allocation3 + $0x2] sm:$0x3]
        %v6738 = vsel %vm6466, %v6730, %v6737
        %6739 = vst [vmem:[#allocation3 + $0x2] sm:$0x3] %v6738
        %v6740 = vld [vmem:[#allocation3 + $0x4] sm:$0x3]
        %v6741 = vsel %vm6466, %v6731, %v6740
        %6742 = vst [vmem:[#allocation3 + $0x4] sm:$0x3] %v6741
        %v6743 = vld [vmem:[#allocation3 + $0x18] sm:$0x3]
        %v6744 = vsel %vm6466, %v2468, %v6743
        %6745 = vst [vmem:[#allocation3 + $0x18] sm:$0x3] %v6744
        %v6746 = vld [vmem:[#allocation3 + $0x1a] sm:$0x3]
        %v6747 = vsel %vm6466, %v6732, %v6746
        %6748 = vst [vmem:[#allocation3 + $0x1a] sm:$0x3] %v6747
        %v6749 = vld [vmem:[#allocation3 + $0x1c] sm:$0x3]
        %v6750 = vsel %vm6466, %v6733, %v6749
        %6751 = vst [vmem:[#allocation3 + $0x1c] sm:$0x3] %v6750
        %v6752 = vld [vmem:[#allocation3] sm:$0x1]
        %v6753 = vld [vmem:[#allocation3 + $0x2] sm:$0x1]
        %v6754 = vld [vmem:[#allocation3 + $0x18] sm:$0x1]
        %v6755 = vld [vmem:[#allocation3 + $0x1a] sm:$0x1]
        %v6756 = vld [vmem:[#allocation7] sm:$0xff]
        %v6757 = vld [vmem:[#allocation7 + $0x8] sm:$0xff]
        %v6758 = vld [vmem:[#allocation7 + $0x10] sm:$0xff]
        %v6759 = vld [vmem:[#allocation7 + $0x18] sm:$0xff]
        %v6760 = vld [vmem:[#allocation7 + $0x20] sm:$0xff]
        %v6761 = vld [vmem:[#allocation7 + $0x28] sm:$0xff]
        %v6762 = vld [vmem:[#allocation7 + $0x30] sm:$0xff]
        %v6763 = vld [vmem:[#allocation7 + $0x38] sm:$0xff]
        %v6764 = vld [vmem:[#allocation7 + $0x40] sm:$0xff]
        %v6765 = vld [vmem:[#allocation7 + $0x48] sm:$0xff]
        %v6766 = vld [vmem:[#allocation7 + $0x50] sm:$0xff]
        %v6767 = vld [vmem:[#allocation7 + $0x58] sm:$0xff]
        %v6768 = vld [vmem:[#allocation7 + $0x60] sm:$0xff]
        %v6769 = vld [vmem:[#allocation7 + $0x68] sm:$0xff]
        %v6770 = vld [vmem:[#allocation7 + $0x70] sm:$0xff]
        %v6771 = vld [vmem:[#allocation7 + $0x78] sm:$0xff]
        %v6772 = vld [vmem:[%s6667] sm:$0x1]
        %v6773 = vld [vmem:[%s6667 + $0x2] sm:$0x1]
        %v6774 = vld [vmem:[%s6667 + $0x18] sm:$0x1]
        %v6775 = vld [vmem:[%s6667 + $0x1a] sm:$0x1]
        %s6776 = scalar_lea.vmem [#allocation7], 128
        %v6777 = vld [vmem:[%s6776] sm:$0xff]
        %v6778 = vld [vmem:[%s6776 + $0x8] sm:$0xff]
        %v6779 = vld [vmem:[%s6776 + $0x10] sm:$0xff]
        %v6780 = vld [vmem:[%s6776 + $0x18] sm:$0xff]
        %v6781 = vld [vmem:[%s6776 + $0x20] sm:$0xff]
        %v6782 = vld [vmem:[%s6776 + $0x28] sm:$0xff]
        %v6783 = vld [vmem:[%s6776 + $0x30] sm:$0xff]
        %v6784 = vld [vmem:[%s6776 + $0x38] sm:$0xff]
        %v6785 = vld [vmem:[%s6776 + $0x40] sm:$0xff]
        %v6786 = vld [vmem:[%s6776 + $0x48] sm:$0xff]
        %v6787 = vld [vmem:[%s6776 + $0x50] sm:$0xff]
        %v6788 = vld [vmem:[%s6776 + $0x58] sm:$0xff]
        %v6789 = vld [vmem:[%s6776 + $0x60] sm:$0xff]
        %v6790 = vld [vmem:[%s6776 + $0x68] sm:$0xff]
        %v6791 = vld [vmem:[%s6776 + $0x70] sm:$0xff]
        %v6792 = vld [vmem:[%s6776 + $0x78] sm:$0xff]
        %v6797 = vcombine.low %v6772, %v6773
        %v6798 = vcombine.low %v6774, %v6775
        %v6800 = vunpack.c.l.s4 1966171168
        %v6801 = vunpack.c.0.s8 %v6800
        %v6802 = vlaneseq
        %v6803 = vshrl.u32 %v6802, 7
        %v6804 = vsub.s32 %v6801, %v6803
        %v6805 = vrot.slane %v6797, %v6804
        %v6807 = vunpack.c.l.s4 1966171168
        %v6808 = vunpack.c.0.s8 %v6807
        %v6809 = vlaneseq
        %v6810 = vshrl.u32 %v6809, 7
        %v6811 = vsub.s32 %v6808, %v6810
        %v6812 = vrot.slane %v6798, %v6811
        %v6813 = vcombine.low %v6805, %v6812
        %v6815 = vunpack.c.l.s4 1966171168
        %v6816 = vunpack.c.0.s8 %v6815
        %v6817 = vlaneseq
        %v6818 = vshrl.u32 %v6817, 7
        %v6819 = vsub.s32 %v6816, %v6818
        %v6820 = vrot.slane %v6813, %v6819
        %v6838 = vunpack.c.l.b16 %v6777
        %v6839 = vunpack.c.h.b16 %v6777
        %v6840 = vunpack.c.l.b16 %v6778
        %v6841 = vunpack.c.h.b16 %v6778
        %v6842 = vunpack.c.l.b16 %v6779
        %v6843 = vunpack.c.h.b16 %v6779
        %v6844 = vunpack.c.l.b16 %v6780
        %v6845 = vunpack.c.h.b16 %v6780
        %v6846 = vunpack.c.l.b16 %v6781
        %v6847 = vunpack.c.h.b16 %v6781
        %v6848 = vunpack.c.l.b16 %v6782
        %v6849 = vunpack.c.h.b16 %v6782
        %v6850 = vunpack.c.l.b16 %v6783
        %v6851 = vunpack.c.h.b16 %v6783
        %v6852 = vunpack.c.l.b16 %v6784
        %v6853 = vunpack.c.h.b16 %v6784
        %v6854 = vunpack.c.l.b16 %v6785
        %v6855 = vunpack.c.h.b16 %v6785
        %v6856 = vunpack.c.l.b16 %v6786
        %v6857 = vunpack.c.h.b16 %v6786
        %v6858 = vunpack.c.l.b16 %v6787
        %v6859 = vunpack.c.h.b16 %v6787
        %v6860 = vunpack.c.l.b16 %v6788
        %v6861 = vunpack.c.h.b16 %v6788
        %v6862 = vunpack.c.l.b16 %v6789
        %v6863 = vunpack.c.h.b16 %v6789
        %v6864 = vunpack.c.l.b16 %v6790
        %v6865 = vunpack.c.h.b16 %v6790
        %v6866 = vunpack.c.l.b16 %v6791
        %v6867 = vunpack.c.h.b16 %v6791
        %v6868 = vunpack.c.l.b16 %v6792
        %v6869 = vunpack.c.h.b16 %v6792
        %v6870 = vpack.c.b16 %v6840, %v6838
        %v6871 = vpack.c.b16 %v6841, %v6839
        %v6872 = vpack.c.b16 %v6844, %v6842
        %v6873 = vpack.c.b16 %v6845, %v6843
        %v6874 = vpack.c.b16 %v6848, %v6846
        %v6875 = vpack.c.b16 %v6849, %v6847
        %v6876 = vpack.c.b16 %v6852, %v6850
        %v6877 = vpack.c.b16 %v6853, %v6851
        %v6878 = vpack.c.b16 %v6856, %v6854
        %v6879 = vpack.c.b16 %v6857, %v6855
        %v6880 = vpack.c.b16 %v6860, %v6858
        %v6881 = vpack.c.b16 %v6861, %v6859
        %v6882 = vpack.c.b16 %v6864, %v6862
        %v6883 = vpack.c.b16 %v6865, %v6863
        %v6884 = vpack.c.b16 %v6868, %v6866
        %v6885 = vpack.c.b16 %v6869, %v6867
        %6902 = vmatprep.subr.bf16.mxu0 %v6871
        %6903 = vmatpush1.bf16.msra.mxu0 %v6870
        %6904 = vmatprep.subr.bf16.mxu0 %v6873
        %6905 = vmatpush1.bf16.msra.mxu0 %v6872
        %6906 = vmatprep.subr.bf16.mxu0 %v6875
        %6907 = vmatpush1.bf16.msra.mxu0 %v6874
        %6908 = vmatprep.subr.bf16.mxu0 %v6877
        %6909 = vmatpush1.bf16.msra.mxu0 %v6876
        %6910 = vmatprep.subr.bf16.mxu0 %v6879
        %6911 = vmatpush1.bf16.msra.mxu0 %v6878
        %6912 = vmatprep.subr.bf16.mxu0 %v6881
        %6913 = vmatpush1.bf16.msra.mxu0 %v6880
        %6914 = vmatprep.subr.bf16.mxu0 %v6883
        %6915 = vmatpush1.bf16.msra.mxu0 %v6882
        %6916 = vmatprep.subr.bf16.mxu0 %v6885
        %6917 = vmatpush1.bf16.msra.mxu0 %v6884
        %6918 = vmatprep.subr.bf16.mxu0 0
        %6919 = vmatpush1.bf16.msra.mxu0 0
        %6920 = vmatprep.subr.bf16.mxu0 0
        %6921 = vmatpush1.bf16.msra.mxu0 0
        %6922 = vmatprep.subr.bf16.mxu0 0
        %6923 = vmatpush1.bf16.msra.mxu0 0
        %6924 = vmatprep.subr.bf16.mxu0 0
        %6925 = vmatpush1.bf16.msra.mxu0 0
        %6926 = vmatprep.subr.bf16.mxu0 0
        %6927 = vmatpush1.bf16.msra.mxu0 0
        %6928 = vmatprep.subr.bf16.mxu0 0
        %6929 = vmatpush1.bf16.msra.mxu0 0
        %6930 = vmatprep.subr.bf16.mxu0 0
        %6931 = vmatpush1.bf16.msra.mxu0 0
        %6932 = vmatprep.subr.bf16.mxu0 0
        %6933 = vmatpush1.bf16.msra.mxu0 0
        %6934 = vmatprep.mubr.bf16.mxu0 0
        %6935 = vmatmul.mubr.bf16.gmra.mrb[0].mxu0 %v6820
        %v6936 = vpop.f32.mrb[0].mxu0
        %v6937 = vadd.f32 0.0, %v6936
        %v6938 = vpop.f32.mrb[0].mxu0
        %v6939 = vadd.f32 0.0, %v6938
        %v6940 = vpop.f32.mrb[0].mxu0
        %v6941 = vpop.f32.mrb[0].mxu0
        %6942 = vdwg.mxu0
        %v6947 = vcombine.low %v6752, %v6753
        %v6948 = vcombine.low %v6754, %v6755
        %v6950 = vunpack.c.l.s4 1966171168
        %v6951 = vunpack.c.0.s8 %v6950
        %v6952 = vlaneseq
        %v6953 = vshrl.u32 %v6952, 7
        %v6954 = vsub.s32 %v6951, %v6953
        %v6955 = vrot.slane %v6947, %v6954
        %v6957 = vunpack.c.l.s4 1966171168
        %v6958 = vunpack.c.0.s8 %v6957
        %v6959 = vlaneseq
        %v6960 = vshrl.u32 %v6959, 7
        %v6961 = vsub.s32 %v6958, %v6960
        %v6962 = vrot.slane %v6948, %v6961
        %v6963 = vcombine.low %v6955, %v6962
        %v6965 = vunpack.c.l.s4 1966171168
        %v6966 = vunpack.c.0.s8 %v6965
        %v6967 = vlaneseq
        %v6968 = vshrl.u32 %v6967, 7
        %v6969 = vsub.s32 %v6966, %v6968
        %v6970 = vrot.slane %v6963, %v6969
        %v6988 = vunpack.c.l.b16 %v6756
        %v6989 = vunpack.c.h.b16 %v6756
        %v6990 = vunpack.c.l.b16 %v6757
        %v6991 = vunpack.c.h.b16 %v6757
        %v6992 = vunpack.c.l.b16 %v6758
        %v6993 = vunpack.c.h.b16 %v6758
        %v6994 = vunpack.c.l.b16 %v6759
        %v6995 = vunpack.c.h.b16 %v6759
        %v6996 = vunpack.c.l.b16 %v6760
        %v6997 = vunpack.c.h.b16 %v6760
        %v6998 = vunpack.c.l.b16 %v6761
        %v6999 = vunpack.c.h.b16 %v6761
        %v7000 = vunpack.c.l.b16 %v6762
        %v7001 = vunpack.c.h.b16 %v6762
        %v7002 = vunpack.c.l.b16 %v6763
        %v7003 = vunpack.c.h.b16 %v6763
        %v7004 = vunpack.c.l.b16 %v6764
        %v7005 = vunpack.c.h.b16 %v6764
        %v7006 = vunpack.c.l.b16 %v6765
        %v7007 = vunpack.c.h.b16 %v6765
        %v7008 = vunpack.c.l.b16 %v6766
        %v7009 = vunpack.c.h.b16 %v6766
        %v7010 = vunpack.c.l.b16 %v6767
        %v7011 = vunpack.c.h.b16 %v6767
        %v7012 = vunpack.c.l.b16 %v6768
        %v7013 = vunpack.c.h.b16 %v6768
        %v7014 = vunpack.c.l.b16 %v6769
        %v7015 = vunpack.c.h.b16 %v6769
        %v7016 = vunpack.c.l.b16 %v6770
        %v7017 = vunpack.c.h.b16 %v6770
        %v7018 = vunpack.c.l.b16 %v6771
        %v7019 = vunpack.c.h.b16 %v6771
        %v7020 = vpack.c.b16 %v6990, %v6988
        %v7021 = vpack.c.b16 %v6991, %v6989
        %v7022 = vpack.c.b16 %v6994, %v6992
        %v7023 = vpack.c.b16 %v6995, %v6993
        %v7024 = vpack.c.b16 %v6998, %v6996
        %v7025 = vpack.c.b16 %v6999, %v6997
        %v7026 = vpack.c.b16 %v7002, %v7000
        %v7027 = vpack.c.b16 %v7003, %v7001
        %v7028 = vpack.c.b16 %v7006, %v7004
        %v7029 = vpack.c.b16 %v7007, %v7005
        %v7030 = vpack.c.b16 %v7010, %v7008
        %v7031 = vpack.c.b16 %v7011, %v7009
        %v7032 = vpack.c.b16 %v7014, %v7012
        %v7033 = vpack.c.b16 %v7015, %v7013
        %v7034 = vpack.c.b16 %v7018, %v7016
        %v7035 = vpack.c.b16 %v7019, %v7017
        %7052 = vmatprep.subr.bf16.mxu0 %v7021
        %7053 = vmatpush1.bf16.msra.mxu0 %v7020
        %7054 = vmatprep.subr.bf16.mxu0 %v7023
        %7055 = vmatpush1.bf16.msra.mxu0 %v7022
        %7056 = vmatprep.subr.bf16.mxu0 %v7025
        %7057 = vmatpush1.bf16.msra.mxu0 %v7024
        %7058 = vmatprep.subr.bf16.mxu0 %v7027
        %7059 = vmatpush1.bf16.msra.mxu0 %v7026
        %7060 = vmatprep.subr.bf16.mxu0 %v7029
        %7061 = vmatpush1.bf16.msra.mxu0 %v7028
        %7062 = vmatprep.subr.bf16.mxu0 %v7031
        %7063 = vmatpush1.bf16.msra.mxu0 %v7030
        %7064 = vmatprep.subr.bf16.mxu0 %v7033
        %7065 = vmatpush1.bf16.msra.mxu0 %v7032
        %7066 = vmatprep.subr.bf16.mxu0 %v7035
        %7067 = vmatpush1.bf16.msra.mxu0 %v7034
        %7068 = vmatprep.subr.bf16.mxu0 0
        %7069 = vmatpush1.bf16.msra.mxu0 0
        %7070 = vmatprep.subr.bf16.mxu0 0
        %7071 = vmatpush1.bf16.msra.mxu0 0
        %7072 = vmatprep.subr.bf16.mxu0 0
        %7073 = vmatpush1.bf16.msra.mxu0 0
        %7074 = vmatprep.subr.bf16.mxu0 0
        %7075 = vmatpush1.bf16.msra.mxu0 0
        %7076 = vmatprep.subr.bf16.mxu0 0
        %7077 = vmatpush1.bf16.msra.mxu0 0
        %7078 = vmatprep.subr.bf16.mxu0 0
        %7079 = vmatpush1.bf16.msra.mxu0 0
        %7080 = vmatprep.subr.bf16.mxu0 0
        %7081 = vmatpush1.bf16.msra.mxu0 0
        %7082 = vmatprep.subr.bf16.mxu0 0
        %7083 = vmatpush1.bf16.msra.mxu0 0
        %7084 = vmatprep.mubr.bf16.mxu0 0
        %7085 = vmatmul.mubr.bf16.gmra.mrb[0].mxu0 %v6970
        %v7086 = vpop.f32.mrb[0].mxu0
        %v7087 = vadd.f32 %v6937, %v7086
        %v7088 = vpop.f32.mrb[0].mxu0
        %v7089 = vadd.f32 %v6939, %v7088
        %v7090 = vpop.f32.mrb[0].mxu0
        %v7091 = vpop.f32.mrb[0].mxu0
        %7092 = vdwg.mxu0
        %v7093 = vld [vmem:[#allocation3] sm:$0x3]
        %v7094 = vld [vmem:[#allocation3 + $0x2] sm:$0x3]
        %v7095 = vld [vmem:[#allocation3 + $0x18] sm:$0x3]
        %v7096 = vld [vmem:[#allocation3 + $0x1a] sm:$0x3]
        %v7102 = vunpack.c.l.s4 1966171168
        %v7103 = vunpack.c.0.s8 %v7102
        %v7104 = vlaneseq
        %v7105 = vshrl.u32 %v7104, 7
        %v7106 = vsub.s32 %v7103, %v7105
        %v7107 = vrot.slane %v7093, %v7106
        %v7108 = vcombine.high %v7107, %v7107
        %v7110 = vunpack.c.l.s4 1966171168
        %v7111 = vunpack.c.0.s8 %v7110
        %v7112 = vlaneseq
        %v7113 = vshrl.u32 %v7112, 7
        %v7114 = vsub.s32 %v7111, %v7113
        %v7115 = vrot.slane %v7094, %v7114
        %v7116 = vcombine.high %v7115, %v7115
        %v7118 = vunpack.c.l.s4 1966171168
        %v7119 = vunpack.c.0.s8 %v7118
        %v7120 = vlaneseq
        %v7121 = vshrl.u32 %v7120, 7
        %v7122 = vsub.s32 %v7119, %v7121
        %v7123 = vrot.slane %v7095, %v7122
        %v7124 = vcombine.high %v7123, %v7123
        %v7126 = vunpack.c.l.s4 1966171168
        %v7127 = vunpack.c.0.s8 %v7126
        %v7128 = vlaneseq
        %v7129 = vshrl.u32 %v7128, 7
        %v7130 = vsub.s32 %v7127, %v7129
        %v7131 = vrot.slane %v7096, %v7130
        %v7132 = vcombine.high %v7131, %v7131
        %vm7133 = vsmask.f32 1284
        %vm7134 = vmor %vm1707, %vm7133
        %vm7135 = vsmask.f32 2312
        %vm7136 = vmor %vm7134, %vm7135
        %vm7137 = vsmask.f32 3340
        %vm7138 = vmor %vm7136, %vm7137
        %vm7139 = vsmask.f32 4368
        %vm7140 = vmor %vm7138, %vm7139
        %vm7141 = vsmask.f32 5396
        %vm7142 = vmor %vm7140, %vm7141
        %vm7143 = vsmask.f32 6424
        %vm7144 = vmor %vm7142, %vm7143
        %vm7145 = vsmask.f32 7452
        %vm7146 = vmor %vm7144, %vm7145
        %v7148 = vshrl.u32 %v7107, 16
        %v7150 = vrot.slane %v7148, 7
        %v7151 = vrot.slane %v7150, 1
        %v7153 = vshll.u32 %v7108, 16
        %v7155 = vsel %vm7146, %v7151, %v7153
        %v7157 = vshrl.u32 %v7115, 16
        %v7159 = vrot.slane %v7157, 7
        %v7160 = vrot.slane %v7159, 1
        %v7162 = vshll.u32 %v7116, 16
        %v7164 = vsel %vm7146, %v7160, %v7162
        %v7166 = vshrl.u32 %v7123, 16
        %v7168 = vrot.slane %v7166, 7
        %v7169 = vrot.slane %v7168, 1
        %v7171 = vshll.u32 %v7124, 16
        %v7173 = vsel %vm7146, %v7169, %v7171
        %v7175 = vshrl.u32 %v7131, 16
        %v7177 = vrot.slane %v7175, 7
        %v7178 = vrot.slane %v7177, 1
        %v7180 = vshll.u32 %v7132, 16
        %v7182 = vsel %vm7146, %v7178, %v7180
        %s7183 = scalar_lea.vmem [#allocation7], 256
        %v7184 = vld [vmem:[%s7183] sm:$0xff]
        %v7185 = vld [vmem:[%s7183 + $0x8] sm:$0xff]
        %v7186 = vld [vmem:[%s7183 + $0x10] sm:$0xff]
        %v7187 = vld [vmem:[%s7183 + $0x18] sm:$0xff]
        %v7188 = vld [vmem:[%s7183 + $0x20] sm:$0xff]
        %v7189 = vld [vmem:[%s7183 + $0x28] sm:$0xff]
        %v7190 = vld [vmem:[%s7183 + $0x30] sm:$0xff]
        %v7191 = vld [vmem:[%s7183 + $0x38] sm:$0xff]
        %v7192 = vld [vmem:[%s7183 + $0x40] sm:$0xff]
        %v7193 = vld [vmem:[%s7183 + $0x48] sm:$0xff]
        %v7194 = vld [vmem:[%s7183 + $0x50] sm:$0xff]
        %v7195 = vld [vmem:[%s7183 + $0x58] sm:$0xff]
        %v7196 = vld [vmem:[%s7183 + $0x60] sm:$0xff]
        %v7197 = vld [vmem:[%s7183 + $0x68] sm:$0xff]
        %v7198 = vld [vmem:[%s7183 + $0x70] sm:$0xff]
        %v7199 = vld [vmem:[%s7183 + $0x78] sm:$0xff]
        %v7200 = vcombine.low %v7155, %v7164
        %v7201 = vcombine.low %v7173, %v7182
        %v7203 = vunpack.c.l.s4 1966171168
        %v7204 = vunpack.c.0.s8 %v7203
        %v7205 = vlaneseq
        %v7206 = vshrl.u32 %v7205, 7
        %v7207 = vsub.s32 %v7204, %v7206
        %v7208 = vrot.slane %v7200, %v7207
        %v7210 = vunpack.c.l.s4 1966171168
        %v7211 = vunpack.c.0.s8 %v7210
        %v7212 = vlaneseq
        %v7213 = vshrl.u32 %v7212, 7
        %v7214 = vsub.s32 %v7211, %v7213
        %v7215 = vrot.slane %v7201, %v7214
        %v7216 = vcombine.low %v7208, %v7215
        %v7218 = vunpack.c.l.s4 1966171168
        %v7219 = vunpack.c.0.s8 %v7218
        %v7220 = vlaneseq
        %v7221 = vshrl.u32 %v7220, 7
        %v7222 = vsub.s32 %v7219, %v7221
        %v7223 = vrot.slane %v7216, %v7222
        %v7241 = vunpack.c.l.b16 %v7184
        %v7242 = vunpack.c.h.b16 %v7184
        %v7243 = vunpack.c.l.b16 %v7185
        %v7244 = vunpack.c.h.b16 %v7185
        %v7245 = vunpack.c.l.b16 %v7186
        %v7246 = vunpack.c.h.b16 %v7186
        %v7247 = vunpack.c.l.b16 %v7187
        %v7248 = vunpack.c.h.b16 %v7187
        %v7249 = vunpack.c.l.b16 %v7188
        %v7250 = vunpack.c.h.b16 %v7188
        %v7251 = vunpack.c.l.b16 %v7189
        %v7252 = vunpack.c.h.b16 %v7189
        %v7253 = vunpack.c.l.b16 %v7190
        %v7254 = vunpack.c.h.b16 %v7190
        %v7255 = vunpack.c.l.b16 %v7191
        %v7256 = vunpack.c.h.b16 %v7191
        %v7257 = vunpack.c.l.b16 %v7192
        %v7258 = vunpack.c.h.b16 %v7192
        %v7259 = vunpack.c.l.b16 %v7193
        %v7260 = vunpack.c.h.b16 %v7193
        %v7261 = vunpack.c.l.b16 %v7194
        %v7262 = vunpack.c.h.b16 %v7194
        %v7263 = vunpack.c.l.b16 %v7195
        %v7264 = vunpack.c.h.b16 %v7195
        %v7265 = vunpack.c.l.b16 %v7196
        %v7266 = vunpack.c.h.b16 %v7196
        %v7267 = vunpack.c.l.b16 %v7197
        %v7268 = vunpack.c.h.b16 %v7197
        %v7269 = vunpack.c.l.b16 %v7198
        %v7270 = vunpack.c.h.b16 %v7198
        %v7271 = vunpack.c.l.b16 %v7199
        %v7272 = vunpack.c.h.b16 %v7199
        %v7273 = vpack.c.b16 %v7243, %v7241
        %v7274 = vpack.c.b16 %v7244, %v7242
        %v7275 = vpack.c.b16 %v7247, %v7245
        %v7276 = vpack.c.b16 %v7248, %v7246
        %v7277 = vpack.c.b16 %v7251, %v7249
        %v7278 = vpack.c.b16 %v7252, %v7250
        %v7279 = vpack.c.b16 %v7255, %v7253
        %v7280 = vpack.c.b16 %v7256, %v7254
        %v7281 = vpack.c.b16 %v7259, %v7257
        %v7282 = vpack.c.b16 %v7260, %v7258
        %v7283 = vpack.c.b16 %v7263, %v7261
        %v7284 = vpack.c.b16 %v7264, %v7262
        %v7285 = vpack.c.b16 %v7267, %v7265
        %v7286 = vpack.c.b16 %v7268, %v7266
        %v7287 = vpack.c.b16 %v7271, %v7269
        %v7288 = vpack.c.b16 %v7272, %v7270
        %7305 = vmatprep.subr.bf16.mxu0 %v7274
        %7306 = vmatpush1.bf16.msra.mxu0 %v7273
        %7307 = vmatprep.subr.bf16.mxu0 %v7276
        %7308 = vmatpush1.bf16.msra.mxu0 %v7275
        %7309 = vmatprep.subr.bf16.mxu0 %v7278
        %7310 = vmatpush1.bf16.msra.mxu0 %v7277
        %7311 = vmatprep.subr.bf16.mxu0 %v7280
        %7312 = vmatpush1.bf16.msra.mxu0 %v7279
        %7313 = vmatprep.subr.bf16.mxu0 %v7282
        %7314 = vmatpush1.bf16.msra.mxu0 %v7281
        %7315 = vmatprep.subr.bf16.mxu0 %v7284
        %7316 = vmatpush1.bf16.msra.mxu0 %v7283
        %7317 = vmatprep.subr.bf16.mxu0 %v7286
        %7318 = vmatpush1.bf16.msra.mxu0 %v7285
        %7319 = vmatprep.subr.bf16.mxu0 %v7288
        %7320 = vmatpush1.bf16.msra.mxu0 %v7287
        %7321 = vmatprep.subr.bf16.mxu0 0
        %7322 = vmatpush1.bf16.msra.mxu0 0
        %7323 = vmatprep.subr.bf16.mxu0 0
        %7324 = vmatpush1.bf16.msra.mxu0 0
        %7325 = vmatprep.subr.bf16.mxu0 0
        %7326 = vmatpush1.bf16.msra.mxu0 0
        %7327 = vmatprep.subr.bf16.mxu0 0
        %7328 = vmatpush1.bf16.msra.mxu0 0
        %7329 = vmatprep.subr.bf16.mxu0 0
        %7330 = vmatpush1.bf16.msra.mxu0 0
        %7331 = vmatprep.subr.bf16.mxu0 0
        %7332 = vmatpush1.bf16.msra.mxu0 0
        %7333 = vmatprep.subr.bf16.mxu0 0
        %7334 = vmatpush1.bf16.msra.mxu0 0
        %7335 = vmatprep.subr.bf16.mxu0 0
        %7336 = vmatpush1.bf16.msra.mxu0 0
        %7337 = vmatprep.mubr.bf16.mxu0 0
        %7338 = vmatmul.mubr.bf16.gmra.mrb[0].mxu0 %v7223
        %v7339 = vpop.f32.mrb[0].mxu0
        %v7340 = vadd.f32 0.0, %v7339
        %v7341 = vpop.f32.mrb[0].mxu0
        %v7342 = vadd.f32 0.0, %v7341
        %v7343 = vpop.f32.mrb[0].mxu0
        %v7344 = vpop.f32.mrb[0].mxu0
        %7345 = vdwg.mxu0
        %v7346 = vadd.f32 %v7087, %v7340
        %v7347 = vadd.f32 %v7089, %v7342
        %v7348 = vld [vmem:[%s6667] sm:$0x3]
        %v7349 = vld [vmem:[%s6667 + $0x2] sm:$0x3]
        %v7350 = vld [vmem:[%s6667 + $0x18] sm:$0x3]
        %v7351 = vld [vmem:[%s6667 + $0x1a] sm:$0x3]
        %v7357 = vunpack.c.l.s4 1966171168
        %v7358 = vunpack.c.0.s8 %v7357
        %v7359 = vlaneseq
        %v7360 = vshrl.u32 %v7359, 7
        %v7361 = vsub.s32 %v7358, %v7360
        %v7362 = vrot.slane %v7348, %v7361
        %v7363 = vcombine.high %v7362, %v7362
        %v7365 = vunpack.c.l.s4 1966171168
        %v7366 = vunpack.c.0.s8 %v7365
        %v7367 = vlaneseq
        %v7368 = vshrl.u32 %v7367, 7
        %v7369 = vsub.s32 %v7366, %v7368
        %v7370 = vrot.slane %v7349, %v7369
        %v7371 = vcombine.high %v7370, %v7370
        %v7373 = vunpack.c.l.s4 1966171168
        %v7374 = vunpack.c.0.s8 %v7373
        %v7375 = vlaneseq
        %v7376 = vshrl.u32 %v7375, 7
        %v7377 = vsub.s32 %v7374, %v7376
        %v7378 = vrot.slane %v7350, %v7377
        %v7379 = vcombine.high %v7378, %v7378
        %v7381 = vunpack.c.l.s4 1966171168
        %v7382 = vunpack.c.0.s8 %v7381
        %v7383 = vlaneseq
        %v7384 = vshrl.u32 %v7383, 7
        %v7385 = vsub.s32 %v7382, %v7384
        %v7386 = vrot.slane %v7351, %v7385
        %v7387 = vcombine.high %v7386, %v7386
        %v7389 = vshrl.u32 %v7362, 16
        %v7391 = vrot.slane %v7389, 7
        %v7392 = vrot.slane %v7391, 1
        %v7394 = vshll.u32 %v7363, 16
        %v7396 = vsel %vm7146, %v7392, %v7394
        %v7398 = vshrl.u32 %v7370, 16
        %v7400 = vrot.slane %v7398, 7
        %v7401 = vrot.slane %v7400, 1
        %v7403 = vshll.u32 %v7371, 16
        %v7405 = vsel %vm7146, %v7401, %v7403
        %v7407 = vshrl.u32 %v7378, 16
        %v7409 = vrot.slane %v7407, 7
        %v7410 = vrot.slane %v7409, 1
        %v7412 = vshll.u32 %v7379, 16
        %v7414 = vsel %vm7146, %v7410, %v7412
        %v7416 = vshrl.u32 %v7386, 16
        %v7418 = vrot.slane %v7416, 7
        %v7419 = vrot.slane %v7418, 1
        %v7421 = vshll.u32 %v7387, 16
        %v7423 = vsel %vm7146, %v7419, %v7421
        %s7424 = scalar_lea.vmem [#allocation7], 384
        %v7425 = vld [vmem:[%s7424] sm:$0xff]
        %v7426 = vld [vmem:[%s7424 + $0x8] sm:$0xff]
        %v7427 = vld [vmem:[%s7424 + $0x10] sm:$0xff]
        %v7428 = vld [vmem:[%s7424 + $0x18] sm:$0xff]
        %v7429 = vld [vmem:[%s7424 + $0x20] sm:$0xff]
        %v7430 = vld [vmem:[%s7424 + $0x28] sm:$0xff]
        %v7431 = vld [vmem:[%s7424 + $0x30] sm:$0xff]
        %v7432 = vld [vmem:[%s7424 + $0x38] sm:$0xff]
        %v7433 = vld [vmem:[%s7424 + $0x40] sm:$0xff]
        %v7434 = vld [vmem:[%s7424 + $0x48] sm:$0xff]
        %v7435 = vld [vmem:[%s7424 + $0x50] sm:$0xff]
        %v7436 = vld [vmem:[%s7424 + $0x58] sm:$0xff]
        %v7437 = vld [vmem:[%s7424 + $0x60] sm:$0xff]
        %v7438 = vld [vmem:[%s7424 + $0x68] sm:$0xff]
        %v7439 = vld [vmem:[%s7424 + $0x70] sm:$0xff]
        %v7440 = vld [vmem:[%s7424 + $0x78] sm:$0xff]
        %v7441 = vcombine.low %v7396, %v7405
        %v7442 = vcombine.low %v7414, %v7423
        %v7444 = vunpack.c.l.s4 1966171168
        %v7445 = vunpack.c.0.s8 %v7444
        %v7446 = vlaneseq
        %v7447 = vshrl.u32 %v7446, 7
        %v7448 = vsub.s32 %v7445, %v7447
        %v7449 = vrot.slane %v7441, %v7448
        %v7451 = vunpack.c.l.s4 1966171168
        %v7452 = vunpack.c.0.s8 %v7451
        %v7453 = vlaneseq
        %v7454 = vshrl.u32 %v7453, 7
        %v7455 = vsub.s32 %v7452, %v7454
        %v7456 = vrot.slane %v7442, %v7455
        %v7457 = vcombine.low %v7449, %v7456
        %v7459 = vunpack.c.l.s4 1966171168
        %v7460 = vunpack.c.0.s8 %v7459
        %v7461 = vlaneseq
        %v7462 = vshrl.u32 %v7461, 7
        %v7463 = vsub.s32 %v7460, %v7462
        %v7464 = vrot.slane %v7457, %v7463
        %v7482 = vunpack.c.l.b16 %v7425
        %v7483 = vunpack.c.h.b16 %v7425
        %v7484 = vunpack.c.l.b16 %v7426
        %v7485 = vunpack.c.h.b16 %v7426
        %v7486 = vunpack.c.l.b16 %v7427
        %v7487 = vunpack.c.h.b16 %v7427
        %v7488 = vunpack.c.l.b16 %v7428
        %v7489 = vunpack.c.h.b16 %v7428
        %v7490 = vunpack.c.l.b16 %v7429
        %v7491 = vunpack.c.h.b16 %v7429
        %v7492 = vunpack.c.l.b16 %v7430
        %v7493 = vunpack.c.h.b16 %v7430
        %v7494 = vunpack.c.l.b16 %v7431
        %v7495 = vunpack.c.h.b16 %v7431
        %v7496 = vunpack.c.l.b16 %v7432
        %v7497 = vunpack.c.h.b16 %v7432
        %v7498 = vunpack.c.l.b16 %v7433
        %v7499 = vunpack.c.h.b16 %v7433
        %v7500 = vunpack.c.l.b16 %v7434
        %v7501 = vunpack.c.h.b16 %v7434
        %v7502 = vunpack.c.l.b16 %v7435
        %v7503 = vunpack.c.h.b16 %v7435
        %v7504 = vunpack.c.l.b16 %v7436
        %v7505 = vunpack.c.h.b16 %v7436
        %v7506 = vunpack.c.l.b16 %v7437
        %v7507 = vunpack.c.h.b16 %v7437
        %v7508 = vunpack.c.l.b16 %v7438
        %v7509 = vunpack.c.h.b16 %v7438
        %v7510 = vunpack.c.l.b16 %v7439
        %v7511 = vunpack.c.h.b16 %v7439
        %v7512 = vunpack.c.l.b16 %v7440
        %v7513 = vunpack.c.h.b16 %v7440
        %v7514 = vpack.c.b16 %v7484, %v7482
        %v7515 = vpack.c.b16 %v7485, %v7483
        %v7516 = vpack.c.b16 %v7488, %v7486
        %v7517 = vpack.c.b16 %v7489, %v7487
        %v7518 = vpack.c.b16 %v7492, %v7490
        %v7519 = vpack.c.b16 %v7493, %v7491
        %v7520 = vpack.c.b16 %v7496, %v7494
        %v7521 = vpack.c.b16 %v7497, %v7495
        %v7522 = vpack.c.b16 %v7500, %v7498
        %v7523 = vpack.c.b16 %v7501, %v7499
        %v7524 = vpack.c.b16 %v7504, %v7502
        %v7525 = vpack.c.b16 %v7505, %v7503
        %v7526 = vpack.c.b16 %v7508, %v7506
        %v7527 = vpack.c.b16 %v7509, %v7507
        %v7528 = vpack.c.b16 %v7512, %v7510
        %v7529 = vpack.c.b16 %v7513, %v7511
        %7546 = vmatprep.subr.bf16.mxu0 %v7515
        %7547 = vmatpush1.bf16.msra.mxu0 %v7514
        %7548 = vmatprep.subr.bf16.mxu0 %v7517
        %7549 = vmatpush1.bf16.msra.mxu0 %v7516
        %7550 = vmatprep.subr.bf16.mxu0 %v7519
        %7551 = vmatpush1.bf16.msra.mxu0 %v7518
        %7552 = vmatprep.subr.bf16.mxu0 %v7521
        %7553 = vmatpush1.bf16.msra.mxu0 %v7520
        %7554 = vmatprep.subr.bf16.mxu0 %v7523
        %7555 = vmatpush1.bf16.msra.mxu0 %v7522
        %7556 = vmatprep.subr.bf16.mxu0 %v7525
        %7557 = vmatpush1.bf16.msra.mxu0 %v7524
        %7558 = vmatprep.subr.bf16.mxu0 %v7527
        %7559 = vmatpush1.bf16.msra.mxu0 %v7526
        %7560 = vmatprep.subr.bf16.mxu0 %v7529
        %7561 = vmatpush1.bf16.msra.mxu0 %v7528
        %7562 = vmatprep.subr.bf16.mxu0 0
        %7563 = vmatpush1.bf16.msra.mxu0 0
        %7564 = vmatprep.subr.bf16.mxu0 0
        %7565 = vmatpush1.bf16.msra.mxu0 0
        %7566 = vmatprep.subr.bf16.mxu0 0
        %7567 = vmatpush1.bf16.msra.mxu0 0
        %7568 = vmatprep.subr.bf16.mxu0 0
        %7569 = vmatpush1.bf16.msra.mxu0 0
        %7570 = vmatprep.subr.bf16.mxu0 0
        %7571 = vmatpush1.bf16.msra.mxu0 0
        %7572 = vmatprep.subr.bf16.mxu0 0
        %7573 = vmatpush1.bf16.msra.mxu0 0
        %7574 = vmatprep.subr.bf16.mxu0 0
        %7575 = vmatpush1.bf16.msra.mxu0 0
        %7576 = vmatprep.subr.bf16.mxu0 0
        %7577 = vmatpush1.bf16.msra.mxu0 0
        %7578 = vmatprep.mubr.bf16.mxu0 0
        %7579 = vmatmul.mubr.bf16.gmra.mrb[0].mxu0 %v7464
        %v7580 = vpop.f32.mrb[0].mxu0
        %v7581 = vadd.f32 0.0, %v7580
        %v7582 = vpop.f32.mrb[0].mxu0
        %v7583 = vadd.f32 0.0, %v7582
        %v7584 = vpop.f32.mrb[0].mxu0
        %v7585 = vpop.f32.mrb[0].mxu0
        %7586 = vdwg.mxu0
        %v7587 = vadd.f32 %v7346, %v7581
        %v7588 = vadd.f32 %v7347, %v7583
        %v7589 = vld [vmem:[%s6504] sm:$0x1]
        %v7590 = vld [vmem:[%s6504 + $0x2] sm:$0x1]
        %v7591 = vld [vmem:[%s6504 + $0x18] sm:$0x1]
        %v7592 = vld [vmem:[%s6504 + $0x1a] sm:$0x1]
        %s7593 = scalar_lea.vmem [#allocation7], 512
        %v7594 = vld [vmem:[%s7593] sm:$0xff]
        %v7595 = vld [vmem:[%s7593 + $0x8] sm:$0xff]
        %v7596 = vld [vmem:[%s7593 + $0x10] sm:$0xff]
        %v7597 = vld [vmem:[%s7593 + $0x18] sm:$0xff]
        %v7598 = vld [vmem:[%s7593 + $0x20] sm:$0xff]
        %v7599 = vld [vmem:[%s7593 + $0x28] sm:$0xff]
        %v7600 = vld [vmem:[%s7593 + $0x30] sm:$0xff]
        %v7601 = vld [vmem:[%s7593 + $0x38] sm:$0xff]
        %v7602 = vld [vmem:[%s7593 + $0x40] sm:$0xff]
        %v7603 = vld [vmem:[%s7593 + $0x48] sm:$0xff]
        %v7604 = vld [vmem:[%s7593 + $0x50] sm:$0xff]
        %v7605 = vld [vmem:[%s7593 + $0x58] sm:$0xff]
        %v7606 = vld [vmem:[%s7593 + $0x60] sm:$0xff]
        %v7607 = vld [vmem:[%s7593 + $0x68] sm:$0xff]
        %v7608 = vld [vmem:[%s7593 + $0x70] sm:$0xff]
        %v7609 = vld [vmem:[%s7593 + $0x78] sm:$0xff]
        %v7614 = vcombine.low %v7589, %v7590
        %v7615 = vcombine.low %v7591, %v7592
        %v7617 = vunpack.c.l.s4 1966171168
        %v7618 = vunpack.c.0.s8 %v7617
        %v7619 = vlaneseq
        %v7620 = vshrl.u32 %v7619, 7
        %v7621 = vsub.s32 %v7618, %v7620
        %v7622 = vrot.slane %v7614, %v7621
        %v7624 = vunpack.c.l.s4 1966171168
        %v7625 = vunpack.c.0.s8 %v7624
        %v7626 = vlaneseq
        %v7627 = vshrl.u32 %v7626, 7
        %v7628 = vsub.s32 %v7625, %v7627
        %v7629 = vrot.slane %v7615, %v7628
        %v7630 = vcombine.low %v7622, %v7629
        %v7632 = vunpack.c.l.s4 1966171168
        %v7633 = vunpack.c.0.s8 %v7632
        %v7634 = vlaneseq
        %v7635 = vshrl.u32 %v7634, 7
        %v7636 = vsub.s32 %v7633, %v7635
        %v7637 = vrot.slane %v7630, %v7636
        %v7655 = vunpack.c.l.b16 %v7594
        %v7656 = vunpack.c.h.b16 %v7594
        %v7657 = vunpack.c.l.b16 %v7595
        %v7658 = vunpack.c.h.b16 %v7595
        %v7659 = vunpack.c.l.b16 %v7596
        %v7660 = vunpack.c.h.b16 %v7596
        %v7661 = vunpack.c.l.b16 %v7597
        %v7662 = vunpack.c.h.b16 %v7597
        %v7663 = vunpack.c.l.b16 %v7598
        %v7664 = vunpack.c.h.b16 %v7598
        %v7665 = vunpack.c.l.b16 %v7599
        %v7666 = vunpack.c.h.b16 %v7599
        %v7667 = vunpack.c.l.b16 %v7600
        %v7668 = vunpack.c.h.b16 %v7600
        %v7669 = vunpack.c.l.b16 %v7601
        %v7670 = vunpack.c.h.b16 %v7601
        %v7671 = vunpack.c.l.b16 %v7602
        %v7672 = vunpack.c.h.b16 %v7602
        %v7673 = vunpack.c.l.b16 %v7603
        %v7674 = vunpack.c.h.b16 %v7603
        %v7675 = vunpack.c.l.b16 %v7604
        %v7676 = vunpack.c.h.b16 %v7604
        %v7677 = vunpack.c.l.b16 %v7605
        %v7678 = vunpack.c.h.b16 %v7605
        %v7679 = vunpack.c.l.b16 %v7606
        %v7680 = vunpack.c.h.b16 %v7606
        %v7681 = vunpack.c.l.b16 %v7607
        %v7682 = vunpack.c.h.b16 %v7607
        %v7683 = vunpack.c.l.b16 %v7608
        %v7684 = vunpack.c.h.b16 %v7608
        %v7685 = vunpack.c.l.b16 %v7609
        %v7686 = vunpack.c.h.b16 %v7609
        %v7687 = vpack.c.b16 %v7657, %v7655
        %v7688 = vpack.c.b16 %v7658, %v7656
        %v7689 = vpack.c.b16 %v7661, %v7659
        %v7690 = vpack.c.b16 %v7662, %v7660
        %v7691 = vpack.c.b16 %v7665, %v7663
        %v7692 = vpack.c.b16 %v7666, %v7664
        %v7693 = vpack.c.b16 %v7669, %v7667
        %v7694 = vpack.c.b16 %v7670, %v7668
        %v7695 = vpack.c.b16 %v7673, %v7671
        %v7696 = vpack.c.b16 %v7674, %v7672
        %v7697 = vpack.c.b16 %v7677, %v7675
        %v7698 = vpack.c.b16 %v7678, %v7676
        %v7699 = vpack.c.b16 %v7681, %v7679
        %v7700 = vpack.c.b16 %v7682, %v7680
        %v7701 = vpack.c.b16 %v7685, %v7683
        %v7702 = vpack.c.b16 %v7686, %v7684
        %7719 = vmatprep.subr.bf16.mxu0 %v7688
        %7720 = vmatpush1.bf16.msra.mxu0 %v7687
        %7721 = vmatprep.subr.bf16.mxu0 %v7690
        %7722 = vmatpush1.bf16.msra.mxu0 %v7689
        %7723 = vmatprep.subr.bf16.mxu0 %v7692
        %7724 = vmatpush1.bf16.msra.mxu0 %v7691
        %7725 = vmatprep.subr.bf16.mxu0 %v7694
        %7726 = vmatpush1.bf16.msra.mxu0 %v7693
        %7727 = vmatprep.subr.bf16.mxu0 %v7696
        %7728 = vmatpush1.bf16.msra.mxu0 %v7695
        %7729 = vmatprep.subr.bf16.mxu0 %v7698
        %7730 = vmatpush1.bf16.msra.mxu0 %v7697
        %7731 = vmatprep.subr.bf16.mxu0 %v7700
        %7732 = vmatpush1.bf16.msra.mxu0 %v7699
        %7733 = vmatprep.subr.bf16.mxu0 %v7702
        %7734 = vmatpush1.bf16.msra.mxu0 %v7701
        %7735 = vmatprep.subr.bf16.mxu0 0
        %7736 = vmatpush1.bf16.msra.mxu0 0
        %7737 = vmatprep.subr.bf16.mxu0 0
        %7738 = vmatpush1.bf16.msra.mxu0 0
        %7739 = vmatprep.subr.bf16.mxu0 0
        %7740 = vmatpush1.bf16.msra.mxu0 0
        %7741 = vmatprep.subr.bf16.mxu0 0
        %7742 = vmatpush1.bf16.msra.mxu0 0
        %7743 = vmatprep.subr.bf16.mxu0 0
        %7744 = vmatpush1.bf16.msra.mxu0 0
        %7745 = vmatprep.subr.bf16.mxu0 0
        %7746 = vmatpush1.bf16.msra.mxu0 0
        %7747 = vmatprep.subr.bf16.mxu0 0
        %7748 = vmatpush1.bf16.msra.mxu0 0
        %7749 = vmatprep.subr.bf16.mxu0 0
        %7750 = vmatpush1.bf16.msra.mxu0 0
        %7751 = vmatprep.mubr.bf16.mxu0 0
        %7752 = vmatmul.mubr.bf16.gmra.mrb[0].mxu0 %v7637
        %v7753 = vpop.f32.mrb[0].mxu0
        %v7754 = vadd.f32 0.0, %v7753
        %v7755 = vpop.f32.mrb[0].mxu0
        %v7756 = vadd.f32 0.0, %v7755
        %v7757 = vpop.f32.mrb[0].mxu0
        %v7758 = vpop.f32.mrb[0].mxu0
        %7759 = vdwg.mxu0
        %v7760 = vadd.f32 %v7587, %v7754
        %v7761 = vadd.f32 %v7588, %v7756
        %v7762 = vld [vmem:[%s6464] sm:$0x1]
        %v7763 = vld [vmem:[%s6464 + $0x2] sm:$0x1]
        %v7764 = vld [vmem:[%s6464 + $0x18] sm:$0x1]
        %v7765 = vld [vmem:[%s6464 + $0x1a] sm:$0x1]
        %s7766 = scalar_lea.vmem [#allocation7], 640
        %v7767 = vld [vmem:[%s7766] sm:$0xff]
        %v7768 = vld [vmem:[%s7766 + $0x8] sm:$0xff]
        %v7769 = vld [vmem:[%s7766 + $0x10] sm:$0xff]
        %v7770 = vld [vmem:[%s7766 + $0x18] sm:$0xff]
        %v7771 = vld [vmem:[%s7766 + $0x20] sm:$0xff]
        %v7772 = vld [vmem:[%s7766 + $0x28] sm:$0xff]
        %v7773 = vld [vmem:[%s7766 + $0x30] sm:$0xff]
        %v7774 = vld [vmem:[%s7766 + $0x38] sm:$0xff]
        %v7775 = vld [vmem:[%s7766 + $0x40] sm:$0xff]
        %v7776 = vld [vmem:[%s7766 + $0x48] sm:$0xff]
        %v7777 = vld [vmem:[%s7766 + $0x50] sm:$0xff]
        %v7778 = vld [vmem:[%s7766 + $0x58] sm:$0xff]
        %v7779 = vld [vmem:[%s7766 + $0x60] sm:$0xff]
        %v7780 = vld [vmem:[%s7766 + $0x68] sm:$0xff]
        %v7781 = vld [vmem:[%s7766 + $0x70] sm:$0xff]
        %v7782 = vld [vmem:[%s7766 + $0x78] sm:$0xff]
        %v7787 = vcombine.low %v7762, %v7763
        %v7788 = vcombine.low %v7764, %v7765
        %v7790 = vunpack.c.l.s4 1966171168
        %v7791 = vunpack.c.0.s8 %v7790
        %v7792 = vlaneseq
        %v7793 = vshrl.u32 %v7792, 7
        %v7794 = vsub.s32 %v7791, %v7793
        %v7795 = vrot.slane %v7787, %v7794
        %v7797 = vunpack.c.l.s4 1966171168
        %v7798 = vunpack.c.0.s8 %v7797
        %v7799 = vlaneseq
        %v7800 = vshrl.u32 %v7799, 7
        %v7801 = vsub.s32 %v7798, %v7800
        %v7802 = vrot.slane %v7788, %v7801
        %v7803 = vcombine.low %v7795, %v7802
        %v7805 = vunpack.c.l.s4 1966171168
        %v7806 = vunpack.c.0.s8 %v7805
        %v7807 = vlaneseq
        %v7808 = vshrl.u32 %v7807, 7
        %v7809 = vsub.s32 %v7806, %v7808
        %v7810 = vrot.slane %v7803, %v7809
        %v7828 = vunpack.c.l.b16 %v7767
        %v7829 = vunpack.c.h.b16 %v7767
        %v7830 = vunpack.c.l.b16 %v7768
        %v7831 = vunpack.c.h.b16 %v7768
        %v7832 = vunpack.c.l.b16 %v7769
        %v7833 = vunpack.c.h.b16 %v7769
        %v7834 = vunpack.c.l.b16 %v7770
        %v7835 = vunpack.c.h.b16 %v7770
        %v7836 = vunpack.c.l.b16 %v7771
        %v7837 = vunpack.c.h.b16 %v7771
        %v7838 = vunpack.c.l.b16 %v7772
        %v7839 = vunpack.c.h.b16 %v7772
        %v7840 = vunpack.c.l.b16 %v7773
        %v7841 = vunpack.c.h.b16 %v7773
        %v7842 = vunpack.c.l.b16 %v7774
        %v7843 = vunpack.c.h.b16 %v7774
        %v7844 = vunpack.c.l.b16 %v7775
        %v7845 = vunpack.c.h.b16 %v7775
        %v7846 = vunpack.c.l.b16 %v7776
        %v7847 = vunpack.c.h.b16 %v7776
        %v7848 = vunpack.c.l.b16 %v7777
        %v7849 = vunpack.c.h.b16 %v7777
        %v7850 = vunpack.c.l.b16 %v7778
        %v7851 = vunpack.c.h.b16 %v7778
        %v7852 = vunpack.c.l.b16 %v7779
        %v7853 = vunpack.c.h.b16 %v7779
        %v7854 = vunpack.c.l.b16 %v7780
        %v7855 = vunpack.c.h.b16 %v7780
        %v7856 = vunpack.c.l.b16 %v7781
        %v7857 = vunpack.c.h.b16 %v7781
        %v7858 = vunpack.c.l.b16 %v7782
        %v7859 = vunpack.c.h.b16 %v7782
        %v7860 = vpack.c.b16 %v7830, %v7828
        %v7861 = vpack.c.b16 %v7831, %v7829
        %v7862 = vpack.c.b16 %v7834, %v7832
        %v7863 = vpack.c.b16 %v7835, %v7833
        %v7864 = vpack.c.b16 %v7838, %v7836
        %v7865 = vpack.c.b16 %v7839, %v7837
        %v7866 = vpack.c.b16 %v7842, %v7840
        %v7867 = vpack.c.b16 %v7843, %v7841
        %v7868 = vpack.c.b16 %v7846, %v7844
        %v7869 = vpack.c.b16 %v7847, %v7845
        %v7870 = vpack.c.b16 %v7850, %v7848
        %v7871 = vpack.c.b16 %v7851, %v7849
        %v7872 = vpack.c.b16 %v7854, %v7852
        %v7873 = vpack.c.b16 %v7855, %v7853
        %v7874 = vpack.c.b16 %v7858, %v7856
        %v7875 = vpack.c.b16 %v7859, %v7857
        %7892 = vmatprep.subr.bf16.mxu0 %v7861
        %7893 = vmatpush1.bf16.msra.mxu0 %v7860
        %7894 = vmatprep.subr.bf16.mxu0 %v7863
        %7895 = vmatpush1.bf16.msra.mxu0 %v7862
        %7896 = vmatprep.subr.bf16.mxu0 %v7865
        %7897 = vmatpush1.bf16.msra.mxu0 %v7864
        %7898 = vmatprep.subr.bf16.mxu0 %v7867
        %7899 = vmatpush1.bf16.msra.mxu0 %v7866
        %7900 = vmatprep.subr.bf16.mxu0 %v7869
        %7901 = vmatpush1.bf16.msra.mxu0 %v7868
        %7902 = vmatprep.subr.bf16.mxu0 %v7871
        %7903 = vmatpush1.bf16.msra.mxu0 %v7870
        %7904 = vmatprep.subr.bf16.mxu0 %v7873
        %7905 = vmatpush1.bf16.msra.mxu0 %v7872
        %7906 = vmatprep.subr.bf16.mxu0 %v7875
        %7907 = vmatpush1.bf16.msra.mxu0 %v7874
        %7908 = vmatprep.subr.bf16.mxu0 0
        %7909 = vmatpush1.bf16.msra.mxu0 0
        %7910 = vmatprep.subr.bf16.mxu0 0
        %7911 = vmatpush1.bf16.msra.mxu0 0
        %7912 = vmatprep.subr.bf16.mxu0 0
        %7913 = vmatpush1.bf16.msra.mxu0 0
        %7914 = vmatprep.subr.bf16.mxu0 0
        %7915 = vmatpush1.bf16.msra.mxu0 0
        %7916 = vmatprep.subr.bf16.mxu0 0
        %7917 = vmatpush1.bf16.msra.mxu0 0
        %7918 = vmatprep.subr.bf16.mxu0 0
        %7919 = vmatpush1.bf16.msra.mxu0 0
        %7920 = vmatprep.subr.bf16.mxu0 0
        %7921 = vmatpush1.bf16.msra.mxu0 0
        %7922 = vmatprep.subr.bf16.mxu0 0
        %7923 = vmatpush1.bf16.msra.mxu0 0
        %7924 = vmatprep.mubr.bf16.mxu0 0
        %7925 = vmatmul.mubr.bf16.gmra.mrb[0].mxu0 %v7810
        %v7926 = vpop.f32.mrb[0].mxu0
        %v7927 = vadd.f32 0.0, %v7926
        %v7928 = vpop.f32.mrb[0].mxu0
        %v7929 = vadd.f32 0.0, %v7928
        %v7930 = vpop.f32.mrb[0].mxu0
        %v7931 = vpop.f32.mrb[0].mxu0
        %7932 = vdwg.mxu0
        %v7933 = vadd.f32 %v7760, %v7927
        %v7934 = vadd.f32 %v7761, %v7929
        %v7935 = vld [vmem:[%s6504] sm:$0x3]
        %v7936 = vld [vmem:[%s6504 + $0x2] sm:$0x3]
        %v7937 = vld [vmem:[%s6504 + $0x18] sm:$0x3]
        %v7938 = vld [vmem:[%s6504 + $0x1a] sm:$0x3]
        %v7944 = vunpack.c.l.s4 1966171168
        %v7945 = vunpack.c.0.s8 %v7944
        %v7946 = vlaneseq
        %v7947 = vshrl.u32 %v7946, 7
        %v7948 = vsub.s32 %v7945, %v7947
        %v7949 = vrot.slane %v7935, %v7948
        %v7950 = vcombine.high %v7949, %v7949
        %v7952 = vunpack.c.l.s4 1966171168
        %v7953 = vunpack.c.0.s8 %v7952
        %v7954 = vlaneseq
        %v7955 = vshrl.u32 %v7954, 7
        %v7956 = vsub.s32 %v7953, %v7955
        %v7957 = vrot.slane %v7936, %v7956
        %v7958 = vcombine.high %v7957, %v7957
        %v7960 = vunpack.c.l.s4 1966171168
        %v7961 = vunpack.c.0.s8 %v7960
        %v7962 = vlaneseq
        %v7963 = vshrl.u32 %v7962, 7
        %v7964 = vsub.s32 %v7961, %v7963
        %v7965 = vrot.slane %v7937, %v7964
        %v7966 = vcombine.high %v7965, %v7965
        %v7968 = vunpack.c.l.s4 1966171168
        %v7969 = vunpack.c.0.s8 %v7968
        %v7970 = vlaneseq
        %v7971 = vshrl.u32 %v7970, 7
        %v7972 = vsub.s32 %v7969, %v7971
        %v7973 = vrot.slane %v7938, %v7972
        %v7974 = vcombine.high %v7973, %v7973
        %v7976 = vshrl.u32 %v7949, 16
        %v7978 = vrot.slane %v7976, 7
        %v7979 = vrot.slane %v7978, 1
        %v7981 = vshll.u32 %v7950, 16
        %v7983 = vsel %vm7146, %v7979, %v7981
        %v7985 = vshrl.u32 %v7957, 16
        %v7987 = vrot.slane %v7985, 7
        %v7988 = vrot.slane %v7987, 1
        %v7990 = vshll.u32 %v7958, 16
        %v7992 = vsel %vm7146, %v7988, %v7990
        %v7994 = vshrl.u32 %v7965, 16
        %v7996 = vrot.slane %v7994, 7
        %v7997 = vrot.slane %v7996, 1
        %v7999 = vshll.u32 %v7966, 16
        %v8001 = vsel %vm7146, %v7997, %v7999
        %v8003 = vshrl.u32 %v7973, 16
        %v8005 = vrot.slane %v8003, 7
        %v8006 = vrot.slane %v8005, 1
        %v8008 = vshll.u32 %v7974, 16
        %v8010 = vsel %vm7146, %v8006, %v8008
        %s8011 = scalar_lea.vmem [#allocation7], 768
        %v8012 = vld [vmem:[%s8011] sm:$0xff]
        %v8013 = vld [vmem:[%s8011 + $0x8] sm:$0xff]
        %v8014 = vld [vmem:[%s8011 + $0x10] sm:$0xff]
        %v8015 = vld [vmem:[%s8011 + $0x18] sm:$0xff]
        %v8016 = vld [vmem:[%s8011 + $0x20] sm:$0xff]
        %v8017 = vld [vmem:[%s8011 + $0x28] sm:$0xff]
        %v8018 = vld [vmem:[%s8011 + $0x30] sm:$0xff]
        %v8019 = vld [vmem:[%s8011 + $0x38] sm:$0xff]
        %v8020 = vld [vmem:[%s8011 + $0x40] sm:$0xff]
        %v8021 = vld [vmem:[%s8011 + $0x48] sm:$0xff]
        %v8022 = vld [vmem:[%s8011 + $0x50] sm:$0xff]
        %v8023 = vld [vmem:[%s8011 + $0x58] sm:$0xff]
        %v8024 = vld [vmem:[%s8011 + $0x60] sm:$0xff]
        %v8025 = vld [vmem:[%s8011 + $0x68] sm:$0xff]
        %v8026 = vld [vmem:[%s8011 + $0x70] sm:$0xff]
        %v8027 = vld [vmem:[%s8011 + $0x78] sm:$0xff]
        %v8028 = vcombine.low %v7983, %v7992
        %v8029 = vcombine.low %v8001, %v8010
        %v8031 = vunpack.c.l.s4 1966171168
        %v8032 = vunpack.c.0.s8 %v8031
        %v8033 = vlaneseq
        %v8034 = vshrl.u32 %v8033, 7
        %v8035 = vsub.s32 %v8032, %v8034
        %v8036 = vrot.slane %v8028, %v8035
        %v8038 = vunpack.c.l.s4 1966171168
        %v8039 = vunpack.c.0.s8 %v8038
        %v8040 = vlaneseq
        %v8041 = vshrl.u32 %v8040, 7
        %v8042 = vsub.s32 %v8039, %v8041
        %v8043 = vrot.slane %v8029, %v8042
        %v8044 = vcombine.low %v8036, %v8043
        %v8046 = vunpack.c.l.s4 1966171168
        %v8047 = vunpack.c.0.s8 %v8046
        %v8048 = vlaneseq
        %v8049 = vshrl.u32 %v8048, 7
        %v8050 = vsub.s32 %v8047, %v8049
        %v8051 = vrot.slane %v8044, %v8050
        %v8069 = vunpack.c.l.b16 %v8012
        %v8070 = vunpack.c.h.b16 %v8012
        %v8071 = vunpack.c.l.b16 %v8013
        %v8072 = vunpack.c.h.b16 %v8013
        %v8073 = vunpack.c.l.b16 %v8014
        %v8074 = vunpack.c.h.b16 %v8014
        %v8075 = vunpack.c.l.b16 %v8015
        %v8076 = vunpack.c.h.b16 %v8015
        %v8077 = vunpack.c.l.b16 %v8016
        %v8078 = vunpack.c.h.b16 %v8016
        %v8079 = vunpack.c.l.b16 %v8017
        %v8080 = vunpack.c.h.b16 %v8017
        %v8081 = vunpack.c.l.b16 %v8018
        %v8082 = vunpack.c.h.b16 %v8018
        %v8083 = vunpack.c.l.b16 %v8019
        %v8084 = vunpack.c.h.b16 %v8019
        %v8085 = vunpack.c.l.b16 %v8020
        %v8086 = vunpack.c.h.b16 %v8020
        %v8087 = vunpack.c.l.b16 %v8021
        %v8088 = vunpack.c.h.b16 %v8021
        %v8089 = vunpack.c.l.b16 %v8022
        %v8090 = vunpack.c.h.b16 %v8022
        %v8091 = vunpack.c.l.b16 %v8023
        %v8092 = vunpack.c.h.b16 %v8023
        %v8093 = vunpack.c.l.b16 %v8024
        %v8094 = vunpack.c.h.b16 %v8024
        %v8095 = vunpack.c.l.b16 %v8025
        %v8096 = vunpack.c.h.b16 %v8025
        %v8097 = vunpack.c.l.b16 %v8026
        %v8098 = vunpack.c.h.b16 %v8026
        %v8099 = vunpack.c.l.b16 %v8027
        %v8100 = vunpack.c.h.b16 %v8027
        %v8101 = vpack.c.b16 %v8071, %v8069
        %v8102 = vpack.c.b16 %v8072, %v8070
        %v8103 = vpack.c.b16 %v8075, %v8073
        %v8104 = vpack.c.b16 %v8076, %v8074
        %v8105 = vpack.c.b16 %v8079, %v8077
        %v8106 = vpack.c.b16 %v8080, %v8078
        %v8107 = vpack.c.b16 %v8083, %v8081
        %v8108 = vpack.c.b16 %v8084, %v8082
        %v8109 = vpack.c.b16 %v8087, %v8085
        %v8110 = vpack.c.b16 %v8088, %v8086
        %v8111 = vpack.c.b16 %v8091, %v8089
        %v8112 = vpack.c.b16 %v8092, %v8090
        %v8113 = vpack.c.b16 %v8095, %v8093
        %v8114 = vpack.c.b16 %v8096, %v8094
        %v8115 = vpack.c.b16 %v8099, %v8097
        %v8116 = vpack.c.b16 %v8100, %v8098
        %8133 = vmatprep.subr.bf16.mxu0 %v8102
        %8134 = vmatpush1.bf16.msra.mxu0 %v8101
        %8135 = vmatprep.subr.bf16.mxu0 %v8104
        %8136 = vmatpush1.bf16.msra.mxu0 %v8103
        %8137 = vmatprep.subr.bf16.mxu0 %v8106
        %8138 = vmatpush1.bf16.msra.mxu0 %v8105
        %8139 = vmatprep.subr.bf16.mxu0 %v8108
        %8140 = vmatpush1.bf16.msra.mxu0 %v8107
        %8141 = vmatprep.subr.bf16.mxu0 %v8110
        %8142 = vmatpush1.bf16.msra.mxu0 %v8109
        %8143 = vmatprep.subr.bf16.mxu0 %v8112
        %8144 = vmatpush1.bf16.msra.mxu0 %v8111
        %8145 = vmatprep.subr.bf16.mxu0 %v8114
        %8146 = vmatpush1.bf16.msra.mxu0 %v8113
        %8147 = vmatprep.subr.bf16.mxu0 %v8116
        %8148 = vmatpush1.bf16.msra.mxu0 %v8115
        %8149 = vmatprep.subr.bf16.mxu0 0
        %8150 = vmatpush1.bf16.msra.mxu0 0
        %8151 = vmatprep.subr.bf16.mxu0 0
        %8152 = vmatpush1.bf16.msra.mxu0 0
        %8153 = vmatprep.subr.bf16.mxu0 0
        %8154 = vmatpush1.bf16.msra.mxu0 0
        %8155 = vmatprep.subr.bf16.mxu0 0
        %8156 = vmatpush1.bf16.msra.mxu0 0
        %8157 = vmatprep.subr.bf16.mxu0 0
        %8158 = vmatpush1.bf16.msra.mxu0 0
        %8159 = vmatprep.subr.bf16.mxu0 0
        %8160 = vmatpush1.bf16.msra.mxu0 0
        %8161 = vmatprep.subr.bf16.mxu0 0
        %8162 = vmatpush1.bf16.msra.mxu0 0
        %8163 = vmatprep.subr.bf16.mxu0 0
        %8164 = vmatpush1.bf16.msra.mxu0 0
        %8165 = vmatprep.mubr.bf16.mxu0 0
        %8166 = vmatmul.mubr.bf16.gmra.mrb[0].mxu0 %v8051
        %v8167 = vpop.f32.mrb[0].mxu0
        %v8168 = vadd.f32 0.0, %v8167
        %v8169 = vpop.f32.mrb[0].mxu0
        %v8170 = vadd.f32 0.0, %v8169
        %v8171 = vpop.f32.mrb[0].mxu0
        %v8172 = vpop.f32.mrb[0].mxu0
        %8173 = vdwg.mxu0
        %v8174 = vadd.f32 %v7933, %v8168
        %v8175 = vadd.f32 %v7934, %v8170
        %v8176 = vld [vmem:[%s6464] sm:$0x3]
        %v8177 = vld [vmem:[%s6464 + $0x2] sm:$0x3]
        %v8178 = vld [vmem:[%s6464 + $0x18] sm:$0x3]
        %v8179 = vld [vmem:[%s6464 + $0x1a] sm:$0x3]
        %v8185 = vunpack.c.l.s4 1966171168
        %v8186 = vunpack.c.0.s8 %v8185
        %v8187 = vlaneseq
        %v8188 = vshrl.u32 %v8187, 7
        %v8189 = vsub.s32 %v8186, %v8188
        %v8190 = vrot.slane %v8176, %v8189
        %v8191 = vcombine.high %v8190, %v8190
        %v8193 = vunpack.c.l.s4 1966171168
        %v8194 = vunpack.c.0.s8 %v8193
        %v8195 = vlaneseq
        %v8196 = vshrl.u32 %v8195, 7
        %v8197 = vsub.s32 %v8194, %v8196
        %v8198 = vrot.slane %v8177, %v8197
        %v8199 = vcombine.high %v8198, %v8198
        %v8201 = vunpack.c.l.s4 1966171168
        %v8202 = vunpack.c.0.s8 %v8201
        %v8203 = vlaneseq
        %v8204 = vshrl.u32 %v8203, 7
        %v8205 = vsub.s32 %v8202, %v8204
        %v8206 = vrot.slane %v8178, %v8205
        %v8207 = vcombine.high %v8206, %v8206
        %v8209 = vunpack.c.l.s4 1966171168
        %v8210 = vunpack.c.0.s8 %v8209
        %v8211 = vlaneseq
        %v8212 = vshrl.u32 %v8211, 7
        %v8213 = vsub.s32 %v8210, %v8212
        %v8214 = vrot.slane %v8179, %v8213
        %v8215 = vcombine.high %v8214, %v8214
        %v8217 = vshrl.u32 %v8190, 16
        %v8219 = vrot.slane %v8217, 7
        %v8220 = vrot.slane %v8219, 1
        %v8222 = vshll.u32 %v8191, 16
        %v8224 = vsel %vm7146, %v8220, %v8222
        %v8226 = vshrl.u32 %v8198, 16
        %v8228 = vrot.slane %v8226, 7
        %v8229 = vrot.slane %v8228, 1
        %v8231 = vshll.u32 %v8199, 16
        %v8233 = vsel %vm7146, %v8229, %v8231
        %v8235 = vshrl.u32 %v8206, 16
        %v8237 = vrot.slane %v8235, 7
        %v8238 = vrot.slane %v8237, 1
        %v8240 = vshll.u32 %v8207, 16
        %v8242 = vsel %vm7146, %v8238, %v8240
        %v8244 = vshrl.u32 %v8214, 16
        %v8246 = vrot.slane %v8244, 7
        %v8247 = vrot.slane %v8246, 1
        %v8249 = vshll.u32 %v8215, 16
        %v8251 = vsel %vm7146, %v8247, %v8249
        %s8252 = scalar_lea.vmem [#allocation7], 896
        %v8253 = vld [vmem:[%s8252] sm:$0xff]
        %v8254 = vld [vmem:[%s8252 + $0x8] sm:$0xff]
        %v8255 = vld [vmem:[%s8252 + $0x10] sm:$0xff]
        %v8256 = vld [vmem:[%s8252 + $0x18] sm:$0xff]
        %v8257 = vld [vmem:[%s8252 + $0x20] sm:$0xff]
        %v8258 = vld [vmem:[%s8252 + $0x28] sm:$0xff]
        %v8259 = vld [vmem:[%s8252 + $0x30] sm:$0xff]
        %v8260 = vld [vmem:[%s8252 + $0x38] sm:$0xff]
        %v8261 = vld [vmem:[%s8252 + $0x40] sm:$0xff]
        %v8262 = vld [vmem:[%s8252 + $0x48] sm:$0xff]
        %v8263 = vld [vmem:[%s8252 + $0x50] sm:$0xff]
        %v8264 = vld [vmem:[%s8252 + $0x58] sm:$0xff]
        %v8265 = vld [vmem:[%s8252 + $0x60] sm:$0xff]
        %v8266 = vld [vmem:[%s8252 + $0x68] sm:$0xff]
        %v8267 = vld [vmem:[%s8252 + $0x70] sm:$0xff]
        %v8268 = vld [vmem:[%s8252 + $0x78] sm:$0xff]
        %v8269 = vcombine.low %v8224, %v8233
        %v8270 = vcombine.low %v8242, %v8251
        %v8272 = vunpack.c.l.s4 1966171168
        %v8273 = vunpack.c.0.s8 %v8272
        %v8274 = vlaneseq
        %v8275 = vshrl.u32 %v8274, 7
        %v8276 = vsub.s32 %v8273, %v8275
        %v8277 = vrot.slane %v8269, %v8276
        %v8279 = vunpack.c.l.s4 1966171168
        %v8280 = vunpack.c.0.s8 %v8279
        %v8281 = vlaneseq
        %v8282 = vshrl.u32 %v8281, 7
        %v8283 = vsub.s32 %v8280, %v8282
        %v8284 = vrot.slane %v8270, %v8283
        %v8285 = vcombine.low %v8277, %v8284
        %v8287 = vunpack.c.l.s4 1966171168
        %v8288 = vunpack.c.0.s8 %v8287
        %v8289 = vlaneseq
        %v8290 = vshrl.u32 %v8289, 7
        %v8291 = vsub.s32 %v8288, %v8290
        %v8292 = vrot.slane %v8285, %v8291
        %v8310 = vunpack.c.l.b16 %v8253
        %v8311 = vunpack.c.h.b16 %v8253
        %v8312 = vunpack.c.l.b16 %v8254
        %v8313 = vunpack.c.h.b16 %v8254
        %v8314 = vunpack.c.l.b16 %v8255
        %v8315 = vunpack.c.h.b16 %v8255
        %v8316 = vunpack.c.l.b16 %v8256
        %v8317 = vunpack.c.h.b16 %v8256
        %v8318 = vunpack.c.l.b16 %v8257
        %v8319 = vunpack.c.h.b16 %v8257
        %v8320 = vunpack.c.l.b16 %v8258
        %v8321 = vunpack.c.h.b16 %v8258
        %v8322 = vunpack.c.l.b16 %v8259
        %v8323 = vunpack.c.h.b16 %v8259
        %v8324 = vunpack.c.l.b16 %v8260
        %v8325 = vunpack.c.h.b16 %v8260
        %v8326 = vunpack.c.l.b16 %v8261
        %v8327 = vunpack.c.h.b16 %v8261
        %v8328 = vunpack.c.l.b16 %v8262
        %v8329 = vunpack.c.h.b16 %v8262
        %v8330 = vunpack.c.l.b16 %v8263
        %v8331 = vunpack.c.h.b16 %v8263
        %v8332 = vunpack.c.l.b16 %v8264
        %v8333 = vunpack.c.h.b16 %v8264
        %v8334 = vunpack.c.l.b16 %v8265
        %v8335 = vunpack.c.h.b16 %v8265
        %v8336 = vunpack.c.l.b16 %v8266
        %v8337 = vunpack.c.h.b16 %v8266
        %v8338 = vunpack.c.l.b16 %v8267
        %v8339 = vunpack.c.h.b16 %v8267
        %v8340 = vunpack.c.l.b16 %v8268
        %v8341 = vunpack.c.h.b16 %v8268
        %v8342 = vpack.c.b16 %v8312, %v8310
        %v8343 = vpack.c.b16 %v8313, %v8311
        %v8344 = vpack.c.b16 %v8316, %v8314
        %v8345 = vpack.c.b16 %v8317, %v8315
        %v8346 = vpack.c.b16 %v8320, %v8318
        %v8347 = vpack.c.b16 %v8321, %v8319
        %v8348 = vpack.c.b16 %v8324, %v8322
        %v8349 = vpack.c.b16 %v8325, %v8323
        %v8350 = vpack.c.b16 %v8328, %v8326
        %v8351 = vpack.c.b16 %v8329, %v8327
        %v8352 = vpack.c.b16 %v8332, %v8330
        %v8353 = vpack.c.b16 %v8333, %v8331
        %v8354 = vpack.c.b16 %v8336, %v8334
        %v8355 = vpack.c.b16 %v8337, %v8335
        %v8356 = vpack.c.b16 %v8340, %v8338
        %v8357 = vpack.c.b16 %v8341, %v8339
        %8374 = vmatprep.subr.bf16.mxu0 %v8343
        %8375 = vmatpush1.bf16.msra.mxu0 %v8342
        %8376 = vmatprep.subr.bf16.mxu0 %v8345
        %8377 = vmatpush1.bf16.msra.mxu0 %v8344
        %8378 = vmatprep.subr.bf16.mxu0 %v8347
        %8379 = vmatpush1.bf16.msra.mxu0 %v8346
        %8380 = vmatprep.subr.bf16.mxu0 %v8349
        %8381 = vmatpush1.bf16.msra.mxu0 %v8348
        %8382 = vmatprep.subr.bf16.mxu0 %v8351
        %8383 = vmatpush1.bf16.msra.mxu0 %v8350
        %8384 = vmatprep.subr.bf16.mxu0 %v8353
        %8385 = vmatpush1.bf16.msra.mxu0 %v8352
        %8386 = vmatprep.subr.bf16.mxu0 %v8355
        %8387 = vmatpush1.bf16.msra.mxu0 %v8354
        %8388 = vmatprep.subr.bf16.mxu0 %v8357
        %8389 = vmatpush1.bf16.msra.mxu0 %v8356
        %8390 = vmatprep.subr.bf16.mxu0 0
        %8391 = vmatpush1.bf16.msra.mxu0 0
        %8392 = vmatprep.subr.bf16.mxu0 0
        %8393 = vmatpush1.bf16.msra.mxu0 0
        %8394 = vmatprep.subr.bf16.mxu0 0
        %8395 = vmatpush1.bf16.msra.mxu0 0
        %8396 = vmatprep.subr.bf16.mxu0 0
        %8397 = vmatpush1.bf16.msra.mxu0 0
        %8398 = vmatprep.subr.bf16.mxu0 0
        %8399 = vmatpush1.bf16.msra.mxu0 0
        %8400 = vmatprep.subr.bf16.mxu0 0
        %8401 = vmatpush1.bf16.msra.mxu0 0
        %8402 = vmatprep.subr.bf16.mxu0 0
        %8403 = vmatpush1.bf16.msra.mxu0 0
        %8404 = vmatprep.subr.bf16.mxu0 0
        %8405 = vmatpush1.bf16.msra.mxu0 0
        %8406 = vmatprep.mubr.bf16.mxu0 0
        %8407 = vmatmul.mubr.bf16.gmra.mrb[0].mxu0 %v8292
        %v8408 = vpop.f32.mrb[0].mxu0
        %v8409 = vadd.f32 0.0, %v8408
        %v8410 = vpop.f32.mrb[0].mxu0
        %v8411 = vadd.f32 0.0, %v8410
        %v8412 = vpop.f32.mrb[0].mxu0
        %v8413 = vpop.f32.mrb[0].mxu0
        %8414 = vdwg.mxu0
        %v8415 = vadd.f32 %v8174, %v8409
        %v8416 = vadd.f32 %v8175, %v8411
        %s8417 = scalar_lea.vmem [#allocation3], 2
        %v8418 = vld [vmem:[%s8417] sm:$0x1]
        %v8419 = vld [vmem:[%s8417 + $0x2] sm:$0x1]
        %v8420 = vld [vmem:[%s8417 + $0x18] sm:$0x1]
        %v8421 = vld [vmem:[%s8417 + $0x1a] sm:$0x1]
        %s8422 = scalar_lea.vmem [#allocation7], 1024
        %v8423 = vld [vmem:[%s8422] sm:$0xff]
        %v8424 = vld [vmem:[%s8422 + $0x8] sm:$0xff]
        %v8425 = vld [vmem:[%s8422 + $0x10] sm:$0xff]
        %v8426 = vld [vmem:[%s8422 + $0x18] sm:$0xff]
        %v8427 = vld [vmem:[%s8422 + $0x20] sm:$0xff]
        %v8428 = vld [vmem:[%s8422 + $0x28] sm:$0xff]
        %v8429 = vld [vmem:[%s8422 + $0x30] sm:$0xff]
        %v8430 = vld [vmem:[%s8422 + $0x38] sm:$0xff]
        %v8431 = vld [vmem:[%s8422 + $0x40] sm:$0xff]
        %v8432 = vld [vmem:[%s8422 + $0x48] sm:$0xff]
        %v8433 = vld [vmem:[%s8422 + $0x50] sm:$0xff]
        %v8434 = vld [vmem:[%s8422 + $0x58] sm:$0xff]
        %v8435 = vld [vmem:[%s8422 + $0x60] sm:$0xff]
        %v8436 = vld [vmem:[%s8422 + $0x68] sm:$0xff]
        %v8437 = vld [vmem:[%s8422 + $0x70] sm:$0xff]
        %v8438 = vld [vmem:[%s8422 + $0x78] sm:$0xff]
        %v8443 = vcombine.low %v8418, %v8419
        %v8444 = vcombine.low %v8420, %v8421
        %v8446 = vunpack.c.l.s4 1966171168
        %v8447 = vunpack.c.0.s8 %v8446
        %v8448 = vlaneseq
        %v8449 = vshrl.u32 %v8448, 7
        %v8450 = vsub.s32 %v8447, %v8449
        %v8451 = vrot.slane %v8443, %v8450
        %v8453 = vunpack.c.l.s4 1966171168
        %v8454 = vunpack.c.0.s8 %v8453
        %v8455 = vlaneseq
        %v8456 = vshrl.u32 %v8455, 7
        %v8457 = vsub.s32 %v8454, %v8456
        %v8458 = vrot.slane %v8444, %v8457
        %v8459 = vcombine.low %v8451, %v8458
        %v8461 = vunpack.c.l.s4 1966171168
        %v8462 = vunpack.c.0.s8 %v8461
        %v8463 = vlaneseq
        %v8464 = vshrl.u32 %v8463, 7
        %v8465 = vsub.s32 %v8462, %v8464
        %v8466 = vrot.slane %v8459, %v8465
        %v8484 = vunpack.c.l.b16 %v8423
        %v8485 = vunpack.c.h.b16 %v8423
        %v8486 = vunpack.c.l.b16 %v8424
        %v8487 = vunpack.c.h.b16 %v8424
        %v8488 = vunpack.c.l.b16 %v8425
        %v8489 = vunpack.c.h.b16 %v8425
        %v8490 = vunpack.c.l.b16 %v8426
        %v8491 = vunpack.c.h.b16 %v8426
        %v8492 = vunpack.c.l.b16 %v8427
        %v8493 = vunpack.c.h.b16 %v8427
        %v8494 = vunpack.c.l.b16 %v8428
        %v8495 = vunpack.c.h.b16 %v8428
        %v8496 = vunpack.c.l.b16 %v8429
        %v8497 = vunpack.c.h.b16 %v8429
        %v8498 = vunpack.c.l.b16 %v8430
        %v8499 = vunpack.c.h.b16 %v8430
        %v8500 = vunpack.c.l.b16 %v8431
        %v8501 = vunpack.c.h.b16 %v8431
        %v8502 = vunpack.c.l.b16 %v8432
        %v8503 = vunpack.c.h.b16 %v8432
        %v8504 = vunpack.c.l.b16 %v8433
        %v8505 = vunpack.c.h.b16 %v8433
        %v8506 = vunpack.c.l.b16 %v8434
        %v8507 = vunpack.c.h.b16 %v8434
        %v8508 = vunpack.c.l.b16 %v8435
        %v8509 = vunpack.c.h.b16 %v8435
        %v8510 = vunpack.c.l.b16 %v8436
        %v8511 = vunpack.c.h.b16 %v8436
        %v8512 = vunpack.c.l.b16 %v8437
        %v8513 = vunpack.c.h.b16 %v8437
        %v8514 = vunpack.c.l.b16 %v8438
        %v8515 = vunpack.c.h.b16 %v8438
        %v8516 = vpack.c.b16 %v8486, %v8484
        %v8517 = vpack.c.b16 %v8487, %v8485
        %v8518 = vpack.c.b16 %v8490, %v8488
        %v8519 = vpack.c.b16 %v8491, %v8489
        %v8520 = vpack.c.b16 %v8494, %v8492
        %v8521 = vpack.c.b16 %v8495, %v8493
        %v8522 = vpack.c.b16 %v8498, %v8496
        %v8523 = vpack.c.b16 %v8499, %v8497
        %v8524 = vpack.c.b16 %v8502, %v8500
        %v8525 = vpack.c.b16 %v8503, %v8501
        %v8526 = vpack.c.b16 %v8506, %v8504
        %v8527 = vpack.c.b16 %v8507, %v8505
        %v8528 = vpack.c.b16 %v8510, %v8508
        %v8529 = vpack.c.b16 %v8511, %v8509
        %v8530 = vpack.c.b16 %v8514, %v8512
        %v8531 = vpack.c.b16 %v8515, %v8513
        %8548 = vmatprep.subr.bf16.mxu0 %v8517
        %8549 = vmatpush1.bf16.msra.mxu0 %v8516
        %8550 = vmatprep.subr.bf16.mxu0 %v8519
        %8551 = vmatpush1.bf16.msra.mxu0 %v8518
        %8552 = vmatprep.subr.bf16.mxu0 %v8521
        %8553 = vmatpush1.bf16.msra.mxu0 %v8520
        %8554 = vmatprep.subr.bf16.mxu0 %v8523
        %8555 = vmatpush1.bf16.msra.mxu0 %v8522
        %8556 = vmatprep.subr.bf16.mxu0 %v8525
        %8557 = vmatpush1.bf16.msra.mxu0 %v8524
        %8558 = vmatprep.subr.bf16.mxu0 %v8527
        %8559 = vmatpush1.bf16.msra.mxu0 %v8526
        %8560 = vmatprep.subr.bf16.mxu0 %v8529
        %8561 = vmatpush1.bf16.msra.mxu0 %v8528
        %8562 = vmatprep.subr.bf16.mxu0 %v8531
        %8563 = vmatpush1.bf16.msra.mxu0 %v8530
        %8564 = vmatprep.subr.bf16.mxu0 0
        %8565 = vmatpush1.bf16.msra.mxu0 0
        %8566 = vmatprep.subr.bf16.mxu0 0
        %8567 = vmatpush1.bf16.msra.mxu0 0
        %8568 = vmatprep.subr.bf16.mxu0 0
        %8569 = vmatpush1.bf16.msra.mxu0 0
        %8570 = vmatprep.subr.bf16.mxu0 0
        %8571 = vmatpush1.bf16.msra.mxu0 0
        %8572 = vmatprep.subr.bf16.mxu0 0
        %8573 = vmatpush1.bf16.msra.mxu0 0
        %8574 = vmatprep.subr.bf16.mxu0 0
        %8575 = vmatpush1.bf16.msra.mxu0 0
        %8576 = vmatprep.subr.bf16.mxu0 0
        %8577 = vmatpush1.bf16.msra.mxu0 0
        %8578 = vmatprep.subr.bf16.mxu0 0
        %8579 = vmatpush1.bf16.msra.mxu0 0
        %8580 = vmatprep.mubr.bf16.mxu0 0
        %8581 = vmatmul.mubr.bf16.gmra.mrb[0].mxu0 %v8466
        %v8582 = vpop.f32.mrb[0].mxu0
        %v8583 = vadd.f32 0.0, %v8582
        %v8584 = vpop.f32.mrb[0].mxu0
        %v8585 = vadd.f32 0.0, %v8584
        %v8586 = vpop.f32.mrb[0].mxu0
        %v8587 = vpop.f32.mrb[0].mxu0
        %8588 = vdwg.mxu0
        %v8589 = vadd.f32 %v8415, %v8583
        %v8590 = vadd.f32 %v8416, %v8585
        %s8591 = scalar_lea.vmem [#allocation3], 8
        %v8592 = vld [vmem:[%s8591] sm:$0x1]
        %v8593 = vld [vmem:[%s8591 + $0x2] sm:$0x1]
        %v8594 = vld [vmem:[%s8591 + $0x18] sm:$0x1]
        %v8595 = vld [vmem:[%s8591 + $0x1a] sm:$0x1]
        %s8596 = scalar_lea.vmem [#allocation7], 1152
        %v8597 = vld [vmem:[%s8596] sm:$0xff]
        %v8598 = vld [vmem:[%s8596 + $0x8] sm:$0xff]
        %v8599 = vld [vmem:[%s8596 + $0x10] sm:$0xff]
        %v8600 = vld [vmem:[%s8596 + $0x18] sm:$0xff]
        %v8601 = vld [vmem:[%s8596 + $0x20] sm:$0xff]
        %v8602 = vld [vmem:[%s8596 + $0x28] sm:$0xff]
        %v8603 = vld [vmem:[%s8596 + $0x30] sm:$0xff]
        %v8604 = vld [vmem:[%s8596 + $0x38] sm:$0xff]
        %v8605 = vld [vmem:[%s8596 + $0x40] sm:$0xff]
        %v8606 = vld [vmem:[%s8596 + $0x48] sm:$0xff]
        %v8607 = vld [vmem:[%s8596 + $0x50] sm:$0xff]
        %v8608 = vld [vmem:[%s8596 + $0x58] sm:$0xff]
        %v8609 = vld [vmem:[%s8596 + $0x60] sm:$0xff]
        %v8610 = vld [vmem:[%s8596 + $0x68] sm:$0xff]
        %v8611 = vld [vmem:[%s8596 + $0x70] sm:$0xff]
        %v8612 = vld [vmem:[%s8596 + $0x78] sm:$0xff]
        %v8617 = vcombine.low %v8592, %v8593
        %v8618 = vcombine.low %v8594, %v8595
        %v8620 = vunpack.c.l.s4 1966171168
        %v8621 = vunpack.c.0.s8 %v8620
        %v8622 = vlaneseq
        %v8623 = vshrl.u32 %v8622, 7
        %v8624 = vsub.s32 %v8621, %v8623
        %v8625 = vrot.slane %v8617, %v8624
        %v8627 = vunpack.c.l.s4 1966171168
        %v8628 = vunpack.c.0.s8 %v8627
        %v8629 = vlaneseq
        %v8630 = vshrl.u32 %v8629, 7
        %v8631 = vsub.s32 %v8628, %v8630
        %v8632 = vrot.slane %v8618, %v8631
        %v8633 = vcombine.low %v8625, %v8632
        %v8635 = vunpack.c.l.s4 1966171168
        %v8636 = vunpack.c.0.s8 %v8635
        %v8637 = vlaneseq
        %v8638 = vshrl.u32 %v8637, 7
        %v8639 = vsub.s32 %v8636, %v8638
        %v8640 = vrot.slane %v8633, %v8639
        %v8658 = vunpack.c.l.b16 %v8597
        %v8659 = vunpack.c.h.b16 %v8597
        %v8660 = vunpack.c.l.b16 %v8598
        %v8661 = vunpack.c.h.b16 %v8598
        %v8662 = vunpack.c.l.b16 %v8599
        %v8663 = vunpack.c.h.b16 %v8599
        %v8664 = vunpack.c.l.b16 %v8600
        %v8665 = vunpack.c.h.b16 %v8600
        %v8666 = vunpack.c.l.b16 %v8601
        %v8667 = vunpack.c.h.b16 %v8601
        %v8668 = vunpack.c.l.b16 %v8602
        %v8669 = vunpack.c.h.b16 %v8602
        %v8670 = vunpack.c.l.b16 %v8603
        %v8671 = vunpack.c.h.b16 %v8603
        %v8672 = vunpack.c.l.b16 %v8604
        %v8673 = vunpack.c.h.b16 %v8604
        %v8674 = vunpack.c.l.b16 %v8605
        %v8675 = vunpack.c.h.b16 %v8605
        %v8676 = vunpack.c.l.b16 %v8606
        %v8677 = vunpack.c.h.b16 %v8606
        %v8678 = vunpack.c.l.b16 %v8607
        %v8679 = vunpack.c.h.b16 %v8607
        %v8680 = vunpack.c.l.b16 %v8608
        %v8681 = vunpack.c.h.b16 %v8608
        %v8682 = vunpack.c.l.b16 %v8609
        %v8683 = vunpack.c.h.b16 %v8609
        %v8684 = vunpack.c.l.b16 %v8610
        %v8685 = vunpack.c.h.b16 %v8610
        %v8686 = vunpack.c.l.b16 %v8611
        %v8687 = vunpack.c.h.b16 %v8611
        %v8688 = vunpack.c.l.b16 %v8612
        %v8689 = vunpack.c.h.b16 %v8612
        %v8690 = vpack.c.b16 %v8660, %v8658
        %v8691 = vpack.c.b16 %v8661, %v8659
        %v8692 = vpack.c.b16 %v8664, %v8662
        %v8693 = vpack.c.b16 %v8665, %v8663
        %v8694 = vpack.c.b16 %v8668, %v8666
        %v8695 = vpack.c.b16 %v8669, %v8667
        %v8696 = vpack.c.b16 %v8672, %v8670
        %v8697 = vpack.c.b16 %v8673, %v8671
        %v8698 = vpack.c.b16 %v8676, %v8674
        %v8699 = vpack.c.b16 %v8677, %v8675
        %v8700 = vpack.c.b16 %v8680, %v8678
        %v8701 = vpack.c.b16 %v8681, %v8679
        %v8702 = vpack.c.b16 %v8684, %v8682
        %v8703 = vpack.c.b16 %v8685, %v8683
        %v8704 = vpack.c.b16 %v8688, %v8686
        %v8705 = vpack.c.b16 %v8689, %v8687
        %8722 = vmatprep.subr.bf16.mxu0 %v8691
        %8723 = vmatpush1.bf16.msra.mxu0 %v8690
        %8724 = vmatprep.subr.bf16.mxu0 %v8693
        %8725 = vmatpush1.bf16.msra.mxu0 %v8692
        %8726 = vmatprep.subr.bf16.mxu0 %v8695
        %8727 = vmatpush1.bf16.msra.mxu0 %v8694
        %8728 = vmatprep.subr.bf16.mxu0 %v8697
        %8729 = vmatpush1.bf16.msra.mxu0 %v8696
        %8730 = vmatprep.subr.bf16.mxu0 %v8699
        %8731 = vmatpush1.bf16.msra.mxu0 %v8698
        %8732 = vmatprep.subr.bf16.mxu0 %v8701
        %8733 = vmatpush1.bf16.msra.mxu0 %v8700
        %8734 = vmatprep.subr.bf16.mxu0 %v8703
        %8735 = vmatpush1.bf16.msra.mxu0 %v8702
        %8736 = vmatprep.subr.bf16.mxu0 %v8705
        %8737 = vmatpush1.bf16.msra.mxu0 %v8704
        %8738 = vmatprep.subr.bf16.mxu0 0
        %8739 = vmatpush1.bf16.msra.mxu0 0
        %8740 = vmatprep.subr.bf16.mxu0 0
        %8741 = vmatpush1.bf16.msra.mxu0 0
        %8742 = vmatprep.subr.bf16.mxu0 0
        %8743 = vmatpush1.bf16.msra.mxu0 0
        %8744 = vmatprep.subr.bf16.mxu0 0
        %8745 = vmatpush1.bf16.msra.mxu0 0
        %8746 = vmatprep.subr.bf16.mxu0 0
        %8747 = vmatpush1.bf16.msra.mxu0 0
        %8748 = vmatprep.subr.bf16.mxu0 0
        %8749 = vmatpush1.bf16.msra.mxu0 0
        %8750 = vmatprep.subr.bf16.mxu0 0
        %8751 = vmatpush1.bf16.msra.mxu0 0
        %8752 = vmatprep.subr.bf16.mxu0 0
        %8753 = vmatpush1.bf16.msra.mxu0 0
        %8754 = vmatprep.mubr.bf16.mxu0 0
        %8755 = vmatmul.mubr.bf16.gmra.mrb[0].mxu0 %v8640
        %v8756 = vpop.f32.mrb[0].mxu0
        %v8757 = vadd.f32 0.0, %v8756
        %v8758 = vpop.f32.mrb[0].mxu0
        %v8759 = vadd.f32 0.0, %v8758
        %v8760 = vpop.f32.mrb[0].mxu0
        %v8761 = vpop.f32.mrb[0].mxu0
        %8762 = vdwg.mxu0
        %v8763 = vadd.f32 %v8589, %v8757
        %v8764 = vadd.f32 %v8590, %v8759
        %v8765 = vld [vmem:[%s8417] sm:$0x3]
        %v8766 = vld [vmem:[%s8417 + $0x2] sm:$0x3]
        %v8767 = vld [vmem:[%s8417 + $0x18] sm:$0x3]
        %v8768 = vld [vmem:[%s8417 + $0x1a] sm:$0x3]
        %v8774 = vunpack.c.l.s4 1966171168
        %v8775 = vunpack.c.0.s8 %v8774
        %v8776 = vlaneseq
        %v8777 = vshrl.u32 %v8776, 7
        %v8778 = vsub.s32 %v8775, %v8777
        %v8779 = vrot.slane %v8765, %v8778
        %v8780 = vcombine.high %v8779, %v8779
        %v8782 = vunpack.c.l.s4 1966171168
        %v8783 = vunpack.c.0.s8 %v8782
        %v8784 = vlaneseq
        %v8785 = vshrl.u32 %v8784, 7
        %v8786 = vsub.s32 %v8783, %v8785
        %v8787 = vrot.slane %v8766, %v8786
        %v8788 = vcombine.high %v8787, %v8787
        %v8790 = vunpack.c.l.s4 1966171168
        %v8791 = vunpack.c.0.s8 %v8790
        %v8792 = vlaneseq
        %v8793 = vshrl.u32 %v8792, 7
        %v8794 = vsub.s32 %v8791, %v8793
        %v8795 = vrot.slane %v8767, %v8794
        %v8796 = vcombine.high %v8795, %v8795
        %v8798 = vunpack.c.l.s4 1966171168
        %v8799 = vunpack.c.0.s8 %v8798
        %v8800 = vlaneseq
        %v8801 = vshrl.u32 %v8800, 7
        %v8802 = vsub.s32 %v8799, %v8801
        %v8803 = vrot.slane %v8768, %v8802
        %v8804 = vcombine.high %v8803, %v8803
        %v8806 = vshrl.u32 %v8779, 16
        %v8808 = vrot.slane %v8806, 7
        %v8809 = vrot.slane %v8808, 1
        %v8811 = vshll.u32 %v8780, 16
        %v8813 = vsel %vm7146, %v8809, %v8811
        %v8815 = vshrl.u32 %v8787, 16
        %v8817 = vrot.slane %v8815, 7
        %v8818 = vrot.slane %v8817, 1
        %v8820 = vshll.u32 %v8788, 16
        %v8822 = vsel %vm7146, %v8818, %v8820
        %v8824 = vshrl.u32 %v8795, 16
        %v8826 = vrot.slane %v8824, 7
        %v8827 = vrot.slane %v8826, 1
        %v8829 = vshll.u32 %v8796, 16
        %v8831 = vsel %vm7146, %v8827, %v8829
        %v8833 = vshrl.u32 %v8803, 16
        %v8835 = vrot.slane %v8833, 7
        %v8836 = vrot.slane %v8835, 1
        %v8838 = vshll.u32 %v8804, 16
        %v8840 = vsel %vm7146, %v8836, %v8838
        %s8841 = scalar_lea.vmem [#allocation7], 1280
        %v8842 = vld [vmem:[%s8841] sm:$0xff]
        %v8843 = vld [vmem:[%s8841 + $0x8] sm:$0xff]
        %v8844 = vld [vmem:[%s8841 + $0x10] sm:$0xff]
        %v8845 = vld [vmem:[%s8841 + $0x18] sm:$0xff]
        %v8846 = vld [vmem:[%s8841 + $0x20] sm:$0xff]
        %v8847 = vld [vmem:[%s8841 + $0x28] sm:$0xff]
        %v8848 = vld [vmem:[%s8841 + $0x30] sm:$0xff]
        %v8849 = vld [vmem:[%s8841 + $0x38] sm:$0xff]
        %v8850 = vld [vmem:[%s8841 + $0x40] sm:$0xff]
        %v8851 = vld [vmem:[%s8841 + $0x48] sm:$0xff]
        %v8852 = vld [vmem:[%s8841 + $0x50] sm:$0xff]
        %v8853 = vld [vmem:[%s8841 + $0x58] sm:$0xff]
        %v8854 = vld [vmem:[%s8841 + $0x60] sm:$0xff]
        %v8855 = vld [vmem:[%s8841 + $0x68] sm:$0xff]
        %v8856 = vld [vmem:[%s8841 + $0x70] sm:$0xff]
        %v8857 = vld [vmem:[%s8841 + $0x78] sm:$0xff]
        %v8858 = vcombine.low %v8813, %v8822
        %v8859 = vcombine.low %v8831, %v8840
        %v8861 = vunpack.c.l.s4 1966171168
        %v8862 = vunpack.c.0.s8 %v8861
        %v8863 = vlaneseq
        %v8864 = vshrl.u32 %v8863, 7
        %v8865 = vsub.s32 %v8862, %v8864
        %v8866 = vrot.slane %v8858, %v8865
        %v8868 = vunpack.c.l.s4 1966171168
        %v8869 = vunpack.c.0.s8 %v8868
        %v8870 = vlaneseq
        %v8871 = vshrl.u32 %v8870, 7
        %v8872 = vsub.s32 %v8869, %v8871
        %v8873 = vrot.slane %v8859, %v8872
        %v8874 = vcombine.low %v8866, %v8873
        %v8876 = vunpack.c.l.s4 1966171168
        %v8877 = vunpack.c.0.s8 %v8876
        %v8878 = vlaneseq
        %v8879 = vshrl.u32 %v8878, 7
        %v8880 = vsub.s32 %v8877, %v8879
        %v8881 = vrot.slane %v8874, %v8880
        %v8899 = vunpack.c.l.b16 %v8842
        %v8900 = vunpack.c.h.b16 %v8842
        %v8901 = vunpack.c.l.b16 %v8843
        %v8902 = vunpack.c.h.b16 %v8843
        %v8903 = vunpack.c.l.b16 %v8844
        %v8904 = vunpack.c.h.b16 %v8844
        %v8905 = vunpack.c.l.b16 %v8845
        %v8906 = vunpack.c.h.b16 %v8845
        %v8907 = vunpack.c.l.b16 %v8846
        %v8908 = vunpack.c.h.b16 %v8846
        %v8909 = vunpack.c.l.b16 %v8847
        %v8910 = vunpack.c.h.b16 %v8847
        %v8911 = vunpack.c.l.b16 %v8848
        %v8912 = vunpack.c.h.b16 %v8848
        %v8913 = vunpack.c.l.b16 %v8849
        %v8914 = vunpack.c.h.b16 %v8849
        %v8915 = vunpack.c.l.b16 %v8850
        %v8916 = vunpack.c.h.b16 %v8850
        %v8917 = vunpack.c.l.b16 %v8851
        %v8918 = vunpack.c.h.b16 %v8851
        %v8919 = vunpack.c.l.b16 %v8852
        %v8920 = vunpack.c.h.b16 %v8852
        %v8921 = vunpack.c.l.b16 %v8853
        %v8922 = vunpack.c.h.b16 %v8853
        %v8923 = vunpack.c.l.b16 %v8854
        %v8924 = vunpack.c.h.b16 %v8854
        %v8925 = vunpack.c.l.b16 %v8855
        %v8926 = vunpack.c.h.b16 %v8855
        %v8927 = vunpack.c.l.b16 %v8856
        %v8928 = vunpack.c.h.b16 %v8856
        %v8929 = vunpack.c.l.b16 %v8857
        %v8930 = vunpack.c.h.b16 %v8857
        %v8931 = vpack.c.b16 %v8901, %v8899
        %v8932 = vpack.c.b16 %v8902, %v8900
        %v8933 = vpack.c.b16 %v8905, %v8903
        %v8934 = vpack.c.b16 %v8906, %v8904
        %v8935 = vpack.c.b16 %v8909, %v8907
        %v8936 = vpack.c.b16 %v8910, %v8908
        %v8937 = vpack.c.b16 %v8913, %v8911
        %v8938 = vpack.c.b16 %v8914, %v8912
        %v8939 = vpack.c.b16 %v8917, %v8915
        %v8940 = vpack.c.b16 %v8918, %v8916
        %v8941 = vpack.c.b16 %v8921, %v8919
        %v8942 = vpack.c.b16 %v8922, %v8920
        %v8943 = vpack.c.b16 %v8925, %v8923
        %v8944 = vpack.c.b16 %v8926, %v8924
        %v8945 = vpack.c.b16 %v8929, %v8927
        %v8946 = vpack.c.b16 %v8930, %v8928
        %8963 = vmatprep.subr.bf16.mxu0 %v8932
        %8964 = vmatpush1.bf16.msra.mxu0 %v8931
        %8965 = vmatprep.subr.bf16.mxu0 %v8934
        %8966 = vmatpush1.bf16.msra.mxu0 %v8933
        %8967 = vmatprep.subr.bf16.mxu0 %v8936
        %8968 = vmatpush1.bf16.msra.mxu0 %v8935
        %8969 = vmatprep.subr.bf16.mxu0 %v8938
        %8970 = vmatpush1.bf16.msra.mxu0 %v8937
        %8971 = vmatprep.subr.bf16.mxu0 %v8940
        %8972 = vmatpush1.bf16.msra.mxu0 %v8939
        %8973 = vmatprep.subr.bf16.mxu0 %v8942
        %8974 = vmatpush1.bf16.msra.mxu0 %v8941
        %8975 = vmatprep.subr.bf16.mxu0 %v8944
        %8976 = vmatpush1.bf16.msra.mxu0 %v8943
        %8977 = vmatprep.subr.bf16.mxu0 %v8946
        %8978 = vmatpush1.bf16.msra.mxu0 %v8945
        %8979 = vmatprep.subr.bf16.mxu0 0
        %8980 = vmatpush1.bf16.msra.mxu0 0
        %8981 = vmatprep.subr.bf16.mxu0 0
        %8982 = vmatpush1.bf16.msra.mxu0 0
        %8983 = vmatprep.subr.bf16.mxu0 0
        %8984 = vmatpush1.bf16.msra.mxu0 0
        %8985 = vmatprep.subr.bf16.mxu0 0
        %8986 = vmatpush1.bf16.msra.mxu0 0
        %8987 = vmatprep.subr.bf16.mxu0 0
        %8988 = vmatpush1.bf16.msra.mxu0 0
        %8989 = vmatprep.subr.bf16.mxu0 0
        %8990 = vmatpush1.bf16.msra.mxu0 0
        %8991 = vmatprep.subr.bf16.mxu0 0
        %8992 = vmatpush1.bf16.msra.mxu0 0
        %8993 = vmatprep.subr.bf16.mxu0 0
        %8994 = vmatpush1.bf16.msra.mxu0 0
        %8995 = vmatprep.mubr.bf16.mxu0 0
        %8996 = vmatmul.mubr.bf16.gmra.mrb[0].mxu0 %v8881
        %v8997 = vpop.f32.mrb[0].mxu0
        %v8998 = vadd.f32 0.0, %v8997
        %v8999 = vpop.f32.mrb[0].mxu0
        %v9000 = vadd.f32 0.0, %v8999
        %v9001 = vpop.f32.mrb[0].mxu0
        %v9002 = vpop.f32.mrb[0].mxu0
        %9003 = vdwg.mxu0
        %v9004 = vadd.f32 %v8763, %v8998
        %v9005 = vadd.f32 %v8764, %v9000
        %v9006 = vld [vmem:[%s8591] sm:$0x3]
        %v9007 = vld [vmem:[%s8591 + $0x2] sm:$0x3]
        %v9008 = vld [vmem:[%s8591 + $0x18] sm:$0x3]
        %v9009 = vld [vmem:[%s8591 + $0x1a] sm:$0x3]
        %v9015 = vunpack.c.l.s4 1966171168
        %v9016 = vunpack.c.0.s8 %v9015
        %v9017 = vlaneseq
        %v9018 = vshrl.u32 %v9017, 7
        %v9019 = vsub.s32 %v9016, %v9018
        %v9020 = vrot.slane %v9006, %v9019
        %v9021 = vcombine.high %v9020, %v9020
        %v9023 = vunpack.c.l.s4 1966171168
        %v9024 = vunpack.c.0.s8 %v9023
        %v9025 = vlaneseq
        %v9026 = vshrl.u32 %v9025, 7
        %v9027 = vsub.s32 %v9024, %v9026
        %v9028 = vrot.slane %v9007, %v9027
        %v9029 = vcombine.high %v9028, %v9028
        %v9031 = vunpack.c.l.s4 1966171168
        %v9032 = vunpack.c.0.s8 %v9031
        %v9033 = vlaneseq
        %v9034 = vshrl.u32 %v9033, 7
        %v9035 = vsub.s32 %v9032, %v9034
        %v9036 = vrot.slane %v9008, %v9035
        %v9037 = vcombine.high %v9036, %v9036
        %v9039 = vunpack.c.l.s4 1966171168
        %v9040 = vunpack.c.0.s8 %v9039
        %v9041 = vlaneseq
        %v9042 = vshrl.u32 %v9041, 7
        %v9043 = vsub.s32 %v9040, %v9042
        %v9044 = vrot.slane %v9009, %v9043
        %v9045 = vcombine.high %v9044, %v9044
        %v9047 = vshrl.u32 %v9020, 16
        %v9049 = vrot.slane %v9047, 7
        %v9050 = vrot.slane %v9049, 1
        %v9052 = vshll.u32 %v9021, 16
        %v9054 = vsel %vm7146, %v9050, %v9052
        %v9056 = vshrl.u32 %v9028, 16
        %v9058 = vrot.slane %v9056, 7
        %v9059 = vrot.slane %v9058, 1
        %v9061 = vshll.u32 %v9029, 16
        %v9063 = vsel %vm7146, %v9059, %v9061
        %v9065 = vshrl.u32 %v9036, 16
        %v9067 = vrot.slane %v9065, 7
        %v9068 = vrot.slane %v9067, 1
        %v9070 = vshll.u32 %v9037, 16
        %v9072 = vsel %vm7146, %v9068, %v9070
        %v9074 = vshrl.u32 %v9044, 16
        %v9076 = vrot.slane %v9074, 7
        %v9077 = vrot.slane %v9076, 1
        %v9079 = vshll.u32 %v9045, 16
        %v9081 = vsel %vm7146, %v9077, %v9079
        %s9082 = scalar_lea.vmem [#allocation7], 1408
        %v9083 = vld [vmem:[%s9082] sm:$0xff]
        %v9084 = vld [vmem:[%s9082 + $0x8] sm:$0xff]
        %v9085 = vld [vmem:[%s9082 + $0x10] sm:$0xff]
        %v9086 = vld [vmem:[%s9082 + $0x18] sm:$0xff]
        %v9087 = vld [vmem:[%s9082 + $0x20] sm:$0xff]
        %v9088 = vld [vmem:[%s9082 + $0x28] sm:$0xff]
        %v9089 = vld [vmem:[%s9082 + $0x30] sm:$0xff]
        %v9090 = vld [vmem:[%s9082 + $0x38] sm:$0xff]
        %v9091 = vld [vmem:[%s9082 + $0x40] sm:$0xff]
        %v9092 = vld [vmem:[%s9082 + $0x48] sm:$0xff]
        %v9093 = vld [vmem:[%s9082 + $0x50] sm:$0xff]
        %v9094 = vld [vmem:[%s9082 + $0x58] sm:$0xff]
        %v9095 = vld [vmem:[%s9082 + $0x60] sm:$0xff]
        %v9096 = vld [vmem:[%s9082 + $0x68] sm:$0xff]
        %v9097 = vld [vmem:[%s9082 + $0x70] sm:$0xff]
        %v9098 = vld [vmem:[%s9082 + $0x78] sm:$0xff]
        %v9099 = vcombine.low %v9054, %v9063
        %v9100 = vcombine.low %v9072, %v9081
        %v9102 = vunpack.c.l.s4 1966171168
        %v9103 = vunpack.c.0.s8 %v9102
        %v9104 = vlaneseq
        %v9105 = vshrl.u32 %v9104, 7
        %v9106 = vsub.s32 %v9103, %v9105
        %v9107 = vrot.slane %v9099, %v9106
        %v9109 = vunpack.c.l.s4 1966171168
        %v9110 = vunpack.c.0.s8 %v9109
        %v9111 = vlaneseq
        %v9112 = vshrl.u32 %v9111, 7
        %v9113 = vsub.s32 %v9110, %v9112
        %v9114 = vrot.slane %v9100, %v9113
        %v9115 = vcombine.low %v9107, %v9114
        %v9117 = vunpack.c.l.s4 1966171168
        %v9118 = vunpack.c.0.s8 %v9117
        %v9119 = vlaneseq
        %v9120 = vshrl.u32 %v9119, 7
        %v9121 = vsub.s32 %v9118, %v9120
        %v9122 = vrot.slane %v9115, %v9121
        %v9140 = vunpack.c.l.b16 %v9083
        %v9141 = vunpack.c.h.b16 %v9083
        %v9142 = vunpack.c.l.b16 %v9084
        %v9143 = vunpack.c.h.b16 %v9084
        %v9144 = vunpack.c.l.b16 %v9085
        %v9145 = vunpack.c.h.b16 %v9085
        %v9146 = vunpack.c.l.b16 %v9086
        %v9147 = vunpack.c.h.b16 %v9086
        %v9148 = vunpack.c.l.b16 %v9087
        %v9149 = vunpack.c.h.b16 %v9087
        %v9150 = vunpack.c.l.b16 %v9088
        %v9151 = vunpack.c.h.b16 %v9088
        %v9152 = vunpack.c.l.b16 %v9089
        %v9153 = vunpack.c.h.b16 %v9089
        %v9154 = vunpack.c.l.b16 %v9090
        %v9155 = vunpack.c.h.b16 %v9090
        %v9156 = vunpack.c.l.b16 %v9091
        %v9157 = vunpack.c.h.b16 %v9091
        %v9158 = vunpack.c.l.b16 %v9092
        %v9159 = vunpack.c.h.b16 %v9092
        %v9160 = vunpack.c.l.b16 %v9093
        %v9161 = vunpack.c.h.b16 %v9093
        %v9162 = vunpack.c.l.b16 %v9094
        %v9163 = vunpack.c.h.b16 %v9094
        %v9164 = vunpack.c.l.b16 %v9095
        %v9165 = vunpack.c.h.b16 %v9095
        %v9166 = vunpack.c.l.b16 %v9096
        %v9167 = vunpack.c.h.b16 %v9096
        %v9168 = vunpack.c.l.b16 %v9097
        %v9169 = vunpack.c.h.b16 %v9097
        %v9170 = vunpack.c.l.b16 %v9098
        %v9171 = vunpack.c.h.b16 %v9098
        %v9172 = vpack.c.b16 %v9142, %v9140
        %v9173 = vpack.c.b16 %v9143, %v9141
        %v9174 = vpack.c.b16 %v9146, %v9144
        %v9175 = vpack.c.b16 %v9147, %v9145
        %v9176 = vpack.c.b16 %v9150, %v9148
        %v9177 = vpack.c.b16 %v9151, %v9149
        %v9178 = vpack.c.b16 %v9154, %v9152
        %v9179 = vpack.c.b16 %v9155, %v9153
        %v9180 = vpack.c.b16 %v9158, %v9156
        %v9181 = vpack.c.b16 %v9159, %v9157
        %v9182 = vpack.c.b16 %v9162, %v9160
        %v9183 = vpack.c.b16 %v9163, %v9161
        %v9184 = vpack.c.b16 %v9166, %v9164
        %v9185 = vpack.c.b16 %v9167, %v9165
        %v9186 = vpack.c.b16 %v9170, %v9168
        %v9187 = vpack.c.b16 %v9171, %v9169
        %9204 = vmatprep.subr.bf16.mxu0 %v9173
        %9205 = vmatpush1.bf16.msra.mxu0 %v9172
        %9206 = vmatprep.subr.bf16.mxu0 %v9175
        %9207 = vmatpush1.bf16.msra.mxu0 %v9174
        %9208 = vmatprep.subr.bf16.mxu0 %v9177
        %9209 = vmatpush1.bf16.msra.mxu0 %v9176
        %9210 = vmatprep.subr.bf16.mxu0 %v9179
        %9211 = vmatpush1.bf16.msra.mxu0 %v9178
        %9212 = vmatprep.subr.bf16.mxu0 %v9181
        %9213 = vmatpush1.bf16.msra.mxu0 %v9180
        %9214 = vmatprep.subr.bf16.mxu0 %v9183
        %9215 = vmatpush1.bf16.msra.mxu0 %v9182
        %9216 = vmatprep.subr.bf16.mxu0 %v9185
        %9217 = vmatpush1.bf16.msra.mxu0 %v9184
        %9218 = vmatprep.subr.bf16.mxu0 %v9187
        %9219 = vmatpush1.bf16.msra.mxu0 %v9186
        %9220 = vmatprep.subr.bf16.mxu0 0
        %9221 = vmatpush1.bf16.msra.mxu0 0
        %9222 = vmatprep.subr.bf16.mxu0 0
        %9223 = vmatpush1.bf16.msra.mxu0 0
        %9224 = vmatprep.subr.bf16.mxu0 0
        %9225 = vmatpush1.bf16.msra.mxu0 0
        %9226 = vmatprep.subr.bf16.mxu0 0
        %9227 = vmatpush1.bf16.msra.mxu0 0
        %9228 = vmatprep.subr.bf16.mxu0 0
        %9229 = vmatpush1.bf16.msra.mxu0 0
        %9230 = vmatprep.subr.bf16.mxu0 0
        %9231 = vmatpush1.bf16.msra.mxu0 0
        %9232 = vmatprep.subr.bf16.mxu0 0
        %9233 = vmatpush1.bf16.msra.mxu0 0
        %9234 = vmatprep.subr.bf16.mxu0 0
        %9235 = vmatpush1.bf16.msra.mxu0 0
        %9236 = vmatprep.mubr.bf16.mxu0 0
        %9237 = vmatmul.mubr.bf16.gmra.mrb[0].mxu0 %v9122
        %v9238 = vpop.f32.mrb[0].mxu0
        %v9239 = vadd.f32 0.0, %v9238
        %v9240 = vpop.f32.mrb[0].mxu0
        %v9241 = vadd.f32 0.0, %v9240
        %v9242 = vpop.f32.mrb[0].mxu0
        %v9243 = vpop.f32.mrb[0].mxu0
        %9244 = vdwg.mxu0
        %v9245 = vadd.f32 %v9004, %v9239
        %v9246 = vadd.f32 %v9005, %v9241
        %s9247 = scalar_lea.vmem [#allocation3], 14
        %v9248 = vld [vmem:[%s9247] sm:$0x1]
        %v9249 = vld [vmem:[%s9247 + $0x2] sm:$0x1]
        %v9250 = vld [vmem:[%s9247 + $0x18] sm:$0x1]
        %v9251 = vld [vmem:[%s9247 + $0x1a] sm:$0x1]
        %s9252 = scalar_lea.vmem [#allocation7], 1536
        %v9253 = vld [vmem:[%s9252] sm:$0xff]
        %v9254 = vld [vmem:[%s9252 + $0x8] sm:$0xff]
        %v9255 = vld [vmem:[%s9252 + $0x10] sm:$0xff]
        %v9256 = vld [vmem:[%s9252 + $0x18] sm:$0xff]
        %v9257 = vld [vmem:[%s9252 + $0x20] sm:$0xff]
        %v9258 = vld [vmem:[%s9252 + $0x28] sm:$0xff]
        %v9259 = vld [vmem:[%s9252 + $0x30] sm:$0xff]
        %v9260 = vld [vmem:[%s9252 + $0x38] sm:$0xff]
        %v9261 = vld [vmem:[%s9252 + $0x40] sm:$0xff]
        %v9262 = vld [vmem:[%s9252 + $0x48] sm:$0xff]
        %v9263 = vld [vmem:[%s9252 + $0x50] sm:$0xff]
        %v9264 = vld [vmem:[%s9252 + $0x58] sm:$0xff]
        %v9265 = vld [vmem:[%s9252 + $0x60] sm:$0xff]
        %v9266 = vld [vmem:[%s9252 + $0x68] sm:$0xff]
        %v9267 = vld [vmem:[%s9252 + $0x70] sm:$0xff]
        %v9268 = vld [vmem:[%s9252 + $0x78] sm:$0xff]
        %v9273 = vcombine.low %v9248, %v9249
        %v9274 = vcombine.low %v9250, %v9251
        %v9276 = vunpack.c.l.s4 1966171168
        %v9277 = vunpack.c.0.s8 %v9276
        %v9278 = vlaneseq
        %v9279 = vshrl.u32 %v9278, 7
        %v9280 = vsub.s32 %v9277, %v9279
        %v9281 = vrot.slane %v9273, %v9280
        %v9283 = vunpack.c.l.s4 1966171168
        %v9284 = vunpack.c.0.s8 %v9283
        %v9285 = vlaneseq
        %v9286 = vshrl.u32 %v9285, 7
        %v9287 = vsub.s32 %v9284, %v9286
        %v9288 = vrot.slane %v9274, %v9287
        %v9289 = vcombine.low %v9281, %v9288
        %v9291 = vunpack.c.l.s4 1966171168
        %v9292 = vunpack.c.0.s8 %v9291
        %v9293 = vlaneseq
        %v9294 = vshrl.u32 %v9293, 7
        %v9295 = vsub.s32 %v9292, %v9294
        %v9296 = vrot.slane %v9289, %v9295
        %v9314 = vunpack.c.l.b16 %v9253
        %v9315 = vunpack.c.h.b16 %v9253
        %v9316 = vunpack.c.l.b16 %v9254
        %v9317 = vunpack.c.h.b16 %v9254
        %v9318 = vunpack.c.l.b16 %v9255
        %v9319 = vunpack.c.h.b16 %v9255
        %v9320 = vunpack.c.l.b16 %v9256
        %v9321 = vunpack.c.h.b16 %v9256
        %v9322 = vunpack.c.l.b16 %v9257
        %v9323 = vunpack.c.h.b16 %v9257
        %v9324 = vunpack.c.l.b16 %v9258
        %v9325 = vunpack.c.h.b16 %v9258
        %v9326 = vunpack.c.l.b16 %v9259
        %v9327 = vunpack.c.h.b16 %v9259
        %v9328 = vunpack.c.l.b16 %v9260
        %v9329 = vunpack.c.h.b16 %v9260
        %v9330 = vunpack.c.l.b16 %v9261
        %v9331 = vunpack.c.h.b16 %v9261
        %v9332 = vunpack.c.l.b16 %v9262
        %v9333 = vunpack.c.h.b16 %v9262
        %v9334 = vunpack.c.l.b16 %v9263
        %v9335 = vunpack.c.h.b16 %v9263
        %v9336 = vunpack.c.l.b16 %v9264
        %v9337 = vunpack.c.h.b16 %v9264
        %v9338 = vunpack.c.l.b16 %v9265
        %v9339 = vunpack.c.h.b16 %v9265
        %v9340 = vunpack.c.l.b16 %v9266
        %v9341 = vunpack.c.h.b16 %v9266
        %v9342 = vunpack.c.l.b16 %v9267
        %v9343 = vunpack.c.h.b16 %v9267
        %v9344 = vunpack.c.l.b16 %v9268
        %v9345 = vunpack.c.h.b16 %v9268
        %v9346 = vpack.c.b16 %v9316, %v9314
        %v9347 = vpack.c.b16 %v9317, %v9315
        %v9348 = vpack.c.b16 %v9320, %v9318
        %v9349 = vpack.c.b16 %v9321, %v9319
        %v9350 = vpack.c.b16 %v9324, %v9322
        %v9351 = vpack.c.b16 %v9325, %v9323
        %v9352 = vpack.c.b16 %v9328, %v9326
        %v9353 = vpack.c.b16 %v9329, %v9327
        %v9354 = vpack.c.b16 %v9332, %v9330
        %v9355 = vpack.c.b16 %v9333, %v9331
        %v9356 = vpack.c.b16 %v9336, %v9334
        %v9357 = vpack.c.b16 %v9337, %v9335
        %v9358 = vpack.c.b16 %v9340, %v9338
        %v9359 = vpack.c.b16 %v9341, %v9339
        %v9360 = vpack.c.b16 %v9344, %v9342
        %v9361 = vpack.c.b16 %v9345, %v9343
        %9378 = vmatprep.subr.bf16.mxu0 %v9347
        %9379 = vmatpush1.bf16.msra.mxu0 %v9346
        %9380 = vmatprep.subr.bf16.mxu0 %v9349
        %9381 = vmatpush1.bf16.msra.mxu0 %v9348
        %9382 = vmatprep.subr.bf16.mxu0 %v9351
        %9383 = vmatpush1.bf16.msra.mxu0 %v9350
        %9384 = vmatprep.subr.bf16.mxu0 %v9353
        %9385 = vmatpush1.bf16.msra.mxu0 %v9352
        %9386 = vmatprep.subr.bf16.mxu0 %v9355
        %9387 = vmatpush1.bf16.msra.mxu0 %v9354
        %9388 = vmatprep.subr.bf16.mxu0 %v9357
        %9389 = vmatpush1.bf16.msra.mxu0 %v9356
        %9390 = vmatprep.subr.bf16.mxu0 %v9359
        %9391 = vmatpush1.bf16.msra.mxu0 %v9358
        %9392 = vmatprep.subr.bf16.mxu0 %v9361
        %9393 = vmatpush1.bf16.msra.mxu0 %v9360
        %9394 = vmatprep.subr.bf16.mxu0 0
        %9395 = vmatpush1.bf16.msra.mxu0 0
        %9396 = vmatprep.subr.bf16.mxu0 0
        %9397 = vmatpush1.bf16.msra.mxu0 0
        %9398 = vmatprep.subr.bf16.mxu0 0
        %9399 = vmatpush1.bf16.msra.mxu0 0
        %9400 = vmatprep.subr.bf16.mxu0 0
        %9401 = vmatpush1.bf16.msra.mxu0 0
        %9402 = vmatprep.subr.bf16.mxu0 0
        %9403 = vmatpush1.bf16.msra.mxu0 0
        %9404 = vmatprep.subr.bf16.mxu0 0
        %9405 = vmatpush1.bf16.msra.mxu0 0
        %9406 = vmatprep.subr.bf16.mxu0 0
        %9407 = vmatpush1.bf16.msra.mxu0 0
        %9408 = vmatprep.subr.bf16.mxu0 0
        %9409 = vmatpush1.bf16.msra.mxu0 0
        %9410 = vmatprep.mubr.bf16.mxu0 0
        %9411 = vmatmul.mubr.bf16.gmra.mrb[0].mxu0 %v9296
        %v9412 = vpop.f32.mrb[0].mxu0
        %v9413 = vadd.f32 0.0, %v9412
        %v9414 = vpop.f32.mrb[0].mxu0
        %v9415 = vadd.f32 0.0, %v9414
        %v9416 = vpop.f32.mrb[0].mxu0
        %v9417 = vpop.f32.mrb[0].mxu0
        %9418 = vdwg.mxu0
        %v9419 = vadd.f32 %v9245, %v9413
        %v9420 = vadd.f32 %v9246, %v9415
        %s9421 = scalar_lea.vmem [#allocation3], 20
        %v9422 = vld [vmem:[%s9421] sm:$0x1]
        %v9423 = vld [vmem:[%s9421 + $0x2] sm:$0x1]
        %v9424 = vld [vmem:[%s9421 + $0x18] sm:$0x1]
        %v9425 = vld [vmem:[%s9421 + $0x1a] sm:$0x1]
        %s9426 = scalar_lea.vmem [#allocation7], 1664
        %v9427 = vld [vmem:[%s9426] sm:$0xff]
        %v9428 = vld [vmem:[%s9426 + $0x8] sm:$0xff]
        %v9429 = vld [vmem:[%s9426 + $0x10] sm:$0xff]
        %v9430 = vld [vmem:[%s9426 + $0x18] sm:$0xff]
        %v9431 = vld [vmem:[%s9426 + $0x20] sm:$0xff]
        %v9432 = vld [vmem:[%s9426 + $0x28] sm:$0xff]
        %v9433 = vld [vmem:[%s9426 + $0x30] sm:$0xff]
        %v9434 = vld [vmem:[%s9426 + $0x38] sm:$0xff]
        %v9435 = vld [vmem:[%s9426 + $0x40] sm:$0xff]
        %v9436 = vld [vmem:[%s9426 + $0x48] sm:$0xff]
        %v9437 = vld [vmem:[%s9426 + $0x50] sm:$0xff]
        %v9438 = vld [vmem:[%s9426 + $0x58] sm:$0xff]
        %v9439 = vld [vmem:[%s9426 + $0x60] sm:$0xff]
        %v9440 = vld [vmem:[%s9426 + $0x68] sm:$0xff]
        %v9441 = vld [vmem:[%s9426 + $0x70] sm:$0xff]
        %v9442 = vld [vmem:[%s9426 + $0x78] sm:$0xff]
        %v9447 = vcombine.low %v9422, %v9423
        %v9448 = vcombine.low %v9424, %v9425
        %v9450 = vunpack.c.l.s4 1966171168
        %v9451 = vunpack.c.0.s8 %v9450
        %v9452 = vlaneseq
        %v9453 = vshrl.u32 %v9452, 7
        %v9454 = vsub.s32 %v9451, %v9453
        %v9455 = vrot.slane %v9447, %v9454
        %v9457 = vunpack.c.l.s4 1966171168
        %v9458 = vunpack.c.0.s8 %v9457
        %v9459 = vlaneseq
        %v9460 = vshrl.u32 %v9459, 7
        %v9461 = vsub.s32 %v9458, %v9460
        %v9462 = vrot.slane %v9448, %v9461
        %v9463 = vcombine.low %v9455, %v9462
        %v9465 = vunpack.c.l.s4 1966171168
        %v9466 = vunpack.c.0.s8 %v9465
        %v9467 = vlaneseq
        %v9468 = vshrl.u32 %v9467, 7
        %v9469 = vsub.s32 %v9466, %v9468
        %v9470 = vrot.slane %v9463, %v9469
        %v9488 = vunpack.c.l.b16 %v9427
        %v9489 = vunpack.c.h.b16 %v9427
        %v9490 = vunpack.c.l.b16 %v9428
        %v9491 = vunpack.c.h.b16 %v9428
        %v9492 = vunpack.c.l.b16 %v9429
        %v9493 = vunpack.c.h.b16 %v9429
        %v9494 = vunpack.c.l.b16 %v9430
        %v9495 = vunpack.c.h.b16 %v9430
        %v9496 = vunpack.c.l.b16 %v9431
        %v9497 = vunpack.c.h.b16 %v9431
        %v9498 = vunpack.c.l.b16 %v9432
        %v9499 = vunpack.c.h.b16 %v9432
        %v9500 = vunpack.c.l.b16 %v9433
        %v9501 = vunpack.c.h.b16 %v9433
        %v9502 = vunpack.c.l.b16 %v9434
        %v9503 = vunpack.c.h.b16 %v9434
        %v9504 = vunpack.c.l.b16 %v9435
        %v9505 = vunpack.c.h.b16 %v9435
        %v9506 = vunpack.c.l.b16 %v9436
        %v9507 = vunpack.c.h.b16 %v9436
        %v9508 = vunpack.c.l.b16 %v9437
        %v9509 = vunpack.c.h.b16 %v9437
        %v9510 = vunpack.c.l.b16 %v9438
        %v9511 = vunpack.c.h.b16 %v9438
        %v9512 = vunpack.c.l.b16 %v9439
        %v9513 = vunpack.c.h.b16 %v9439
        %v9514 = vunpack.c.l.b16 %v9440
        %v9515 = vunpack.c.h.b16 %v9440
        %v9516 = vunpack.c.l.b16 %v9441
        %v9517 = vunpack.c.h.b16 %v9441
        %v9518 = vunpack.c.l.b16 %v9442
        %v9519 = vunpack.c.h.b16 %v9442
        %v9520 = vpack.c.b16 %v9490, %v9488
        %v9521 = vpack.c.b16 %v9491, %v9489
        %v9522 = vpack.c.b16 %v9494, %v9492
        %v9523 = vpack.c.b16 %v9495, %v9493
        %v9524 = vpack.c.b16 %v9498, %v9496
        %v9525 = vpack.c.b16 %v9499, %v9497
        %v9526 = vpack.c.b16 %v9502, %v9500
        %v9527 = vpack.c.b16 %v9503, %v9501
        %v9528 = vpack.c.b16 %v9506, %v9504
        %v9529 = vpack.c.b16 %v9507, %v9505
        %v9530 = vpack.c.b16 %v9510, %v9508
        %v9531 = vpack.c.b16 %v9511, %v9509
        %v9532 = vpack.c.b16 %v9514, %v9512
        %v9533 = vpack.c.b16 %v9515, %v9513
        %v9534 = vpack.c.b16 %v9518, %v9516
        %v9535 = vpack.c.b16 %v9519, %v9517
        %9552 = vmatprep.subr.bf16.mxu0 %v9521
        %9553 = vmatpush1.bf16.msra.mxu0 %v9520
        %9554 = vmatprep.subr.bf16.mxu0 %v9523
        %9555 = vmatpush1.bf16.msra.mxu0 %v9522
        %9556 = vmatprep.subr.bf16.mxu0 %v9525
        %9557 = vmatpush1.bf16.msra.mxu0 %v9524
        %9558 = vmatprep.subr.bf16.mxu0 %v9527
        %9559 = vmatpush1.bf16.msra.mxu0 %v9526
        %9560 = vmatprep.subr.bf16.mxu0 %v9529
        %9561 = vmatpush1.bf16.msra.mxu0 %v9528
        %9562 = vmatprep.subr.bf16.mxu0 %v9531
        %9563 = vmatpush1.bf16.msra.mxu0 %v9530
        %9564 = vmatprep.subr.bf16.mxu0 %v9533
        %9565 = vmatpush1.bf16.msra.mxu0 %v9532
        %9566 = vmatprep.subr.bf16.mxu0 %v9535
        %9567 = vmatpush1.bf16.msra.mxu0 %v9534
        %9568 = vmatprep.subr.bf16.mxu0 0
        %9569 = vmatpush1.bf16.msra.mxu0 0
        %9570 = vmatprep.subr.bf16.mxu0 0
        %9571 = vmatpush1.bf16.msra.mxu0 0
        %9572 = vmatprep.subr.bf16.mxu0 0
        %9573 = vmatpush1.bf16.msra.mxu0 0
        %9574 = vmatprep.subr.bf16.mxu0 0
        %9575 = vmatpush1.bf16.msra.mxu0 0
        %9576 = vmatprep.subr.bf16.mxu0 0
        %9577 = vmatpush1.bf16.msra.mxu0 0
        %9578 = vmatprep.subr.bf16.mxu0 0
        %9579 = vmatpush1.bf16.msra.mxu0 0
        %9580 = vmatprep.subr.bf16.mxu0 0
        %9581 = vmatpush1.bf16.msra.mxu0 0
        %9582 = vmatprep.subr.bf16.mxu0 0
        %9583 = vmatpush1.bf16.msra.mxu0 0
        %9584 = vmatprep.mubr.bf16.mxu0 0
        %9585 = vmatmul.mubr.bf16.gmra.mrb[0].mxu0 %v9470
        %v9586 = vpop.f32.mrb[0].mxu0
        %v9587 = vadd.f32 0.0, %v9586
        %v9588 = vpop.f32.mrb[0].mxu0
        %v9589 = vadd.f32 0.0, %v9588
        %v9590 = vpop.f32.mrb[0].mxu0
        %v9591 = vpop.f32.mrb[0].mxu0
        %9592 = vdwg.mxu0
        %v9593 = vadd.f32 %v9419, %v9587
        %v9594 = vadd.f32 %v9420, %v9589
        %v9595 = vld [vmem:[%s9247] sm:$0x3]
        %v9596 = vld [vmem:[%s9247 + $0x2] sm:$0x3]
        %v9597 = vld [vmem:[%s9247 + $0x18] sm:$0x3]
        %v9598 = vld [vmem:[%s9247 + $0x1a] sm:$0x3]
        %v9604 = vunpack.c.l.s4 1966171168
        %v9605 = vunpack.c.0.s8 %v9604
        %v9606 = vlaneseq
        %v9607 = vshrl.u32 %v9606, 7
        %v9608 = vsub.s32 %v9605, %v9607
        %v9609 = vrot.slane %v9595, %v9608
        %v9610 = vcombine.high %v9609, %v9609
        %v9612 = vunpack.c.l.s4 1966171168
        %v9613 = vunpack.c.0.s8 %v9612
        %v9614 = vlaneseq
        %v9615 = vshrl.u32 %v9614, 7
        %v9616 = vsub.s32 %v9613, %v9615
        %v9617 = vrot.slane %v9596, %v9616
        %v9618 = vcombine.high %v9617, %v9617
        %v9620 = vunpack.c.l.s4 1966171168
        %v9621 = vunpack.c.0.s8 %v9620
        %v9622 = vlaneseq
        %v9623 = vshrl.u32 %v9622, 7
        %v9624 = vsub.s32 %v9621, %v9623
        %v9625 = vrot.slane %v9597, %v9624
        %v9626 = vcombine.high %v9625, %v9625
        %v9628 = vunpack.c.l.s4 1966171168
        %v9629 = vunpack.c.0.s8 %v9628
        %v9630 = vlaneseq
        %v9631 = vshrl.u32 %v9630, 7
        %v9632 = vsub.s32 %v9629, %v9631
        %v9633 = vrot.slane %v9598, %v9632
        %v9634 = vcombine.high %v9633, %v9633
        %v9636 = vshrl.u32 %v9609, 16
        %v9638 = vrot.slane %v9636, 7
        %v9639 = vrot.slane %v9638, 1
        %v9641 = vshll.u32 %v9610, 16
        %v9643 = vsel %vm7146, %v9639, %v9641
        %v9645 = vshrl.u32 %v9617, 16
        %v9647 = vrot.slane %v9645, 7
        %v9648 = vrot.slane %v9647, 1
        %v9650 = vshll.u32 %v9618, 16
        %v9652 = vsel %vm7146, %v9648, %v9650
        %v9654 = vshrl.u32 %v9625, 16
        %v9656 = vrot.slane %v9654, 7
        %v9657 = vrot.slane %v9656, 1
        %v9659 = vshll.u32 %v9626, 16
        %v9661 = vsel %vm7146, %v9657, %v9659
        %v9663 = vshrl.u32 %v9633, 16
        %v9665 = vrot.slane %v9663, 7
        %v9666 = vrot.slane %v9665, 1
        %v9668 = vshll.u32 %v9634, 16
        %v9670 = vsel %vm7146, %v9666, %v9668
        %s9671 = scalar_lea.vmem [#allocation7], 1792
        %v9672 = vld [vmem:[%s9671] sm:$0xff]
        %v9673 = vld [vmem:[%s9671 + $0x8] sm:$0xff]
        %v9674 = vld [vmem:[%s9671 + $0x10] sm:$0xff]
        %v9675 = vld [vmem:[%s9671 + $0x18] sm:$0xff]
        %v9676 = vld [vmem:[%s9671 + $0x20] sm:$0xff]
        %v9677 = vld [vmem:[%s9671 + $0x28] sm:$0xff]
        %v9678 = vld [vmem:[%s9671 + $0x30] sm:$0xff]
        %v9679 = vld [vmem:[%s9671 + $0x38] sm:$0xff]
        %v9680 = vld [vmem:[%s9671 + $0x40] sm:$0xff]
        %v9681 = vld [vmem:[%s9671 + $0x48] sm:$0xff]
        %v9682 = vld [vmem:[%s9671 + $0x50] sm:$0xff]
        %v9683 = vld [vmem:[%s9671 + $0x58] sm:$0xff]
        %v9684 = vld [vmem:[%s9671 + $0x60] sm:$0xff]
        %v9685 = vld [vmem:[%s9671 + $0x68] sm:$0xff]
        %v9686 = vld [vmem:[%s9671 + $0x70] sm:$0xff]
        %v9687 = vld [vmem:[%s9671 + $0x78] sm:$0xff]
        %v9688 = vcombine.low %v9643, %v9652
        %v9689 = vcombine.low %v9661, %v9670
        %v9691 = vunpack.c.l.s4 1966171168
        %v9692 = vunpack.c.0.s8 %v9691
        %v9693 = vlaneseq
        %v9694 = vshrl.u32 %v9693, 7
        %v9695 = vsub.s32 %v9692, %v9694
        %v9696 = vrot.slane %v9688, %v9695
        %v9698 = vunpack.c.l.s4 1966171168
        %v9699 = vunpack.c.0.s8 %v9698
        %v9700 = vlaneseq
        %v9701 = vshrl.u32 %v9700, 7
        %v9702 = vsub.s32 %v9699, %v9701
        %v9703 = vrot.slane %v9689, %v9702
        %v9704 = vcombine.low %v9696, %v9703
        %v9706 = vunpack.c.l.s4 1966171168
        %v9707 = vunpack.c.0.s8 %v9706
        %v9708 = vlaneseq
        %v9709 = vshrl.u32 %v9708, 7
        %v9710 = vsub.s32 %v9707, %v9709
        %v9711 = vrot.slane %v9704, %v9710
        %v9729 = vunpack.c.l.b16 %v9672
        %v9730 = vunpack.c.h.b16 %v9672
        %v9731 = vunpack.c.l.b16 %v9673
        %v9732 = vunpack.c.h.b16 %v9673
        %v9733 = vunpack.c.l.b16 %v9674
        %v9734 = vunpack.c.h.b16 %v9674
        %v9735 = vunpack.c.l.b16 %v9675
        %v9736 = vunpack.c.h.b16 %v9675
        %v9737 = vunpack.c.l.b16 %v9676
        %v9738 = vunpack.c.h.b16 %v9676
        %v9739 = vunpack.c.l.b16 %v9677
        %v9740 = vunpack.c.h.b16 %v9677
        %v9741 = vunpack.c.l.b16 %v9678
        %v9742 = vunpack.c.h.b16 %v9678
        %v9743 = vunpack.c.l.b16 %v9679
        %v9744 = vunpack.c.h.b16 %v9679
        %v9745 = vunpack.c.l.b16 %v9680
        %v9746 = vunpack.c.h.b16 %v9680
        %v9747 = vunpack.c.l.b16 %v9681
        %v9748 = vunpack.c.h.b16 %v9681
        %v9749 = vunpack.c.l.b16 %v9682
        %v9750 = vunpack.c.h.b16 %v9682
        %v9751 = vunpack.c.l.b16 %v9683
        %v9752 = vunpack.c.h.b16 %v9683
        %v9753 = vunpack.c.l.b16 %v9684
        %v9754 = vunpack.c.h.b16 %v9684
        %v9755 = vunpack.c.l.b16 %v9685
        %v9756 = vunpack.c.h.b16 %v9685
        %v9757 = vunpack.c.l.b16 %v9686
        %v9758 = vunpack.c.h.b16 %v9686
        %v9759 = vunpack.c.l.b16 %v9687
        %v9760 = vunpack.c.h.b16 %v9687
        %v9761 = vpack.c.b16 %v9731, %v9729
        %v9762 = vpack.c.b16 %v9732, %v9730
        %v9763 = vpack.c.b16 %v9735, %v9733
        %v9764 = vpack.c.b16 %v9736, %v9734
        %v9765 = vpack.c.b16 %v9739, %v9737
        %v9766 = vpack.c.b16 %v9740, %v9738
        %v9767 = vpack.c.b16 %v9743, %v9741
        %v9768 = vpack.c.b16 %v9744, %v9742
        %v9769 = vpack.c.b16 %v9747, %v9745
        %v9770 = vpack.c.b16 %v9748, %v9746
        %v9771 = vpack.c.b16 %v9751, %v9749
        %v9772 = vpack.c.b16 %v9752, %v9750
        %v9773 = vpack.c.b16 %v9755, %v9753
        %v9774 = vpack.c.b16 %v9756, %v9754
        %v9775 = vpack.c.b16 %v9759, %v9757
        %v9776 = vpack.c.b16 %v9760, %v9758
        %9793 = vmatprep.subr.bf16.mxu0 %v9762
        %9794 = vmatpush1.bf16.msra.mxu0 %v9761
        %9795 = vmatprep.subr.bf16.mxu0 %v9764
        %9796 = vmatpush1.bf16.msra.mxu0 %v9763
        %9797 = vmatprep.subr.bf16.mxu0 %v9766
        %9798 = vmatpush1.bf16.msra.mxu0 %v9765
        %9799 = vmatprep.subr.bf16.mxu0 %v9768
        %9800 = vmatpush1.bf16.msra.mxu0 %v9767
        %9801 = vmatprep.subr.bf16.mxu0 %v9770
        %9802 = vmatpush1.bf16.msra.mxu0 %v9769
        %9803 = vmatprep.subr.bf16.mxu0 %v9772
        %9804 = vmatpush1.bf16.msra.mxu0 %v9771
        %9805 = vmatprep.subr.bf16.mxu0 %v9774
        %9806 = vmatpush1.bf16.msra.mxu0 %v9773
        %9807 = vmatprep.subr.bf16.mxu0 %v9776
        %9808 = vmatpush1.bf16.msra.mxu0 %v9775
        %9809 = vmatprep.subr.bf16.mxu0 0
        %9810 = vmatpush1.bf16.msra.mxu0 0
        %9811 = vmatprep.subr.bf16.mxu0 0
        %9812 = vmatpush1.bf16.msra.mxu0 0
        %9813 = vmatprep.subr.bf16.mxu0 0
        %9814 = vmatpush1.bf16.msra.mxu0 0
        %9815 = vmatprep.subr.bf16.mxu0 0
        %9816 = vmatpush1.bf16.msra.mxu0 0
        %9817 = vmatprep.subr.bf16.mxu0 0
        %9818 = vmatpush1.bf16.msra.mxu0 0
        %9819 = vmatprep.subr.bf16.mxu0 0
        %9820 = vmatpush1.bf16.msra.mxu0 0
        %9821 = vmatprep.subr.bf16.mxu0 0
        %9822 = vmatpush1.bf16.msra.mxu0 0
        %9823 = vmatprep.subr.bf16.mxu0 0
        %9824 = vmatpush1.bf16.msra.mxu0 0
        %9825 = vmatprep.mubr.bf16.mxu0 0
        %9826 = vmatmul.mubr.bf16.gmra.mrb[0].mxu0 %v9711
        %v9827 = vpop.f32.mrb[0].mxu0
        %v9828 = vadd.f32 0.0, %v9827
        %v9829 = vpop.f32.mrb[0].mxu0
        %v9830 = vadd.f32 0.0, %v9829
        %v9831 = vpop.f32.mrb[0].mxu0
        %v9832 = vpop.f32.mrb[0].mxu0
        %9833 = vdwg.mxu0
        %v9834 = vadd.f32 %v9593, %v9828
        %v9835 = vadd.f32 %v9594, %v9830
        %v9836 = vld [vmem:[%s9421] sm:$0x3]
        %v9837 = vld [vmem:[%s9421 + $0x2] sm:$0x3]
        %v9838 = vld [vmem:[%s9421 + $0x18] sm:$0x3]
        %v9839 = vld [vmem:[%s9421 + $0x1a] sm:$0x3]
        %v9845 = vunpack.c.l.s4 1966171168
        %v9846 = vunpack.c.0.s8 %v9845
        %v9847 = vlaneseq
        %v9848 = vshrl.u32 %v9847, 7
        %v9849 = vsub.s32 %v9846, %v9848
        %v9850 = vrot.slane %v9836, %v9849
        %v9851 = vcombine.high %v9850, %v9850
        %v9853 = vunpack.c.l.s4 1966171168
        %v9854 = vunpack.c.0.s8 %v9853
        %v9855 = vlaneseq
        %v9856 = vshrl.u32 %v9855, 7
        %v9857 = vsub.s32 %v9854, %v9856
        %v9858 = vrot.slane %v9837, %v9857
        %v9859 = vcombine.high %v9858, %v9858
        %v9861 = vunpack.c.l.s4 1966171168
        %v9862 = vunpack.c.0.s8 %v9861
        %v9863 = vlaneseq
        %v9864 = vshrl.u32 %v9863, 7
        %v9865 = vsub.s32 %v9862, %v9864
        %v9866 = vrot.slane %v9838, %v9865
        %v9867 = vcombine.high %v9866, %v9866
        %v9869 = vunpack.c.l.s4 1966171168
        %v9870 = vunpack.c.0.s8 %v9869
        %v9871 = vlaneseq
        %v9872 = vshrl.u32 %v9871, 7
        %v9873 = vsub.s32 %v9870, %v9872
        %v9874 = vrot.slane %v9839, %v9873
        %v9875 = vcombine.high %v9874, %v9874
        %v9877 = vshrl.u32 %v9850, 16
        %v9879 = vrot.slane %v9877, 7
        %v9880 = vrot.slane %v9879, 1
        %v9882 = vshll.u32 %v9851, 16
        %v9884 = vsel %vm7146, %v9880, %v9882
        %v9886 = vshrl.u32 %v9858, 16
        %v9888 = vrot.slane %v9886, 7
        %v9889 = vrot.slane %v9888, 1
        %v9891 = vshll.u32 %v9859, 16
        %v9893 = vsel %vm7146, %v9889, %v9891
        %v9895 = vshrl.u32 %v9866, 16
        %v9897 = vrot.slane %v9895, 7
        %v9898 = vrot.slane %v9897, 1
        %v9900 = vshll.u32 %v9867, 16
        %v9902 = vsel %vm7146, %v9898, %v9900
        %v9904 = vshrl.u32 %v9874, 16
        %v9906 = vrot.slane %v9904, 7
        %v9907 = vrot.slane %v9906, 1
        %v9909 = vshll.u32 %v9875, 16
        %v9911 = vsel %vm7146, %v9907, %v9909
        %s9912 = scalar_lea.vmem [#allocation7], 1920
        %v9913 = vld [vmem:[%s9912] sm:$0xff]
        %v9914 = vld [vmem:[%s9912 + $0x8] sm:$0xff]
        %v9915 = vld [vmem:[%s9912 + $0x10] sm:$0xff]
        %v9916 = vld [vmem:[%s9912 + $0x18] sm:$0xff]
        %v9917 = vld [vmem:[%s9912 + $0x20] sm:$0xff]
        %v9918 = vld [vmem:[%s9912 + $0x28] sm:$0xff]
        %v9919 = vld [vmem:[%s9912 + $0x30] sm:$0xff]
        %v9920 = vld [vmem:[%s9912 + $0x38] sm:$0xff]
        %v9921 = vld [vmem:[%s9912 + $0x40] sm:$0xff]
        %v9922 = vld [vmem:[%s9912 + $0x48] sm:$0xff]
        %v9923 = vld [vmem:[%s9912 + $0x50] sm:$0xff]
        %v9924 = vld [vmem:[%s9912 + $0x58] sm:$0xff]
        %v9925 = vld [vmem:[%s9912 + $0x60] sm:$0xff]
        %v9926 = vld [vmem:[%s9912 + $0x68] sm:$0xff]
        %v9927 = vld [vmem:[%s9912 + $0x70] sm:$0xff]
        %v9928 = vld [vmem:[%s9912 + $0x78] sm:$0xff]
        %v9929 = vcombine.low %v9884, %v9893
        %v9930 = vcombine.low %v9902, %v9911
        %v9932 = vunpack.c.l.s4 1966171168
        %v9933 = vunpack.c.0.s8 %v9932
        %v9934 = vlaneseq
        %v9935 = vshrl.u32 %v9934, 7
        %v9936 = vsub.s32 %v9933, %v9935
        %v9937 = vrot.slane %v9929, %v9936
        %v9939 = vunpack.c.l.s4 1966171168
        %v9940 = vunpack.c.0.s8 %v9939
        %v9941 = vlaneseq
        %v9942 = vshrl.u32 %v9941, 7
        %v9943 = vsub.s32 %v9940, %v9942
        %v9944 = vrot.slane %v9930, %v9943
        %v9945 = vcombine.low %v9937, %v9944
        %v9947 = vunpack.c.l.s4 1966171168
        %v9948 = vunpack.c.0.s8 %v9947
        %v9949 = vlaneseq
        %v9950 = vshrl.u32 %v9949, 7
        %v9951 = vsub.s32 %v9948, %v9950
        %v9952 = vrot.slane %v9945, %v9951
        %v9970 = vunpack.c.l.b16 %v9913
        %v9971 = vunpack.c.h.b16 %v9913
        %v9972 = vunpack.c.l.b16 %v9914
        %v9973 = vunpack.c.h.b16 %v9914
        %v9974 = vunpack.c.l.b16 %v9915
        %v9975 = vunpack.c.h.b16 %v9915
        %v9976 = vunpack.c.l.b16 %v9916
        %v9977 = vunpack.c.h.b16 %v9916
        %v9978 = vunpack.c.l.b16 %v9917
        %v9979 = vunpack.c.h.b16 %v9917
        %v9980 = vunpack.c.l.b16 %v9918
        %v9981 = vunpack.c.h.b16 %v9918
        %v9982 = vunpack.c.l.b16 %v9919
        %v9983 = vunpack.c.h.b16 %v9919
        %v9984 = vunpack.c.l.b16 %v9920
        %v9985 = vunpack.c.h.b16 %v9920
        %v9986 = vunpack.c.l.b16 %v9921
        %v9987 = vunpack.c.h.b16 %v9921
        %v9988 = vunpack.c.l.b16 %v9922
        %v9989 = vunpack.c.h.b16 %v9922
        %v9990 = vunpack.c.l.b16 %v9923
        %v9991 = vunpack.c.h.b16 %v9923
        %v9992 = vunpack.c.l.b16 %v9924
        %v9993 = vunpack.c.h.b16 %v9924
        %v9994 = vunpack.c.l.b16 %v9925
        %v9995 = vunpack.c.h.b16 %v9925
        %v9996 = vunpack.c.l.b16 %v9926
        %v9997 = vunpack.c.h.b16 %v9926
        %v9998 = vunpack.c.l.b16 %v9927
        %v9999 = vunpack.c.h.b16 %v9927
        %v10000 = vunpack.c.l.b16 %v9928
        %v10001 = vunpack.c.h.b16 %v9928
        %v10002 = vpack.c.b16 %v9972, %v9970
        %v10003 = vpack.c.b16 %v9973, %v9971
        %v10004 = vpack.c.b16 %v9976, %v9974
        %v10005 = vpack.c.b16 %v9977, %v9975
        %v10006 = vpack.c.b16 %v9980, %v9978
        %v10007 = vpack.c.b16 %v9981, %v9979
        %v10008 = vpack.c.b16 %v9984, %v9982
        %v10009 = vpack.c.b16 %v9985, %v9983
        %v10010 = vpack.c.b16 %v9988, %v9986
        %v10011 = vpack.c.b16 %v9989, %v9987
        %v10012 = vpack.c.b16 %v9992, %v9990
        %v10013 = vpack.c.b16 %v9993, %v9991
        %v10014 = vpack.c.b16 %v9996, %v9994
        %v10015 = vpack.c.b16 %v9997, %v9995
        %v10016 = vpack.c.b16 %v10000, %v9998
        %v10017 = vpack.c.b16 %v10001, %v9999
        %10034 = vmatprep.subr.bf16.mxu0 %v10003
        %10035 = vmatpush1.bf16.msra.mxu0 %v10002
        %10036 = vmatprep.subr.bf16.mxu0 %v10005
        %10037 = vmatpush1.bf16.msra.mxu0 %v10004
        %10038 = vmatprep.subr.bf16.mxu0 %v10007
        %10039 = vmatpush1.bf16.msra.mxu0 %v10006
        %10040 = vmatprep.subr.bf16.mxu0 %v10009
        %10041 = vmatpush1.bf16.msra.mxu0 %v10008
        %10042 = vmatprep.subr.bf16.mxu0 %v10011
        %10043 = vmatpush1.bf16.msra.mxu0 %v10010
        %10044 = vmatprep.subr.bf16.mxu0 %v10013
        %10045 = vmatpush1.bf16.msra.mxu0 %v10012
        %10046 = vmatprep.subr.bf16.mxu0 %v10015
        %10047 = vmatpush1.bf16.msra.mxu0 %v10014
        %10048 = vmatprep.subr.bf16.mxu0 %v10017
        %10049 = vmatpush1.bf16.msra.mxu0 %v10016
        %10050 = vmatprep.subr.bf16.mxu0 0
        %10051 = vmatpush1.bf16.msra.mxu0 0
        %10052 = vmatprep.subr.bf16.mxu0 0
        %10053 = vmatpush1.bf16.msra.mxu0 0
        %10054 = vmatprep.subr.bf16.mxu0 0
        %10055 = vmatpush1.bf16.msra.mxu0 0
        %10056 = vmatprep.subr.bf16.mxu0 0
        %10057 = vmatpush1.bf16.msra.mxu0 0
        %10058 = vmatprep.subr.bf16.mxu0 0
        %10059 = vmatpush1.bf16.msra.mxu0 0
        %10060 = vmatprep.subr.bf16.mxu0 0
        %10061 = vmatpush1.bf16.msra.mxu0 0
        %10062 = vmatprep.subr.bf16.mxu0 0
        %10063 = vmatpush1.bf16.msra.mxu0 0
        %10064 = vmatprep.subr.bf16.mxu0 0
        %10065 = vmatpush1.bf16.msra.mxu0 0
        %10066 = vmatprep.mubr.bf16.mxu0 0
        %10067 = vmatmul.mubr.bf16.gmra.mrb[0].mxu0 %v9952
        %v10068 = vpop.f32.mrb[0].mxu0
        %v10069 = vadd.f32 0.0, %v10068
        %v10070 = vpop.f32.mrb[0].mxu0
        %v10071 = vadd.f32 0.0, %v10070
        %v10072 = vpop.f32.mrb[0].mxu0
        %v10073 = vpop.f32.mrb[0].mxu0
        %10074 = vdwg.mxu0
        %v10075 = vadd.f32 %v9834, %v10069
        %v10076 = vadd.f32 %v9835, %v10071
        %v10077 = vld [vmem:[%s6] sm:$0x3]
        %v10079 = vlaneseq
        %v10080 = vshrl.u32 %v10079, 7
        %v10081 = vsub.s32 0, %v10080
        %v10082 = vrot.slane %v10077, %v10081
        %v10083 = vlaneseq
        %v10084 = vshrl.u32 %v10083, 7
        %v10085 = vsub.s32 1, %v10084
        %v10086 = vrot.slane %v10077, %v10085
        %v10089 = vadd.f32 %v10075, %v10082
        %v10090 = vadd.f32 %v10076, %v10086
        %vm10091 = vcmp.ge.f32.partialorder %v10089, 0.0
        %vm10092 = vcmp.ge.f32.partialorder %v10090, 0.0
        %v10093 = vmul.f32 %v10089, 0.2
        %v10094 = vmul.f32 %v10090, 0.2
        %v10095 = vsel %vm10091, %v10089, %v10093
        %v10096 = vsel %vm10092, %v10090, %v10094
        %v10099 = vcombine.low %v10095, %v10096
        %v10100 = vcombine.high %v10095, %v10096
        %v10103 = vcombine.high %v10099, %v10099
        %v10104 = vcombine.high %v10100, %v10100
        %vm10107 = vcmask 1043456
        %v10108 = vsel %vm10107, %v10099, 0.0
        %v10109 = vrot.slane %v10108, 4
        %v10110 = vadd.f32 %v10108, %v10109
        %v10111 = vrot.slane %v10110, 2
        %v10112 = vadd.f32 %v10110, %v10111
        %v10113 = vrot.slane %v10112, 1
        %v10114 = vadd.f32 %v10112, %v10113
        %v10115 = vsel %vm10107, %v10103, 0.0
        %v10116 = vrot.slane %v10115, 4
        %v10117 = vadd.f32 %v10115, %v10116
        %v10118 = vrot.slane %v10117, 2
        %v10119 = vadd.f32 %v10117, %v10118
        %v10120 = vrot.slane %v10119, 1
        %v10121 = vadd.f32 %v10119, %v10120
        %v10122 = vsel %vm10107, %v10100, 0.0
        %v10123 = vrot.slane %v10122, 4
        %v10124 = vadd.f32 %v10122, %v10123
        %v10125 = vrot.slane %v10124, 2
        %v10126 = vadd.f32 %v10124, %v10125
        %v10127 = vrot.slane %v10126, 1
        %v10128 = vadd.f32 %v10126, %v10127
        %v10129 = vsel %vm10107, %v10104, 0.0
        %v10130 = vrot.slane %v10129, 4
        %v10131 = vadd.f32 %v10129, %v10130
        %v10132 = vrot.slane %v10131, 2
        %v10133 = vadd.f32 %v10131, %v10132
        %v10134 = vrot.slane %v10133, 1
        %v10135 = vadd.f32 %v10133, %v10134
        %v10136 = vrcp.pop 4.0
        %v10137 = vmul.f32 %v10114, %v10136
        %v10138 = vmul.f32 %v10121, %v10136
        %v10139 = vmul.f32 %v10128, %v10136
        %v10140 = vmul.f32 %v10135, %v10136
        %v10141 = vld [vmem:[%s7] sm:$0x3]
        %v10143 = vlaneseq
        %v10144 = vshrl.u32 %v10143, 7
        %v10145 = vsub.s32 0, %v10144
        %v10146 = vrot.slane %v10141, %v10145
        %v10147 = vlaneseq
        %v10148 = vshrl.u32 %v10147, 7
        %v10149 = vsub.s32 1, %v10148
        %v10150 = vrot.slane %v10141, %v10149
        %v10153 = vmul.f32 %v10137, %v10146
        %v10154 = vmul.f32 %v10138, %v10150
        %v10155 = vmul.f32 %v10139, %v10146
        %v10156 = vmul.f32 %v10140, %v10150
        %v10161 = vrot.slane %v10155, 7
        %v10162 = vsel %vm1532, %v10161, %v10153
        %v10163 = vrot.slane %v10156, 7
        %v10164 = vsel %vm1532, %v10163, %v10154
        %v10167 = vsel %vm1597, %v10162, 0.0
        %v10168 = vsel %vm1597, %v10164, 0.0
        %v10169 = vadd.f32 %v10167, %v10168
        %10170 = vadd.xlane.f32.xlu0 %v10169
        %v10171 = vpop.xlane.xlu0 %10170
        %v10172 = vld [vmem:[#allocation4] sm:$0x1]
        %v10174 = vlaneseq
        %v10175 = vshrl.u32 %v10174, 7
        %v10176 = vsub.s32 0, %v10175
        %v10177 = vrot.slane %v10172, %v10176
        %v10179 = vadd.f32 %v10171, %v10177
        %v10182 = vunpack.c.l.s4 1966171168
        %v10183 = vunpack.c.0.s8 %v10182
        %v10184 = vlaneseq
        %v10185 = vshrl.u32 %v10184, 7
        %v10186 = vsub.s32 %v10183, %v10185
        %v10187 = vrot.slane %v10179, %v10186
        %v10188 = vcombine.high %v10187, %v10187
        %v10190 = vunpack.c.l.s4 1966171168
        %v10191 = vunpack.c.0.s8 %v10190
        %v10192 = vlaneseq
        %v10193 = vshrl.u32 %v10192, 7
        %v10194 = vsub.s32 %v10191, %v10193
        %v10195 = vrot.slane %v10187, %v10194
        %v10197 = vunpack.c.l.s4 1966171168
        %v10198 = vunpack.c.0.s8 %v10197
        %v10199 = vlaneseq
        %v10200 = vshrl.u32 %v10199, 7
        %v10201 = vsub.s32 %v10198, %v10200
        %v10202 = vrot.slane %v10188, %v10201
        %vm10205 = vcmask 0
        %10206 = vst.msk [vmem:[%s367] sm:$0x1] %vm10205, %v10195
        %10207 = vst.msk [vmem:[%s367 + $0x1] sm:$0x1] %vm10205, %v10202
        %s10208 = smul.u32 2, %s24
        %p10209 = scmp.lt.s32.totalorder %s10208, 3
        %s10210 = scalar_select %p10209, %s10208, 3
        %s10211 = scalar_lea.vmem %s9, %s10210
        // Predicated region
        $region65: #{tpu_custom_call.1} parent=55 // pred_check
          %p10212 = pneg %p236
        $region66: #{tpu_custom_call.1} parent=55 // pred_check_branch
          %10214 = sbr.rel (%p10212) target = $region68
        $region67: #{tpu_custom_call.1} parent=55 // pred_region
          %s10215 = smul.u32 2, %s24
        $region68: #{tpu_custom_call.1} parent=55 // pred_fallthru
          _
      $region56: #{tpu_custom_call.1} parent=5 // pred_fallthru
        _
      %p10216 = scmp.le.s32.totalorder 2, %s19
      // Predicated region
      $region69: #{tpu_custom_call.1} parent=5 // pred_check
        %p10217 = pneg %p10216
      $region70: #{tpu_custom_call.1} parent=5 // pred_check_branch
        %10219 = sbr.rel (%p10217) target = $region72
      $region71: #{tpu_custom_call.1} parent=5 // pred_region
        %s10220 = ssub.s32 %s19, 2
        // Predicated region
        $region73: #{tpu_custom_call.1} parent=71 // pred_check
          %p10221 = pneg %p242
        $region74: #{tpu_custom_call.1} parent=71 // pred_check_branch
          %10223 = sbr.rel (%p10221) target = $region76
        $region75: #{tpu_custom_call.1} parent=71 // pred_region
          %s10224 = smul.u32 2, %s25
          %p10225 = scmp.lt.s32.totalorder %s10224, 3
          %s10226 = scalar_select %p10225, %s10224, 3
          %s10227 = scalar_lea.vmem %s9, %s10226
        $region76: #{tpu_custom_call.1} parent=71 // pred_fallthru
          _
      $region72: #{tpu_custom_call.1} parent=5 // pred_fallthru
        _
    $region6: #{tpu_custom_call.1} parent=1 // loop_footer
      %s23 = sadd.s32 1, %s19
    $region7: #{tpu_custom_call.1} parent=1 // loop_footer_branch
      %18 = sbr.rel target = $region3
    $region8: #{tpu_custom_call.1} parent=1 // loop_exit
      _
    %10228 = vsyncpa [#allocation6], 1
    %s10229 = scalar_lea.sflag [#allocation6], 1
    %10230 = vsyncpa %s10229, 1
    %10231 = vsyncpa [#allocation8], 1

</llo_original>
